<compile_context>
chip_gen: v6e
topology: v6e:2x2x1
jax: 0.10.0
libtpu: 0.0.40
codegen_flags: <defaults>
</compile_context>

<pallas_src>
import jax
import jax.numpy as jnp
from jax.experimental import pallas as pl
from jax.experimental.pallas import tpu as pltpu


OUT_MIN_LANES = 128  # lane-dense output tile width (>= T, >= 4*H for H <= 32)


def _aligned_offsets(widths, align=128):
    """128-lane aligned packing offsets for a list of segment widths."""
    offs, o = [], 0
    for w in widths:
        offs.append(o)
        o += -(-int(w) // align) * align
    return offs, o


# ------------------------- fused forward Pallas kernel -------------------------

def _fused_forward_kernel(x0_ref, m1_ref, m2_ref, m3_ref, m4_ref, wx0_ref,
                          bias_ref, sw_ref, h_ref, out_ref, hid_ref):
    f32, bf16 = jnp.float32, jnp.bfloat16
    H = h_ref.shape[2]                  # GRU hidden size
    G = 4 * H                           # merged gate width [r | z | n_x | n_h]
    T = x0_ref.shape[1]                 # sequence length (= 3*3 spatial positions)
    C = wx0_ref.shape[0]                # channels fed to the GRU (64)
    Bp = x0_ref.shape[0]                # padded batch (sublane-aligned)
    OUT = out_ref.shape[1]

    def mm(a, b):
        return jnp.dot(a, b, preferred_element_type=f32)

    # Packed bias row: [b1 | b2 | b3 | b4 | bg0 | bg1 | dbias], 128-lane aligned.
    widths = (m1_ref.shape[1], m2_ref.shape[1], m3_ref.shape[1], m4_ref.shape[1],
              G, G, OUT)
    offs, _ = _aligned_offsets(widths)

    def bseg(i):
        return bias_ref[:, offs[i]:offs[i] + widths[i]]

    x0 = x0_ref[...]                                          # (Bp, T) f32 flattened input

    # ---- CNN stack: each conv folded offline into one bf16 matmul + bias + ReLU ----
    a = jnp.maximum(mm(x0.astype(bf16), m1_ref[...]) + bseg(0), 0.0)   # ConvT 1->8
    a = jnp.maximum(mm(a.astype(bf16), m2_ref[...]) + bseg(1), 0.0)    # ConvT 8->16
    a = jnp.maximum(mm(a.astype(bf16), m3_ref[...]) + bseg(2), 0.0)    # Conv 16->32
    a = jnp.maximum(mm(a.astype(bf16), m4_ref[...]) + bseg(3), 0.0)    # Conv 32->64, (t,c) cols

    # Residual (x += inputs: single input channel broadcast over C output channels)
    # fused with restacking to (T*Bp, C) so the GRU layer-0 input projections for
    # all T timesteps are ONE matmul against the raw (C, 4H) weight -- no
    # zero-padded block-diagonal weight, one MXU weight load.
    a_steps = [a[:, t * C:(t + 1) * C] + x0[:, t:t + 1] for t in range(T)]
    a_stk = jnp.concatenate(a_steps, axis=0).astype(bf16)     # (T*Bp, C)
    gi0_all = mm(a_stk, wx0_ref[...]) + bseg(4)               # (T*Bp, 4H) f32

    # Small f32 weights packed by rows: [wh0 (H) | [wx1;wh1] (2H) | dmat (T*H)].
    wh0 = sw_ref[0:H, 0:G]                                    # layer-0 recurrent
    w1 = sw_ref[H:3 * H, 0:G]                                 # layer-1 input+recurrent, fused
    dmat = sw_ref[3 * H:(3 + T) * H, 0:OUT]                   # Linear(H->1) for all T steps
    bg1 = bseg(5)

    h0 = h_ref[0]                                             # (Bp, H)
    h1 = h_ref[1]                                             # (Bp, H)

    def gru_cell(g, h_prev):
        # merged gate layout [r | z | n_x | n_h]; PyTorch GRU equations
        rz = jax.nn.sigmoid(g[:, 0:2 * H])                    # one EUP dispatch for r and z
        r, z = rz[:, 0:H], rz[:, H:2 * H]
        n = jnp.tanh(g[:, 2 * H:3 * H] + r * g[:, 3 * H:4 * H])
        return (1.0 - z) * n + z * h_prev

    # TODO(synk): PyTorch GRU inter-layer dropout (p=0.2) is train-mode only; omitted
    # (inference semantics).
    h1_steps = []
    for t in range(T):                                        # T=9, fully unrolled at trace time
        g0 = gi0_all[t * Bp:(t + 1) * Bp, :] + mm(h0, wh0)    # one recurrent matmul per cell
        h0 = gru_cell(g0, h0)
        g1 = mm(jnp.concatenate([h0, h1], axis=1), w1) + bg1  # fused wx1/wh1 matmul
        h1 = gru_cell(g1, h1)
        h1_steps.append(h1)

    # Linear(H -> 1) for all steps, hoisted out of the recurrent loop: one matmul
    # writing a lane-dense (Bp, 128) output tile (lane t = prediction for step t).
    h1_all = jnp.concatenate(h1_steps, axis=1)                # (Bp, T*H)
    out_ref[...] = mm(h1_all, dmat) + bseg(6)
    hid_ref[0] = h0
    hid_ref[1] = h1


# ---------------------- one-time weight preprocessing --------------------------

def _conv_matrix(w_oikk, hi, wi, nhwc_out=False):
    """Dense matrix M with flat(conv2d(x)) = flat(x) @ M (stride 1, no padding).

    Rows use NCHW flatten (c*hi*wi + y*wi + x).  Columns use NCHW flatten of the
    output unless nhwc_out=True, then (y*wo + x)*cout + o.
    """
    co, ci, kh, kw = w_oikk.shape
    ho, wo = hi - kh + 1, wi - kw + 1
    sy = jnp.stack([jnp.eye(hi, ho, k=-p, dtype=jnp.float32) for p in range(kh)])
    sx = jnp.stack([jnp.eye(wi, wo, k=-q, dtype=jnp.float32) for q in range(kw)])
    out_spec = "cYXyxo" if nhwc_out else "cYXoyx"
    m = jnp.einsum("ocpq,pYy,qXx->" + out_spec, w_oikk.astype(jnp.float32), sy, sx)
    return m.reshape(ci * hi * wi, co * ho * wo), (ho, wo)


def _conv_transpose_matrix(w_iokk, hi, wi):
    """Dense matrix for ConvTranspose2d (stride 1, no padding), NCHW flatten in/out."""
    ci, co, kh, kw = w_iokk.shape
    ho, wo = hi + kh - 1, wi + kw - 1
    sy = jnp.stack([jnp.eye(hi, ho, k=p, dtype=jnp.float32) for p in range(kh)])
    sx = jnp.stack([jnp.eye(wi, wo, k=q, dtype=jnp.float32) for q in range(kw)])
    m = jnp.einsum("copq,pYy,qXx->cYXoyx", w_iokk.astype(jnp.float32), sy, sx)
    return m.reshape(ci * hi * wi, co * ho * wo), (ho, wo)


def _gru_merged_weights(w_ih, w_hh, b_ih, b_hh):
    """Merge PyTorch GRU weights into gate layout [r | z | n_x | n_h]."""
    H = w_hh.shape[1]
    I = w_ih.shape[1]
    zI = jnp.zeros((I, H), jnp.float32)
    zH = jnp.zeros((H, H), jnp.float32)
    wx = jnp.concatenate([w_ih[:H].T, w_ih[H:2 * H].T, w_ih[2 * H:].T, zI], axis=1)   # (I, 4H)
    wh = jnp.concatenate([w_hh[:H].T, w_hh[H:2 * H].T, zH, w_hh[2 * H:].T], axis=1)   # (H, 4H)
    bg = jnp.concatenate([b_ih[:H] + b_hh[:H], b_ih[H:2 * H] + b_hh[H:2 * H],
                          b_ih[2 * H:], b_hh[2 * H:]]).reshape(1, 4 * H)
    return wx, wh, bg


def prepare_fused_params(params):
    """One-time conversion of PyTorch-layout parameters into kernel-ready arrays."""
    f32, bf16 = jnp.float32, jnp.bfloat16
    T = 9                                                     # 3x3 final spatial positions

    m1, s1 = _conv_transpose_matrix(params["up1_w"], 3, 3)    # (9, 200),   out 5x5
    m2, s2 = _conv_transpose_matrix(params["up2_w"], 5, 5)    # (200, 784), out 7x7
    m3, s3 = _conv_matrix(params["c1_w"], 7, 7)               # (784, 800), out 5x5
    m4, s4 = _conv_matrix(params["c2_w"], 5, 5, nhwc_out=True)  # (800, 576), out 3x3 (t,c)

    b1 = jnp.repeat(params["up1_b"], s1[0] * s1[1]).astype(f32)       # NCHW columns
    b2 = jnp.repeat(params["up2_b"], s2[0] * s2[1]).astype(f32)
    b3 = jnp.repeat(params["c1_b"], s3[0] * s3[1]).astype(f32)
    b4 = jnp.tile(params["c2_b"], s4[0] * s4[1]).astype(f32)          # NHWC columns

    wx0, wh0, bg0 = _gru_merged_weights(params["gru0_wih"], params["gru0_whh"],
                                        params["gru0_bih"], params["gru0_bhh"])
    wx1, wh1, bg1 = _gru_merged_weights(params["gru1_wih"], params["gru1_whh"],
                                        params["gru1_bih"], params["gru1_bhh"])
    H = wh0.shape[0]
    G = 4 * H
    OUT = max(G, OUT_MIN_LANES)
    w1 = jnp.concatenate([wx1, wh1], axis=0)                          # (2H, 4H) fused layer-1

    # Linear(H->1) for all T steps folded into a lane-dense (T*H, OUT) matrix.
    dmat = jnp.kron(jnp.eye(T, dtype=f32), params["dense_w"].T.astype(f32))  # (T*H, T)
    dmat = jnp.pad(dmat, ((0, 0), (0, OUT - T)))
    dbias = jnp.full((OUT,), params["dense_b"][0], f32)

    # Pack every tiny bias into a single (1, P) row, 128-lane aligned segments.
    segs = [b1, b2, b3, b4, bg0.reshape(-1), bg1.reshape(-1), dbias]
    offs, total = _aligned_offsets([s.shape[0] for s in segs])
    bias_row = jnp.zeros((1, total), f32)
    for off, s in zip(offs, segs):
        bias_row = bias_row.at[0, off:off + s.shape[0]].set(s.astype(f32))

    # Pack the small f32 GRU/head weights into one (3H + T*H, OUT) slab.
    def padw(m):
        return jnp.pad(m.astype(f32), ((0, 0), (0, OUT - m.shape[1])))
    sw = jnp.concatenate([padw(wh0), padw(w1), padw(dmat)], axis=0)

    return {"m1": m1.astype(bf16), "m2": m2.astype(bf16),
            "m3": m3.astype(bf16), "m4": m4.astype(bf16),
            "wx0": wx0.astype(bf16), "bias": bias_row, "sw": sw}


# --------------------------- parameters & forward ---------------------------

def init_params(key, hidden_dim=32):
    def u(k, shape, fan_in):
        bound = 1.0 / jnp.sqrt(jnp.float32(fan_in))
        return jax.random.uniform(k, shape, jnp.float32, -bound, bound)

    ks = jax.random.split(key, 18)
    H = hidden_dim
    return {
        # ConvTranspose2d weights: (in, out, kh, kw)
        "up1_w": u(ks[0], (1, 8, 3, 3), 1 * 9),   "up1_b": u(ks[1], (8,), 1 * 9),
        "up2_w": u(ks[2], (8, 16, 3, 3), 8 * 9),  "up2_b": u(ks[3], (16,), 8 * 9),
        # Conv2d weights: (out, in, kh, kw)
        "c1_w": u(ks[4], (32, 16, 3, 3), 16 * 9), "c1_b": u(ks[5], (32,), 16 * 9),
        "c2_w": u(ks[6], (64, 32, 3, 3), 32 * 9), "c2_b": u(ks[7], (64,), 32 * 9),
        # GRU layer 0 (input 64), layer 1 (input H); gate order [r, z, n]
        "gru0_wih": u(ks[8], (3 * H, 64), H),  "gru0_whh": u(ks[9], (3 * H, H), H),
        "gru0_bih": u(ks[10], (3 * H,), H),    "gru0_bhh": u(ks[11], (3 * H,), H),
        "gru1_wih": u(ks[12], (3 * H, H), H),  "gru1_whh": u(ks[13], (3 * H, H), H),
        "gru1_bih": u(ks[14], (3 * H,), H),    "gru1_bhh": u(ks[15], (3 * H,), H),
        # Linear(hidden_dim, 1)
        "dense_w": u(ks[16], (1, H), H),       "dense_b": u(ks[17], (1,), H),
    }


def cnn_with_rnn_forward(fused, inputs, hidden):
    """Forward pass. inputs: (B, 1, 3, 3) NCHW float32; hidden: (2, >=B, H)."""
    B = inputs.shape[0]
    T = inputs.shape[2] * inputs.shape[3]
    H = hidden.shape[2]
    assert hidden.shape[0] == 2 and hidden.shape[1] >= B, "bad hidden shape"
    B_pad = max(8, -(-B // 8) * 8)
    OUT = fused["sw"].shape[1]

    x0 = jnp.pad(inputs.reshape(B, T).astype(jnp.float32),
                 ((0, B_pad - B), (0, 0)))                        # (B_pad, T)
    h_init = hidden[:, -B:, :].astype(jnp.float32)                # hidden[:, -B:, :]
    h_init = jnp.pad(h_init, ((0, 0), (0, B_pad - B), (0, 0)))    # (2, B_pad, H)

    # TODO(synk): if this forward is called in an outer loop (per decode step), fold
    # that loop into a grid axis with constant weight index_maps so weights are
    # DMA'd into VMEM once and revisited across steps.
    out_pad, hid_pad = pl.pallas_call(
        _fused_forward_kernel,
        out_shape=(jax.ShapeDtypeStruct((B_pad, OUT), jnp.float32),
                   jax.ShapeDtypeStruct((2, B_pad, H), jnp.float32)),
        compiler_params=pltpu.CompilerParams(vmem_limit_bytes=16 * 1024 * 1024),
    )(x0, fused["m1"], fused["m2"], fused["m3"], fused["m4"], fused["wx0"],
      fused["bias"], fused["sw"], h_init)

    # NOTE: padded batch rows and output lanes >= T of out_pad / hid_pad hold garbage
    # and must never be consumed unsliced.
    out = out_pad[:B, :T].reshape(B, T, 1)
    hidden_out = hid_pad[:, :B, :]
    return out, hidden_out


# ----------------------- plain-JAX reference (for checking) -----------------------

def _gru_layer_ref(x_seq, h0, w_ih, w_hh, b_ih, b_hh):
    H = w_hh.shape[1]

    def cell(h, x):
        gi = x @ w_ih.T + b_ih
        gh = h @ w_hh.T + b_hh
        r = jax.nn.sigmoid(gi[:, :H] + gh[:, :H])
        z = jax.nn.sigmoid(gi[:, H:2 * H] + gh[:, H:2 * H])
        n = jnp.tanh(gi[:, 2 * H:] + r * gh[:, 2 * H:])
        h_new = (1.0 - z) * n + z * h
        return h_new, h_new

    h_last, ys = jax.lax.scan(cell, h0, jnp.swapaxes(x_seq, 0, 1))
    return jnp.swapaxes(ys, 0, 1), h_last


def reference_forward(params, inputs, hidden):
    x = inputs.astype(jnp.float32)

    def convt(v, w, b):
        kh, kw = w.shape[2], w.shape[3]
        wflip = jnp.flip(w, (-2, -1)).transpose(1, 0, 2, 3)
        y = jax.lax.conv_general_dilated(
            v, wflip, (1, 1), [(kh - 1, kh - 1), (kw - 1, kw - 1)],
            dimension_numbers=("NCHW", "OIHW", "NCHW"))
        return y + b[None, :, None, None]

    def conv(v, w, b):
        y = jax.lax.conv_general_dilated(
            v, w, (1, 1), "VALID", dimension_numbers=("NCHW", "OIHW", "NCHW"))
        return y + b[None, :, None, None]

    x1 = jax.nn.relu(convt(x, params["up1_w"], params["up1_b"]))
    x2 = jax.nn.relu(convt(x1, params["up2_w"], params["up2_b"]))
    x3 = jax.nn.relu(conv(x2, params["c1_w"], params["c1_b"]))
    x4 = jax.nn.relu(conv(x3, params["c2_w"], params["c2_b"]))
    x4 = x4 + x                                              # residual, 1 -> 64 channel bcast
    B = x.shape[0]
    seq = x4.reshape(B, x4.shape[1], -1).transpose(0, 2, 1)  # (B, 9, 64)
    h = hidden[:, -B:, :]
    y0, h0f = _gru_layer_ref(seq, h[0], params["gru0_wih"], params["gru0_whh"],
                             params["gru0_bih"], params["gru0_bhh"])
    y1, h1f = _gru_layer_ref(y0, h[1], params["gru1_wih"], params["gru1_whh"],
                             params["gru1_bih"], params["gru1_bhh"])
    out = y1 @ params["dense_w"].T + params["dense_b"]       # (B, 9, 1)
    return out, jnp.stack([h0f, h1f], axis=0)


if __name__ == "__main__":
    key = jax.random.PRNGKey(0)
    k_par, k_in = jax.random.split(key, 2)
    hidden_dim = 32
    B = 2
    params = init_params(k_par, hidden_dim)
    fused = prepare_fused_params(params)                 # one-time weight preprocessing
    inputs = jax.random.normal(k_in, (B, 1, 3, 3), jnp.float32)
    hidden = jnp.zeros((2, B, hidden_dim), jnp.float32)  # init_hidden(B)

    fwd = jax.jit(cnn_with_rnn_forward)
    out, hidden_out = fwd(fused, inputs, hidden)
    jax.block_until_ready((out, hidden_out))

    assert out.shape == (B, 9, 1), out.shape
    assert hidden_out.shape == (2, B, hidden_dim), hidden_out.shape
    assert bool(jnp.all(jnp.isfinite(out))) and bool(jnp.all(jnp.isfinite(hidden_out)))

    # Numerical check against a plain-JAX reference of the PyTorch module.
    # (Loose, norm-relative tolerance: the kernel streams conv weights in bf16.)
    with jax.default_matmul_precision("float32"):
        out_r, hid_r = reference_forward(params, inputs, hidden)
    jax.block_until_ready((out_r, hid_r))

    def rel_err(a, b):
        return float(jnp.linalg.norm(a - b) / (jnp.linalg.norm(b) + 1e-6))

    assert rel_err(out, out_r) < 5e-2, rel_err(out, out_r)
    assert rel_err(hidden_out, hid_r) < 5e-2, rel_err(hidden_out, hid_r)
    print("KERNEL_OK")
</pallas_src>

<mosaic_0001>
module attributes {stable_mosaic.version = 11 : i64} {
  func.func @_fused_forward_kernel(%arg0: memref<8x9xf32, #tpu.memory_space<vmem>>, %arg1: memref<9x200xbf16, #tpu.memory_space<vmem>>, %arg2: memref<200x784xbf16, #tpu.memory_space<vmem>>, %arg3: memref<784x800xbf16, #tpu.memory_space<vmem>>, %arg4: memref<800x576xbf16, #tpu.memory_space<vmem>>, %arg5: memref<64x128xbf16, #tpu.memory_space<vmem>>, %arg6: memref<1x3072xf32, #tpu.memory_space<vmem>>, %arg7: memref<384x128xf32, #tpu.memory_space<vmem>>, %arg8: memref<2x8x32xf32, #tpu.memory_space<vmem>>, %arg9: memref<8x128xf32, #tpu.memory_space<vmem>>, %arg10: memref<2x8x32xf32, #tpu.memory_space<vmem>>) attributes {dimension_semantics = [], scalar_prefetch = 0 : i64, scratch_operands = 0 : i64, tpu.core_type = #tpu.core_type<tc>} {
    %c0 = arith.constant 0 : index
    %c0_0 = arith.constant 0 : index
    %0 = vector.load %arg0[%c0, %c0_0] : memref<8x9xf32, #tpu.memory_space<vmem>>, vector<8x9xf32>
    %1 = arith.truncf %0 : vector<8x9xf32> to vector<8x9xbf16>
    %c0_1 = arith.constant 0 : index
    %c0_2 = arith.constant 0 : index
    %2 = vector.load %arg1[%c0_1, %c0_2] : memref<9x200xbf16, #tpu.memory_space<vmem>>, vector<9x200xbf16>
    %cst = arith.constant dense<0.000000e+00> : vector<8x200xf32>
    %3 = tpu.matmul %1, %2, %cst {dimension_numbers = #tpu.dot_dimension_numbers<[1], [0], [0], [1], [0, 0, 1, 1], [], []>} : vector<8x9xbf16>, vector<9x200xbf16>, vector<8x200xf32> -> vector<8x200xf32>
    %c0_3 = arith.constant 0 : index
    %c0_4 = arith.constant 0 : index
    %4 = vector.load %arg6[%c0_3, %c0_4] : memref<1x3072xf32, #tpu.memory_space<vmem>>, vector<1x200xf32>
    %5 = vector.broadcast %4 : vector<1x200xf32> to vector<8x200xf32>
    %6 = arith.addf %3, %5 : vector<8x200xf32>
    %cst_5 = arith.constant 0.000000e+00 : f32
    %7 = vector.broadcast %cst_5 : f32 to vector<8x200xf32>
    %8 = arith.maximumf %6, %7 : vector<8x200xf32>
    %9 = arith.truncf %8 : vector<8x200xf32> to vector<8x200xbf16>
    %c0_6 = arith.constant 0 : index
    %c0_7 = arith.constant 0 : index
    %10 = vector.load %arg2[%c0_6, %c0_7] : memref<200x784xbf16, #tpu.memory_space<vmem>>, vector<200x784xbf16>
    %cst_8 = arith.constant dense<0.000000e+00> : vector<8x784xf32>
    %11 = tpu.matmul %9, %10, %cst_8 {dimension_numbers = #tpu.dot_dimension_numbers<[1], [0], [0], [1], [0, 0, 1, 1], [], []>} : vector<8x200xbf16>, vector<200x784xbf16>, vector<8x784xf32> -> vector<8x784xf32>
    %c0_9 = arith.constant 0 : index
    %c256 = arith.constant 256 : index
    %12 = vector.load %arg6[%c0_9, %c256] : memref<1x3072xf32, #tpu.memory_space<vmem>>, vector<1x784xf32>
    %13 = vector.broadcast %12 : vector<1x784xf32> to vector<8x784xf32>
    %14 = arith.addf %11, %13 : vector<8x784xf32>
    %cst_10 = arith.constant 0.000000e+00 : f32
    %15 = vector.broadcast %cst_10 : f32 to vector<8x784xf32>
    %16 = arith.maximumf %14, %15 : vector<8x784xf32>
    %17 = arith.truncf %16 : vector<8x784xf32> to vector<8x784xbf16>
    %c0_11 = arith.constant 0 : index
    %c0_12 = arith.constant 0 : index
    %18 = vector.load %arg3[%c0_11, %c0_12] : memref<784x800xbf16, #tpu.memory_space<vmem>>, vector<784x800xbf16>
    %cst_13 = arith.constant dense<0.000000e+00> : vector<8x800xf32>
    %19 = tpu.matmul %17, %18, %cst_13 {dimension_numbers = #tpu.dot_dimension_numbers<[1], [0], [0], [1], [0, 0, 1, 1], [], []>} : vector<8x784xbf16>, vector<784x800xbf16>, vector<8x800xf32> -> vector<8x800xf32>
    %c0_14 = arith.constant 0 : index
    %c1152 = arith.constant 1152 : index
    %20 = vector.load %arg6[%c0_14, %c1152] : memref<1x3072xf32, #tpu.memory_space<vmem>>, vector<1x800xf32>
    %21 = vector.broadcast %20 : vector<1x800xf32> to vector<8x800xf32>
    %22 = arith.addf %19, %21 : vector<8x800xf32>
    %cst_15 = arith.constant 0.000000e+00 : f32
    %23 = vector.broadcast %cst_15 : f32 to vector<8x800xf32>
    %24 = arith.maximumf %22, %23 : vector<8x800xf32>
    %25 = arith.truncf %24 : vector<8x800xf32> to vector<8x800xbf16>
    %c0_16 = arith.constant 0 : index
    %c0_17 = arith.constant 0 : index
    %26 = vector.load %arg4[%c0_16, %c0_17] : memref<800x576xbf16, #tpu.memory_space<vmem>>, vector<800x576xbf16>
    %cst_18 = arith.constant dense<0.000000e+00> : vector<8x576xf32>
    %27 = tpu.matmul %25, %26, %cst_18 {dimension_numbers = #tpu.dot_dimension_numbers<[1], [0], [0], [1], [0, 0, 1, 1], [], []>} : vector<8x800xbf16>, vector<800x576xbf16>, vector<8x576xf32> -> vector<8x576xf32>
    %c0_19 = arith.constant 0 : index
    %c2048 = arith.constant 2048 : index
    %28 = vector.load %arg6[%c0_19, %c2048] : memref<1x3072xf32, #tpu.memory_space<vmem>>, vector<1x576xf32>
    %29 = vector.broadcast %28 : vector<1x576xf32> to vector<8x576xf32>
    %30 = arith.addf %27, %29 : vector<8x576xf32>
    %cst_20 = arith.constant 0.000000e+00 : f32
    %31 = vector.broadcast %cst_20 : f32 to vector<8x576xf32>
    %32 = arith.maximumf %30, %31 : vector<8x576xf32>
    %33 = vector.extract_strided_slice %32 {offsets = [0, 0], sizes = [8, 64], strides = [1, 1]} : vector<8x576xf32> to vector<8x64xf32>
    %34 = vector.extract_strided_slice %0 {offsets = [0, 0], sizes = [8, 1], strides = [1, 1]} : vector<8x9xf32> to vector<8x1xf32>
    %35 = vector.broadcast %34 : vector<8x1xf32> to vector<8x64xf32>
    %36 = arith.addf %33, %35 : vector<8x64xf32>
    %37 = vector.extract_strided_slice %32 {offsets = [0, 64], sizes = [8, 64], strides = [1, 1]} : vector<8x576xf32> to vector<8x64xf32>
    %38 = vector.extract_strided_slice %0 {offsets = [0, 1], sizes = [8, 1], strides = [1, 1]} : vector<8x9xf32> to vector<8x1xf32>
    %39 = vector.broadcast %38 : vector<8x1xf32> to vector<8x64xf32>
    %40 = arith.addf %37, %39 : vector<8x64xf32>
    %41 = vector.extract_strided_slice %32 {offsets = [0, 128], sizes = [8, 64], strides = [1, 1]} : vector<8x576xf32> to vector<8x64xf32>
    %42 = vector.extract_strided_slice %0 {offsets = [0, 2], sizes = [8, 1], strides = [1, 1]} : vector<8x9xf32> to vector<8x1xf32>
    %43 = vector.broadcast %42 : vector<8x1xf32> to vector<8x64xf32>
    %44 = arith.addf %41, %43 : vector<8x64xf32>
    %45 = vector.extract_strided_slice %32 {offsets = [0, 192], sizes = [8, 64], strides = [1, 1]} : vector<8x576xf32> to vector<8x64xf32>
    %46 = vector.extract_strided_slice %0 {offsets = [0, 3], sizes = [8, 1], strides = [1, 1]} : vector<8x9xf32> to vector<8x1xf32>
    %47 = vector.broadcast %46 : vector<8x1xf32> to vector<8x64xf32>
    %48 = arith.addf %45, %47 : vector<8x64xf32>
    %49 = vector.extract_strided_slice %32 {offsets = [0, 256], sizes = [8, 64], strides = [1, 1]} : vector<8x576xf32> to vector<8x64xf32>
    %50 = vector.extract_strided_slice %0 {offsets = [0, 4], sizes = [8, 1], strides = [1, 1]} : vector<8x9xf32> to vector<8x1xf32>
    %51 = vector.broadcast %50 : vector<8x1xf32> to vector<8x64xf32>
    %52 = arith.addf %49, %51 : vector<8x64xf32>
    %53 = vector.extract_strided_slice %32 {offsets = [0, 320], sizes = [8, 64], strides = [1, 1]} : vector<8x576xf32> to vector<8x64xf32>
    %54 = vector.extract_strided_slice %0 {offsets = [0, 5], sizes = [8, 1], strides = [1, 1]} : vector<8x9xf32> to vector<8x1xf32>
    %55 = vector.broadcast %54 : vector<8x1xf32> to vector<8x64xf32>
    %56 = arith.addf %53, %55 : vector<8x64xf32>
    %57 = vector.extract_strided_slice %32 {offsets = [0, 384], sizes = [8, 64], strides = [1, 1]} : vector<8x576xf32> to vector<8x64xf32>
    %58 = vector.extract_strided_slice %0 {offsets = [0, 6], sizes = [8, 1], strides = [1, 1]} : vector<8x9xf32> to vector<8x1xf32>
    %59 = vector.broadcast %58 : vector<8x1xf32> to vector<8x64xf32>
    %60 = arith.addf %57, %59 : vector<8x64xf32>
    %61 = vector.extract_strided_slice %32 {offsets = [0, 448], sizes = [8, 64], strides = [1, 1]} : vector<8x576xf32> to vector<8x64xf32>
    %62 = vector.extract_strided_slice %0 {offsets = [0, 7], sizes = [8, 1], strides = [1, 1]} : vector<8x9xf32> to vector<8x1xf32>
    %63 = vector.broadcast %62 : vector<8x1xf32> to vector<8x64xf32>
    %64 = arith.addf %61, %63 : vector<8x64xf32>
    %65 = vector.extract_strided_slice %32 {offsets = [0, 512], sizes = [8, 64], strides = [1, 1]} : vector<8x576xf32> to vector<8x64xf32>
    %66 = vector.extract_strided_slice %0 {offsets = [0, 8], sizes = [8, 1], strides = [1, 1]} : vector<8x9xf32> to vector<8x1xf32>
    %67 = vector.broadcast %66 : vector<8x1xf32> to vector<8x64xf32>
    %68 = arith.addf %65, %67 : vector<8x64xf32>
    %69 = tpu.concatenate %36, %40, %44, %48, %52, %56, %60, %64, %68 in 0 : vector<8x64xf32>, vector<8x64xf32>, vector<8x64xf32>, vector<8x64xf32>, vector<8x64xf32>, vector<8x64xf32>, vector<8x64xf32>, vector<8x64xf32>, vector<8x64xf32> -> vector<72x64xf32>
    %70 = arith.truncf %69 : vector<72x64xf32> to vector<72x64xbf16>
    %c0_21 = arith.constant 0 : index
    %c0_22 = arith.constant 0 : index
    %71 = vector.load %arg5[%c0_21, %c0_22] : memref<64x128xbf16, #tpu.memory_space<vmem>>, vector<64x128xbf16>
    %cst_23 = arith.constant dense<0.000000e+00> : vector<72x128xf32>
    %72 = tpu.matmul %70, %71, %cst_23 {dimension_numbers = #tpu.dot_dimension_numbers<[1], [0], [0], [1], [0, 0, 1, 1], [], []>} : vector<72x64xbf16>, vector<64x128xbf16>, vector<72x128xf32> -> vector<72x128xf32>
    %c0_24 = arith.constant 0 : index
    %c2688 = arith.constant 2688 : index
    %73 = vector.load %arg6[%c0_24, %c2688] : memref<1x3072xf32, #tpu.memory_space<vmem>>, vector<1x128xf32>
    %74 = vector.broadcast %73 : vector<1x128xf32> to vector<72x128xf32>
    %75 = arith.addf %72, %74 : vector<72x128xf32>
    %c0_25 = arith.constant 0 : index
    %c0_26 = arith.constant 0 : index
    %76 = vector.load %arg7[%c0_25, %c0_26] : memref<384x128xf32, #tpu.memory_space<vmem>>, vector<32x128xf32>
    %c32 = arith.constant 32 : index
    %c0_27 = arith.constant 0 : index
    %77 = vector.load %arg7[%c32, %c0_27] : memref<384x128xf32, #tpu.memory_space<vmem>>, vector<64x128xf32>
    %c96 = arith.constant 96 : index
    %c0_28 = arith.constant 0 : index
    %78 = vector.load %arg7[%c96, %c0_28] : memref<384x128xf32, #tpu.memory_space<vmem>>, vector<288x128xf32>
    %c0_29 = arith.constant 0 : index
    %c2816 = arith.constant 2816 : index
    %79 = vector.load %arg6[%c0_29, %c2816] : memref<1x3072xf32, #tpu.memory_space<vmem>>, vector<1x128xf32>
    %c0_30 = arith.constant 0 : index
    %c0_31 = arith.constant 0 : index
    %c0_32 = arith.constant 0 : index
    %80 = vector.load %arg8[%c0_30, %c0_31, %c0_32] : memref<2x8x32xf32, #tpu.memory_space<vmem>>, vector<1x8x32xf32>
    %81 = vector.shape_cast %80 : vector<1x8x32xf32> to vector<8x32xf32>
    %c1 = arith.constant 1 : index
    %c0_33 = arith.constant 0 : index
    %c0_34 = arith.constant 0 : index
    %82 = vector.load %arg8[%c1, %c0_33, %c0_34] : memref<2x8x32xf32, #tpu.memory_space<vmem>>, vector<1x8x32xf32>
    %83 = vector.shape_cast %82 : vector<1x8x32xf32> to vector<8x32xf32>
    %84 = vector.extract_strided_slice %75 {offsets = [0, 0], sizes = [8, 128], strides = [1, 1]} : vector<72x128xf32> to vector<8x128xf32>
    %cst_35 = arith.constant dense<0.000000e+00> : vector<8x128xf32>
    %85 = tpu.matmul %81, %76, %cst_35 {dimension_numbers = #tpu.dot_dimension_numbers<[1], [0], [0], [1], [0, 0, 1, 1], [], []>} : vector<8x32xf32>, vector<32x128xf32>, vector<8x128xf32> -> vector<8x128xf32>
    %86 = arith.addf %84, %85 : vector<8x128xf32>
    %87 = vector.extract_strided_slice %86 {offsets = [0, 0], sizes = [8, 64], strides = [1, 1]} : vector<8x128xf32> to vector<8x64xf32>
    %88 = arith.negf %87 : vector<8x64xf32>
    %89 = math.exp %88 : vector<8x64xf32>
    %cst_36 = arith.constant 1.000000e+00 : f32
    %90 = vector.broadcast %cst_36 : f32 to vector<8x64xf32>
    %91 = arith.addf %90, %89 : vector<8x64xf32>
    %92 = arith.divf %90, %91 : vector<8x64xf32>
    %93 = vector.extract_strided_slice %92 {offsets = [0, 0], sizes = [8, 32], strides = [1, 1]} : vector<8x64xf32> to vector<8x32xf32>
    %94 = vector.extract_strided_slice %92 {offsets = [0, 32], sizes = [8, 32], strides = [1, 1]} : vector<8x64xf32> to vector<8x32xf32>
    %95 = vector.extract_strided_slice %86 {offsets = [0, 64], sizes = [8, 32], strides = [1, 1]} : vector<8x128xf32> to vector<8x32xf32>
    %96 = vector.extract_strided_slice %86 {offsets = [0, 96], sizes = [8, 32], strides = [1, 1]} : vector<8x128xf32> to vector<8x32xf32>
    %97 = arith.mulf %93, %96 : vector<8x32xf32>
    %98 = arith.addf %95, %97 : vector<8x32xf32>
    %99 = math.tanh %98 : vector<8x32xf32>
    %cst_37 = arith.constant 1.000000e+00 : f32
    %100 = vector.broadcast %cst_37 : f32 to vector<8x32xf32>
    %101 = arith.subf %100, %94 : vector<8x32xf32>
    %102 = arith.mulf %101, %99 : vector<8x32xf32>
    %103 = arith.mulf %94, %81 : vector<8x32xf32>
    %104 = arith.addf %102, %103 : vector<8x32xf32>
    %105 = tpu.concatenate %104, %83 in 1 : vector<8x32xf32>, vector<8x32xf32> -> vector<8x64xf32>
    %cst_38 = arith.constant dense<0.000000e+00> : vector<8x128xf32>
    %106 = tpu.matmul %105, %77, %cst_38 {dimension_numbers = #tpu.dot_dimension_numbers<[1], [0], [0], [1], [0, 0, 1, 1], [], []>} : vector<8x64xf32>, vector<64x128xf32>, vector<8x128xf32> -> vector<8x128xf32>
    %107 = vector.broadcast %79 : vector<1x128xf32> to vector<8x128xf32>
    %108 = arith.addf %106, %107 : vector<8x128xf32>
    %109 = vector.extract_strided_slice %108 {offsets = [0, 0], sizes = [8, 64], strides = [1, 1]} : vector<8x128xf32> to vector<8x64xf32>
    %110 = arith.negf %109 : vector<8x64xf32>
    %111 = math.exp %110 : vector<8x64xf32>
    %cst_39 = arith.constant 1.000000e+00 : f32
    %112 = vector.broadcast %cst_39 : f32 to vector<8x64xf32>
    %113 = arith.addf %112, %111 : vector<8x64xf32>
    %114 = arith.divf %112, %113 : vector<8x64xf32>
    %115 = vector.extract_strided_slice %114 {offsets = [0, 0], sizes = [8, 32], strides = [1, 1]} : vector<8x64xf32> to vector<8x32xf32>
    %116 = vector.extract_strided_slice %114 {offsets = [0, 32], sizes = [8, 32], strides = [1, 1]} : vector<8x64xf32> to vector<8x32xf32>
    %117 = vector.extract_strided_slice %108 {offsets = [0, 64], sizes = [8, 32], strides = [1, 1]} : vector<8x128xf32> to vector<8x32xf32>
    %118 = vector.extract_strided_slice %108 {offsets = [0, 96], sizes = [8, 32], strides = [1, 1]} : vector<8x128xf32> to vector<8x32xf32>
    %119 = arith.mulf %115, %118 : vector<8x32xf32>
    %120 = arith.addf %117, %119 : vector<8x32xf32>
    %121 = math.tanh %120 : vector<8x32xf32>
    %cst_40 = arith.constant 1.000000e+00 : f32
    %122 = vector.broadcast %cst_40 : f32 to vector<8x32xf32>
    %123 = arith.subf %122, %116 : vector<8x32xf32>
    %124 = arith.mulf %123, %121 : vector<8x32xf32>
    %125 = arith.mulf %116, %83 : vector<8x32xf32>
    %126 = arith.addf %124, %125 : vector<8x32xf32>
    %127 = vector.extract_strided_slice %75 {offsets = [8, 0], sizes = [8, 128], strides = [1, 1]} : vector<72x128xf32> to vector<8x128xf32>
    %cst_41 = arith.constant dense<0.000000e+00> : vector<8x128xf32>
    %128 = tpu.matmul %104, %76, %cst_41 {dimension_numbers = #tpu.dot_dimension_numbers<[1], [0], [0], [1], [0, 0, 1, 1], [], []>} : vector<8x32xf32>, vector<32x128xf32>, vector<8x128xf32> -> vector<8x128xf32>
    %129 = arith.addf %127, %128 : vector<8x128xf32>
    %130 = vector.extract_strided_slice %129 {offsets = [0, 0], sizes = [8, 64], strides = [1, 1]} : vector<8x128xf32> to vector<8x64xf32>
    %131 = arith.negf %130 : vector<8x64xf32>
    %132 = math.exp %131 : vector<8x64xf32>
    %cst_42 = arith.constant 1.000000e+00 : f32
    %133 = vector.broadcast %cst_42 : f32 to vector<8x64xf32>
    %134 = arith.addf %133, %132 : vector<8x64xf32>
    %135 = arith.divf %133, %134 : vector<8x64xf32>
    %136 = vector.extract_strided_slice %135 {offsets = [0, 0], sizes = [8, 32], strides = [1, 1]} : vector<8x64xf32> to vector<8x32xf32>
    %137 = vector.extract_strided_slice %135 {offsets = [0, 32], sizes = [8, 32], strides = [1, 1]} : vector<8x64xf32> to vector<8x32xf32>
    %138 = vector.extract_strided_slice %129 {offsets = [0, 64], sizes = [8, 32], strides = [1, 1]} : vector<8x128xf32> to vector<8x32xf32>
    %139 = vector.extract_strided_slice %129 {offsets = [0, 96], sizes = [8, 32], strides = [1, 1]} : vector<8x128xf32> to vector<8x32xf32>
    %140 = arith.mulf %136, %139 : vector<8x32xf32>
    %141 = arith.addf %138, %140 : vector<8x32xf32>
    %142 = math.tanh %141 : vector<8x32xf32>
    %cst_43 = arith.constant 1.000000e+00 : f32
    %143 = vector.broadcast %cst_43 : f32 to vector<8x32xf32>
    %144 = arith.subf %143, %137 : vector<8x32xf32>
    %145 = arith.mulf %144, %142 : vector<8x32xf32>
    %146 = arith.mulf %137, %104 : vector<8x32xf32>
    %147 = arith.addf %145, %146 : vector<8x32xf32>
    %148 = tpu.concatenate %147, %126 in 1 : vector<8x32xf32>, vector<8x32xf32> -> vector<8x64xf32>
    %cst_44 = arith.constant dense<0.000000e+00> : vector<8x128xf32>
    %149 = tpu.matmul %148, %77, %cst_44 {dimension_numbers = #tpu.dot_dimension_numbers<[1], [0], [0], [1], [0, 0, 1, 1], [], []>} : vector<8x64xf32>, vector<64x128xf32>, vector<8x128xf32> -> vector<8x128xf32>
    %150 = vector.broadcast %79 : vector<1x128xf32> to vector<8x128xf32>
    %151 = arith.addf %149, %150 : vector<8x128xf32>
    %152 = vector.extract_strided_slice %151 {offsets = [0, 0], sizes = [8, 64], strides = [1, 1]} : vector<8x128xf32> to vector<8x64xf32>
    %153 = arith.negf %152 : vector<8x64xf32>
    %154 = math.exp %153 : vector<8x64xf32>
    %cst_45 = arith.constant 1.000000e+00 : f32
    %155 = vector.broadcast %cst_45 : f32 to vector<8x64xf32>
    %156 = arith.addf %155, %154 : vector<8x64xf32>
    %157 = arith.divf %155, %156 : vector<8x64xf32>
    %158 = vector.extract_strided_slice %157 {offsets = [0, 0], sizes = [8, 32], strides = [1, 1]} : vector<8x64xf32> to vector<8x32xf32>
    %159 = vector.extract_strided_slice %157 {offsets = [0, 32], sizes = [8, 32], strides = [1, 1]} : vector<8x64xf32> to vector<8x32xf32>
    %160 = vector.extract_strided_slice %151 {offsets = [0, 64], sizes = [8, 32], strides = [1, 1]} : vector<8x128xf32> to vector<8x32xf32>
    %161 = vector.extract_strided_slice %151 {offsets = [0, 96], sizes = [8, 32], strides = [1, 1]} : vector<8x128xf32> to vector<8x32xf32>
    %162 = arith.mulf %158, %161 : vector<8x32xf32>
    %163 = arith.addf %160, %162 : vector<8x32xf32>
    %164 = math.tanh %163 : vector<8x32xf32>
    %cst_46 = arith.constant 1.000000e+00 : f32
    %165 = vector.broadcast %cst_46 : f32 to vector<8x32xf32>
    %166 = arith.subf %165, %159 : vector<8x32xf32>
    %167 = arith.mulf %166, %164 : vector<8x32xf32>
    %168 = arith.mulf %159, %126 : vector<8x32xf32>
    %169 = arith.addf %167, %168 : vector<8x32xf32>
    %170 = vector.extract_strided_slice %75 {offsets = [16, 0], sizes = [8, 128], strides = [1, 1]} : vector<72x128xf32> to vector<8x128xf32>
    %cst_47 = arith.constant dense<0.000000e+00> : vector<8x128xf32>
    %171 = tpu.matmul %147, %76, %cst_47 {dimension_numbers = #tpu.dot_dimension_numbers<[1], [0], [0], [1], [0, 0, 1, 1], [], []>} : vector<8x32xf32>, vector<32x128xf32>, vector<8x128xf32> -> vector<8x128xf32>
    %172 = arith.addf %170, %171 : vector<8x128xf32>
    %173 = vector.extract_strided_slice %172 {offsets = [0, 0], sizes = [8, 64], strides = [1, 1]} : vector<8x128xf32> to vector<8x64xf32>
    %174 = arith.negf %173 : vector<8x64xf32>
    %175 = math.exp %174 : vector<8x64xf32>
    %cst_48 = arith.constant 1.000000e+00 : f32
    %176 = vector.broadcast %cst_48 : f32 to vector<8x64xf32>
    %177 = arith.addf %176, %175 : vector<8x64xf32>
    %178 = arith.divf %176, %177 : vector<8x64xf32>
    %179 = vector.extract_strided_slice %178 {offsets = [0, 0], sizes = [8, 32], strides = [1, 1]} : vector<8x64xf32> to vector<8x32xf32>
    %180 = vector.extract_strided_slice %178 {offsets = [0, 32], sizes = [8, 32], strides = [1, 1]} : vector<8x64xf32> to vector<8x32xf32>
    %181 = vector.extract_strided_slice %172 {offsets = [0, 64], sizes = [8, 32], strides = [1, 1]} : vector<8x128xf32> to vector<8x32xf32>
    %182 = vector.extract_strided_slice %172 {offsets = [0, 96], sizes = [8, 32], strides = [1, 1]} : vector<8x128xf32> to vector<8x32xf32>
    %183 = arith.mulf %179, %182 : vector<8x32xf32>
    %184 = arith.addf %181, %183 : vector<8x32xf32>
    %185 = math.tanh %184 : vector<8x32xf32>
    %cst_49 = arith.constant 1.000000e+00 : f32
    %186 = vector.broadcast %cst_49 : f32 to vector<8x32xf32>
    %187 = arith.subf %186, %180 : vector<8x32xf32>
    %188 = arith.mulf %187, %185 : vector<8x32xf32>
    %189 = arith.mulf %180, %147 : vector<8x32xf32>
    %190 = arith.addf %188, %189 : vector<8x32xf32>
    %191 = tpu.concatenate %190, %169 in 1 : vector<8x32xf32>, vector<8x32xf32> -> vector<8x64xf32>
    %cst_50 = arith.constant dense<0.000000e+00> : vector<8x128xf32>
    %192 = tpu.matmul %191, %77, %cst_50 {dimension_numbers = #tpu.dot_dimension_numbers<[1], [0], [0], [1], [0, 0, 1, 1], [], []>} : vector<8x64xf32>, vector<64x128xf32>, vector<8x128xf32> -> vector<8x128xf32>
    %193 = vector.broadcast %79 : vector<1x128xf32> to vector<8x128xf32>
    %194 = arith.addf %192, %193 : vector<8x128xf32>
    %195 = vector.extract_strided_slice %194 {offsets = [0, 0], sizes = [8, 64], strides = [1, 1]} : vector<8x128xf32> to vector<8x64xf32>
    %196 = arith.negf %195 : vector<8x64xf32>
    %197 = math.exp %196 : vector<8x64xf32>
    %cst_51 = arith.constant 1.000000e+00 : f32
    %198 = vector.broadcast %cst_51 : f32 to vector<8x64xf32>
    %199 = arith.addf %198, %197 : vector<8x64xf32>
    %200 = arith.divf %198, %199 : vector<8x64xf32>
    %201 = vector.extract_strided_slice %200 {offsets = [0, 0], sizes = [8, 32], strides = [1, 1]} : vector<8x64xf32> to vector<8x32xf32>
    %202 = vector.extract_strided_slice %200 {offsets = [0, 32], sizes = [8, 32], strides = [1, 1]} : vector<8x64xf32> to vector<8x32xf32>
    %203 = vector.extract_strided_slice %194 {offsets = [0, 64], sizes = [8, 32], strides = [1, 1]} : vector<8x128xf32> to vector<8x32xf32>
    %204 = vector.extract_strided_slice %194 {offsets = [0, 96], sizes = [8, 32], strides = [1, 1]} : vector<8x128xf32> to vector<8x32xf32>
    %205 = arith.mulf %201, %204 : vector<8x32xf32>
    %206 = arith.addf %203, %205 : vector<8x32xf32>
    %207 = math.tanh %206 : vector<8x32xf32>
    %cst_52 = arith.constant 1.000000e+00 : f32
    %208 = vector.broadcast %cst_52 : f32 to vector<8x32xf32>
    %209 = arith.subf %208, %202 : vector<8x32xf32>
    %210 = arith.mulf %209, %207 : vector<8x32xf32>
    %211 = arith.mulf %202, %169 : vector<8x32xf32>
    %212 = arith.addf %210, %211 : vector<8x32xf32>
    %213 = vector.extract_strided_slice %75 {offsets = [24, 0], sizes = [8, 128], strides = [1, 1]} : vector<72x128xf32> to vector<8x128xf32>
    %cst_53 = arith.constant dense<0.000000e+00> : vector<8x128xf32>
    %214 = tpu.matmul %190, %76, %cst_53 {dimension_numbers = #tpu.dot_dimension_numbers<[1], [0], [0], [1], [0, 0, 1, 1], [], []>} : vector<8x32xf32>, vector<32x128xf32>, vector<8x128xf32> -> vector<8x128xf32>
    %215 = arith.addf %213, %214 : vector<8x128xf32>
    %216 = vector.extract_strided_slice %215 {offsets = [0, 0], sizes = [8, 64], strides = [1, 1]} : vector<8x128xf32> to vector<8x64xf32>
    %217 = arith.negf %216 : vector<8x64xf32>
    %218 = math.exp %217 : vector<8x64xf32>
    %cst_54 = arith.constant 1.000000e+00 : f32
    %219 = vector.broadcast %cst_54 : f32 to vector<8x64xf32>
    %220 = arith.addf %219, %218 : vector<8x64xf32>
    %221 = arith.divf %219, %220 : vector<8x64xf32>
    %222 = vector.extract_strided_slice %221 {offsets = [0, 0], sizes = [8, 32], strides = [1, 1]} : vector<8x64xf32> to vector<8x32xf32>
    %223 = vector.extract_strided_slice %221 {offsets = [0, 32], sizes = [8, 32], strides = [1, 1]} : vector<8x64xf32> to vector<8x32xf32>
    %224 = vector.extract_strided_slice %215 {offsets = [0, 64], sizes = [8, 32], strides = [1, 1]} : vector<8x128xf32> to vector<8x32xf32>
    %225 = vector.extract_strided_slice %215 {offsets = [0, 96], sizes = [8, 32], strides = [1, 1]} : vector<8x128xf32> to vector<8x32xf32>
    %226 = arith.mulf %222, %225 : vector<8x32xf32>
    %227 = arith.addf %224, %226 : vector<8x32xf32>
    %228 = math.tanh %227 : vector<8x32xf32>
    %cst_55 = arith.constant 1.000000e+00 : f32
    %229 = vector.broadcast %cst_55 : f32 to vector<8x32xf32>
    %230 = arith.subf %229, %223 : vector<8x32xf32>
    %231 = arith.mulf %230, %228 : vector<8x32xf32>
    %232 = arith.mulf %223, %190 : vector<8x32xf32>
    %233 = arith.addf %231, %232 : vector<8x32xf32>
    %234 = tpu.concatenate %233, %212 in 1 : vector<8x32xf32>, vector<8x32xf32> -> vector<8x64xf32>
    %cst_56 = arith.constant dense<0.000000e+00> : vector<8x128xf32>
    %235 = tpu.matmul %234, %77, %cst_56 {dimension_numbers = #tpu.dot_dimension_numbers<[1], [0], [0], [1], [0, 0, 1, 1], [], []>} : vector<8x64xf32>, vector<64x128xf32>, vector<8x128xf32> -> vector<8x128xf32>
    %236 = vector.broadcast %79 : vector<1x128xf32> to vector<8x128xf32>
    %237 = arith.addf %235, %236 : vector<8x128xf32>
    %238 = vector.extract_strided_slice %237 {offsets = [0, 0], sizes = [8, 64], strides = [1, 1]} : vector<8x128xf32> to vector<8x64xf32>
    %239 = arith.negf %238 : vector<8x64xf32>
    %240 = math.exp %239 : vector<8x64xf32>
    %cst_57 = arith.constant 1.000000e+00 : f32
    %241 = vector.broadcast %cst_57 : f32 to vector<8x64xf32>
    %242 = arith.addf %241, %240 : vector<8x64xf32>
    %243 = arith.divf %241, %242 : vector<8x64xf32>
    %244 = vector.extract_strided_slice %243 {offsets = [0, 0], sizes = [8, 32], strides = [1, 1]} : vector<8x64xf32> to vector<8x32xf32>
    %245 = vector.extract_strided_slice %243 {offsets = [0, 32], sizes = [8, 32], strides = [1, 1]} : vector<8x64xf32> to vector<8x32xf32>
    %246 = vector.extract_strided_slice %237 {offsets = [0, 64], sizes = [8, 32], strides = [1, 1]} : vector<8x128xf32> to vector<8x32xf32>
    %247 = vector.extract_strided_slice %237 {offsets = [0, 96], sizes = [8, 32], strides = [1, 1]} : vector<8x128xf32> to vector<8x32xf32>
    %248 = arith.mulf %244, %247 : vector<8x32xf32>
    %249 = arith.addf %246, %248 : vector<8x32xf32>
    %250 = math.tanh %249 : vector<8x32xf32>
    %cst_58 = arith.constant 1.000000e+00 : f32
    %251 = vector.broadcast %cst_58 : f32 to vector<8x32xf32>
    %252 = arith.subf %251, %245 : vector<8x32xf32>
    %253 = arith.mulf %252, %250 : vector<8x32xf32>
    %254 = arith.mulf %245, %212 : vector<8x32xf32>
    %255 = arith.addf %253, %254 : vector<8x32xf32>
    %256 = vector.extract_strided_slice %75 {offsets = [32, 0], sizes = [8, 128], strides = [1, 1]} : vector<72x128xf32> to vector<8x128xf32>
    %cst_59 = arith.constant dense<0.000000e+00> : vector<8x128xf32>
    %257 = tpu.matmul %233, %76, %cst_59 {dimension_numbers = #tpu.dot_dimension_numbers<[1], [0], [0], [1], [0, 0, 1, 1], [], []>} : vector<8x32xf32>, vector<32x128xf32>, vector<8x128xf32> -> vector<8x128xf32>
    %258 = arith.addf %256, %257 : vector<8x128xf32>
    %259 = vector.extract_strided_slice %258 {offsets = [0, 0], sizes = [8, 64], strides = [1, 1]} : vector<8x128xf32> to vector<8x64xf32>
    %260 = arith.negf %259 : vector<8x64xf32>
    %261 = math.exp %260 : vector<8x64xf32>
    %cst_60 = arith.constant 1.000000e+00 : f32
    %262 = vector.broadcast %cst_60 : f32 to vector<8x64xf32>
    %263 = arith.addf %262, %261 : vector<8x64xf32>
    %264 = arith.divf %262, %263 : vector<8x64xf32>
    %265 = vector.extract_strided_slice %264 {offsets = [0, 0], sizes = [8, 32], strides = [1, 1]} : vector<8x64xf32> to vector<8x32xf32>
    %266 = vector.extract_strided_slice %264 {offsets = [0, 32], sizes = [8, 32], strides = [1, 1]} : vector<8x64xf32> to vector<8x32xf32>
    %267 = vector.extract_strided_slice %258 {offsets = [0, 64], sizes = [8, 32], strides = [1, 1]} : vector<8x128xf32> to vector<8x32xf32>
    %268 = vector.extract_strided_slice %258 {offsets = [0, 96], sizes = [8, 32], strides = [1, 1]} : vector<8x128xf32> to vector<8x32xf32>
    %269 = arith.mulf %265, %268 : vector<8x32xf32>
    %270 = arith.addf %267, %269 : vector<8x32xf32>
    %271 = math.tanh %270 : vector<8x32xf32>
    %cst_61 = arith.constant 1.000000e+00 : f32
    %272 = vector.broadcast %cst_61 : f32 to vector<8x32xf32>
    %273 = arith.subf %272, %266 : vector<8x32xf32>
    %274 = arith.mulf %273, %271 : vector<8x32xf32>
    %275 = arith.mulf %266, %233 : vector<8x32xf32>
    %276 = arith.addf %274, %275 : vector<8x32xf32>
    %277 = tpu.concatenate %276, %255 in 1 : vector<8x32xf32>, vector<8x32xf32> -> vector<8x64xf32>
    %cst_62 = arith.constant dense<0.000000e+00> : vector<8x128xf32>
    %278 = tpu.matmul %277, %77, %cst_62 {dimension_numbers = #tpu.dot_dimension_numbers<[1], [0], [0], [1], [0, 0, 1, 1], [], []>} : vector<8x64xf32>, vector<64x128xf32>, vector<8x128xf32> -> vector<8x128xf32>
    %279 = vector.broadcast %79 : vector<1x128xf32> to vector<8x128xf32>
    %280 = arith.addf %278, %279 : vector<8x128xf32>
    %281 = vector.extract_strided_slice %280 {offsets = [0, 0], sizes = [8, 64], strides = [1, 1]} : vector<8x128xf32> to vector<8x64xf32>
    %282 = arith.negf %281 : vector<8x64xf32>
    %283 = math.exp %282 : vector<8x64xf32>
    %cst_63 = arith.constant 1.000000e+00 : f32
    %284 = vector.broadcast %cst_63 : f32 to vector<8x64xf32>
    %285 = arith.addf %284, %283 : vector<8x64xf32>
    %286 = arith.divf %284, %285 : vector<8x64xf32>
    %287 = vector.extract_strided_slice %286 {offsets = [0, 0], sizes = [8, 32], strides = [1, 1]} : vector<8x64xf32> to vector<8x32xf32>
    %288 = vector.extract_strided_slice %286 {offsets = [0, 32], sizes = [8, 32], strides = [1, 1]} : vector<8x64xf32> to vector<8x32xf32>
    %289 = vector.extract_strided_slice %280 {offsets = [0, 64], sizes = [8, 32], strides = [1, 1]} : vector<8x128xf32> to vector<8x32xf32>
    %290 = vector.extract_strided_slice %280 {offsets = [0, 96], sizes = [8, 32], strides = [1, 1]} : vector<8x128xf32> to vector<8x32xf32>
    %291 = arith.mulf %287, %290 : vector<8x32xf32>
    %292 = arith.addf %289, %291 : vector<8x32xf32>
    %293 = math.tanh %292 : vector<8x32xf32>
    %cst_64 = arith.constant 1.000000e+00 : f32
    %294 = vector.broadcast %cst_64 : f32 to vector<8x32xf32>
    %295 = arith.subf %294, %288 : vector<8x32xf32>
    %296 = arith.mulf %295, %293 : vector<8x32xf32>
    %297 = arith.mulf %288, %255 : vector<8x32xf32>
    %298 = arith.addf %296, %297 : vector<8x32xf32>
    %299 = vector.extract_strided_slice %75 {offsets = [40, 0], sizes = [8, 128], strides = [1, 1]} : vector<72x128xf32> to vector<8x128xf32>
    %cst_65 = arith.constant dense<0.000000e+00> : vector<8x128xf32>
    %300 = tpu.matmul %276, %76, %cst_65 {dimension_numbers = #tpu.dot_dimension_numbers<[1], [0], [0], [1], [0, 0, 1, 1], [], []>} : vector<8x32xf32>, vector<32x128xf32>, vector<8x128xf32> -> vector<8x128xf32>
    %301 = arith.addf %299, %300 : vector<8x128xf32>
    %302 = vector.extract_strided_slice %301 {offsets = [0, 0], sizes = [8, 64], strides = [1, 1]} : vector<8x128xf32> to vector<8x64xf32>
    %303 = arith.negf %302 : vector<8x64xf32>
    %304 = math.exp %303 : vector<8x64xf32>
    %cst_66 = arith.constant 1.000000e+00 : f32
    %305 = vector.broadcast %cst_66 : f32 to vector<8x64xf32>
    %306 = arith.addf %305, %304 : vector<8x64xf32>
    %307 = arith.divf %305, %306 : vector<8x64xf32>
    %308 = vector.extract_strided_slice %307 {offsets = [0, 0], sizes = [8, 32], strides = [1, 1]} : vector<8x64xf32> to vector<8x32xf32>
    %309 = vector.extract_strided_slice %307 {offsets = [0, 32], sizes = [8, 32], strides = [1, 1]} : vector<8x64xf32> to vector<8x32xf32>
    %310 = vector.extract_strided_slice %301 {offsets = [0, 64], sizes = [8, 32], strides = [1, 1]} : vector<8x128xf32> to vector<8x32xf32>
    %311 = vector.extract_strided_slice %301 {offsets = [0, 96], sizes = [8, 32], strides = [1, 1]} : vector<8x128xf32> to vector<8x32xf32>
    %312 = arith.mulf %308, %311 : vector<8x32xf32>
    %313 = arith.addf %310, %312 : vector<8x32xf32>
    %314 = math.tanh %313 : vector<8x32xf32>
    %cst_67 = arith.constant 1.000000e+00 : f32
    %315 = vector.broadcast %cst_67 : f32 to vector<8x32xf32>
    %316 = arith.subf %315, %309 : vector<8x32xf32>
    %317 = arith.mulf %316, %314 : vector<8x32xf32>
    %318 = arith.mulf %309, %276 : vector<8x32xf32>
    %319 = arith.addf %317, %318 : vector<8x32xf32>
    %320 = tpu.concatenate %319, %298 in 1 : vector<8x32xf32>, vector<8x32xf32> -> vector<8x64xf32>
    %cst_68 = arith.constant dense<0.000000e+00> : vector<8x128xf32>
    %321 = tpu.matmul %320, %77, %cst_68 {dimension_numbers = #tpu.dot_dimension_numbers<[1], [0], [0], [1], [0, 0, 1, 1], [], []>} : vector<8x64xf32>, vector<64x128xf32>, vector<8x128xf32> -> vector<8x128xf32>
    %322 = vector.broadcast %79 : vector<1x128xf32> to vector<8x128xf32>
    %323 = arith.addf %321, %322 : vector<8x128xf32>
    %324 = vector.extract_strided_slice %323 {offsets = [0, 0], sizes = [8, 64], strides = [1, 1]} : vector<8x128xf32> to vector<8x64xf32>
    %325 = arith.negf %324 : vector<8x64xf32>
    %326 = math.exp %325 : vector<8x64xf32>
    %cst_69 = arith.constant 1.000000e+00 : f32
    %327 = vector.broadcast %cst_69 : f32 to vector<8x64xf32>
    %328 = arith.addf %327, %326 : vector<8x64xf32>
    %329 = arith.divf %327, %328 : vector<8x64xf32>
    %330 = vector.extract_strided_slice %329 {offsets = [0, 0], sizes = [8, 32], strides = [1, 1]} : vector<8x64xf32> to vector<8x32xf32>
    %331 = vector.extract_strided_slice %329 {offsets = [0, 32], sizes = [8, 32], strides = [1, 1]} : vector<8x64xf32> to vector<8x32xf32>
    %332 = vector.extract_strided_slice %323 {offsets = [0, 64], sizes = [8, 32], strides = [1, 1]} : vector<8x128xf32> to vector<8x32xf32>
    %333 = vector.extract_strided_slice %323 {offsets = [0, 96], sizes = [8, 32], strides = [1, 1]} : vector<8x128xf32> to vector<8x32xf32>
    %334 = arith.mulf %330, %333 : vector<8x32xf32>
    %335 = arith.addf %332, %334 : vector<8x32xf32>
    %336 = math.tanh %335 : vector<8x32xf32>
    %cst_70 = arith.constant 1.000000e+00 : f32
    %337 = vector.broadcast %cst_70 : f32 to vector<8x32xf32>
    %338 = arith.subf %337, %331 : vector<8x32xf32>
    %339 = arith.mulf %338, %336 : vector<8x32xf32>
    %340 = arith.mulf %331, %298 : vector<8x32xf32>
    %341 = arith.addf %339, %340 : vector<8x32xf32>
    %342 = vector.extract_strided_slice %75 {offsets = [48, 0], sizes = [8, 128], strides = [1, 1]} : vector<72x128xf32> to vector<8x128xf32>
    %cst_71 = arith.constant dense<0.000000e+00> : vector<8x128xf32>
    %343 = tpu.matmul %319, %76, %cst_71 {dimension_numbers = #tpu.dot_dimension_numbers<[1], [0], [0], [1], [0, 0, 1, 1], [], []>} : vector<8x32xf32>, vector<32x128xf32>, vector<8x128xf32> -> vector<8x128xf32>
    %344 = arith.addf %342, %343 : vector<8x128xf32>
    %345 = vector.extract_strided_slice %344 {offsets = [0, 0], sizes = [8, 64], strides = [1, 1]} : vector<8x128xf32> to vector<8x64xf32>
    %346 = arith.negf %345 : vector<8x64xf32>
    %347 = math.exp %346 : vector<8x64xf32>
    %cst_72 = arith.constant 1.000000e+00 : f32
    %348 = vector.broadcast %cst_72 : f32 to vector<8x64xf32>
    %349 = arith.addf %348, %347 : vector<8x64xf32>
    %350 = arith.divf %348, %349 : vector<8x64xf32>
    %351 = vector.extract_strided_slice %350 {offsets = [0, 0], sizes = [8, 32], strides = [1, 1]} : vector<8x64xf32> to vector<8x32xf32>
    %352 = vector.extract_strided_slice %350 {offsets = [0, 32], sizes = [8, 32], strides = [1, 1]} : vector<8x64xf32> to vector<8x32xf32>
    %353 = vector.extract_strided_slice %344 {offsets = [0, 64], sizes = [8, 32], strides = [1, 1]} : vector<8x128xf32> to vector<8x32xf32>
    %354 = vector.extract_strided_slice %344 {offsets = [0, 96], sizes = [8, 32], strides = [1, 1]} : vector<8x128xf32> to vector<8x32xf32>
    %355 = arith.mulf %351, %354 : vector<8x32xf32>
    %356 = arith.addf %353, %355 : vector<8x32xf32>
    %357 = math.tanh %356 : vector<8x32xf32>
    %cst_73 = arith.constant 1.000000e+00 : f32
    %358 = vector.broadcast %cst_73 : f32 to vector<8x32xf32>
    %359 = arith.subf %358, %352 : vector<8x32xf32>
    %360 = arith.mulf %359, %357 : vector<8x32xf32>
    %361 = arith.mulf %352, %319 : vector<8x32xf32>
    %362 = arith.addf %360, %361 : vector<8x32xf32>
    %363 = tpu.concatenate %362, %341 in 1 : vector<8x32xf32>, vector<8x32xf32> -> vector<8x64xf32>
    %cst_74 = arith.constant dense<0.000000e+00> : vector<8x128xf32>
    %364 = tpu.matmul %363, %77, %cst_74 {dimension_numbers = #tpu.dot_dimension_numbers<[1], [0], [0], [1], [0, 0, 1, 1], [], []>} : vector<8x64xf32>, vector<64x128xf32>, vector<8x128xf32> -> vector<8x128xf32>
    %365 = vector.broadcast %79 : vector<1x128xf32> to vector<8x128xf32>
    %366 = arith.addf %364, %365 : vector<8x128xf32>
    %367 = vector.extract_strided_slice %366 {offsets = [0, 0], sizes = [8, 64], strides = [1, 1]} : vector<8x128xf32> to vector<8x64xf32>
    %368 = arith.negf %367 : vector<8x64xf32>
    %369 = math.exp %368 : vector<8x64xf32>
    %cst_75 = arith.constant 1.000000e+00 : f32
    %370 = vector.broadcast %cst_75 : f32 to vector<8x64xf32>
    %371 = arith.addf %370, %369 : vector<8x64xf32>
    %372 = arith.divf %370, %371 : vector<8x64xf32>
    %373 = vector.extract_strided_slice %372 {offsets = [0, 0], sizes = [8, 32], strides = [1, 1]} : vector<8x64xf32> to vector<8x32xf32>
    %374 = vector.extract_strided_slice %372 {offsets = [0, 32], sizes = [8, 32], strides = [1, 1]} : vector<8x64xf32> to vector<8x32xf32>
    %375 = vector.extract_strided_slice %366 {offsets = [0, 64], sizes = [8, 32], strides = [1, 1]} : vector<8x128xf32> to vector<8x32xf32>
    %376 = vector.extract_strided_slice %366 {offsets = [0, 96], sizes = [8, 32], strides = [1, 1]} : vector<8x128xf32> to vector<8x32xf32>
    %377 = arith.mulf %373, %376 : vector<8x32xf32>
    %378 = arith.addf %375, %377 : vector<8x32xf32>
    %379 = math.tanh %378 : vector<8x32xf32>
    %cst_76 = arith.constant 1.000000e+00 : f32
    %380 = vector.broadcast %cst_76 : f32 to vector<8x32xf32>
    %381 = arith.subf %380, %374 : vector<8x32xf32>
    %382 = arith.mulf %381, %379 : vector<8x32xf32>
    %383 = arith.mulf %374, %341 : vector<8x32xf32>
    %384 = arith.addf %382, %383 : vector<8x32xf32>
    %385 = vector.extract_strided_slice %75 {offsets = [56, 0], sizes = [8, 128], strides = [1, 1]} : vector<72x128xf32> to vector<8x128xf32>
    %cst_77 = arith.constant dense<0.000000e+00> : vector<8x128xf32>
    %386 = tpu.matmul %362, %76, %cst_77 {dimension_numbers = #tpu.dot_dimension_numbers<[1], [0], [0], [1], [0, 0, 1, 1], [], []>} : vector<8x32xf32>, vector<32x128xf32>, vector<8x128xf32> -> vector<8x128xf32>
    %387 = arith.addf %385, %386 : vector<8x128xf32>
    %388 = vector.extract_strided_slice %387 {offsets = [0, 0], sizes = [8, 64], strides = [1, 1]} : vector<8x128xf32> to vector<8x64xf32>
    %389 = arith.negf %388 : vector<8x64xf32>
    %390 = math.exp %389 : vector<8x64xf32>
    %cst_78 = arith.constant 1.000000e+00 : f32
    %391 = vector.broadcast %cst_78 : f32 to vector<8x64xf32>
    %392 = arith.addf %391, %390 : vector<8x64xf32>
    %393 = arith.divf %391, %392 : vector<8x64xf32>
    %394 = vector.extract_strided_slice %393 {offsets = [0, 0], sizes = [8, 32], strides = [1, 1]} : vector<8x64xf32> to vector<8x32xf32>
    %395 = vector.extract_strided_slice %393 {offsets = [0, 32], sizes = [8, 32], strides = [1, 1]} : vector<8x64xf32> to vector<8x32xf32>
    %396 = vector.extract_strided_slice %387 {offsets = [0, 64], sizes = [8, 32], strides = [1, 1]} : vector<8x128xf32> to vector<8x32xf32>
    %397 = vector.extract_strided_slice %387 {offsets = [0, 96], sizes = [8, 32], strides = [1, 1]} : vector<8x128xf32> to vector<8x32xf32>
    %398 = arith.mulf %394, %397 : vector<8x32xf32>
    %399 = arith.addf %396, %398 : vector<8x32xf32>
    %400 = math.tanh %399 : vector<8x32xf32>
    %cst_79 = arith.constant 1.000000e+00 : f32
    %401 = vector.broadcast %cst_79 : f32 to vector<8x32xf32>
    %402 = arith.subf %401, %395 : vector<8x32xf32>
    %403 = arith.mulf %402, %400 : vector<8x32xf32>
    %404 = arith.mulf %395, %362 : vector<8x32xf32>
    %405 = arith.addf %403, %404 : vector<8x32xf32>
    %406 = tpu.concatenate %405, %384 in 1 : vector<8x32xf32>, vector<8x32xf32> -> vector<8x64xf32>
    %cst_80 = arith.constant dense<0.000000e+00> : vector<8x128xf32>
    %407 = tpu.matmul %406, %77, %cst_80 {dimension_numbers = #tpu.dot_dimension_numbers<[1], [0], [0], [1], [0, 0, 1, 1], [], []>} : vector<8x64xf32>, vector<64x128xf32>, vector<8x128xf32> -> vector<8x128xf32>
    %408 = vector.broadcast %79 : vector<1x128xf32> to vector<8x128xf32>
    %409 = arith.addf %407, %408 : vector<8x128xf32>
    %410 = vector.extract_strided_slice %409 {offsets = [0, 0], sizes = [8, 64], strides = [1, 1]} : vector<8x128xf32> to vector<8x64xf32>
    %411 = arith.negf %410 : vector<8x64xf32>
    %412 = math.exp %411 : vector<8x64xf32>
    %cst_81 = arith.constant 1.000000e+00 : f32
    %413 = vector.broadcast %cst_81 : f32 to vector<8x64xf32>
    %414 = arith.addf %413, %412 : vector<8x64xf32>
    %415 = arith.divf %413, %414 : vector<8x64xf32>
    %416 = vector.extract_strided_slice %415 {offsets = [0, 0], sizes = [8, 32], strides = [1, 1]} : vector<8x64xf32> to vector<8x32xf32>
    %417 = vector.extract_strided_slice %415 {offsets = [0, 32], sizes = [8, 32], strides = [1, 1]} : vector<8x64xf32> to vector<8x32xf32>
    %418 = vector.extract_strided_slice %409 {offsets = [0, 64], sizes = [8, 32], strides = [1, 1]} : vector<8x128xf32> to vector<8x32xf32>
    %419 = vector.extract_strided_slice %409 {offsets = [0, 96], sizes = [8, 32], strides = [1, 1]} : vector<8x128xf32> to vector<8x32xf32>
    %420 = arith.mulf %416, %419 : vector<8x32xf32>
    %421 = arith.addf %418, %420 : vector<8x32xf32>
    %422 = math.tanh %421 : vector<8x32xf32>
    %cst_82 = arith.constant 1.000000e+00 : f32
    %423 = vector.broadcast %cst_82 : f32 to vector<8x32xf32>
    %424 = arith.subf %423, %417 : vector<8x32xf32>
    %425 = arith.mulf %424, %422 : vector<8x32xf32>
    %426 = arith.mulf %417, %384 : vector<8x32xf32>
    %427 = arith.addf %425, %426 : vector<8x32xf32>
    %428 = vector.extract_strided_slice %75 {offsets = [64, 0], sizes = [8, 128], strides = [1, 1]} : vector<72x128xf32> to vector<8x128xf32>
    %cst_83 = arith.constant dense<0.000000e+00> : vector<8x128xf32>
    %429 = tpu.matmul %405, %76, %cst_83 {dimension_numbers = #tpu.dot_dimension_numbers<[1], [0], [0], [1], [0, 0, 1, 1], [], []>} : vector<8x32xf32>, vector<32x128xf32>, vector<8x128xf32> -> vector<8x128xf32>
    %430 = arith.addf %428, %429 : vector<8x128xf32>
    %431 = vector.extract_strided_slice %430 {offsets = [0, 0], sizes = [8, 64], strides = [1, 1]} : vector<8x128xf32> to vector<8x64xf32>
    %432 = arith.negf %431 : vector<8x64xf32>
    %433 = math.exp %432 : vector<8x64xf32>
    %cst_84 = arith.constant 1.000000e+00 : f32
    %434 = vector.broadcast %cst_84 : f32 to vector<8x64xf32>
    %435 = arith.addf %434, %433 : vector<8x64xf32>
    %436 = arith.divf %434, %435 : vector<8x64xf32>
    %437 = vector.extract_strided_slice %436 {offsets = [0, 0], sizes = [8, 32], strides = [1, 1]} : vector<8x64xf32> to vector<8x32xf32>
    %438 = vector.extract_strided_slice %436 {offsets = [0, 32], sizes = [8, 32], strides = [1, 1]} : vector<8x64xf32> to vector<8x32xf32>
    %439 = vector.extract_strided_slice %430 {offsets = [0, 64], sizes = [8, 32], strides = [1, 1]} : vector<8x128xf32> to vector<8x32xf32>
    %440 = vector.extract_strided_slice %430 {offsets = [0, 96], sizes = [8, 32], strides = [1, 1]} : vector<8x128xf32> to vector<8x32xf32>
    %441 = arith.mulf %437, %440 : vector<8x32xf32>
    %442 = arith.addf %439, %441 : vector<8x32xf32>
    %443 = math.tanh %442 : vector<8x32xf32>
    %cst_85 = arith.constant 1.000000e+00 : f32
    %444 = vector.broadcast %cst_85 : f32 to vector<8x32xf32>
    %445 = arith.subf %444, %438 : vector<8x32xf32>
    %446 = arith.mulf %445, %443 : vector<8x32xf32>
    %447 = arith.mulf %438, %405 : vector<8x32xf32>
    %448 = arith.addf %446, %447 : vector<8x32xf32>
    %449 = tpu.concatenate %448, %427 in 1 : vector<8x32xf32>, vector<8x32xf32> -> vector<8x64xf32>
    %cst_86 = arith.constant dense<0.000000e+00> : vector<8x128xf32>
    %450 = tpu.matmul %449, %77, %cst_86 {dimension_numbers = #tpu.dot_dimension_numbers<[1], [0], [0], [1], [0, 0, 1, 1], [], []>} : vector<8x64xf32>, vector<64x128xf32>, vector<8x128xf32> -> vector<8x128xf32>
    %451 = vector.broadcast %79 : vector<1x128xf32> to vector<8x128xf32>
    %452 = arith.addf %450, %451 : vector<8x128xf32>
    %453 = vector.extract_strided_slice %452 {offsets = [0, 0], sizes = [8, 64], strides = [1, 1]} : vector<8x128xf32> to vector<8x64xf32>
    %454 = arith.negf %453 : vector<8x64xf32>
    %455 = math.exp %454 : vector<8x64xf32>
    %cst_87 = arith.constant 1.000000e+00 : f32
    %456 = vector.broadcast %cst_87 : f32 to vector<8x64xf32>
    %457 = arith.addf %456, %455 : vector<8x64xf32>
    %458 = arith.divf %456, %457 : vector<8x64xf32>
    %459 = vector.extract_strided_slice %458 {offsets = [0, 0], sizes = [8, 32], strides = [1, 1]} : vector<8x64xf32> to vector<8x32xf32>
    %460 = vector.extract_strided_slice %458 {offsets = [0, 32], sizes = [8, 32], strides = [1, 1]} : vector<8x64xf32> to vector<8x32xf32>
    %461 = vector.extract_strided_slice %452 {offsets = [0, 64], sizes = [8, 32], strides = [1, 1]} : vector<8x128xf32> to vector<8x32xf32>
    %462 = vector.extract_strided_slice %452 {offsets = [0, 96], sizes = [8, 32], strides = [1, 1]} : vector<8x128xf32> to vector<8x32xf32>
    %463 = arith.mulf %459, %462 : vector<8x32xf32>
    %464 = arith.addf %461, %463 : vector<8x32xf32>
    %465 = math.tanh %464 : vector<8x32xf32>
    %cst_88 = arith.constant 1.000000e+00 : f32
    %466 = vector.broadcast %cst_88 : f32 to vector<8x32xf32>
    %467 = arith.subf %466, %460 : vector<8x32xf32>
    %468 = arith.mulf %467, %465 : vector<8x32xf32>
    %469 = arith.mulf %460, %427 : vector<8x32xf32>
    %470 = arith.addf %468, %469 : vector<8x32xf32>
    %471 = tpu.concatenate %126, %169, %212, %255, %298, %341, %384, %427, %470 in 1 : vector<8x32xf32>, vector<8x32xf32>, vector<8x32xf32>, vector<8x32xf32>, vector<8x32xf32>, vector<8x32xf32>, vector<8x32xf32>, vector<8x32xf32>, vector<8x32xf32> -> vector<8x288xf32>
    %cst_89 = arith.constant dense<0.000000e+00> : vector<8x128xf32>
    %472 = tpu.matmul %471, %78, %cst_89 {dimension_numbers = #tpu.dot_dimension_numbers<[1], [0], [0], [1], [0, 0, 1, 1], [], []>} : vector<8x288xf32>, vector<288x128xf32>, vector<8x128xf32> -> vector<8x128xf32>
    %c0_90 = arith.constant 0 : index
    %c2944 = arith.constant 2944 : index
    %473 = vector.load %arg6[%c0_90, %c2944] : memref<1x3072xf32, #tpu.memory_space<vmem>>, vector<1x128xf32>
    %474 = vector.broadcast %473 : vector<1x128xf32> to vector<8x128xf32>
    %475 = arith.addf %472, %474 : vector<8x128xf32>
    %c0_91 = arith.constant 0 : index
    %c0_92 = arith.constant 0 : index
    %476 = vector.load %arg9[%c0_91, %c0_92] : memref<8x128xf32, #tpu.memory_space<vmem>>, vector<8x128xf32>
    tpu.vector_store %arg9[%c0_91, %c0_92], %475 {strides = array<i32>} : memref<8x128xf32, #tpu.memory_space<vmem>>, vector<8x128xf32>,
    %c0_93 = arith.constant 0 : index
    %c0_94 = arith.constant 0 : index
    %c0_95 = arith.constant 0 : index
    %477 = vector.load %arg10[%c0_93, %c0_94, %c0_95] : memref<2x8x32xf32, #tpu.memory_space<vmem>>, vector<1x8x32xf32>
    %478 = vector.shape_cast %477 : vector<1x8x32xf32> to vector<8x32xf32>
    %479 = vector.shape_cast %448 : vector<8x32xf32> to vector<1x8x32xf32>
    tpu.vector_store %arg10[%c0_93, %c0_94, %c0_95], %479 {strides = array<i32>} : memref<2x8x32xf32, #tpu.memory_space<vmem>>, vector<1x8x32xf32>,
    %c1_96 = arith.constant 1 : index
    %c0_97 = arith.constant 0 : index
    %c0_98 = arith.constant 0 : index
    %480 = vector.load %arg10[%c1_96, %c0_97, %c0_98] : memref<2x8x32xf32, #tpu.memory_space<vmem>>, vector<1x8x32xf32>
    %481 = vector.shape_cast %480 : vector<1x8x32xf32> to vector<8x32xf32>
    %482 = vector.shape_cast %470 : vector<8x32xf32> to vector<1x8x32xf32>
    tpu.vector_store %arg10[%c1_96, %c0_97, %c0_98], %482 {strides = array<i32>} : memref<2x8x32xf32, #tpu.memory_space<vmem>>, vector<1x8x32xf32>,
    return
  }
}

</mosaic_0001>

<llo_original>
// kernel: cnn_with_rnn_forward.1
$region0: #{cnn_with_rnn_forward.1}
  #allocation0 [shape = 'u32[]', space=smem, size = 0x4, offset = 0x4, fixed_abs, tag = 'smem constant byte address 0x4 - core index']
  #allocation1 [shape = 'u32[144,128]{1,0:T(1,128)}', space=vmem, size = 0x12000, scoped, tag = 'internal scratch']
  %s0 = inlined_call_operand.vmem [shape: f32[8,9], index: 0, kind: input, shape index: {}]
  %s1 = inlined_call_operand.hbm [shape: bf16[9,200], index: 1, kind: input, shape index: {}]
  %s2 = inlined_call_operand.hbm [shape: bf16[200,784], index: 2, kind: input, shape index: {}]
  %s3 = inlined_call_operand.hbm [shape: bf16[784,800], index: 3, kind: input, shape index: {}]
  %s4 = inlined_call_operand.hbm [shape: bf16[800,576], index: 4, kind: input, shape index: {}]
  %s5 = inlined_call_operand.hbm [shape: bf16[64,128], index: 5, kind: input, shape index: {}]
  %s6 = inlined_call_operand.hbm [shape: f32[1,3072], index: 6, kind: input, shape index: {}]
  %s7 = inlined_call_operand.hbm [shape: f32[384,128], index: 7, kind: input, shape index: {}]
  %s8 = inlined_call_operand.vmem [shape: f32[2,8,32], index: 8, kind: input, shape index: {}]
  %s9 = inlined_call_operand.vmem [shape: f32[8,128], index: 9, kind: output, shape index: {0}]
  %s10 = inlined_call_operand.vmem [shape: f32[2,8,32], index: 10, kind: output, shape index: {1}]
  %11 = xla_tuple %s9, %s10
  %s12 = sld [smem:[#allocation0]]
  $region82: #{cnn_with_rnn_forward.1} parent=0
    _
  %s14 = ssub.s32 1, %s12
  %s15 = scalar_select 0, %s14, %s12
  $region1: #{cnn_with_rnn_forward.1} parent=0
    #allocation2 [shape = 'u8[8192]{0}', space=vmem, size = 0x2000, scoped, tag = 'input window, operand 1, single buffered']
    #allocation3 [shape = 's32[1]{0}', space=sflag, size = 0x4, scoped, tag = 'scoped memory for cnn_with_rnn_forward.1']
    #allocation4 [shape = 'u8[358400]{0}', space=vmem, size = 0x57800, scoped, tag = 'input window, operand 2, single buffered']
    #allocation5 [shape = 's32[1]{0}', space=sflag, size = 0x4, scoped, tag = 'scoped memory for cnn_with_rnn_forward.1']
    #allocation6 [shape = 'u8[1404928]{0}', space=vmem, size = 0x157000, scoped, tag = 'input window, operand 3, single buffered']
    #allocation7 [shape = 'u8[1024000]{0}', space=vmem, size = 0xfa000, scoped, tag = 'input window, operand 4, single buffered']
    #allocation8 [shape = 's32[1]{0}', space=sflag, size = 0x4, scoped, tag = 'scoped memory for cnn_with_rnn_forward.1']
    #allocation9 [shape = 'u8[16384]{0}', space=vmem, size = 0x4000, scoped, tag = 'input window, operand 5, single buffered']
    #allocation10 [shape = 'u8[12288]{0}', space=vmem, size = 0x3000, scoped, tag = 'input window, operand 6, single buffered']
    #allocation11 [shape = 's32[1]{0}', space=sflag, size = 0x4, scoped, tag = 'scoped memory for cnn_with_rnn_forward.1']
    #allocation12 [shape = 'u8[196608]{0}', space=vmem, size = 0x30000, scoped, tag = 'input window, operand 7, single buffered']
    %16 = vsyncpa [#allocation3], 0
    %17 = vsyncpa [#allocation5], 0
    %18 = vsyncpa [#allocation8], 0
    %19 = vsyncpa [#allocation11], 0
    // Predicated region
    $region2: #{cnn_with_rnn_forward.1} parent=1 // pred_check
      _
    $region3: #{cnn_with_rnn_forward.1} parent=1 // pred_check_branch
      %21 = sbr.rel (0) target = $region5
    $region4: #{cnn_with_rnn_forward.1} parent=1 // pred_region
      _
    $region5: #{cnn_with_rnn_forward.1} parent=1 // pred_fallthru
      _
    // Predicated region
    $region6: #{cnn_with_rnn_forward.1} parent=1 // pred_check
      _
    $region7: #{cnn_with_rnn_forward.1} parent=1 // pred_check_branch
      %23 = sbr.rel (0) target = $region9
    $region8: #{cnn_with_rnn_forward.1} parent=1 // pred_region
      %s25 = ssub.s32 256, 256
      %26 = vsyncadd [#allocation3], %s25
      %s27 = sshll.u32 [#allocation2], 4
      %s28 = int_to_ptr.vmem [resolvable:$true] %s27
      %33 = dma.hbm_to_vmem [thread:$0]  %s1, 256, %s28, [#allocation3], 128, 128, 8
    $region9: #{cnn_with_rnn_forward.1} parent=1 // pred_fallthru
      _
    // Predicated region
    $region10: #{cnn_with_rnn_forward.1} parent=1 // pred_check
      _
    $region11: #{cnn_with_rnn_forward.1} parent=1 // pred_check_branch
      %35 = sbr.rel (0) target = $region13
    $region12: #{cnn_with_rnn_forward.1} parent=1 // pred_region
      %s37 = ssub.s32 11200, 11200
      %38 = vsyncadd [#allocation5], %s37
      %s39 = sshll.u32 [#allocation4], 4
      %s40 = int_to_ptr.vmem [resolvable:$true] %s39
      %45 = dma.hbm_to_vmem [thread:$0]  %s2, 11200, %s40, [#allocation5], 448, 448, 28
    $region13: #{cnn_with_rnn_forward.1} parent=1 // pred_fallthru
      _
    // Predicated region
    $region14: #{cnn_with_rnn_forward.1} parent=1 // pred_check
      _
    $region15: #{cnn_with_rnn_forward.1} parent=1 // pred_check_branch
      %47 = sbr.rel (0) target = $region17
    $region16: #{cnn_with_rnn_forward.1} parent=1 // pred_region
      %s49 = ssub.s32 43904, 43904
      %50 = vsyncadd [#allocation5], %s49
      %s51 = sshll.u32 [#allocation6], 4
      %s52 = int_to_ptr.vmem [resolvable:$true] %s51
      %57 = dma.hbm_to_vmem [thread:$0]  %s3, 43904, %s52, [#allocation5], 448, 448, 28
    $region17: #{cnn_with_rnn_forward.1} parent=1 // pred_fallthru
      _
    // Predicated region
    $region18: #{cnn_with_rnn_forward.1} parent=1 // pred_check
      _
    $region19: #{cnn_with_rnn_forward.1} parent=1 // pred_check_branch
      %59 = sbr.rel (0) target = $region21
    $region20: #{cnn_with_rnn_forward.1} parent=1 // pred_region
      %s61 = ssub.s32 32000, 32000
      %62 = vsyncadd [#allocation8], %s61
      %s63 = sshll.u32 [#allocation7], 4
      %s64 = int_to_ptr.vmem [resolvable:$true] %s63
      %69 = dma.hbm_to_vmem [thread:$0]  %s4, 32000, %s64, [#allocation8], 320, 320, 20
    $region21: #{cnn_with_rnn_forward.1} parent=1 // pred_fallthru
      _
    // Predicated region
    $region22: #{cnn_with_rnn_forward.1} parent=1 // pred_check
      _
    $region23: #{cnn_with_rnn_forward.1} parent=1 // pred_check_branch
      %71 = sbr.rel (0) target = $region25
    $region24: #{cnn_with_rnn_forward.1} parent=1 // pred_region
      %s73 = ssub.s32 512, 512
      %74 = vsyncadd [#allocation8], %s73
      %s75 = sshll.u32 [#allocation9], 4
      %s76 = int_to_ptr.vmem [resolvable:$true] %s75
      %81 = dma.hbm_to_vmem [thread:$0]  %s5, 512, %s76, [#allocation8], 64, 64, 4
    $region25: #{cnn_with_rnn_forward.1} parent=1 // pred_fallthru
      _
    // Predicated region
    $region26: #{cnn_with_rnn_forward.1} parent=1 // pred_check
      _
    $region27: #{cnn_with_rnn_forward.1} parent=1 // pred_check_branch
      %83 = sbr.rel (0) target = $region29
    $region28: #{cnn_with_rnn_forward.1} parent=1 // pred_region
      %s85 = ssub.s32 384, 384
      %86 = vsyncadd [#allocation11], %s85
      %s88 = sshll.u32 [#allocation10], 4
      %s89 = int_to_ptr.vmem [resolvable:$true] %s88
      %91 = dma.hbm_to_vmem [thread:$0]  %s6, 384, %s89, [#allocation11]
    $region29: #{cnn_with_rnn_forward.1} parent=1 // pred_fallthru
      _
    // Predicated region
    $region30: #{cnn_with_rnn_forward.1} parent=1 // pred_check
      _
    $region31: #{cnn_with_rnn_forward.1} parent=1 // pred_check_branch
      %93 = sbr.rel (0) target = $region33
    $region32: #{cnn_with_rnn_forward.1} parent=1 // pred_region
      %s95 = ssub.s32 6144, 6144
      %96 = vsyncadd [#allocation11], %s95
      %s97 = sshll.u32 [#allocation12], 4
      %s98 = int_to_ptr.vmem [resolvable:$true] %s97
      %103 = dma.hbm_to_vmem [thread:$0]  %s7, 6144, %s98, [#allocation11], 128, 128, 8
    $region33: #{cnn_with_rnn_forward.1} parent=1 // pred_fallthru
      _
    // Predicated region
    $region34: #{cnn_with_rnn_forward.1} parent=1 // pred_check
      _
    $region35: #{cnn_with_rnn_forward.1} parent=1 // pred_check_branch
      %105 = sbr.rel (0) target = $region37
    $region36: #{cnn_with_rnn_forward.1} parent=1 // pred_region
      _
    $region37: #{cnn_with_rnn_forward.1} parent=1 // pred_fallthru
      _
    // Predicated region
    $region38: #{cnn_with_rnn_forward.1} parent=1 // pred_check
      _
    $region39: #{cnn_with_rnn_forward.1} parent=1 // pred_check_branch
      %107 = sbr.rel (0) target = $region41
    $region40: #{cnn_with_rnn_forward.1} parent=1 // pred_region
      %108 = dma.done [#allocation3], 256
    $region41: #{cnn_with_rnn_forward.1} parent=1 // pred_fallthru
      _
    // Predicated region
    $region42: #{cnn_with_rnn_forward.1} parent=1 // pred_check
      _
    $region43: #{cnn_with_rnn_forward.1} parent=1 // pred_check_branch
      %110 = sbr.rel (0) target = $region45
    $region44: #{cnn_with_rnn_forward.1} parent=1 // pred_region
      %111 = dma.done [#allocation5], 11200
    $region45: #{cnn_with_rnn_forward.1} parent=1 // pred_fallthru
      _
    // Predicated region
    $region46: #{cnn_with_rnn_forward.1} parent=1 // pred_check
      _
    $region47: #{cnn_with_rnn_forward.1} parent=1 // pred_check_branch
      %113 = sbr.rel (0) target = $region49
    $region48: #{cnn_with_rnn_forward.1} parent=1 // pred_region
      %114 = dma.done [#allocation5], 43904
    $region49: #{cnn_with_rnn_forward.1} parent=1 // pred_fallthru
      _
    // Predicated region
    $region50: #{cnn_with_rnn_forward.1} parent=1 // pred_check
      _
    $region51: #{cnn_with_rnn_forward.1} parent=1 // pred_check_branch
      %116 = sbr.rel (0) target = $region53
    $region52: #{cnn_with_rnn_forward.1} parent=1 // pred_region
      %117 = dma.done [#allocation8], 32000
    $region53: #{cnn_with_rnn_forward.1} parent=1 // pred_fallthru
      _
    // Predicated region
    $region54: #{cnn_with_rnn_forward.1} parent=1 // pred_check
      _
    $region55: #{cnn_with_rnn_forward.1} parent=1 // pred_check_branch
      %119 = sbr.rel (0) target = $region57
    $region56: #{cnn_with_rnn_forward.1} parent=1 // pred_region
      %120 = dma.done [#allocation8], 512
    $region57: #{cnn_with_rnn_forward.1} parent=1 // pred_fallthru
      _
    // Predicated region
    $region58: #{cnn_with_rnn_forward.1} parent=1 // pred_check
      _
    $region59: #{cnn_with_rnn_forward.1} parent=1 // pred_check_branch
      %122 = sbr.rel (0) target = $region61
    $region60: #{cnn_with_rnn_forward.1} parent=1 // pred_region
      %123 = dma.done [#allocation11], 384
    $region61: #{cnn_with_rnn_forward.1} parent=1 // pred_fallthru
      _
    // Predicated region
    $region62: #{cnn_with_rnn_forward.1} parent=1 // pred_check
      _
    $region63: #{cnn_with_rnn_forward.1} parent=1 // pred_check_branch
      %125 = sbr.rel (0) target = $region65
    $region64: #{cnn_with_rnn_forward.1} parent=1 // pred_region
      %126 = dma.done [#allocation11], 6144
    $region65: #{cnn_with_rnn_forward.1} parent=1 // pred_fallthru
      _
    %v128 = vld [vmem:[%s0] sm:$0xff]
    %v129 = vpack.c.bf16 %v128, %v128
    %v130 = vld [vmem:[#allocation2] sm:$0xff]
    %v131 = vld [vmem:[#allocation2 + $0x8] sm:$0x11]
    %v132 = vld [vmem:[#allocation10] sm:$0x3]
    %v134 = vlaneseq
    %v135 = vshrl.u32 %v134, 7
    %v136 = vsub.s32 0, %v135
    %v137 = vrot.slane %v132, %v136
    %v138 = vlaneseq
    %v139 = vshrl.u32 %v138, 7
    %v140 = vsub.s32 1, %v139
    %v141 = vrot.slane %v132, %v140
    %v146 = vunpack.c.l.b16 %v130
    %v147 = vunpack.c.h.b16 %v130
    %v148 = vunpack.c.l.b16 %v131
    %v149 = vunpack.c.h.b16 %v131
    %v150 = vpack.c.b16 %v148, %v146
    %v151 = vpack.c.b16 %v149, %v147
    %vm152 = vcmask 72704
    %v154 = vsel %vm152, %v129, 0
    %vm156 = vcmask 1043456
    %vm157 = vcmask 1044480
    %v158 = vsel %vm156, 4294967295, 65535
    %v159 = vsel %vm157, %v158, 0
    %v161 = vand.u32 %v150, %v159
    %v164 = vand.u32 %v151, %v159
    %166 = vmatprep.subr.bf16.mxu0 0
    %167 = vmatpush1.bf16.msra.mxu0 0
    %168 = vmatprep.subr.bf16.mxu0 0
    %169 = vmatpush1.bf16.msra.mxu0 0
    %170 = vmatprep.subr.bf16.mxu0 0
    %171 = vmatpush1.bf16.msra.mxu0 0
    %172 = vmatprep.subr.bf16.mxu0 0
    %173 = vmatpush1.bf16.msra.mxu0 0
    %174 = vmatprep.subr.bf16.mxu0 0
    %175 = vmatpush1.bf16.msra.mxu0 0
    %176 = vmatprep.subr.bf16.mxu0 0
    %177 = vmatpush1.bf16.msra.mxu0 0
    %178 = vmatprep.subr.bf16.mxu0 0
    %179 = vmatpush1.bf16.msra.mxu0 0
    %180 = vmatprep.subr.bf16.mxu0 %v164
    %181 = vmatpush1.bf16.msra.mxu0 %v161
    %182 = vmatprep.subr.bf16.mxu0 0
    %183 = vmatpush2.bf16.msra.mxu0 0
    %184 = vmatprep.subr.bf16.mxu0 0
    %185 = vmatpush2.bf16.msra.mxu0 0
    %186 = vmatprep.subr.bf16.mxu0 0
    %187 = vmatpush2.bf16.msra.mxu0 0
    %188 = vmatprep.subr.bf16.mxu0 0
    %189 = vmatpush2.bf16.msra.mxu0 0
    %190 = vmatprep.subr.bf16.mxu0 0
    %191 = vmatpush2.bf16.msra.mxu0 0
    %192 = vmatprep.subr.bf16.mxu0 0
    %193 = vmatpush2.bf16.msra.mxu0 0
    %194 = vmatprep.subr.bf16.mxu0 0
    %195 = vmatpush2.bf16.msra.mxu0 0
    %196 = vmatprep.subr.bf16.mxu0 0
    %197 = vmatpush2.bf16.msra.mxu0 0
    %198 = vmatprep.mubr.bf16.mxu0 0
    %199 = vmatmul.mubr.bf16.gmra.mxu0 %v154
    %v200 = vpop.f32.mrf.mxu0
    %v201 = vadd.f32 %v137, %v200
    %v202 = vpop.f32.mrf.mxu0
    %v203 = vadd.f32 %v141, %v202
    %v204 = vpop.f32.mrf.mxu0
    %v205 = vpop.f32.mrf.mxu0
    %206 = vdwg.mxu0
    %v207 = vmax.f32 %v201, 0.0
    %v208 = vmax.f32 %v203, 0.0
    %v209 = vpack.c.bf16 %v207, %v207
    %v210 = vpack.c.bf16 %v208, %v208
    %v211 = vld [vmem:[#allocation4] sm:$0xff]
    %v212 = vld [vmem:[#allocation4 + $0x8] sm:$0xff]
    %v213 = vld [vmem:[#allocation4 + $0x10] sm:$0xff]
    %v214 = vld [vmem:[#allocation4 + $0x18] sm:$0xf]
    %v215 = vld [vmem:[#allocation4 + $0x1c] sm:$0xff]
    %v216 = vld [vmem:[#allocation4 + $0x24] sm:$0xff]
    %v217 = vld [vmem:[#allocation4 + $0x2c] sm:$0xff]
    %v218 = vld [vmem:[#allocation4 + $0x34] sm:$0xf]
    %v219 = vld [vmem:[#allocation4 + $0x38] sm:$0xff]
    %v220 = vld [vmem:[#allocation4 + $0x40] sm:$0xff]
    %v221 = vld [vmem:[#allocation4 + $0x48] sm:$0xff]
    %v222 = vld [vmem:[#allocation4 + $0x50] sm:$0xf]
    %v223 = vld [vmem:[#allocation4 + $0x54] sm:$0xff]
    %v224 = vld [vmem:[#allocation4 + $0x5c] sm:$0xff]
    %v225 = vld [vmem:[#allocation4 + $0x64] sm:$0xff]
    %v226 = vld [vmem:[#allocation4 + $0x6c] sm:$0xf]
    %v227 = vld [vmem:[#allocation4 + $0x70] sm:$0xff]
    %v228 = vld [vmem:[#allocation4 + $0x78] sm:$0xff]
    %v229 = vld [vmem:[#allocation4 + $0x80] sm:$0xff]
    %v230 = vld [vmem:[#allocation4 + $0x88] sm:$0xf]
    %v231 = vld [vmem:[#allocation4 + $0x8c] sm:$0xff]
    %v232 = vld [vmem:[#allocation4 + $0x94] sm:$0xff]
    %v233 = vld [vmem:[#allocation4 + $0x9c] sm:$0xff]
    %v234 = vld [vmem:[#allocation4 + $0xa4] sm:$0xf]
    %v235 = vld [vmem:[#allocation4 + $0xa8] sm:$0xff]
    %v236 = vld [vmem:[#allocation4 + $0xb0] sm:$0xff]
    %v237 = vld [vmem:[#allocation4 + $0xb8] sm:$0xff]
    %v238 = vld [vmem:[#allocation4 + $0xc0] sm:$0xf]
    %v239 = vld [vmem:[#allocation4 + $0xc4] sm:$0xff]
    %v240 = vld [vmem:[#allocation4 + $0xcc] sm:$0xff]
    %v241 = vld [vmem:[#allocation4 + $0xd4] sm:$0xff]
    %v242 = vld [vmem:[#allocation4 + $0xdc] sm:$0xf]
    %v243 = vld [vmem:[#allocation4 + $0xe0] sm:$0xff]
    %v244 = vld [vmem:[#allocation4 + $0xe8] sm:$0xff]
    %v245 = vld [vmem:[#allocation4 + $0xf0] sm:$0xff]
    %v246 = vld [vmem:[#allocation4 + $0xf8] sm:$0xf]
    %v247 = vld [vmem:[#allocation4 + $0xfc] sm:$0xff]
    %v248 = vld [vmem:[#allocation4 + $0x104] sm:$0xff]
    %v249 = vld [vmem:[#allocation4 + $0x10c] sm:$0xff]
    %v250 = vld [vmem:[#allocation4 + $0x114] sm:$0xf]
    %v251 = vld [vmem:[#allocation4 + $0x118] sm:$0xff]
    %v252 = vld [vmem:[#allocation4 + $0x120] sm:$0xff]
    %v253 = vld [vmem:[#allocation4 + $0x128] sm:$0xff]
    %v254 = vld [vmem:[#allocation4 + $0x130] sm:$0xf]
    %v255 = vld [vmem:[#allocation4 + $0x134] sm:$0xff]
    %v256 = vld [vmem:[#allocation4 + $0x13c] sm:$0xff]
    %v257 = vld [vmem:[#allocation4 + $0x144] sm:$0xff]
    %v258 = vld [vmem:[#allocation4 + $0x14c] sm:$0xf]
    %v259 = vld [vmem:[#allocation4 + $0x150] sm:$0xff]
    %v260 = vld [vmem:[#allocation4 + $0x158] sm:$0xff]
    %v261 = vld [vmem:[#allocation4 + $0x160] sm:$0xff]
    %v262 = vld [vmem:[#allocation4 + $0x168] sm:$0xf]
    %v263 = vld [vmem:[#allocation4 + $0x16c] sm:$0xff]
    %v264 = vld [vmem:[#allocation4 + $0x174] sm:$0xff]
    %v265 = vld [vmem:[#allocation4 + $0x17c] sm:$0xff]
    %v266 = vld [vmem:[#allocation4 + $0x184] sm:$0xf]
    %v267 = vld [vmem:[#allocation4 + $0x188] sm:$0xff]
    %v268 = vld [vmem:[#allocation4 + $0x190] sm:$0xff]
    %v269 = vld [vmem:[#allocation4 + $0x198] sm:$0xff]
    %v270 = vld [vmem:[#allocation4 + $0x1a0] sm:$0xf]
    %v271 = vld [vmem:[#allocation4 + $0x1a4] sm:$0xff]
    %v272 = vld [vmem:[#allocation4 + $0x1ac] sm:$0xff]
    %v273 = vld [vmem:[#allocation4 + $0x1b4] sm:$0xff]
    %v274 = vld [vmem:[#allocation4 + $0x1bc] sm:$0xf]
    %v275 = vld [vmem:[#allocation4 + $0x1c0] sm:$0xff]
    %v276 = vld [vmem:[#allocation4 + $0x1c8] sm:$0xff]
    %v277 = vld [vmem:[#allocation4 + $0x1d0] sm:$0xff]
    %v278 = vld [vmem:[#allocation4 + $0x1d8] sm:$0xf]
    %v279 = vld [vmem:[#allocation4 + $0x1dc] sm:$0xff]
    %v280 = vld [vmem:[#allocation4 + $0x1e4] sm:$0xff]
    %v281 = vld [vmem:[#allocation4 + $0x1ec] sm:$0xff]
    %v282 = vld [vmem:[#allocation4 + $0x1f4] sm:$0xf]
    %v283 = vld [vmem:[#allocation4 + $0x1f8] sm:$0xff]
    %v284 = vld [vmem:[#allocation4 + $0x200] sm:$0xff]
    %v285 = vld [vmem:[#allocation4 + $0x208] sm:$0xff]
    %v286 = vld [vmem:[#allocation4 + $0x210] sm:$0xf]
    %v287 = vld [vmem:[#allocation4 + $0x214] sm:$0xff]
    %v288 = vld [vmem:[#allocation4 + $0x21c] sm:$0xff]
    %v289 = vld [vmem:[#allocation4 + $0x224] sm:$0xff]
    %v290 = vld [vmem:[#allocation4 + $0x22c] sm:$0xf]
    %v291 = vld [vmem:[#allocation4 + $0x230] sm:$0xff]
    %v292 = vld [vmem:[#allocation4 + $0x238] sm:$0xff]
    %v293 = vld [vmem:[#allocation4 + $0x240] sm:$0xff]
    %v294 = vld [vmem:[#allocation4 + $0x248] sm:$0xf]
    %v295 = vld [vmem:[#allocation4 + $0x24c] sm:$0xff]
    %v296 = vld [vmem:[#allocation4 + $0x254] sm:$0xff]
    %v297 = vld [vmem:[#allocation4 + $0x25c] sm:$0xff]
    %v298 = vld [vmem:[#allocation4 + $0x264] sm:$0xf]
    %v299 = vld [vmem:[#allocation4 + $0x268] sm:$0xff]
    %v300 = vld [vmem:[#allocation4 + $0x270] sm:$0xff]
    %v301 = vld [vmem:[#allocation4 + $0x278] sm:$0xff]
    %v302 = vld [vmem:[#allocation4 + $0x280] sm:$0xf]
    %v303 = vld [vmem:[#allocation4 + $0x284] sm:$0xff]
    %v304 = vld [vmem:[#allocation4 + $0x28c] sm:$0xff]
    %v305 = vld [vmem:[#allocation4 + $0x294] sm:$0xff]
    %v306 = vld [vmem:[#allocation4 + $0x29c] sm:$0xf]
    %v307 = vld [vmem:[#allocation4 + $0x2a0] sm:$0xff]
    %v308 = vld [vmem:[#allocation4 + $0x2a8] sm:$0xff]
    %v309 = vld [vmem:[#allocation4 + $0x2b0] sm:$0xff]
    %v310 = vld [vmem:[#allocation4 + $0x2b8] sm:$0xf]
    %v311 = vld [vmem:[#allocation10 + $0x2] sm:$0x7f]
    %v313 = vlaneseq
    %v314 = vshrl.u32 %v313, 7
    %v315 = vsub.s32 0, %v314
    %v316 = vrot.slane %v311, %v315
    %v317 = vlaneseq
    %v318 = vshrl.u32 %v317, 7
    %v319 = vsub.s32 1, %v318
    %v320 = vrot.slane %v311, %v319
    %v321 = vlaneseq
    %v322 = vshrl.u32 %v321, 7
    %v323 = vsub.s32 2, %v322
    %v324 = vrot.slane %v311, %v323
    %v325 = vlaneseq
    %v326 = vshrl.u32 %v325, 7
    %v327 = vsub.s32 3, %v326
    %v328 = vrot.slane %v311, %v327
    %v329 = vlaneseq
    %v330 = vshrl.u32 %v329, 7
    %v331 = vsub.s32 4, %v330
    %v332 = vrot.slane %v311, %v331
    %v333 = vlaneseq
    %v334 = vshrl.u32 %v333, 7
    %v335 = vsub.s32 5, %v334
    %v336 = vrot.slane %v311, %v335
    %v337 = vlaneseq
    %v338 = vshrl.u32 %v337, 7
    %v339 = vsub.s32 6, %v338
    %v340 = vrot.slane %v311, %v339
    %v448 = vunpack.c.l.b16 %v211
    %v449 = vunpack.c.h.b16 %v211
    %v450 = vunpack.c.l.b16 %v212
    %v451 = vunpack.c.h.b16 %v212
    %v452 = vunpack.c.l.b16 %v213
    %v453 = vunpack.c.h.b16 %v213
    %v454 = vunpack.c.l.b16 %v214
    %v455 = vunpack.c.l.b16 %v215
    %v456 = vunpack.c.h.b16 %v215
    %v457 = vunpack.c.l.b16 %v216
    %v458 = vunpack.c.h.b16 %v216
    %v459 = vunpack.c.l.b16 %v217
    %v460 = vunpack.c.h.b16 %v217
    %v461 = vunpack.c.l.b16 %v218
    %v462 = vunpack.c.l.b16 %v219
    %v463 = vunpack.c.h.b16 %v219
    %v464 = vunpack.c.l.b16 %v220
    %v465 = vunpack.c.h.b16 %v220
    %v466 = vunpack.c.l.b16 %v221
    %v467 = vunpack.c.h.b16 %v221
    %v468 = vunpack.c.l.b16 %v222
    %v469 = vunpack.c.l.b16 %v223
    %v470 = vunpack.c.h.b16 %v223
    %v471 = vunpack.c.l.b16 %v224
    %v472 = vunpack.c.h.b16 %v224
    %v473 = vunpack.c.l.b16 %v225
    %v474 = vunpack.c.h.b16 %v225
    %v475 = vunpack.c.l.b16 %v226
    %v476 = vunpack.c.l.b16 %v227
    %v477 = vunpack.c.h.b16 %v227
    %v478 = vunpack.c.l.b16 %v228
    %v479 = vunpack.c.h.b16 %v228
    %v480 = vunpack.c.l.b16 %v229
    %v481 = vunpack.c.h.b16 %v229
    %v482 = vunpack.c.l.b16 %v230
    %v483 = vunpack.c.l.b16 %v231
    %v484 = vunpack.c.h.b16 %v231
    %v485 = vunpack.c.l.b16 %v232
    %v486 = vunpack.c.h.b16 %v232
    %v487 = vunpack.c.l.b16 %v233
    %v488 = vunpack.c.h.b16 %v233
    %v489 = vunpack.c.l.b16 %v234
    %v490 = vunpack.c.l.b16 %v235
    %v491 = vunpack.c.h.b16 %v235
    %v492 = vunpack.c.l.b16 %v236
    %v493 = vunpack.c.h.b16 %v236
    %v494 = vunpack.c.l.b16 %v237
    %v495 = vunpack.c.h.b16 %v237
    %v496 = vunpack.c.l.b16 %v238
    %v497 = vunpack.c.l.b16 %v239
    %v498 = vunpack.c.h.b16 %v239
    %v499 = vunpack.c.l.b16 %v240
    %v500 = vunpack.c.h.b16 %v240
    %v501 = vunpack.c.l.b16 %v241
    %v502 = vunpack.c.h.b16 %v241
    %v503 = vunpack.c.l.b16 %v242
    %v504 = vunpack.c.l.b16 %v243
    %v505 = vunpack.c.h.b16 %v243
    %v506 = vunpack.c.l.b16 %v244
    %v507 = vunpack.c.h.b16 %v244
    %v508 = vunpack.c.l.b16 %v245
    %v509 = vunpack.c.h.b16 %v245
    %v510 = vunpack.c.l.b16 %v246
    %v511 = vunpack.c.l.b16 %v247
    %v512 = vunpack.c.h.b16 %v247
    %v513 = vunpack.c.l.b16 %v248
    %v514 = vunpack.c.h.b16 %v248
    %v515 = vunpack.c.l.b16 %v249
    %v516 = vunpack.c.h.b16 %v249
    %v517 = vunpack.c.l.b16 %v250
    %v518 = vunpack.c.l.b16 %v251
    %v519 = vunpack.c.h.b16 %v251
    %v520 = vunpack.c.l.b16 %v252
    %v521 = vunpack.c.h.b16 %v252
    %v522 = vunpack.c.l.b16 %v253
    %v523 = vunpack.c.h.b16 %v253
    %v524 = vunpack.c.l.b16 %v254
    %v525 = vunpack.c.l.b16 %v255
    %v526 = vunpack.c.h.b16 %v255
    %v527 = vunpack.c.l.b16 %v256
    %v528 = vunpack.c.h.b16 %v256
    %v529 = vunpack.c.l.b16 %v257
    %v530 = vunpack.c.h.b16 %v257
    %v531 = vunpack.c.l.b16 %v258
    %v532 = vunpack.c.l.b16 %v259
    %v533 = vunpack.c.h.b16 %v259
    %v534 = vunpack.c.l.b16 %v260
    %v535 = vunpack.c.h.b16 %v260
    %v536 = vunpack.c.l.b16 %v261
    %v537 = vunpack.c.h.b16 %v261
    %v538 = vunpack.c.l.b16 %v262
    %v539 = vunpack.c.l.b16 %v263
    %v540 = vunpack.c.h.b16 %v263
    %v541 = vunpack.c.l.b16 %v264
    %v542 = vunpack.c.h.b16 %v264
    %v543 = vunpack.c.l.b16 %v265
    %v544 = vunpack.c.h.b16 %v265
    %v545 = vunpack.c.l.b16 %v266
    %v546 = vunpack.c.l.b16 %v267
    %v547 = vunpack.c.h.b16 %v267
    %v548 = vunpack.c.l.b16 %v268
    %v549 = vunpack.c.h.b16 %v268
    %v550 = vunpack.c.l.b16 %v269
    %v551 = vunpack.c.h.b16 %v269
    %v552 = vunpack.c.l.b16 %v270
    %v553 = vunpack.c.l.b16 %v271
    %v554 = vunpack.c.h.b16 %v271
    %v555 = vunpack.c.l.b16 %v272
    %v556 = vunpack.c.h.b16 %v272
    %v557 = vunpack.c.l.b16 %v273
    %v558 = vunpack.c.h.b16 %v273
    %v559 = vunpack.c.l.b16 %v274
    %v560 = vunpack.c.l.b16 %v275
    %v561 = vunpack.c.h.b16 %v275
    %v562 = vunpack.c.l.b16 %v276
    %v563 = vunpack.c.h.b16 %v276
    %v564 = vunpack.c.l.b16 %v277
    %v565 = vunpack.c.h.b16 %v277
    %v566 = vunpack.c.l.b16 %v278
    %v567 = vunpack.c.l.b16 %v279
    %v568 = vunpack.c.h.b16 %v279
    %v569 = vunpack.c.l.b16 %v280
    %v570 = vunpack.c.h.b16 %v280
    %v571 = vunpack.c.l.b16 %v281
    %v572 = vunpack.c.h.b16 %v281
    %v573 = vunpack.c.l.b16 %v282
    %v574 = vunpack.c.l.b16 %v283
    %v575 = vunpack.c.h.b16 %v283
    %v576 = vunpack.c.l.b16 %v284
    %v577 = vunpack.c.h.b16 %v284
    %v578 = vunpack.c.l.b16 %v285
    %v579 = vunpack.c.h.b16 %v285
    %v580 = vunpack.c.l.b16 %v286
    %v581 = vunpack.c.l.b16 %v287
    %v582 = vunpack.c.h.b16 %v287
    %v583 = vunpack.c.l.b16 %v288
    %v584 = vunpack.c.h.b16 %v288
    %v585 = vunpack.c.l.b16 %v289
    %v586 = vunpack.c.h.b16 %v289
    %v587 = vunpack.c.l.b16 %v290
    %v588 = vunpack.c.l.b16 %v291
    %v589 = vunpack.c.h.b16 %v291
    %v590 = vunpack.c.l.b16 %v292
    %v591 = vunpack.c.h.b16 %v292
    %v592 = vunpack.c.l.b16 %v293
    %v593 = vunpack.c.h.b16 %v293
    %v594 = vunpack.c.l.b16 %v294
    %v595 = vunpack.c.l.b16 %v295
    %v596 = vunpack.c.h.b16 %v295
    %v597 = vunpack.c.l.b16 %v296
    %v598 = vunpack.c.h.b16 %v296
    %v599 = vunpack.c.l.b16 %v297
    %v600 = vunpack.c.h.b16 %v297
    %v601 = vunpack.c.l.b16 %v298
    %v602 = vunpack.c.l.b16 %v299
    %v603 = vunpack.c.h.b16 %v299
    %v604 = vunpack.c.l.b16 %v300
    %v605 = vunpack.c.h.b16 %v300
    %v606 = vunpack.c.l.b16 %v301
    %v607 = vunpack.c.h.b16 %v301
    %v608 = vunpack.c.l.b16 %v302
    %v609 = vunpack.c.l.b16 %v303
    %v610 = vunpack.c.h.b16 %v303
    %v611 = vunpack.c.l.b16 %v304
    %v612 = vunpack.c.h.b16 %v304
    %v613 = vunpack.c.l.b16 %v305
    %v614 = vunpack.c.h.b16 %v305
    %v615 = vunpack.c.l.b16 %v306
    %v616 = vunpack.c.l.b16 %v307
    %v617 = vunpack.c.h.b16 %v307
    %v618 = vunpack.c.l.b16 %v308
    %v619 = vunpack.c.h.b16 %v308
    %v620 = vunpack.c.l.b16 %v309
    %v621 = vunpack.c.h.b16 %v309
    %v622 = vunpack.c.l.b16 %v310
    %v623 = vpack.c.b16 %v455, %v448
    %v624 = vpack.c.b16 %v456, %v449
    %v625 = vpack.c.b16 %v457, %v450
    %v626 = vpack.c.b16 %v458, %v451
    %v627 = vpack.c.b16 %v459, %v452
    %v628 = vpack.c.b16 %v460, %v453
    %v629 = vpack.c.b16 %v461, %v454
    %v630 = vpack.c.b16 %v469, %v462
    %v631 = vpack.c.b16 %v470, %v463
    %v632 = vpack.c.b16 %v471, %v464
    %v633 = vpack.c.b16 %v472, %v465
    %v634 = vpack.c.b16 %v473, %v466
    %v635 = vpack.c.b16 %v474, %v467
    %v636 = vpack.c.b16 %v475, %v468
    %v637 = vpack.c.b16 %v483, %v476
    %v638 = vpack.c.b16 %v484, %v477
    %v639 = vpack.c.b16 %v485, %v478
    %v640 = vpack.c.b16 %v486, %v479
    %v641 = vpack.c.b16 %v487, %v480
    %v642 = vpack.c.b16 %v488, %v481
    %v643 = vpack.c.b16 %v489, %v482
    %v644 = vpack.c.b16 %v497, %v490
    %v645 = vpack.c.b16 %v498, %v491
    %v646 = vpack.c.b16 %v499, %v492
    %v647 = vpack.c.b16 %v500, %v493
    %v648 = vpack.c.b16 %v501, %v494
    %v649 = vpack.c.b16 %v502, %v495
    %v650 = vpack.c.b16 %v503, %v496
    %v651 = vpack.c.b16 %v511, %v504
    %v652 = vpack.c.b16 %v512, %v505
    %v653 = vpack.c.b16 %v513, %v506
    %v654 = vpack.c.b16 %v514, %v507
    %v655 = vpack.c.b16 %v515, %v508
    %v656 = vpack.c.b16 %v516, %v509
    %v657 = vpack.c.b16 %v517, %v510
    %v658 = vpack.c.b16 %v525, %v518
    %v659 = vpack.c.b16 %v526, %v519
    %v660 = vpack.c.b16 %v527, %v520
    %v661 = vpack.c.b16 %v528, %v521
    %v662 = vpack.c.b16 %v529, %v522
    %v663 = vpack.c.b16 %v530, %v523
    %v664 = vpack.c.b16 %v531, %v524
    %v665 = vpack.c.b16 %v539, %v532
    %v666 = vpack.c.b16 %v540, %v533
    %v667 = vpack.c.b16 %v541, %v534
    %v668 = vpack.c.b16 %v542, %v535
    %v669 = vpack.c.b16 %v543, %v536
    %v670 = vpack.c.b16 %v544, %v537
    %v671 = vpack.c.b16 %v545, %v538
    %v672 = vpack.c.b16 %v553, %v546
    %v673 = vpack.c.b16 %v554, %v547
    %v674 = vpack.c.b16 %v555, %v548
    %v675 = vpack.c.b16 %v556, %v549
    %v676 = vpack.c.b16 %v557, %v550
    %v677 = vpack.c.b16 %v558, %v551
    %v678 = vpack.c.b16 %v559, %v552
    %v679 = vpack.c.b16 %v567, %v560
    %v680 = vpack.c.b16 %v568, %v561
    %v681 = vpack.c.b16 %v569, %v562
    %v682 = vpack.c.b16 %v570, %v563
    %v683 = vpack.c.b16 %v571, %v564
    %v684 = vpack.c.b16 %v572, %v565
    %v685 = vpack.c.b16 %v573, %v566
    %v686 = vpack.c.b16 %v581, %v574
    %v687 = vpack.c.b16 %v582, %v575
    %v688 = vpack.c.b16 %v583, %v576
    %v689 = vpack.c.b16 %v584, %v577
    %v690 = vpack.c.b16 %v585, %v578
    %v691 = vpack.c.b16 %v586, %v579
    %v692 = vpack.c.b16 %v587, %v580
    %v693 = vpack.c.b16 %v595, %v588
    %v694 = vpack.c.b16 %v596, %v589
    %v695 = vpack.c.b16 %v597, %v590
    %v696 = vpack.c.b16 %v598, %v591
    %v697 = vpack.c.b16 %v599, %v592
    %v698 = vpack.c.b16 %v600, %v593
    %v699 = vpack.c.b16 %v601, %v594
    %v700 = vpack.c.b16 %v609, %v602
    %v701 = vpack.c.b16 %v610, %v603
    %v702 = vpack.c.b16 %v611, %v604
    %v703 = vpack.c.b16 %v612, %v605
    %v704 = vpack.c.b16 %v613, %v606
    %v705 = vpack.c.b16 %v614, %v607
    %v706 = vpack.c.b16 %v615, %v608
    %v707 = vpack.c.b16 %v616, %v616
    %v708 = vpack.c.b16 %v617, %v617
    %v709 = vpack.c.b16 %v618, %v618
    %v710 = vpack.c.b16 %v619, %v619
    %v711 = vpack.c.b16 %v620, %v620
    %v712 = vpack.c.b16 %v621, %v621
    %v713 = vpack.c.b16 %v622, %v622
    %vm798 = vcmask 588800
    %v800 = vsel %vm798, %v210, 0
    %v803 = vsel %vm156, %v707, 0
    %v806 = vsel %vm156, %v708, 0
    %v809 = vsel %vm156, %v709, 0
    %v812 = vsel %vm156, %v710, 0
    %v815 = vsel %vm156, %v711, 0
    %v818 = vsel %vm156, %v712, 0
    %v821 = vsel %vm156, %v713, 0
    %823 = vmatprep.subr.bf16.mxu0 %v673
    %824 = vmatpush1.bf16.msra.mxu0 %v672
    %825 = vmatprep.subr.bf16.mxu0 %v666
    %826 = vmatpush1.bf16.msra.mxu0 %v665
    %827 = vmatprep.subr.bf16.mxu0 %v659
    %828 = vmatpush1.bf16.msra.mxu0 %v658
    %829 = vmatprep.subr.bf16.mxu0 %v652
    %830 = vmatpush1.bf16.msra.mxu0 %v651
    %831 = vmatprep.subr.bf16.mxu0 %v645
    %832 = vmatpush1.bf16.msra.mxu0 %v644
    %833 = vmatprep.subr.bf16.mxu0 %v638
    %834 = vmatpush1.bf16.msra.mxu0 %v637
    %835 = vmatprep.subr.bf16.mxu0 %v631
    %836 = vmatpush1.bf16.msra.mxu0 %v630
    %837 = vmatprep.subr.bf16.mxu0 %v624
    %838 = vmatpush1.bf16.msra.mxu0 %v623
    %839 = vmatprep.subr.bf16.mxu0 0
    %840 = vmatpush2.bf16.msra.mxu0 0
    %841 = vmatprep.subr.bf16.mxu0 0
    %842 = vmatpush2.bf16.msra.mxu0 0
    %843 = vmatprep.subr.bf16.mxu0 0
    %844 = vmatpush2.bf16.msra.mxu0 0
    %845 = vmatprep.subr.bf16.mxu0 %v806
    %846 = vmatpush2.bf16.msra.mxu0 %v803
    %847 = vmatprep.subr.bf16.mxu0 %v701
    %848 = vmatpush2.bf16.msra.mxu0 %v700
    %849 = vmatprep.subr.bf16.mxu0 %v694
    %850 = vmatpush2.bf16.msra.mxu0 %v693
    %851 = vmatprep.subr.bf16.mxu0 %v687
    %852 = vmatpush2.bf16.msra.mxu0 %v686
    %853 = vmatprep.subr.bf16.mxu0 %v680
    %854 = vmatpush2.bf16.msra.mxu0 %v679
    %855 = vmatprep.mubr.bf16.mxu0 %v800
    %856 = vmatmul.mubr.bf16.gmra.mxu0 %v209
    %v857 = vpop.f32.mrf.mxu0
    %v858 = vadd.f32 %v316, %v857
    %v859 = vpop.f32.mrf.mxu0
    %v860 = vadd.f32 %v320, %v859
    %v861 = vpop.f32.mrf.mxu0
    %v862 = vpop.f32.mrf.mxu0
    %863 = vdwg.mxu0
    %864 = vmatprep.subr.bf16.mxu0 %v675
    %865 = vmatpush1.bf16.msra.mxu0 %v674
    %866 = vmatprep.subr.bf16.mxu0 %v668
    %867 = vmatpush1.bf16.msra.mxu0 %v667
    %868 = vmatprep.subr.bf16.mxu0 %v661
    %869 = vmatpush1.bf16.msra.mxu0 %v660
    %870 = vmatprep.subr.bf16.mxu0 %v654
    %871 = vmatpush1.bf16.msra.mxu0 %v653
    %872 = vmatprep.subr.bf16.mxu0 %v647
    %873 = vmatpush1.bf16.msra.mxu0 %v646
    %874 = vmatprep.subr.bf16.mxu0 %v640
    %875 = vmatpush1.bf16.msra.mxu0 %v639
    %876 = vmatprep.subr.bf16.mxu0 %v633
    %877 = vmatpush1.bf16.msra.mxu0 %v632
    %878 = vmatprep.subr.bf16.mxu0 %v626
    %879 = vmatpush1.bf16.msra.mxu0 %v625
    %880 = vmatprep.subr.bf16.mxu0 0
    %881 = vmatpush2.bf16.msra.mxu0 0
    %882 = vmatprep.subr.bf16.mxu0 0
    %883 = vmatpush2.bf16.msra.mxu0 0
    %884 = vmatprep.subr.bf16.mxu0 0
    %885 = vmatpush2.bf16.msra.mxu0 0
    %886 = vmatprep.subr.bf16.mxu0 %v812
    %887 = vmatpush2.bf16.msra.mxu0 %v809
    %888 = vmatprep.subr.bf16.mxu0 %v703
    %889 = vmatpush2.bf16.msra.mxu0 %v702
    %890 = vmatprep.subr.bf16.mxu0 %v696
    %891 = vmatpush2.bf16.msra.mxu0 %v695
    %892 = vmatprep.subr.bf16.mxu0 %v689
    %893 = vmatpush2.bf16.msra.mxu0 %v688
    %894 = vmatprep.subr.bf16.mxu0 %v682
    %895 = vmatpush2.bf16.msra.mxu0 %v681
    %896 = vmatprep.mubr.bf16.mxu0 %v800
    %897 = vmatmul.mubr.bf16.gmra.mxu0 %v209
    %v898 = vpop.f32.mrf.mxu0
    %v899 = vadd.f32 %v324, %v898
    %v900 = vpop.f32.mrf.mxu0
    %v901 = vadd.f32 %v328, %v900
    %v902 = vpop.f32.mrf.mxu0
    %v903 = vpop.f32.mrf.mxu0
    %904 = vdwg.mxu0
    %905 = vmatprep.subr.bf16.mxu0 %v677
    %906 = vmatpush1.bf16.msra.mxu0 %v676
    %907 = vmatprep.subr.bf16.mxu0 %v670
    %908 = vmatpush1.bf16.msra.mxu0 %v669
    %909 = vmatprep.subr.bf16.mxu0 %v663
    %910 = vmatpush1.bf16.msra.mxu0 %v662
    %911 = vmatprep.subr.bf16.mxu0 %v656
    %912 = vmatpush1.bf16.msra.mxu0 %v655
    %913 = vmatprep.subr.bf16.mxu0 %v649
    %914 = vmatpush1.bf16.msra.mxu0 %v648
    %915 = vmatprep.subr.bf16.mxu0 %v642
    %916 = vmatpush1.bf16.msra.mxu0 %v641
    %917 = vmatprep.subr.bf16.mxu0 %v635
    %918 = vmatpush1.bf16.msra.mxu0 %v634
    %919 = vmatprep.subr.bf16.mxu0 %v628
    %920 = vmatpush1.bf16.msra.mxu0 %v627
    %921 = vmatprep.subr.bf16.mxu0 0
    %922 = vmatpush2.bf16.msra.mxu0 0
    %923 = vmatprep.subr.bf16.mxu0 0
    %924 = vmatpush2.bf16.msra.mxu0 0
    %925 = vmatprep.subr.bf16.mxu0 0
    %926 = vmatpush2.bf16.msra.mxu0 0
    %927 = vmatprep.subr.bf16.mxu0 %v818
    %928 = vmatpush2.bf16.msra.mxu0 %v815
    %929 = vmatprep.subr.bf16.mxu0 %v705
    %930 = vmatpush2.bf16.msra.mxu0 %v704
    %931 = vmatprep.subr.bf16.mxu0 %v698
    %932 = vmatpush2.bf16.msra.mxu0 %v697
    %933 = vmatprep.subr.bf16.mxu0 %v691
    %934 = vmatpush2.bf16.msra.mxu0 %v690
    %935 = vmatprep.subr.bf16.mxu0 %v684
    %936 = vmatpush2.bf16.msra.mxu0 %v683
    %937 = vmatprep.mubr.bf16.mxu0 %v800
    %938 = vmatmul.mubr.bf16.gmra.mxu0 %v209
    %v939 = vpop.f32.mrf.mxu0
    %v940 = vadd.f32 %v332, %v939
    %v941 = vpop.f32.mrf.mxu0
    %v942 = vadd.f32 %v336, %v941
    %v943 = vpop.f32.mrf.mxu0
    %v944 = vpop.f32.mrf.mxu0
    %945 = vdwg.mxu0
    %946 = vmatprep.subr.bf16.mxu0 0
    %947 = vmatpush1.bf16.msra.mxu0 %v678
    %948 = vmatprep.subr.bf16.mxu0 0
    %949 = vmatpush1.bf16.msra.mxu0 %v671
    %950 = vmatprep.subr.bf16.mxu0 0
    %951 = vmatpush1.bf16.msra.mxu0 %v664
    %952 = vmatprep.subr.bf16.mxu0 0
    %953 = vmatpush1.bf16.msra.mxu0 %v657
    %954 = vmatprep.subr.bf16.mxu0 0
    %955 = vmatpush1.bf16.msra.mxu0 %v650
    %956 = vmatprep.subr.bf16.mxu0 0
    %957 = vmatpush1.bf16.msra.mxu0 %v643
    %958 = vmatprep.subr.bf16.mxu0 0
    %959 = vmatpush1.bf16.msra.mxu0 %v636
    %960 = vmatprep.subr.bf16.mxu0 0
    %961 = vmatpush1.bf16.msra.mxu0 %v629
    %962 = vmatprep.subr.bf16.mxu0 0
    %963 = vmatpush2.bf16.msra.mxu0 0
    %964 = vmatprep.subr.bf16.mxu0 0
    %965 = vmatpush2.bf16.msra.mxu0 0
    %966 = vmatprep.subr.bf16.mxu0 0
    %967 = vmatpush2.bf16.msra.mxu0 0
    %968 = vmatprep.subr.bf16.mxu0 0
    %969 = vmatpush2.bf16.msra.mxu0 %v821
    %970 = vmatprep.subr.bf16.mxu0 0
    %971 = vmatpush2.bf16.msra.mxu0 %v706
    %972 = vmatprep.subr.bf16.mxu0 0
    %973 = vmatpush2.bf16.msra.mxu0 %v699
    %974 = vmatprep.subr.bf16.mxu0 0
    %975 = vmatpush2.bf16.msra.mxu0 %v692
    %976 = vmatprep.subr.bf16.mxu0 0
    %977 = vmatpush2.bf16.msra.mxu0 %v685
    %978 = vmatprep.mubr.bf16.mxu0 %v800
    %979 = vmatmul.mubr.bf16.gmra.mxu0 %v209
    %v980 = vpop.f32.mrf.mxu0
    %v981 = vadd.f32 %v340, %v980
    %v982 = vpop.f32.mrf.mxu0
    %v983 = vpop.f32.mrf.mxu0
    %v984 = vpop.f32.mrf.mxu0
    %985 = vdwg.mxu0
    %v986 = vmax.f32 %v858, 0.0
    %v987 = vmax.f32 %v860, 0.0
    %v988 = vmax.f32 %v899, 0.0
    %v989 = vmax.f32 %v901, 0.0
    %v990 = vmax.f32 %v940, 0.0
    %v991 = vmax.f32 %v942, 0.0
    %v992 = vmax.f32 %v981, 0.0
    %v993 = vpack.c.bf16 %v986, %v986
    %v994 = vpack.c.bf16 %v987, %v987
    %v995 = vpack.c.bf16 %v988, %v988
    %v996 = vpack.c.bf16 %v989, %v989
    %v997 = vpack.c.bf16 %v990, %v990
    %v998 = vpack.c.bf16 %v991, %v991
    %v999 = vpack.c.bf16 %v992, %v992
    %v1000 = vld [vmem:[#allocation6] sm:$0xff]
    %v1001 = vld [vmem:[#allocation6 + $0x8] sm:$0xff]
    %v1002 = vld [vmem:[#allocation6 + $0x10] sm:$0xff]
    %v1003 = vld [vmem:[#allocation6 + $0x18] sm:$0xf]
    %v1004 = vld [vmem:[#allocation6 + $0x1c] sm:$0xff]
    %v1005 = vld [vmem:[#allocation6 + $0x24] sm:$0xff]
    %v1006 = vld [vmem:[#allocation6 + $0x2c] sm:$0xff]
    %v1007 = vld [vmem:[#allocation6 + $0x34] sm:$0xf]
    %v1008 = vld [vmem:[#allocation6 + $0x38] sm:$0xff]
    %v1009 = vld [vmem:[#allocation6 + $0x40] sm:$0xff]
    %v1010 = vld [vmem:[#allocation6 + $0x48] sm:$0xff]
    %v1011 = vld [vmem:[#allocation6 + $0x50] sm:$0xf]
    %v1012 = vld [vmem:[#allocation6 + $0x54] sm:$0xff]
    %v1013 = vld [vmem:[#allocation6 + $0x5c] sm:$0xff]
    %v1014 = vld [vmem:[#allocation6 + $0x64] sm:$0xff]
    %v1015 = vld [vmem:[#allocation6 + $0x6c] sm:$0xf]
    %v1016 = vld [vmem:[#allocation6 + $0x70] sm:$0xff]
    %v1017 = vld [vmem:[#allocation6 + $0x78] sm:$0xff]
    %v1018 = vld [vmem:[#allocation6 + $0x80] sm:$0xff]
    %v1019 = vld [vmem:[#allocation6 + $0x88] sm:$0xf]
    %v1020 = vld [vmem:[#allocation6 + $0x8c] sm:$0xff]
    %v1021 = vld [vmem:[#allocation6 + $0x94] sm:$0xff]
    %v1022 = vld [vmem:[#allocation6 + $0x9c] sm:$0xff]
    %v1023 = vld [vmem:[#allocation6 + $0xa4] sm:$0xf]
    %v1024 = vld [vmem:[#allocation6 + $0xa8] sm:$0xff]
    %v1025 = vld [vmem:[#allocation6 + $0xb0] sm:$0xff]
    %v1026 = vld [vmem:[#allocation6 + $0xb8] sm:$0xff]
    %v1027 = vld [vmem:[#allocation6 + $0xc0] sm:$0xf]
    %v1028 = vld [vmem:[#allocation6 + $0xc4] sm:$0xff]
    %v1029 = vld [vmem:[#allocation6 + $0xcc] sm:$0xff]
    %v1030 = vld [vmem:[#allocation6 + $0xd4] sm:$0xff]
    %v1031 = vld [vmem:[#allocation6 + $0xdc] sm:$0xf]
    %v1032 = vld [vmem:[#allocation6 + $0xe0] sm:$0xff]
    %v1033 = vld [vmem:[#allocation6 + $0xe8] sm:$0xff]
    %v1034 = vld [vmem:[#allocation6 + $0xf0] sm:$0xff]
    %v1035 = vld [vmem:[#allocation6 + $0xf8] sm:$0xf]
    %v1036 = vld [vmem:[#allocation6 + $0xfc] sm:$0xff]
    %v1037 = vld [vmem:[#allocation6 + $0x104] sm:$0xff]
    %v1038 = vld [vmem:[#allocation6 + $0x10c] sm:$0xff]
    %v1039 = vld [vmem:[#allocation6 + $0x114] sm:$0xf]
    %v1040 = vld [vmem:[#allocation6 + $0x118] sm:$0xff]
    %v1041 = vld [vmem:[#allocation6 + $0x120] sm:$0xff]
    %v1042 = vld [vmem:[#allocation6 + $0x128] sm:$0xff]
    %v1043 = vld [vmem:[#allocation6 + $0x130] sm:$0xf]
    %v1044 = vld [vmem:[#allocation6 + $0x134] sm:$0xff]
    %v1045 = vld [vmem:[#allocation6 + $0x13c] sm:$0xff]
    %v1046 = vld [vmem:[#allocation6 + $0x144] sm:$0xff]
    %v1047 = vld [vmem:[#allocation6 + $0x14c] sm:$0xf]
    %v1048 = vld [vmem:[#allocation6 + $0x150] sm:$0xff]
    %v1049 = vld [vmem:[#allocation6 + $0x158] sm:$0xff]
    %v1050 = vld [vmem:[#allocation6 + $0x160] sm:$0xff]
    %v1051 = vld [vmem:[#allocation6 + $0x168] sm:$0xf]
    %v1052 = vld [vmem:[#allocation6 + $0x16c] sm:$0xff]
    %v1053 = vld [vmem:[#allocation6 + $0x174] sm:$0xff]
    %v1054 = vld [vmem:[#allocation6 + $0x17c] sm:$0xff]
    %v1055 = vld [vmem:[#allocation6 + $0x184] sm:$0xf]
    %v1056 = vld [vmem:[#allocation6 + $0x188] sm:$0xff]
    %v1057 = vld [vmem:[#allocation6 + $0x190] sm:$0xff]
    %v1058 = vld [vmem:[#allocation6 + $0x198] sm:$0xff]
    %v1059 = vld [vmem:[#allocation6 + $0x1a0] sm:$0xf]
    %v1060 = vld [vmem:[#allocation6 + $0x1a4] sm:$0xff]
    %v1061 = vld [vmem:[#allocation6 + $0x1ac] sm:$0xff]
    %v1062 = vld [vmem:[#allocation6 + $0x1b4] sm:$0xff]
    %v1063 = vld [vmem:[#allocation6 + $0x1bc] sm:$0xf]
    %v1064 = vld [vmem:[#allocation6 + $0x1c0] sm:$0xff]
    %v1065 = vld [vmem:[#allocation6 + $0x1c8] sm:$0xff]
    %v1066 = vld [vmem:[#allocation6 + $0x1d0] sm:$0xff]
    %v1067 = vld [vmem:[#allocation6 + $0x1d8] sm:$0xf]
    %v1068 = vld [vmem:[#allocation6 + $0x1dc] sm:$0xff]
    %v1069 = vld [vmem:[#allocation6 + $0x1e4] sm:$0xff]
    %v1070 = vld [vmem:[#allocation6 + $0x1ec] sm:$0xff]
    %v1071 = vld [vmem:[#allocation6 + $0x1f4] sm:$0xf]
    %v1072 = vld [vmem:[#allocation6 + $0x1f8] sm:$0xff]
    %v1073 = vld [vmem:[#allocation6 + $0x200] sm:$0xff]
    %v1074 = vld [vmem:[#allocation6 + $0x208] sm:$0xff]
    %v1075 = vld [vmem:[#allocation6 + $0x210] sm:$0xf]
    %v1076 = vld [vmem:[#allocation6 + $0x214] sm:$0xff]
    %v1077 = vld [vmem:[#allocation6 + $0x21c] sm:$0xff]
    %v1078 = vld [vmem:[#allocation6 + $0x224] sm:$0xff]
    %v1079 = vld [vmem:[#allocation6 + $0x22c] sm:$0xf]
    %v1080 = vld [vmem:[#allocation6 + $0x230] sm:$0xff]
    %v1081 = vld [vmem:[#allocation6 + $0x238] sm:$0xff]
    %v1082 = vld [vmem:[#allocation6 + $0x240] sm:$0xff]
    %v1083 = vld [vmem:[#allocation6 + $0x248] sm:$0xf]
    %v1084 = vld [vmem:[#allocation6 + $0x24c] sm:$0xff]
    %v1085 = vld [vmem:[#allocation6 + $0x254] sm:$0xff]
    %v1086 = vld [vmem:[#allocation6 + $0x25c] sm:$0xff]
    %v1087 = vld [vmem:[#allocation6 + $0x264] sm:$0xf]
    %v1088 = vld [vmem:[#allocation6 + $0x268] sm:$0xff]
    %v1089 = vld [vmem:[#allocation6 + $0x270] sm:$0xff]
    %v1090 = vld [vmem:[#allocation6 + $0x278] sm:$0xff]
    %v1091 = vld [vmem:[#allocation6 + $0x280] sm:$0xf]
    %v1092 = vld [vmem:[#allocation6 + $0x284] sm:$0xff]
    %v1093 = vld [vmem:[#allocation6 + $0x28c] sm:$0xff]
    %v1094 = vld [vmem:[#allocation6 + $0x294] sm:$0xff]
    %v1095 = vld [vmem:[#allocation6 + $0x29c] sm:$0xf]
    %v1096 = vld [vmem:[#allocation6 + $0x2a0] sm:$0xff]
    %v1097 = vld [vmem:[#allocation6 + $0x2a8] sm:$0xff]
    %v1098 = vld [vmem:[#allocation6 + $0x2b0] sm:$0xff]
    %v1099 = vld [vmem:[#allocation6 + $0x2b8] sm:$0xf]
    %v1100 = vld [vmem:[#allocation6 + $0x2bc] sm:$0xff]
    %v1101 = vld [vmem:[#allocation6 + $0x2c4] sm:$0xff]
    %v1102 = vld [vmem:[#allocation6 + $0x2cc] sm:$0xff]
    %v1103 = vld [vmem:[#allocation6 + $0x2d4] sm:$0xf]
    %v1104 = vld [vmem:[#allocation6 + $0x2d8] sm:$0xff]
    %v1105 = vld [vmem:[#allocation6 + $0x2e0] sm:$0xff]
    %v1106 = vld [vmem:[#allocation6 + $0x2e8] sm:$0xff]
    %v1107 = vld [vmem:[#allocation6 + $0x2f0] sm:$0xf]
    %v1108 = vld [vmem:[#allocation6 + $0x2f4] sm:$0xff]
    %v1109 = vld [vmem:[#allocation6 + $0x2fc] sm:$0xff]
    %v1110 = vld [vmem:[#allocation6 + $0x304] sm:$0xff]
    %v1111 = vld [vmem:[#allocation6 + $0x30c] sm:$0xf]
    %v1112 = vld [vmem:[#allocation6 + $0x310] sm:$0xff]
    %v1113 = vld [vmem:[#allocation6 + $0x318] sm:$0xff]
    %v1114 = vld [vmem:[#allocation6 + $0x320] sm:$0xff]
    %v1115 = vld [vmem:[#allocation6 + $0x328] sm:$0xf]
    %v1116 = vld [vmem:[#allocation6 + $0x32c] sm:$0xff]
    %v1117 = vld [vmem:[#allocation6 + $0x334] sm:$0xff]
    %v1118 = vld [vmem:[#allocation6 + $0x33c] sm:$0xff]
    %v1119 = vld [vmem:[#allocation6 + $0x344] sm:$0xf]
    %v1120 = vld [vmem:[#allocation6 + $0x348] sm:$0xff]
    %v1121 = vld [vmem:[#allocation6 + $0x350] sm:$0xff]
    %v1122 = vld [vmem:[#allocation6 + $0x358] sm:$0xff]
    %v1123 = vld [vmem:[#allocation6 + $0x360] sm:$0xf]
    %v1124 = vld [vmem:[#allocation6 + $0x364] sm:$0xff]
    %v1125 = vld [vmem:[#allocation6 + $0x36c] sm:$0xff]
    %v1126 = vld [vmem:[#allocation6 + $0x374] sm:$0xff]
    %v1127 = vld [vmem:[#allocation6 + $0x37c] sm:$0xf]
    %v1128 = vld [vmem:[#allocation6 + $0x380] sm:$0xff]
    %v1129 = vld [vmem:[#allocation6 + $0x388] sm:$0xff]
    %v1130 = vld [vmem:[#allocation6 + $0x390] sm:$0xff]
    %v1131 = vld [vmem:[#allocation6 + $0x398] sm:$0xf]
    %v1132 = vld [vmem:[#allocation6 + $0x39c] sm:$0xff]
    %v1133 = vld [vmem:[#allocation6 + $0x3a4] sm:$0xff]
    %v1134 = vld [vmem:[#allocation6 + $0x3ac] sm:$0xff]
    %v1135 = vld [vmem:[#allocation6 + $0x3b4] sm:$0xf]
    %v1136 = vld [vmem:[#allocation6 + $0x3b8] sm:$0xff]
    %v1137 = vld [vmem:[#allocation6 + $0x3c0] sm:$0xff]
    %v1138 = vld [vmem:[#allocation6 + $0x3c8] sm:$0xff]
    %v1139 = vld [vmem:[#allocation6 + $0x3d0] sm:$0xf]
    %v1140 = vld [vmem:[#allocation6 + $0x3d4] sm:$0xff]
    %v1141 = vld [vmem:[#allocation6 + $0x3dc] sm:$0xff]
    %v1142 = vld [vmem:[#allocation6 + $0x3e4] sm:$0xff]
    %v1143 = vld [vmem:[#allocation6 + $0x3ec] sm:$0xf]
    %v1144 = vld [vmem:[#allocation6 + $0x3f0] sm:$0xff]
    %v1145 = vld [vmem:[#allocation6 + $0x3f8] sm:$0xff]
    %v1146 = vld [vmem:[#allocation6 + $0x400] sm:$0xff]
    %v1147 = vld [vmem:[#allocation6 + $0x408] sm:$0xf]
    %v1148 = vld [vmem:[#allocation6 + $0x40c] sm:$0xff]
    %v1149 = vld [vmem:[#allocation6 + $0x414] sm:$0xff]
    %v1150 = vld [vmem:[#allocation6 + $0x41c] sm:$0xff]
    %v1151 = vld [vmem:[#allocation6 + $0x424] sm:$0xf]
    %v1152 = vld [vmem:[#allocation6 + $0x428] sm:$0xff]
    %v1153 = vld [vmem:[#allocation6 + $0x430] sm:$0xff]
    %v1154 = vld [vmem:[#allocation6 + $0x438] sm:$0xff]
    %v1155 = vld [vmem:[#allocation6 + $0x440] sm:$0xf]
    %v1156 = vld [vmem:[#allocation6 + $0x444] sm:$0xff]
    %v1157 = vld [vmem:[#allocation6 + $0x44c] sm:$0xff]
    %v1158 = vld [vmem:[#allocation6 + $0x454] sm:$0xff]
    %v1159 = vld [vmem:[#allocation6 + $0x45c] sm:$0xf]
    %v1160 = vld [vmem:[#allocation6 + $0x460] sm:$0xff]
    %v1161 = vld [vmem:[#allocation6 + $0x468] sm:$0xff]
    %v1162 = vld [vmem:[#allocation6 + $0x470] sm:$0xff]
    %v1163 = vld [vmem:[#allocation6 + $0x478] sm:$0xf]
    %v1164 = vld [vmem:[#allocation6 + $0x47c] sm:$0xff]
    %v1165 = vld [vmem:[#allocation6 + $0x484] sm:$0xff]
    %v1166 = vld [vmem:[#allocation6 + $0x48c] sm:$0xff]
    %v1167 = vld [vmem:[#allocation6 + $0x494] sm:$0xf]
    %v1168 = vld [vmem:[#allocation6 + $0x498] sm:$0xff]
    %v1169 = vld [vmem:[#allocation6 + $0x4a0] sm:$0xff]
    %v1170 = vld [vmem:[#allocation6 + $0x4a8] sm:$0xff]
    %v1171 = vld [vmem:[#allocation6 + $0x4b0] sm:$0xf]
    %v1172 = vld [vmem:[#allocation6 + $0x4b4] sm:$0xff]
    %v1173 = vld [vmem:[#allocation6 + $0x4bc] sm:$0xff]
    %v1174 = vld [vmem:[#allocation6 + $0x4c4] sm:$0xff]
    %v1175 = vld [vmem:[#allocation6 + $0x4cc] sm:$0xf]
    %v1176 = vld [vmem:[#allocation6 + $0x4d0] sm:$0xff]
    %v1177 = vld [vmem:[#allocation6 + $0x4d8] sm:$0xff]
    %v1178 = vld [vmem:[#allocation6 + $0x4e0] sm:$0xff]
    %v1179 = vld [vmem:[#allocation6 + $0x4e8] sm:$0xf]
    %v1180 = vld [vmem:[#allocation6 + $0x4ec] sm:$0xff]
    %v1181 = vld [vmem:[#allocation6 + $0x4f4] sm:$0xff]
    %v1182 = vld [vmem:[#allocation6 + $0x4fc] sm:$0xff]
    %v1183 = vld [vmem:[#allocation6 + $0x504] sm:$0xf]
    %v1184 = vld [vmem:[#allocation6 + $0x508] sm:$0xff]
    %v1185 = vld [vmem:[#allocation6 + $0x510] sm:$0xff]
    %v1186 = vld [vmem:[#allocation6 + $0x518] sm:$0xff]
    %v1187 = vld [vmem:[#allocation6 + $0x520] sm:$0xf]
    %v1188 = vld [vmem:[#allocation6 + $0x524] sm:$0xff]
    %v1189 = vld [vmem:[#allocation6 + $0x52c] sm:$0xff]
    %v1190 = vld [vmem:[#allocation6 + $0x534] sm:$0xff]
    %v1191 = vld [vmem:[#allocation6 + $0x53c] sm:$0xf]
    %v1192 = vld [vmem:[#allocation6 + $0x540] sm:$0xff]
    %v1193 = vld [vmem:[#allocation6 + $0x548] sm:$0xff]
    %v1194 = vld [vmem:[#allocation6 + $0x550] sm:$0xff]
    %v1195 = vld [vmem:[#allocation6 + $0x558] sm:$0xf]
    %v1196 = vld [vmem:[#allocation6 + $0x55c] sm:$0xff]
    %v1197 = vld [vmem:[#allocation6 + $0x564] sm:$0xff]
    %v1198 = vld [vmem:[#allocation6 + $0x56c] sm:$0xff]
    %v1199 = vld [vmem:[#allocation6 + $0x574] sm:$0xf]
    %v1200 = vld [vmem:[#allocation6 + $0x578] sm:$0xff]
    %v1201 = vld [vmem:[#allocation6 + $0x580] sm:$0xff]
    %v1202 = vld [vmem:[#allocation6 + $0x588] sm:$0xff]
    %v1203 = vld [vmem:[#allocation6 + $0x590] sm:$0xf]
    %v1204 = vld [vmem:[#allocation6 + $0x594] sm:$0xff]
    %v1205 = vld [vmem:[#allocation6 + $0x59c] sm:$0xff]
    %v1206 = vld [vmem:[#allocation6 + $0x5a4] sm:$0xff]
    %v1207 = vld [vmem:[#allocation6 + $0x5ac] sm:$0xf]
    %v1208 = vld [vmem:[#allocation6 + $0x5b0] sm:$0xff]
    %v1209 = vld [vmem:[#allocation6 + $0x5b8] sm:$0xff]
    %v1210 = vld [vmem:[#allocation6 + $0x5c0] sm:$0xff]
    %v1211 = vld [vmem:[#allocation6 + $0x5c8] sm:$0xf]
    %v1212 = vld [vmem:[#allocation6 + $0x5cc] sm:$0xff]
    %v1213 = vld [vmem:[#allocation6 + $0x5d4] sm:$0xff]
    %v1214 = vld [vmem:[#allocation6 + $0x5dc] sm:$0xff]
    %v1215 = vld [vmem:[#allocation6 + $0x5e4] sm:$0xf]
    %v1216 = vld [vmem:[#allocation6 + $0x5e8] sm:$0xff]
    %v1217 = vld [vmem:[#allocation6 + $0x5f0] sm:$0xff]
    %v1218 = vld [vmem:[#allocation6 + $0x5f8] sm:$0xff]
    %v1219 = vld [vmem:[#allocation6 + $0x600] sm:$0xf]
    %v1220 = vld [vmem:[#allocation6 + $0x604] sm:$0xff]
    %v1221 = vld [vmem:[#allocation6 + $0x60c] sm:$0xff]
    %v1222 = vld [vmem:[#allocation6 + $0x614] sm:$0xff]
    %v1223 = vld [vmem:[#allocation6 + $0x61c] sm:$0xf]
    %v1224 = vld [vmem:[#allocation6 + $0x620] sm:$0xff]
    %v1225 = vld [vmem:[#allocation6 + $0x628] sm:$0xff]
    %v1226 = vld [vmem:[#allocation6 + $0x630] sm:$0xff]
    %v1227 = vld [vmem:[#allocation6 + $0x638] sm:$0xf]
    %v1228 = vld [vmem:[#allocation6 + $0x63c] sm:$0xff]
    %v1229 = vld [vmem:[#allocation6 + $0x644] sm:$0xff]
    %v1230 = vld [vmem:[#allocation6 + $0x64c] sm:$0xff]
    %v1231 = vld [vmem:[#allocation6 + $0x654] sm:$0xf]
    %v1232 = vld [vmem:[#allocation6 + $0x658] sm:$0xff]
    %v1233 = vld [vmem:[#allocation6 + $0x660] sm:$0xff]
    %v1234 = vld [vmem:[#allocation6 + $0x668] sm:$0xff]
    %v1235 = vld [vmem:[#allocation6 + $0x670] sm:$0xf]
    %v1236 = vld [vmem:[#allocation6 + $0x674] sm:$0xff]
    %v1237 = vld [vmem:[#allocation6 + $0x67c] sm:$0xff]
    %v1238 = vld [vmem:[#allocation6 + $0x684] sm:$0xff]
    %v1239 = vld [vmem:[#allocation6 + $0x68c] sm:$0xf]
    %v1240 = vld [vmem:[#allocation6 + $0x690] sm:$0xff]
    %v1241 = vld [vmem:[#allocation6 + $0x698] sm:$0xff]
    %v1242 = vld [vmem:[#allocation6 + $0x6a0] sm:$0xff]
    %v1243 = vld [vmem:[#allocation6 + $0x6a8] sm:$0xf]
    %v1244 = vld [vmem:[#allocation6 + $0x6ac] sm:$0xff]
    %v1245 = vld [vmem:[#allocation6 + $0x6b4] sm:$0xff]
    %v1246 = vld [vmem:[#allocation6 + $0x6bc] sm:$0xff]
    %v1247 = vld [vmem:[#allocation6 + $0x6c4] sm:$0xf]
    %v1248 = vld [vmem:[#allocation6 + $0x6c8] sm:$0xff]
    %v1249 = vld [vmem:[#allocation6 + $0x6d0] sm:$0xff]
    %v1250 = vld [vmem:[#allocation6 + $0x6d8] sm:$0xff]
    %v1251 = vld [vmem:[#allocation6 + $0x6e0] sm:$0xf]
    %v1252 = vld [vmem:[#allocation6 + $0x6e4] sm:$0xff]
    %v1253 = vld [vmem:[#allocation6 + $0x6ec] sm:$0xff]
    %v1254 = vld [vmem:[#allocation6 + $0x6f4] sm:$0xff]
    %v1255 = vld [vmem:[#allocation6 + $0x6fc] sm:$0xf]
    %v1256 = vld [vmem:[#allocation6 + $0x700] sm:$0xff]
    %v1257 = vld [vmem:[#allocation6 + $0x708] sm:$0xff]
    %v1258 = vld [vmem:[#allocation6 + $0x710] sm:$0xff]
    %v1259 = vld [vmem:[#allocation6 + $0x718] sm:$0xf]
    %v1260 = vld [vmem:[#allocation6 + $0x71c] sm:$0xff]
    %v1261 = vld [vmem:[#allocation6 + $0x724] sm:$0xff]
    %v1262 = vld [vmem:[#allocation6 + $0x72c] sm:$0xff]
    %v1263 = vld [vmem:[#allocation6 + $0x734] sm:$0xf]
    %v1264 = vld [vmem:[#allocation6 + $0x738] sm:$0xff]
    %v1265 = vld [vmem:[#allocation6 + $0x740] sm:$0xff]
    %v1266 = vld [vmem:[#allocation6 + $0x748] sm:$0xff]
    %v1267 = vld [vmem:[#allocation6 + $0x750] sm:$0xf]
    %v1268 = vld [vmem:[#allocation6 + $0x754] sm:$0xff]
    %v1269 = vld [vmem:[#allocation6 + $0x75c] sm:$0xff]
    %v1270 = vld [vmem:[#allocation6 + $0x764] sm:$0xff]
    %v1271 = vld [vmem:[#allocation6 + $0x76c] sm:$0xf]
    %v1272 = vld [vmem:[#allocation6 + $0x770] sm:$0xff]
    %v1273 = vld [vmem:[#allocation6 + $0x778] sm:$0xff]
    %v1274 = vld [vmem:[#allocation6 + $0x780] sm:$0xff]
    %v1275 = vld [vmem:[#allocation6 + $0x788] sm:$0xf]
    %v1276 = vld [vmem:[#allocation6 + $0x78c] sm:$0xff]
    %v1277 = vld [vmem:[#allocation6 + $0x794] sm:$0xff]
    %v1278 = vld [vmem:[#allocation6 + $0x79c] sm:$0xff]
    %v1279 = vld [vmem:[#allocation6 + $0x7a4] sm:$0xf]
    %v1280 = vld [vmem:[#allocation6 + $0x7a8] sm:$0xff]
    %v1281 = vld [vmem:[#allocation6 + $0x7b0] sm:$0xff]
    %v1282 = vld [vmem:[#allocation6 + $0x7b8] sm:$0xff]
    %v1283 = vld [vmem:[#allocation6 + $0x7c0] sm:$0xf]
    %v1284 = vld [vmem:[#allocation6 + $0x7c4] sm:$0xff]
    %v1285 = vld [vmem:[#allocation6 + $0x7cc] sm:$0xff]
    %v1286 = vld [vmem:[#allocation6 + $0x7d4] sm:$0xff]
    %v1287 = vld [vmem:[#allocation6 + $0x7dc] sm:$0xf]
    %v1288 = vld [vmem:[#allocation6 + $0x7e0] sm:$0xff]
    %v1289 = vld [vmem:[#allocation6 + $0x7e8] sm:$0xff]
    %v1290 = vld [vmem:[#allocation6 + $0x7f0] sm:$0xff]
    %v1291 = vld [vmem:[#allocation6 + $0x7f8] sm:$0xf]
    %v1292 = vld [vmem:[#allocation6 + $0x7fc] sm:$0xff]
    %v1293 = vld [vmem:[#allocation6 + $0x804] sm:$0xff]
    %v1294 = vld [vmem:[#allocation6 + $0x80c] sm:$0xff]
    %v1295 = vld [vmem:[#allocation6 + $0x814] sm:$0xf]
    %v1296 = vld [vmem:[#allocation6 + $0x818] sm:$0xff]
    %v1297 = vld [vmem:[#allocation6 + $0x820] sm:$0xff]
    %v1298 = vld [vmem:[#allocation6 + $0x828] sm:$0xff]
    %v1299 = vld [vmem:[#allocation6 + $0x830] sm:$0xf]
    %v1300 = vld [vmem:[#allocation6 + $0x834] sm:$0xff]
    %v1301 = vld [vmem:[#allocation6 + $0x83c] sm:$0xff]
    %v1302 = vld [vmem:[#allocation6 + $0x844] sm:$0xff]
    %v1303 = vld [vmem:[#allocation6 + $0x84c] sm:$0xf]
    %v1304 = vld [vmem:[#allocation6 + $0x850] sm:$0xff]
    %v1305 = vld [vmem:[#allocation6 + $0x858] sm:$0xff]
    %v1306 = vld [vmem:[#allocation6 + $0x860] sm:$0xff]
    %v1307 = vld [vmem:[#allocation6 + $0x868] sm:$0xf]
    %v1308 = vld [vmem:[#allocation6 + $0x86c] sm:$0xff]
    %v1309 = vld [vmem:[#allocation6 + $0x874] sm:$0xff]
    %v1310 = vld [vmem:[#allocation6 + $0x87c] sm:$0xff]
    %v1311 = vld [vmem:[#allocation6 + $0x884] sm:$0xf]
    %v1312 = vld [vmem:[#allocation6 + $0x888] sm:$0xff]
    %v1313 = vld [vmem:[#allocation6 + $0x890] sm:$0xff]
    %v1314 = vld [vmem:[#allocation6 + $0x898] sm:$0xff]
    %v1315 = vld [vmem:[#allocation6 + $0x8a0] sm:$0xf]
    %v1316 = vld [vmem:[#allocation6 + $0x8a4] sm:$0xff]
    %v1317 = vld [vmem:[#allocation6 + $0x8ac] sm:$0xff]
    %v1318 = vld [vmem:[#allocation6 + $0x8b4] sm:$0xff]
    %v1319 = vld [vmem:[#allocation6 + $0x8bc] sm:$0xf]
    %v1320 = vld [vmem:[#allocation6 + $0x8c0] sm:$0xff]
    %v1321 = vld [vmem:[#allocation6 + $0x8c8] sm:$0xff]
    %v1322 = vld [vmem:[#allocation6 + $0x8d0] sm:$0xff]
    %v1323 = vld [vmem:[#allocation6 + $0x8d8] sm:$0xf]
    %v1324 = vld [vmem:[#allocation6 + $0x8dc] sm:$0xff]
    %v1325 = vld [vmem:[#allocation6 + $0x8e4] sm:$0xff]
    %v1326 = vld [vmem:[#allocation6 + $0x8ec] sm:$0xff]
    %v1327 = vld [vmem:[#allocation6 + $0x8f4] sm:$0xf]
    %v1328 = vld [vmem:[#allocation6 + $0x8f8] sm:$0xff]
    %v1329 = vld [vmem:[#allocation6 + $0x900] sm:$0xff]
    %v1330 = vld [vmem:[#allocation6 + $0x908] sm:$0xff]
    %v1331 = vld [vmem:[#allocation6 + $0x910] sm:$0xf]
    %v1332 = vld [vmem:[#allocation6 + $0x914] sm:$0xff]
    %v1333 = vld [vmem:[#allocation6 + $0x91c] sm:$0xff]
    %v1334 = vld [vmem:[#allocation6 + $0x924] sm:$0xff]
    %v1335 = vld [vmem:[#allocation6 + $0x92c] sm:$0xf]
    %v1336 = vld [vmem:[#allocation6 + $0x930] sm:$0xff]
    %v1337 = vld [vmem:[#allocation6 + $0x938] sm:$0xff]
    %v1338 = vld [vmem:[#allocation6 + $0x940] sm:$0xff]
    %v1339 = vld [vmem:[#allocation6 + $0x948] sm:$0xf]
    %v1340 = vld [vmem:[#allocation6 + $0x94c] sm:$0xff]
    %v1341 = vld [vmem:[#allocation6 + $0x954] sm:$0xff]
    %v1342 = vld [vmem:[#allocation6 + $0x95c] sm:$0xff]
    %v1343 = vld [vmem:[#allocation6 + $0x964] sm:$0xf]
    %v1344 = vld [vmem:[#allocation6 + $0x968] sm:$0xff]
    %v1345 = vld [vmem:[#allocation6 + $0x970] sm:$0xff]
    %v1346 = vld [vmem:[#allocation6 + $0x978] sm:$0xff]
    %v1347 = vld [vmem:[#allocation6 + $0x980] sm:$0xf]
    %v1348 = vld [vmem:[#allocation6 + $0x984] sm:$0xff]
    %v1349 = vld [vmem:[#allocation6 + $0x98c] sm:$0xff]
    %v1350 = vld [vmem:[#allocation6 + $0x994] sm:$0xff]
    %v1351 = vld [vmem:[#allocation6 + $0x99c] sm:$0xf]
    %v1352 = vld [vmem:[#allocation6 + $0x9a0] sm:$0xff]
    %v1353 = vld [vmem:[#allocation6 + $0x9a8] sm:$0xff]
    %v1354 = vld [vmem:[#allocation6 + $0x9b0] sm:$0xff]
    %v1355 = vld [vmem:[#allocation6 + $0x9b8] sm:$0xf]
    %v1356 = vld [vmem:[#allocation6 + $0x9bc] sm:$0xff]
    %v1357 = vld [vmem:[#allocation6 + $0x9c4] sm:$0xff]
    %v1358 = vld [vmem:[#allocation6 + $0x9cc] sm:$0xff]
    %v1359 = vld [vmem:[#allocation6 + $0x9d4] sm:$0xf]
    %v1360 = vld [vmem:[#allocation6 + $0x9d8] sm:$0xff]
    %v1361 = vld [vmem:[#allocation6 + $0x9e0] sm:$0xff]
    %v1362 = vld [vmem:[#allocation6 + $0x9e8] sm:$0xff]
    %v1363 = vld [vmem:[#allocation6 + $0x9f0] sm:$0xf]
    %v1364 = vld [vmem:[#allocation6 + $0x9f4] sm:$0xff]
    %v1365 = vld [vmem:[#allocation6 + $0x9fc] sm:$0xff]
    %v1366 = vld [vmem:[#allocation6 + $0xa04] sm:$0xff]
    %v1367 = vld [vmem:[#allocation6 + $0xa0c] sm:$0xf]
    %v1368 = vld [vmem:[#allocation6 + $0xa10] sm:$0xff]
    %v1369 = vld [vmem:[#allocation6 + $0xa18] sm:$0xff]
    %v1370 = vld [vmem:[#allocation6 + $0xa20] sm:$0xff]
    %v1371 = vld [vmem:[#allocation6 + $0xa28] sm:$0xf]
    %v1372 = vld [vmem:[#allocation6 + $0xa2c] sm:$0xff]
    %v1373 = vld [vmem:[#allocation6 + $0xa34] sm:$0xff]
    %v1374 = vld [vmem:[#allocation6 + $0xa3c] sm:$0xff]
    %v1375 = vld [vmem:[#allocation6 + $0xa44] sm:$0xf]
    %v1376 = vld [vmem:[#allocation6 + $0xa48] sm:$0xff]
    %v1377 = vld [vmem:[#allocation6 + $0xa50] sm:$0xff]
    %v1378 = vld [vmem:[#allocation6 + $0xa58] sm:$0xff]
    %v1379 = vld [vmem:[#allocation6 + $0xa60] sm:$0xf]
    %v1380 = vld [vmem:[#allocation6 + $0xa64] sm:$0xff]
    %v1381 = vld [vmem:[#allocation6 + $0xa6c] sm:$0xff]
    %v1382 = vld [vmem:[#allocation6 + $0xa74] sm:$0xff]
    %v1383 = vld [vmem:[#allocation6 + $0xa7c] sm:$0xf]
    %v1384 = vld [vmem:[#allocation6 + $0xa80] sm:$0xff]
    %v1385 = vld [vmem:[#allocation6 + $0xa88] sm:$0xff]
    %v1386 = vld [vmem:[#allocation6 + $0xa90] sm:$0xff]
    %v1387 = vld [vmem:[#allocation6 + $0xa98] sm:$0xf]
    %v1388 = vld [vmem:[#allocation6 + $0xa9c] sm:$0xff]
    %v1389 = vld [vmem:[#allocation6 + $0xaa4] sm:$0xff]
    %v1390 = vld [vmem:[#allocation6 + $0xaac] sm:$0xff]
    %v1391 = vld [vmem:[#allocation6 + $0xab4] sm:$0xf]
    %v1392 = vld [vmem:[#allocation10 + $0x9] sm:$0x7f]
    %v1394 = vlaneseq
    %v1395 = vshrl.u32 %v1394, 7
    %v1396 = vsub.s32 0, %v1395
    %v1397 = vrot.slane %v1392, %v1396
    %v1398 = vlaneseq
    %v1399 = vshrl.u32 %v1398, 7
    %v1400 = vsub.s32 1, %v1399
    %v1401 = vrot.slane %v1392, %v1400
    %v1402 = vlaneseq
    %v1403 = vshrl.u32 %v1402, 7
    %v1404 = vsub.s32 2, %v1403
    %v1405 = vrot.slane %v1392, %v1404
    %v1406 = vlaneseq
    %v1407 = vshrl.u32 %v1406, 7
    %v1408 = vsub.s32 3, %v1407
    %v1409 = vrot.slane %v1392, %v1408
    %v1410 = vlaneseq
    %v1411 = vshrl.u32 %v1410, 7
    %v1412 = vsub.s32 4, %v1411
    %v1413 = vrot.slane %v1392, %v1412
    %v1414 = vlaneseq
    %v1415 = vshrl.u32 %v1414, 7
    %v1416 = vsub.s32 5, %v1415
    %v1417 = vrot.slane %v1392, %v1416
    %v1418 = vlaneseq
    %v1419 = vshrl.u32 %v1418, 7
    %v1420 = vsub.s32 6, %v1419
    %v1421 = vrot.slane %v1392, %v1420
    %v1821 = vunpack.c.l.b16 %v1000
    %v1822 = vunpack.c.h.b16 %v1000
    %v1823 = vunpack.c.l.b16 %v1001
    %v1824 = vunpack.c.h.b16 %v1001
    %v1825 = vunpack.c.l.b16 %v1002
    %v1826 = vunpack.c.h.b16 %v1002
    %v1827 = vunpack.c.l.b16 %v1003
    %v1828 = vunpack.c.l.b16 %v1004
    %v1829 = vunpack.c.h.b16 %v1004
    %v1830 = vunpack.c.l.b16 %v1005
    %v1831 = vunpack.c.h.b16 %v1005
    %v1832 = vunpack.c.l.b16 %v1006
    %v1833 = vunpack.c.h.b16 %v1006
    %v1834 = vunpack.c.l.b16 %v1007
    %v1835 = vunpack.c.l.b16 %v1008
    %v1836 = vunpack.c.h.b16 %v1008
    %v1837 = vunpack.c.l.b16 %v1009
    %v1838 = vunpack.c.h.b16 %v1009
    %v1839 = vunpack.c.l.b16 %v1010
    %v1840 = vunpack.c.h.b16 %v1010
    %v1841 = vunpack.c.l.b16 %v1011
    %v1842 = vunpack.c.l.b16 %v1012
    %v1843 = vunpack.c.h.b16 %v1012
    %v1844 = vunpack.c.l.b16 %v1013
    %v1845 = vunpack.c.h.b16 %v1013
    %v1846 = vunpack.c.l.b16 %v1014
    %v1847 = vunpack.c.h.b16 %v1014
    %v1848 = vunpack.c.l.b16 %v1015
    %v1849 = vunpack.c.l.b16 %v1016
    %v1850 = vunpack.c.h.b16 %v1016
    %v1851 = vunpack.c.l.b16 %v1017
    %v1852 = vunpack.c.h.b16 %v1017
    %v1853 = vunpack.c.l.b16 %v1018
    %v1854 = vunpack.c.h.b16 %v1018
    %v1855 = vunpack.c.l.b16 %v1019
    %v1856 = vunpack.c.l.b16 %v1020
    %v1857 = vunpack.c.h.b16 %v1020
    %v1858 = vunpack.c.l.b16 %v1021
    %v1859 = vunpack.c.h.b16 %v1021
    %v1860 = vunpack.c.l.b16 %v1022
    %v1861 = vunpack.c.h.b16 %v1022
    %v1862 = vunpack.c.l.b16 %v1023
    %v1863 = vunpack.c.l.b16 %v1024
    %v1864 = vunpack.c.h.b16 %v1024
    %v1865 = vunpack.c.l.b16 %v1025
    %v1866 = vunpack.c.h.b16 %v1025
    %v1867 = vunpack.c.l.b16 %v1026
    %v1868 = vunpack.c.h.b16 %v1026
    %v1869 = vunpack.c.l.b16 %v1027
    %v1870 = vunpack.c.l.b16 %v1028
    %v1871 = vunpack.c.h.b16 %v1028
    %v1872 = vunpack.c.l.b16 %v1029
    %v1873 = vunpack.c.h.b16 %v1029
    %v1874 = vunpack.c.l.b16 %v1030
    %v1875 = vunpack.c.h.b16 %v1030
    %v1876 = vunpack.c.l.b16 %v1031
    %v1877 = vunpack.c.l.b16 %v1032
    %v1878 = vunpack.c.h.b16 %v1032
    %v1879 = vunpack.c.l.b16 %v1033
    %v1880 = vunpack.c.h.b16 %v1033
    %v1881 = vunpack.c.l.b16 %v1034
    %v1882 = vunpack.c.h.b16 %v1034
    %v1883 = vunpack.c.l.b16 %v1035
    %v1884 = vunpack.c.l.b16 %v1036
    %v1885 = vunpack.c.h.b16 %v1036
    %v1886 = vunpack.c.l.b16 %v1037
    %v1887 = vunpack.c.h.b16 %v1037
    %v1888 = vunpack.c.l.b16 %v1038
    %v1889 = vunpack.c.h.b16 %v1038
    %v1890 = vunpack.c.l.b16 %v1039
    %v1891 = vunpack.c.l.b16 %v1040
    %v1892 = vunpack.c.h.b16 %v1040
    %v1893 = vunpack.c.l.b16 %v1041
    %v1894 = vunpack.c.h.b16 %v1041
    %v1895 = vunpack.c.l.b16 %v1042
    %v1896 = vunpack.c.h.b16 %v1042
    %v1897 = vunpack.c.l.b16 %v1043
    %v1898 = vunpack.c.l.b16 %v1044
    %v1899 = vunpack.c.h.b16 %v1044
    %v1900 = vunpack.c.l.b16 %v1045
    %v1901 = vunpack.c.h.b16 %v1045
    %v1902 = vunpack.c.l.b16 %v1046
    %v1903 = vunpack.c.h.b16 %v1046
    %v1904 = vunpack.c.l.b16 %v1047
    %v1905 = vunpack.c.l.b16 %v1048
    %v1906 = vunpack.c.h.b16 %v1048
    %v1907 = vunpack.c.l.b16 %v1049
    %v1908 = vunpack.c.h.b16 %v1049
    %v1909 = vunpack.c.l.b16 %v1050
    %v1910 = vunpack.c.h.b16 %v1050
    %v1911 = vunpack.c.l.b16 %v1051
    %v1912 = vunpack.c.l.b16 %v1052
    %v1913 = vunpack.c.h.b16 %v1052
    %v1914 = vunpack.c.l.b16 %v1053
    %v1915 = vunpack.c.h.b16 %v1053
    %v1916 = vunpack.c.l.b16 %v1054
    %v1917 = vunpack.c.h.b16 %v1054
    %v1918 = vunpack.c.l.b16 %v1055
    %v1919 = vunpack.c.l.b16 %v1056
    %v1920 = vunpack.c.h.b16 %v1056
    %v1921 = vunpack.c.l.b16 %v1057
    %v1922 = vunpack.c.h.b16 %v1057
    %v1923 = vunpack.c.l.b16 %v1058
    %v1924 = vunpack.c.h.b16 %v1058
    %v1925 = vunpack.c.l.b16 %v1059
    %v1926 = vunpack.c.l.b16 %v1060
    %v1927 = vunpack.c.h.b16 %v1060
    %v1928 = vunpack.c.l.b16 %v1061
    %v1929 = vunpack.c.h.b16 %v1061
    %v1930 = vunpack.c.l.b16 %v1062
    %v1931 = vunpack.c.h.b16 %v1062
    %v1932 = vunpack.c.l.b16 %v1063
    %v1933 = vunpack.c.l.b16 %v1064
    %v1934 = vunpack.c.h.b16 %v1064
    %v1935 = vunpack.c.l.b16 %v1065
    %v1936 = vunpack.c.h.b16 %v1065
    %v1937 = vunpack.c.l.b16 %v1066
    %v1938 = vunpack.c.h.b16 %v1066
    %v1939 = vunpack.c.l.b16 %v1067
    %v1940 = vunpack.c.l.b16 %v1068
    %v1941 = vunpack.c.h.b16 %v1068
    %v1942 = vunpack.c.l.b16 %v1069
    %v1943 = vunpack.c.h.b16 %v1069
    %v1944 = vunpack.c.l.b16 %v1070
    %v1945 = vunpack.c.h.b16 %v1070
    %v1946 = vunpack.c.l.b16 %v1071
    %v1947 = vunpack.c.l.b16 %v1072
    %v1948 = vunpack.c.h.b16 %v1072
    %v1949 = vunpack.c.l.b16 %v1073
    %v1950 = vunpack.c.h.b16 %v1073
    %v1951 = vunpack.c.l.b16 %v1074
    %v1952 = vunpack.c.h.b16 %v1074
    %v1953 = vunpack.c.l.b16 %v1075
    %v1954 = vunpack.c.l.b16 %v1076
    %v1955 = vunpack.c.h.b16 %v1076
    %v1956 = vunpack.c.l.b16 %v1077
    %v1957 = vunpack.c.h.b16 %v1077
    %v1958 = vunpack.c.l.b16 %v1078
    %v1959 = vunpack.c.h.b16 %v1078
    %v1960 = vunpack.c.l.b16 %v1079
    %v1961 = vunpack.c.l.b16 %v1080
    %v1962 = vunpack.c.h.b16 %v1080
    %v1963 = vunpack.c.l.b16 %v1081
    %v1964 = vunpack.c.h.b16 %v1081
    %v1965 = vunpack.c.l.b16 %v1082
    %v1966 = vunpack.c.h.b16 %v1082
    %v1967 = vunpack.c.l.b16 %v1083
    %v1968 = vunpack.c.l.b16 %v1084
    %v1969 = vunpack.c.h.b16 %v1084
    %v1970 = vunpack.c.l.b16 %v1085
    %v1971 = vunpack.c.h.b16 %v1085
    %v1972 = vunpack.c.l.b16 %v1086
    %v1973 = vunpack.c.h.b16 %v1086
    %v1974 = vunpack.c.l.b16 %v1087
    %v1975 = vunpack.c.l.b16 %v1088
    %v1976 = vunpack.c.h.b16 %v1088
    %v1977 = vunpack.c.l.b16 %v1089
    %v1978 = vunpack.c.h.b16 %v1089
    %v1979 = vunpack.c.l.b16 %v1090
    %v1980 = vunpack.c.h.b16 %v1090
    %v1981 = vunpack.c.l.b16 %v1091
    %v1982 = vunpack.c.l.b16 %v1092
    %v1983 = vunpack.c.h.b16 %v1092
    %v1984 = vunpack.c.l.b16 %v1093
    %v1985 = vunpack.c.h.b16 %v1093
    %v1986 = vunpack.c.l.b16 %v1094
    %v1987 = vunpack.c.h.b16 %v1094
    %v1988 = vunpack.c.l.b16 %v1095
    %v1989 = vunpack.c.l.b16 %v1096
    %v1990 = vunpack.c.h.b16 %v1096
    %v1991 = vunpack.c.l.b16 %v1097
    %v1992 = vunpack.c.h.b16 %v1097
    %v1993 = vunpack.c.l.b16 %v1098
    %v1994 = vunpack.c.h.b16 %v1098
    %v1995 = vunpack.c.l.b16 %v1099
    %v1996 = vunpack.c.l.b16 %v1100
    %v1997 = vunpack.c.h.b16 %v1100
    %v1998 = vunpack.c.l.b16 %v1101
    %v1999 = vunpack.c.h.b16 %v1101
    %v2000 = vunpack.c.l.b16 %v1102
    %v2001 = vunpack.c.h.b16 %v1102
    %v2002 = vunpack.c.l.b16 %v1103
    %v2003 = vunpack.c.l.b16 %v1104
    %v2004 = vunpack.c.h.b16 %v1104
    %v2005 = vunpack.c.l.b16 %v1105
    %v2006 = vunpack.c.h.b16 %v1105
    %v2007 = vunpack.c.l.b16 %v1106
    %v2008 = vunpack.c.h.b16 %v1106
    %v2009 = vunpack.c.l.b16 %v1107
    %v2010 = vunpack.c.l.b16 %v1108
    %v2011 = vunpack.c.h.b16 %v1108
    %v2012 = vunpack.c.l.b16 %v1109
    %v2013 = vunpack.c.h.b16 %v1109
    %v2014 = vunpack.c.l.b16 %v1110
    %v2015 = vunpack.c.h.b16 %v1110
    %v2016 = vunpack.c.l.b16 %v1111
    %v2017 = vunpack.c.l.b16 %v1112
    %v2018 = vunpack.c.h.b16 %v1112
    %v2019 = vunpack.c.l.b16 %v1113
    %v2020 = vunpack.c.h.b16 %v1113
    %v2021 = vunpack.c.l.b16 %v1114
    %v2022 = vunpack.c.h.b16 %v1114
    %v2023 = vunpack.c.l.b16 %v1115
    %v2024 = vunpack.c.l.b16 %v1116
    %v2025 = vunpack.c.h.b16 %v1116
    %v2026 = vunpack.c.l.b16 %v1117
    %v2027 = vunpack.c.h.b16 %v1117
    %v2028 = vunpack.c.l.b16 %v1118
    %v2029 = vunpack.c.h.b16 %v1118
    %v2030 = vunpack.c.l.b16 %v1119
    %v2031 = vunpack.c.l.b16 %v1120
    %v2032 = vunpack.c.h.b16 %v1120
    %v2033 = vunpack.c.l.b16 %v1121
    %v2034 = vunpack.c.h.b16 %v1121
    %v2035 = vunpack.c.l.b16 %v1122
    %v2036 = vunpack.c.h.b16 %v1122
    %v2037 = vunpack.c.l.b16 %v1123
    %v2038 = vunpack.c.l.b16 %v1124
    %v2039 = vunpack.c.h.b16 %v1124
    %v2040 = vunpack.c.l.b16 %v1125
    %v2041 = vunpack.c.h.b16 %v1125
    %v2042 = vunpack.c.l.b16 %v1126
    %v2043 = vunpack.c.h.b16 %v1126
    %v2044 = vunpack.c.l.b16 %v1127
    %v2045 = vunpack.c.l.b16 %v1128
    %v2046 = vunpack.c.h.b16 %v1128
    %v2047 = vunpack.c.l.b16 %v1129
    %v2048 = vunpack.c.h.b16 %v1129
    %v2049 = vunpack.c.l.b16 %v1130
    %v2050 = vunpack.c.h.b16 %v1130
    %v2051 = vunpack.c.l.b16 %v1131
    %v2052 = vunpack.c.l.b16 %v1132
    %v2053 = vunpack.c.h.b16 %v1132
    %v2054 = vunpack.c.l.b16 %v1133
    %v2055 = vunpack.c.h.b16 %v1133
    %v2056 = vunpack.c.l.b16 %v1134
    %v2057 = vunpack.c.h.b16 %v1134
    %v2058 = vunpack.c.l.b16 %v1135
    %v2059 = vunpack.c.l.b16 %v1136
    %v2060 = vunpack.c.h.b16 %v1136
    %v2061 = vunpack.c.l.b16 %v1137
    %v2062 = vunpack.c.h.b16 %v1137
    %v2063 = vunpack.c.l.b16 %v1138
    %v2064 = vunpack.c.h.b16 %v1138
    %v2065 = vunpack.c.l.b16 %v1139
    %v2066 = vunpack.c.l.b16 %v1140
    %v2067 = vunpack.c.h.b16 %v1140
    %v2068 = vunpack.c.l.b16 %v1141
    %v2069 = vunpack.c.h.b16 %v1141
    %v2070 = vunpack.c.l.b16 %v1142
    %v2071 = vunpack.c.h.b16 %v1142
    %v2072 = vunpack.c.l.b16 %v1143
    %v2073 = vunpack.c.l.b16 %v1144
    %v2074 = vunpack.c.h.b16 %v1144
    %v2075 = vunpack.c.l.b16 %v1145
    %v2076 = vunpack.c.h.b16 %v1145
    %v2077 = vunpack.c.l.b16 %v1146
    %v2078 = vunpack.c.h.b16 %v1146
    %v2079 = vunpack.c.l.b16 %v1147
    %v2080 = vunpack.c.l.b16 %v1148
    %v2081 = vunpack.c.h.b16 %v1148
    %v2082 = vunpack.c.l.b16 %v1149
    %v2083 = vunpack.c.h.b16 %v1149
    %v2084 = vunpack.c.l.b16 %v1150
    %v2085 = vunpack.c.h.b16 %v1150
    %v2086 = vunpack.c.l.b16 %v1151
    %v2087 = vunpack.c.l.b16 %v1152
    %v2088 = vunpack.c.h.b16 %v1152
    %v2089 = vunpack.c.l.b16 %v1153
    %v2090 = vunpack.c.h.b16 %v1153
    %v2091 = vunpack.c.l.b16 %v1154
    %v2092 = vunpack.c.h.b16 %v1154
    %v2093 = vunpack.c.l.b16 %v1155
    %v2094 = vunpack.c.l.b16 %v1156
    %v2095 = vunpack.c.h.b16 %v1156
    %v2096 = vunpack.c.l.b16 %v1157
    %v2097 = vunpack.c.h.b16 %v1157
    %v2098 = vunpack.c.l.b16 %v1158
    %v2099 = vunpack.c.h.b16 %v1158
    %v2100 = vunpack.c.l.b16 %v1159
    %v2101 = vunpack.c.l.b16 %v1160
    %v2102 = vunpack.c.h.b16 %v1160
    %v2103 = vunpack.c.l.b16 %v1161
    %v2104 = vunpack.c.h.b16 %v1161
    %v2105 = vunpack.c.l.b16 %v1162
    %v2106 = vunpack.c.h.b16 %v1162
    %v2107 = vunpack.c.l.b16 %v1163
    %v2108 = vunpack.c.l.b16 %v1164
    %v2109 = vunpack.c.h.b16 %v1164
    %v2110 = vunpack.c.l.b16 %v1165
    %v2111 = vunpack.c.h.b16 %v1165
    %v2112 = vunpack.c.l.b16 %v1166
    %v2113 = vunpack.c.h.b16 %v1166
    %v2114 = vunpack.c.l.b16 %v1167
    %v2115 = vunpack.c.l.b16 %v1168
    %v2116 = vunpack.c.h.b16 %v1168
    %v2117 = vunpack.c.l.b16 %v1169
    %v2118 = vunpack.c.h.b16 %v1169
    %v2119 = vunpack.c.l.b16 %v1170
    %v2120 = vunpack.c.h.b16 %v1170
    %v2121 = vunpack.c.l.b16 %v1171
    %v2122 = vunpack.c.l.b16 %v1172
    %v2123 = vunpack.c.h.b16 %v1172
    %v2124 = vunpack.c.l.b16 %v1173
    %v2125 = vunpack.c.h.b16 %v1173
    %v2126 = vunpack.c.l.b16 %v1174
    %v2127 = vunpack.c.h.b16 %v1174
    %v2128 = vunpack.c.l.b16 %v1175
    %v2129 = vunpack.c.l.b16 %v1176
    %v2130 = vunpack.c.h.b16 %v1176
    %v2131 = vunpack.c.l.b16 %v1177
    %v2132 = vunpack.c.h.b16 %v1177
    %v2133 = vunpack.c.l.b16 %v1178
    %v2134 = vunpack.c.h.b16 %v1178
    %v2135 = vunpack.c.l.b16 %v1179
    %v2136 = vunpack.c.l.b16 %v1180
    %v2137 = vunpack.c.h.b16 %v1180
    %v2138 = vunpack.c.l.b16 %v1181
    %v2139 = vunpack.c.h.b16 %v1181
    %v2140 = vunpack.c.l.b16 %v1182
    %v2141 = vunpack.c.h.b16 %v1182
    %v2142 = vunpack.c.l.b16 %v1183
    %v2143 = vunpack.c.l.b16 %v1184
    %v2144 = vunpack.c.h.b16 %v1184
    %v2145 = vunpack.c.l.b16 %v1185
    %v2146 = vunpack.c.h.b16 %v1185
    %v2147 = vunpack.c.l.b16 %v1186
    %v2148 = vunpack.c.h.b16 %v1186
    %v2149 = vunpack.c.l.b16 %v1187
    %v2150 = vunpack.c.l.b16 %v1188
    %v2151 = vunpack.c.h.b16 %v1188
    %v2152 = vunpack.c.l.b16 %v1189
    %v2153 = vunpack.c.h.b16 %v1189
    %v2154 = vunpack.c.l.b16 %v1190
    %v2155 = vunpack.c.h.b16 %v1190
    %v2156 = vunpack.c.l.b16 %v1191
    %v2157 = vunpack.c.l.b16 %v1192
    %v2158 = vunpack.c.h.b16 %v1192
    %v2159 = vunpack.c.l.b16 %v1193
    %v2160 = vunpack.c.h.b16 %v1193
    %v2161 = vunpack.c.l.b16 %v1194
    %v2162 = vunpack.c.h.b16 %v1194
    %v2163 = vunpack.c.l.b16 %v1195
    %v2164 = vunpack.c.l.b16 %v1196
    %v2165 = vunpack.c.h.b16 %v1196
    %v2166 = vunpack.c.l.b16 %v1197
    %v2167 = vunpack.c.h.b16 %v1197
    %v2168 = vunpack.c.l.b16 %v1198
    %v2169 = vunpack.c.h.b16 %v1198
    %v2170 = vunpack.c.l.b16 %v1199
    %v2171 = vunpack.c.l.b16 %v1200
    %v2172 = vunpack.c.h.b16 %v1200
    %v2173 = vunpack.c.l.b16 %v1201
    %v2174 = vunpack.c.h.b16 %v1201
    %v2175 = vunpack.c.l.b16 %v1202
    %v2176 = vunpack.c.h.b16 %v1202
    %v2177 = vunpack.c.l.b16 %v1203
    %v2178 = vunpack.c.l.b16 %v1204
    %v2179 = vunpack.c.h.b16 %v1204
    %v2180 = vunpack.c.l.b16 %v1205
    %v2181 = vunpack.c.h.b16 %v1205
    %v2182 = vunpack.c.l.b16 %v1206
    %v2183 = vunpack.c.h.b16 %v1206
    %v2184 = vunpack.c.l.b16 %v1207
    %v2185 = vunpack.c.l.b16 %v1208
    %v2186 = vunpack.c.h.b16 %v1208
    %v2187 = vunpack.c.l.b16 %v1209
    %v2188 = vunpack.c.h.b16 %v1209
    %v2189 = vunpack.c.l.b16 %v1210
    %v2190 = vunpack.c.h.b16 %v1210
    %v2191 = vunpack.c.l.b16 %v1211
    %v2192 = vunpack.c.l.b16 %v1212
    %v2193 = vunpack.c.h.b16 %v1212
    %v2194 = vunpack.c.l.b16 %v1213
    %v2195 = vunpack.c.h.b16 %v1213
    %v2196 = vunpack.c.l.b16 %v1214
    %v2197 = vunpack.c.h.b16 %v1214
    %v2198 = vunpack.c.l.b16 %v1215
    %v2199 = vunpack.c.l.b16 %v1216
    %v2200 = vunpack.c.h.b16 %v1216
    %v2201 = vunpack.c.l.b16 %v1217
    %v2202 = vunpack.c.h.b16 %v1217
    %v2203 = vunpack.c.l.b16 %v1218
    %v2204 = vunpack.c.h.b16 %v1218
    %v2205 = vunpack.c.l.b16 %v1219
    %v2206 = vunpack.c.l.b16 %v1220
    %v2207 = vunpack.c.h.b16 %v1220
    %v2208 = vunpack.c.l.b16 %v1221
    %v2209 = vunpack.c.h.b16 %v1221
    %v2210 = vunpack.c.l.b16 %v1222
    %v2211 = vunpack.c.h.b16 %v1222
    %v2212 = vunpack.c.l.b16 %v1223
    %v2213 = vunpack.c.l.b16 %v1224
    %v2214 = vunpack.c.h.b16 %v1224
    %v2215 = vunpack.c.l.b16 %v1225
    %v2216 = vunpack.c.h.b16 %v1225
    %v2217 = vunpack.c.l.b16 %v1226
    %v2218 = vunpack.c.h.b16 %v1226
    %v2219 = vunpack.c.l.b16 %v1227
    %v2220 = vunpack.c.l.b16 %v1228
    %v2221 = vunpack.c.h.b16 %v1228
    %v2222 = vunpack.c.l.b16 %v1229
    %v2223 = vunpack.c.h.b16 %v1229
    %v2224 = vunpack.c.l.b16 %v1230
    %v2225 = vunpack.c.h.b16 %v1230
    %v2226 = vunpack.c.l.b16 %v1231
    %v2227 = vunpack.c.l.b16 %v1232
    %v2228 = vunpack.c.h.b16 %v1232
    %v2229 = vunpack.c.l.b16 %v1233
    %v2230 = vunpack.c.h.b16 %v1233
    %v2231 = vunpack.c.l.b16 %v1234
    %v2232 = vunpack.c.h.b16 %v1234
    %v2233 = vunpack.c.l.b16 %v1235
    %v2234 = vunpack.c.l.b16 %v1236
    %v2235 = vunpack.c.h.b16 %v1236
    %v2236 = vunpack.c.l.b16 %v1237
    %v2237 = vunpack.c.h.b16 %v1237
    %v2238 = vunpack.c.l.b16 %v1238
    %v2239 = vunpack.c.h.b16 %v1238
    %v2240 = vunpack.c.l.b16 %v1239
    %v2241 = vunpack.c.l.b16 %v1240
    %v2242 = vunpack.c.h.b16 %v1240
    %v2243 = vunpack.c.l.b16 %v1241
    %v2244 = vunpack.c.h.b16 %v1241
    %v2245 = vunpack.c.l.b16 %v1242
    %v2246 = vunpack.c.h.b16 %v1242
    %v2247 = vunpack.c.l.b16 %v1243
    %v2248 = vunpack.c.l.b16 %v1244
    %v2249 = vunpack.c.h.b16 %v1244
    %v2250 = vunpack.c.l.b16 %v1245
    %v2251 = vunpack.c.h.b16 %v1245
    %v2252 = vunpack.c.l.b16 %v1246
    %v2253 = vunpack.c.h.b16 %v1246
    %v2254 = vunpack.c.l.b16 %v1247
    %v2255 = vunpack.c.l.b16 %v1248
    %v2256 = vunpack.c.h.b16 %v1248
    %v2257 = vunpack.c.l.b16 %v1249
    %v2258 = vunpack.c.h.b16 %v1249
    %v2259 = vunpack.c.l.b16 %v1250
    %v2260 = vunpack.c.h.b16 %v1250
    %v2261 = vunpack.c.l.b16 %v1251
    %v2262 = vunpack.c.l.b16 %v1252
    %v2263 = vunpack.c.h.b16 %v1252
    %v2264 = vunpack.c.l.b16 %v1253
    %v2265 = vunpack.c.h.b16 %v1253
    %v2266 = vunpack.c.l.b16 %v1254
    %v2267 = vunpack.c.h.b16 %v1254
    %v2268 = vunpack.c.l.b16 %v1255
    %v2269 = vunpack.c.l.b16 %v1256
    %v2270 = vunpack.c.h.b16 %v1256
    %v2271 = vunpack.c.l.b16 %v1257
    %v2272 = vunpack.c.h.b16 %v1257
    %v2273 = vunpack.c.l.b16 %v1258
    %v2274 = vunpack.c.h.b16 %v1258
    %v2275 = vunpack.c.l.b16 %v1259
    %v2276 = vunpack.c.l.b16 %v1260
    %v2277 = vunpack.c.h.b16 %v1260
    %v2278 = vunpack.c.l.b16 %v1261
    %v2279 = vunpack.c.h.b16 %v1261
    %v2280 = vunpack.c.l.b16 %v1262
    %v2281 = vunpack.c.h.b16 %v1262
    %v2282 = vunpack.c.l.b16 %v1263
    %v2283 = vunpack.c.l.b16 %v1264
    %v2284 = vunpack.c.h.b16 %v1264
    %v2285 = vunpack.c.l.b16 %v1265
    %v2286 = vunpack.c.h.b16 %v1265
    %v2287 = vunpack.c.l.b16 %v1266
    %v2288 = vunpack.c.h.b16 %v1266
    %v2289 = vunpack.c.l.b16 %v1267
    %v2290 = vunpack.c.l.b16 %v1268
    %v2291 = vunpack.c.h.b16 %v1268
    %v2292 = vunpack.c.l.b16 %v1269
    %v2293 = vunpack.c.h.b16 %v1269
    %v2294 = vunpack.c.l.b16 %v1270
    %v2295 = vunpack.c.h.b16 %v1270
    %v2296 = vunpack.c.l.b16 %v1271
    %v2297 = vunpack.c.l.b16 %v1272
    %v2298 = vunpack.c.h.b16 %v1272
    %v2299 = vunpack.c.l.b16 %v1273
    %v2300 = vunpack.c.h.b16 %v1273
    %v2301 = vunpack.c.l.b16 %v1274
    %v2302 = vunpack.c.h.b16 %v1274
    %v2303 = vunpack.c.l.b16 %v1275
    %v2304 = vunpack.c.l.b16 %v1276
    %v2305 = vunpack.c.h.b16 %v1276
    %v2306 = vunpack.c.l.b16 %v1277
    %v2307 = vunpack.c.h.b16 %v1277
    %v2308 = vunpack.c.l.b16 %v1278
    %v2309 = vunpack.c.h.b16 %v1278
    %v2310 = vunpack.c.l.b16 %v1279
    %v2311 = vunpack.c.l.b16 %v1280
    %v2312 = vunpack.c.h.b16 %v1280
    %v2313 = vunpack.c.l.b16 %v1281
    %v2314 = vunpack.c.h.b16 %v1281
    %v2315 = vunpack.c.l.b16 %v1282
    %v2316 = vunpack.c.h.b16 %v1282
    %v2317 = vunpack.c.l.b16 %v1283
    %v2318 = vunpack.c.l.b16 %v1284
    %v2319 = vunpack.c.h.b16 %v1284
    %v2320 = vunpack.c.l.b16 %v1285
    %v2321 = vunpack.c.h.b16 %v1285
    %v2322 = vunpack.c.l.b16 %v1286
    %v2323 = vunpack.c.h.b16 %v1286
    %v2324 = vunpack.c.l.b16 %v1287
    %v2325 = vunpack.c.l.b16 %v1288
    %v2326 = vunpack.c.h.b16 %v1288
    %v2327 = vunpack.c.l.b16 %v1289
    %v2328 = vunpack.c.h.b16 %v1289
    %v2329 = vunpack.c.l.b16 %v1290
    %v2330 = vunpack.c.h.b16 %v1290
    %v2331 = vunpack.c.l.b16 %v1291
    %v2332 = vunpack.c.l.b16 %v1292
    %v2333 = vunpack.c.h.b16 %v1292
    %v2334 = vunpack.c.l.b16 %v1293
    %v2335 = vunpack.c.h.b16 %v1293
    %v2336 = vunpack.c.l.b16 %v1294
    %v2337 = vunpack.c.h.b16 %v1294
    %v2338 = vunpack.c.l.b16 %v1295
    %v2339 = vunpack.c.l.b16 %v1296
    %v2340 = vunpack.c.h.b16 %v1296
    %v2341 = vunpack.c.l.b16 %v1297
    %v2342 = vunpack.c.h.b16 %v1297
    %v2343 = vunpack.c.l.b16 %v1298
    %v2344 = vunpack.c.h.b16 %v1298
    %v2345 = vunpack.c.l.b16 %v1299
    %v2346 = vunpack.c.l.b16 %v1300
    %v2347 = vunpack.c.h.b16 %v1300
    %v2348 = vunpack.c.l.b16 %v1301
    %v2349 = vunpack.c.h.b16 %v1301
    %v2350 = vunpack.c.l.b16 %v1302
    %v2351 = vunpack.c.h.b16 %v1302
    %v2352 = vunpack.c.l.b16 %v1303
    %v2353 = vunpack.c.l.b16 %v1304
    %v2354 = vunpack.c.h.b16 %v1304
    %v2355 = vunpack.c.l.b16 %v1305
    %v2356 = vunpack.c.h.b16 %v1305
    %v2357 = vunpack.c.l.b16 %v1306
    %v2358 = vunpack.c.h.b16 %v1306
    %v2359 = vunpack.c.l.b16 %v1307
    %v2360 = vunpack.c.l.b16 %v1308
    %v2361 = vunpack.c.h.b16 %v1308
    %v2362 = vunpack.c.l.b16 %v1309
    %v2363 = vunpack.c.h.b16 %v1309
    %v2364 = vunpack.c.l.b16 %v1310
    %v2365 = vunpack.c.h.b16 %v1310
    %v2366 = vunpack.c.l.b16 %v1311
    %v2367 = vunpack.c.l.b16 %v1312
    %v2368 = vunpack.c.h.b16 %v1312
    %v2369 = vunpack.c.l.b16 %v1313
    %v2370 = vunpack.c.h.b16 %v1313
    %v2371 = vunpack.c.l.b16 %v1314
    %v2372 = vunpack.c.h.b16 %v1314
    %v2373 = vunpack.c.l.b16 %v1315
    %v2374 = vunpack.c.l.b16 %v1316
    %v2375 = vunpack.c.h.b16 %v1316
    %v2376 = vunpack.c.l.b16 %v1317
    %v2377 = vunpack.c.h.b16 %v1317
    %v2378 = vunpack.c.l.b16 %v1318
    %v2379 = vunpack.c.h.b16 %v1318
    %v2380 = vunpack.c.l.b16 %v1319
    %v2381 = vunpack.c.l.b16 %v1320
    %v2382 = vunpack.c.h.b16 %v1320
    %v2383 = vunpack.c.l.b16 %v1321
    %v2384 = vunpack.c.h.b16 %v1321
    %v2385 = vunpack.c.l.b16 %v1322
    %v2386 = vunpack.c.h.b16 %v1322
    %v2387 = vunpack.c.l.b16 %v1323
    %v2388 = vunpack.c.l.b16 %v1324
    %v2389 = vunpack.c.h.b16 %v1324
    %v2390 = vunpack.c.l.b16 %v1325
    %v2391 = vunpack.c.h.b16 %v1325
    %v2392 = vunpack.c.l.b16 %v1326
    %v2393 = vunpack.c.h.b16 %v1326
    %v2394 = vunpack.c.l.b16 %v1327
    %v2395 = vunpack.c.l.b16 %v1328
    %v2396 = vunpack.c.h.b16 %v1328
    %v2397 = vunpack.c.l.b16 %v1329
    %v2398 = vunpack.c.h.b16 %v1329
    %v2399 = vunpack.c.l.b16 %v1330
    %v2400 = vunpack.c.h.b16 %v1330
    %v2401 = vunpack.c.l.b16 %v1331
    %v2402 = vunpack.c.l.b16 %v1332
    %v2403 = vunpack.c.h.b16 %v1332
    %v2404 = vunpack.c.l.b16 %v1333
    %v2405 = vunpack.c.h.b16 %v1333
    %v2406 = vunpack.c.l.b16 %v1334
    %v2407 = vunpack.c.h.b16 %v1334
    %v2408 = vunpack.c.l.b16 %v1335
    %v2409 = vunpack.c.l.b16 %v1336
    %v2410 = vunpack.c.h.b16 %v1336
    %v2411 = vunpack.c.l.b16 %v1337
    %v2412 = vunpack.c.h.b16 %v1337
    %v2413 = vunpack.c.l.b16 %v1338
    %v2414 = vunpack.c.h.b16 %v1338
    %v2415 = vunpack.c.l.b16 %v1339
    %v2416 = vunpack.c.l.b16 %v1340
    %v2417 = vunpack.c.h.b16 %v1340
    %v2418 = vunpack.c.l.b16 %v1341
    %v2419 = vunpack.c.h.b16 %v1341
    %v2420 = vunpack.c.l.b16 %v1342
    %v2421 = vunpack.c.h.b16 %v1342
    %v2422 = vunpack.c.l.b16 %v1343
    %v2423 = vunpack.c.l.b16 %v1344
    %v2424 = vunpack.c.h.b16 %v1344
    %v2425 = vunpack.c.l.b16 %v1345
    %v2426 = vunpack.c.h.b16 %v1345
    %v2427 = vunpack.c.l.b16 %v1346
    %v2428 = vunpack.c.h.b16 %v1346
    %v2429 = vunpack.c.l.b16 %v1347
    %v2430 = vunpack.c.l.b16 %v1348
    %v2431 = vunpack.c.h.b16 %v1348
    %v2432 = vunpack.c.l.b16 %v1349
    %v2433 = vunpack.c.h.b16 %v1349
    %v2434 = vunpack.c.l.b16 %v1350
    %v2435 = vunpack.c.h.b16 %v1350
    %v2436 = vunpack.c.l.b16 %v1351
    %v2437 = vunpack.c.l.b16 %v1352
    %v2438 = vunpack.c.h.b16 %v1352
    %v2439 = vunpack.c.l.b16 %v1353
    %v2440 = vunpack.c.h.b16 %v1353
    %v2441 = vunpack.c.l.b16 %v1354
    %v2442 = vunpack.c.h.b16 %v1354
    %v2443 = vunpack.c.l.b16 %v1355
    %v2444 = vunpack.c.l.b16 %v1356
    %v2445 = vunpack.c.h.b16 %v1356
    %v2446 = vunpack.c.l.b16 %v1357
    %v2447 = vunpack.c.h.b16 %v1357
    %v2448 = vunpack.c.l.b16 %v1358
    %v2449 = vunpack.c.h.b16 %v1358
    %v2450 = vunpack.c.l.b16 %v1359
    %v2451 = vunpack.c.l.b16 %v1360
    %v2452 = vunpack.c.h.b16 %v1360
    %v2453 = vunpack.c.l.b16 %v1361
    %v2454 = vunpack.c.h.b16 %v1361
    %v2455 = vunpack.c.l.b16 %v1362
    %v2456 = vunpack.c.h.b16 %v1362
    %v2457 = vunpack.c.l.b16 %v1363
    %v2458 = vunpack.c.l.b16 %v1364
    %v2459 = vunpack.c.h.b16 %v1364
    %v2460 = vunpack.c.l.b16 %v1365
    %v2461 = vunpack.c.h.b16 %v1365
    %v2462 = vunpack.c.l.b16 %v1366
    %v2463 = vunpack.c.h.b16 %v1366
    %v2464 = vunpack.c.l.b16 %v1367
    %v2465 = vunpack.c.l.b16 %v1368
    %v2466 = vunpack.c.h.b16 %v1368
    %v2467 = vunpack.c.l.b16 %v1369
    %v2468 = vunpack.c.h.b16 %v1369
    %v2469 = vunpack.c.l.b16 %v1370
    %v2470 = vunpack.c.h.b16 %v1370
    %v2471 = vunpack.c.l.b16 %v1371
    %v2472 = vunpack.c.l.b16 %v1372
    %v2473 = vunpack.c.h.b16 %v1372
    %v2474 = vunpack.c.l.b16 %v1373
    %v2475 = vunpack.c.h.b16 %v1373
    %v2476 = vunpack.c.l.b16 %v1374
    %v2477 = vunpack.c.h.b16 %v1374
    %v2478 = vunpack.c.l.b16 %v1375
    %v2479 = vunpack.c.l.b16 %v1376
    %v2480 = vunpack.c.h.b16 %v1376
    %v2481 = vunpack.c.l.b16 %v1377
    %v2482 = vunpack.c.h.b16 %v1377
    %v2483 = vunpack.c.l.b16 %v1378
    %v2484 = vunpack.c.h.b16 %v1378
    %v2485 = vunpack.c.l.b16 %v1379
    %v2486 = vunpack.c.l.b16 %v1380
    %v2487 = vunpack.c.h.b16 %v1380
    %v2488 = vunpack.c.l.b16 %v1381
    %v2489 = vunpack.c.h.b16 %v1381
    %v2490 = vunpack.c.l.b16 %v1382
    %v2491 = vunpack.c.h.b16 %v1382
    %v2492 = vunpack.c.l.b16 %v1383
    %v2493 = vunpack.c.l.b16 %v1384
    %v2494 = vunpack.c.h.b16 %v1384
    %v2495 = vunpack.c.l.b16 %v1385
    %v2496 = vunpack.c.h.b16 %v1385
    %v2497 = vunpack.c.l.b16 %v1386
    %v2498 = vunpack.c.h.b16 %v1386
    %v2499 = vunpack.c.l.b16 %v1387
    %v2500 = vunpack.c.l.b16 %v1388
    %v2501 = vunpack.c.h.b16 %v1388
    %v2502 = vunpack.c.l.b16 %v1389
    %v2503 = vunpack.c.h.b16 %v1389
    %v2504 = vunpack.c.l.b16 %v1390
    %v2505 = vunpack.c.h.b16 %v1390
    %v2506 = vunpack.c.l.b16 %v1391
    %v2507 = vpack.c.b16 %v1828, %v1821
    %v2508 = vpack.c.b16 %v1829, %v1822
    %v2509 = vpack.c.b16 %v1830, %v1823
    %v2510 = vpack.c.b16 %v1831, %v1824
    %v2511 = vpack.c.b16 %v1832, %v1825
    %v2512 = vpack.c.b16 %v1833, %v1826
    %v2513 = vpack.c.b16 %v1834, %v1827
    %v2514 = vpack.c.b16 %v1842, %v1835
    %v2515 = vpack.c.b16 %v1843, %v1836
    %v2516 = vpack.c.b16 %v1844, %v1837
    %v2517 = vpack.c.b16 %v1845, %v1838
    %v2518 = vpack.c.b16 %v1846, %v1839
    %v2519 = vpack.c.b16 %v1847, %v1840
    %v2520 = vpack.c.b16 %v1848, %v1841
    %v2521 = vpack.c.b16 %v1856, %v1849
    %v2522 = vpack.c.b16 %v1857, %v1850
    %v2523 = vpack.c.b16 %v1858, %v1851
    %v2524 = vpack.c.b16 %v1859, %v1852
    %v2525 = vpack.c.b16 %v1860, %v1853
    %v2526 = vpack.c.b16 %v1861, %v1854
    %v2527 = vpack.c.b16 %v1862, %v1855
    %v2528 = vpack.c.b16 %v1870, %v1863
    %v2529 = vpack.c.b16 %v1871, %v1864
    %v2530 = vpack.c.b16 %v1872, %v1865
    %v2531 = vpack.c.b16 %v1873, %v1866
    %v2532 = vpack.c.b16 %v1874, %v1867
    %v2533 = vpack.c.b16 %v1875, %v1868
    %v2534 = vpack.c.b16 %v1876, %v1869
    %v2535 = vpack.c.b16 %v1884, %v1877
    %v2536 = vpack.c.b16 %v1885, %v1878
    %v2537 = vpack.c.b16 %v1886, %v1879
    %v2538 = vpack.c.b16 %v1887, %v1880
    %v2539 = vpack.c.b16 %v1888, %v1881
    %v2540 = vpack.c.b16 %v1889, %v1882
    %v2541 = vpack.c.b16 %v1890, %v1883
    %v2542 = vpack.c.b16 %v1898, %v1891
    %v2543 = vpack.c.b16 %v1899, %v1892
    %v2544 = vpack.c.b16 %v1900, %v1893
    %v2545 = vpack.c.b16 %v1901, %v1894
    %v2546 = vpack.c.b16 %v1902, %v1895
    %v2547 = vpack.c.b16 %v1903, %v1896
    %v2548 = vpack.c.b16 %v1904, %v1897
    %v2549 = vpack.c.b16 %v1912, %v1905
    %v2550 = vpack.c.b16 %v1913, %v1906
    %v2551 = vpack.c.b16 %v1914, %v1907
    %v2552 = vpack.c.b16 %v1915, %v1908
    %v2553 = vpack.c.b16 %v1916, %v1909
    %v2554 = vpack.c.b16 %v1917, %v1910
    %v2555 = vpack.c.b16 %v1918, %v1911
    %v2556 = vpack.c.b16 %v1926, %v1919
    %v2557 = vpack.c.b16 %v1927, %v1920
    %v2558 = vpack.c.b16 %v1928, %v1921
    %v2559 = vpack.c.b16 %v1929, %v1922
    %v2560 = vpack.c.b16 %v1930, %v1923
    %v2561 = vpack.c.b16 %v1931, %v1924
    %v2562 = vpack.c.b16 %v1932, %v1925
    %v2563 = vpack.c.b16 %v1940, %v1933
    %v2564 = vpack.c.b16 %v1941, %v1934
    %v2565 = vpack.c.b16 %v1942, %v1935
    %v2566 = vpack.c.b16 %v1943, %v1936
    %v2567 = vpack.c.b16 %v1944, %v1937
    %v2568 = vpack.c.b16 %v1945, %v1938
    %v2569 = vpack.c.b16 %v1946, %v1939
    %v2570 = vpack.c.b16 %v1954, %v1947
    %v2571 = vpack.c.b16 %v1955, %v1948
    %v2572 = vpack.c.b16 %v1956, %v1949
    %v2573 = vpack.c.b16 %v1957, %v1950
    %v2574 = vpack.c.b16 %v1958, %v1951
    %v2575 = vpack.c.b16 %v1959, %v1952
    %v2576 = vpack.c.b16 %v1960, %v1953
    %v2577 = vpack.c.b16 %v1968, %v1961
    %v2578 = vpack.c.b16 %v1969, %v1962
    %v2579 = vpack.c.b16 %v1970, %v1963
    %v2580 = vpack.c.b16 %v1971, %v1964
    %v2581 = vpack.c.b16 %v1972, %v1965
    %v2582 = vpack.c.b16 %v1973, %v1966
    %v2583 = vpack.c.b16 %v1974, %v1967
    %v2584 = vpack.c.b16 %v1982, %v1975
    %v2585 = vpack.c.b16 %v1983, %v1976
    %v2586 = vpack.c.b16 %v1984, %v1977
    %v2587 = vpack.c.b16 %v1985, %v1978
    %v2588 = vpack.c.b16 %v1986, %v1979
    %v2589 = vpack.c.b16 %v1987, %v1980
    %v2590 = vpack.c.b16 %v1988, %v1981
    %v2591 = vpack.c.b16 %v1996, %v1989
    %v2592 = vpack.c.b16 %v1997, %v1990
    %v2593 = vpack.c.b16 %v1998, %v1991
    %v2594 = vpack.c.b16 %v1999, %v1992
    %v2595 = vpack.c.b16 %v2000, %v1993
    %v2596 = vpack.c.b16 %v2001, %v1994
    %v2597 = vpack.c.b16 %v2002, %v1995
    %v2598 = vpack.c.b16 %v2010, %v2003
    %v2599 = vpack.c.b16 %v2011, %v2004
    %v2600 = vpack.c.b16 %v2012, %v2005
    %v2601 = vpack.c.b16 %v2013, %v2006
    %v2602 = vpack.c.b16 %v2014, %v2007
    %v2603 = vpack.c.b16 %v2015, %v2008
    %v2604 = vpack.c.b16 %v2016, %v2009
    %v2605 = vpack.c.b16 %v2024, %v2017
    %v2606 = vpack.c.b16 %v2025, %v2018
    %v2607 = vpack.c.b16 %v2026, %v2019
    %v2608 = vpack.c.b16 %v2027, %v2020
    %v2609 = vpack.c.b16 %v2028, %v2021
    %v2610 = vpack.c.b16 %v2029, %v2022
    %v2611 = vpack.c.b16 %v2030, %v2023
    %v2612 = vpack.c.b16 %v2038, %v2031
    %v2613 = vpack.c.b16 %v2039, %v2032
    %v2614 = vpack.c.b16 %v2040, %v2033
    %v2615 = vpack.c.b16 %v2041, %v2034
    %v2616 = vpack.c.b16 %v2042, %v2035
    %v2617 = vpack.c.b16 %v2043, %v2036
    %v2618 = vpack.c.b16 %v2044, %v2037
    %v2619 = vpack.c.b16 %v2052, %v2045
    %v2620 = vpack.c.b16 %v2053, %v2046
    %v2621 = vpack.c.b16 %v2054, %v2047
    %v2622 = vpack.c.b16 %v2055, %v2048
    %v2623 = vpack.c.b16 %v2056, %v2049
    %v2624 = vpack.c.b16 %v2057, %v2050
    %v2625 = vpack.c.b16 %v2058, %v2051
    %v2626 = vpack.c.b16 %v2066, %v2059
    %v2627 = vpack.c.b16 %v2067, %v2060
    %v2628 = vpack.c.b16 %v2068, %v2061
    %v2629 = vpack.c.b16 %v2069, %v2062
    %v2630 = vpack.c.b16 %v2070, %v2063
    %v2631 = vpack.c.b16 %v2071, %v2064
    %v2632 = vpack.c.b16 %v2072, %v2065
    %v2633 = vpack.c.b16 %v2080, %v2073
    %v2634 = vpack.c.b16 %v2081, %v2074
    %v2635 = vpack.c.b16 %v2082, %v2075
    %v2636 = vpack.c.b16 %v2083, %v2076
    %v2637 = vpack.c.b16 %v2084, %v2077
    %v2638 = vpack.c.b16 %v2085, %v2078
    %v2639 = vpack.c.b16 %v2086, %v2079
    %v2640 = vpack.c.b16 %v2094, %v2087
    %v2641 = vpack.c.b16 %v2095, %v2088
    %v2642 = vpack.c.b16 %v2096, %v2089
    %v2643 = vpack.c.b16 %v2097, %v2090
    %v2644 = vpack.c.b16 %v2098, %v2091
    %v2645 = vpack.c.b16 %v2099, %v2092
    %v2646 = vpack.c.b16 %v2100, %v2093
    %v2647 = vpack.c.b16 %v2108, %v2101
    %v2648 = vpack.c.b16 %v2109, %v2102
    %v2649 = vpack.c.b16 %v2110, %v2103
    %v2650 = vpack.c.b16 %v2111, %v2104
    %v2651 = vpack.c.b16 %v2112, %v2105
    %v2652 = vpack.c.b16 %v2113, %v2106
    %v2653 = vpack.c.b16 %v2114, %v2107
    %v2654 = vpack.c.b16 %v2122, %v2115
    %v2655 = vpack.c.b16 %v2123, %v2116
    %v2656 = vpack.c.b16 %v2124, %v2117
    %v2657 = vpack.c.b16 %v2125, %v2118
    %v2658 = vpack.c.b16 %v2126, %v2119
    %v2659 = vpack.c.b16 %v2127, %v2120
    %v2660 = vpack.c.b16 %v2128, %v2121
    %v2661 = vpack.c.b16 %v2136, %v2129
    %v2662 = vpack.c.b16 %v2137, %v2130
    %v2663 = vpack.c.b16 %v2138, %v2131
    %v2664 = vpack.c.b16 %v2139, %v2132
    %v2665 = vpack.c.b16 %v2140, %v2133
    %v2666 = vpack.c.b16 %v2141, %v2134
    %v2667 = vpack.c.b16 %v2142, %v2135
    %v2668 = vpack.c.b16 %v2150, %v2143
    %v2669 = vpack.c.b16 %v2151, %v2144
    %v2670 = vpack.c.b16 %v2152, %v2145
    %v2671 = vpack.c.b16 %v2153, %v2146
    %v2672 = vpack.c.b16 %v2154, %v2147
    %v2673 = vpack.c.b16 %v2155, %v2148
    %v2674 = vpack.c.b16 %v2156, %v2149
    %v2675 = vpack.c.b16 %v2164, %v2157
    %v2676 = vpack.c.b16 %v2165, %v2158
    %v2677 = vpack.c.b16 %v2166, %v2159
    %v2678 = vpack.c.b16 %v2167, %v2160
    %v2679 = vpack.c.b16 %v2168, %v2161
    %v2680 = vpack.c.b16 %v2169, %v2162
    %v2681 = vpack.c.b16 %v2170, %v2163
    %v2682 = vpack.c.b16 %v2178, %v2171
    %v2683 = vpack.c.b16 %v2179, %v2172
    %v2684 = vpack.c.b16 %v2180, %v2173
    %v2685 = vpack.c.b16 %v2181, %v2174
    %v2686 = vpack.c.b16 %v2182, %v2175
    %v2687 = vpack.c.b16 %v2183, %v2176
    %v2688 = vpack.c.b16 %v2184, %v2177
    %v2689 = vpack.c.b16 %v2192, %v2185
    %v2690 = vpack.c.b16 %v2193, %v2186
    %v2691 = vpack.c.b16 %v2194, %v2187
    %v2692 = vpack.c.b16 %v2195, %v2188
    %v2693 = vpack.c.b16 %v2196, %v2189
    %v2694 = vpack.c.b16 %v2197, %v2190
    %v2695 = vpack.c.b16 %v2198, %v2191
    %v2696 = vpack.c.b16 %v2206, %v2199
    %v2697 = vpack.c.b16 %v2207, %v2200
    %v2698 = vpack.c.b16 %v2208, %v2201
    %v2699 = vpack.c.b16 %v2209, %v2202
    %v2700 = vpack.c.b16 %v2210, %v2203
    %v2701 = vpack.c.b16 %v2211, %v2204
    %v2702 = vpack.c.b16 %v2212, %v2205
    %v2703 = vpack.c.b16 %v2220, %v2213
    %v2704 = vpack.c.b16 %v2221, %v2214
    %v2705 = vpack.c.b16 %v2222, %v2215
    %v2706 = vpack.c.b16 %v2223, %v2216
    %v2707 = vpack.c.b16 %v2224, %v2217
    %v2708 = vpack.c.b16 %v2225, %v2218
    %v2709 = vpack.c.b16 %v2226, %v2219
    %v2710 = vpack.c.b16 %v2234, %v2227
    %v2711 = vpack.c.b16 %v2235, %v2228
    %v2712 = vpack.c.b16 %v2236, %v2229
    %v2713 = vpack.c.b16 %v2237, %v2230
    %v2714 = vpack.c.b16 %v2238, %v2231
    %v2715 = vpack.c.b16 %v2239, %v2232
    %v2716 = vpack.c.b16 %v2240, %v2233
    %v2717 = vpack.c.b16 %v2248, %v2241
    %v2718 = vpack.c.b16 %v2249, %v2242
    %v2719 = vpack.c.b16 %v2250, %v2243
    %v2720 = vpack.c.b16 %v2251, %v2244
    %v2721 = vpack.c.b16 %v2252, %v2245
    %v2722 = vpack.c.b16 %v2253, %v2246
    %v2723 = vpack.c.b16 %v2254, %v2247
    %v2724 = vpack.c.b16 %v2262, %v2255
    %v2725 = vpack.c.b16 %v2263, %v2256
    %v2726 = vpack.c.b16 %v2264, %v2257
    %v2727 = vpack.c.b16 %v2265, %v2258
    %v2728 = vpack.c.b16 %v2266, %v2259
    %v2729 = vpack.c.b16 %v2267, %v2260
    %v2730 = vpack.c.b16 %v2268, %v2261
    %v2731 = vpack.c.b16 %v2276, %v2269
    %v2732 = vpack.c.b16 %v2277, %v2270
    %v2733 = vpack.c.b16 %v2278, %v2271
    %v2734 = vpack.c.b16 %v2279, %v2272
    %v2735 = vpack.c.b16 %v2280, %v2273
    %v2736 = vpack.c.b16 %v2281, %v2274
    %v2737 = vpack.c.b16 %v2282, %v2275
    %v2738 = vpack.c.b16 %v2290, %v2283
    %v2739 = vpack.c.b16 %v2291, %v2284
    %v2740 = vpack.c.b16 %v2292, %v2285
    %v2741 = vpack.c.b16 %v2293, %v2286
    %v2742 = vpack.c.b16 %v2294, %v2287
    %v2743 = vpack.c.b16 %v2295, %v2288
    %v2744 = vpack.c.b16 %v2296, %v2289
    %v2745 = vpack.c.b16 %v2304, %v2297
    %v2746 = vpack.c.b16 %v2305, %v2298
    %v2747 = vpack.c.b16 %v2306, %v2299
    %v2748 = vpack.c.b16 %v2307, %v2300
    %v2749 = vpack.c.b16 %v2308, %v2301
    %v2750 = vpack.c.b16 %v2309, %v2302
    %v2751 = vpack.c.b16 %v2310, %v2303
    %v2752 = vpack.c.b16 %v2318, %v2311
    %v2753 = vpack.c.b16 %v2319, %v2312
    %v2754 = vpack.c.b16 %v2320, %v2313
    %v2755 = vpack.c.b16 %v2321, %v2314
    %v2756 = vpack.c.b16 %v2322, %v2315
    %v2757 = vpack.c.b16 %v2323, %v2316
    %v2758 = vpack.c.b16 %v2324, %v2317
    %v2759 = vpack.c.b16 %v2332, %v2325
    %v2760 = vpack.c.b16 %v2333, %v2326
    %v2761 = vpack.c.b16 %v2334, %v2327
    %v2762 = vpack.c.b16 %v2335, %v2328
    %v2763 = vpack.c.b16 %v2336, %v2329
    %v2764 = vpack.c.b16 %v2337, %v2330
    %v2765 = vpack.c.b16 %v2338, %v2331
    %v2766 = vpack.c.b16 %v2346, %v2339
    %v2767 = vpack.c.b16 %v2347, %v2340
    %v2768 = vpack.c.b16 %v2348, %v2341
    %v2769 = vpack.c.b16 %v2349, %v2342
    %v2770 = vpack.c.b16 %v2350, %v2343
    %v2771 = vpack.c.b16 %v2351, %v2344
    %v2772 = vpack.c.b16 %v2352, %v2345
    %v2773 = vpack.c.b16 %v2360, %v2353
    %v2774 = vpack.c.b16 %v2361, %v2354
    %v2775 = vpack.c.b16 %v2362, %v2355
    %v2776 = vpack.c.b16 %v2363, %v2356
    %v2777 = vpack.c.b16 %v2364, %v2357
    %v2778 = vpack.c.b16 %v2365, %v2358
    %v2779 = vpack.c.b16 %v2366, %v2359
    %v2780 = vpack.c.b16 %v2374, %v2367
    %v2781 = vpack.c.b16 %v2375, %v2368
    %v2782 = vpack.c.b16 %v2376, %v2369
    %v2783 = vpack.c.b16 %v2377, %v2370
    %v2784 = vpack.c.b16 %v2378, %v2371
    %v2785 = vpack.c.b16 %v2379, %v2372
    %v2786 = vpack.c.b16 %v2380, %v2373
    %v2787 = vpack.c.b16 %v2388, %v2381
    %v2788 = vpack.c.b16 %v2389, %v2382
    %v2789 = vpack.c.b16 %v2390, %v2383
    %v2790 = vpack.c.b16 %v2391, %v2384
    %v2791 = vpack.c.b16 %v2392, %v2385
    %v2792 = vpack.c.b16 %v2393, %v2386
    %v2793 = vpack.c.b16 %v2394, %v2387
    %v2794 = vpack.c.b16 %v2402, %v2395
    %v2795 = vpack.c.b16 %v2403, %v2396
    %v2796 = vpack.c.b16 %v2404, %v2397
    %v2797 = vpack.c.b16 %v2405, %v2398
    %v2798 = vpack.c.b16 %v2406, %v2399
    %v2799 = vpack.c.b16 %v2407, %v2400
    %v2800 = vpack.c.b16 %v2408, %v2401
    %v2801 = vpack.c.b16 %v2416, %v2409
    %v2802 = vpack.c.b16 %v2417, %v2410
    %v2803 = vpack.c.b16 %v2418, %v2411
    %v2804 = vpack.c.b16 %v2419, %v2412
    %v2805 = vpack.c.b16 %v2420, %v2413
    %v2806 = vpack.c.b16 %v2421, %v2414
    %v2807 = vpack.c.b16 %v2422, %v2415
    %v2808 = vpack.c.b16 %v2430, %v2423
    %v2809 = vpack.c.b16 %v2431, %v2424
    %v2810 = vpack.c.b16 %v2432, %v2425
    %v2811 = vpack.c.b16 %v2433, %v2426
    %v2812 = vpack.c.b16 %v2434, %v2427
    %v2813 = vpack.c.b16 %v2435, %v2428
    %v2814 = vpack.c.b16 %v2436, %v2429
    %v2815 = vpack.c.b16 %v2444, %v2437
    %v2816 = vpack.c.b16 %v2445, %v2438
    %v2817 = vpack.c.b16 %v2446, %v2439
    %v2818 = vpack.c.b16 %v2447, %v2440
    %v2819 = vpack.c.b16 %v2448, %v2441
    %v2820 = vpack.c.b16 %v2449, %v2442
    %v2821 = vpack.c.b16 %v2450, %v2443
    %v2822 = vpack.c.b16 %v2458, %v2451
    %v2823 = vpack.c.b16 %v2459, %v2452
    %v2824 = vpack.c.b16 %v2460, %v2453
    %v2825 = vpack.c.b16 %v2461, %v2454
    %v2826 = vpack.c.b16 %v2462, %v2455
    %v2827 = vpack.c.b16 %v2463, %v2456
    %v2828 = vpack.c.b16 %v2464, %v2457
    %v2829 = vpack.c.b16 %v2472, %v2465
    %v2830 = vpack.c.b16 %v2473, %v2466
    %v2831 = vpack.c.b16 %v2474, %v2467
    %v2832 = vpack.c.b16 %v2475, %v2468
    %v2833 = vpack.c.b16 %v2476, %v2469
    %v2834 = vpack.c.b16 %v2477, %v2470
    %v2835 = vpack.c.b16 %v2478, %v2471
    %v2836 = vpack.c.b16 %v2486, %v2479
    %v2837 = vpack.c.b16 %v2487, %v2480
    %v2838 = vpack.c.b16 %v2488, %v2481
    %v2839 = vpack.c.b16 %v2489, %v2482
    %v2840 = vpack.c.b16 %v2490, %v2483
    %v2841 = vpack.c.b16 %v2491, %v2484
    %v2842 = vpack.c.b16 %v2492, %v2485
    %v2843 = vpack.c.b16 %v2500, %v2493
    %v2844 = vpack.c.b16 %v2501, %v2494
    %v2845 = vpack.c.b16 %v2502, %v2495
    %v2846 = vpack.c.b16 %v2503, %v2496
    %v2847 = vpack.c.b16 %v2504, %v2497
    %v2848 = vpack.c.b16 %v2505, %v2498
    %v2849 = vpack.c.b16 %v2506, %v2499
    %vm3193 = vcmask 130048
    %v3195 = vsel %vm3193, %v999, 0
    %3197 = vmatprep.subr.bf16.mxu0 %v2557
    %3198 = vmatpush1.bf16.msra.mxu0 %v2556
    %3199 = vmatprep.subr.bf16.mxu0 %v2550
    %3200 = vmatpush1.bf16.msra.mxu0 %v2549
    %3201 = vmatprep.subr.bf16.mxu0 %v2543
    %3202 = vmatpush1.bf16.msra.mxu0 %v2542
    %3203 = vmatprep.subr.bf16.mxu0 %v2536
    %3204 = vmatpush1.bf16.msra.mxu0 %v2535
    %3205 = vmatprep.subr.bf16.mxu0 %v2529
    %3206 = vmatpush1.bf16.msra.mxu0 %v2528
    %3207 = vmatprep.subr.bf16.mxu0 %v2522
    %3208 = vmatpush1.bf16.msra.mxu0 %v2521
    %3209 = vmatprep.subr.bf16.mxu0 %v2515
    %3210 = vmatpush1.bf16.msra.mxu0 %v2514
    %3211 = vmatprep.subr.bf16.mxu0 %v2508
    %3212 = vmatpush1.bf16.msra.mxu0 %v2507
    %3213 = vmatprep.subr.bf16.mxu0 %v2613
    %3214 = vmatpush2.bf16.msra.mxu0 %v2612
    %3215 = vmatprep.subr.bf16.mxu0 %v2606
    %3216 = vmatpush2.bf16.msra.mxu0 %v2605
    %3217 = vmatprep.subr.bf16.mxu0 %v2599
    %3218 = vmatpush2.bf16.msra.mxu0 %v2598
    %3219 = vmatprep.subr.bf16.mxu0 %v2592
    %3220 = vmatpush2.bf16.msra.mxu0 %v2591
    %3221 = vmatprep.subr.bf16.mxu0 %v2585
    %3222 = vmatpush2.bf16.msra.mxu0 %v2584
    %3223 = vmatprep.subr.bf16.mxu0 %v2578
    %3224 = vmatpush2.bf16.msra.mxu0 %v2577
    %3225 = vmatprep.subr.bf16.mxu0 %v2571
    %3226 = vmatpush2.bf16.msra.mxu0 %v2570
    %3227 = vmatprep.subr.bf16.mxu0 %v2564
    %3228 = vmatpush2.bf16.msra.mxu0 %v2563
    %3229 = vmatprep.mubr.bf16.mxu0 %v994
    %3230 = vmatmul.mubr.bf16.gmra.mxu0 %v993
    %v3231 = vpop.f32.mrf.mxu0
    %v3232 = vadd.f32 %v1397, %v3231
    %v3233 = vpop.f32.mrf.mxu0
    %v3234 = vadd.f32 %v1401, %v3233
    %v3235 = vpop.f32.mrf.mxu0
    %v3236 = vpop.f32.mrf.mxu0
    %3237 = vdwg.mxu0
    %3238 = vmatprep.subr.bf16.mxu0 %v2669
    %3239 = vmatpush1.bf16.msra.mxu0 %v2668
    %3240 = vmatprep.subr.bf16.mxu0 %v2662
    %3241 = vmatpush1.bf16.msra.mxu0 %v2661
    %3242 = vmatprep.subr.bf16.mxu0 %v2655
    %3243 = vmatpush1.bf16.msra.mxu0 %v2654
    %3244 = vmatprep.subr.bf16.mxu0 %v2648
    %3245 = vmatpush1.bf16.msra.mxu0 %v2647
    %3246 = vmatprep.subr.bf16.mxu0 %v2641
    %3247 = vmatpush1.bf16.msra.mxu0 %v2640
    %3248 = vmatprep.subr.bf16.mxu0 %v2634
    %3249 = vmatpush1.bf16.msra.mxu0 %v2633
    %3250 = vmatprep.subr.bf16.mxu0 %v2627
    %3251 = vmatpush1.bf16.msra.mxu0 %v2626
    %3252 = vmatprep.subr.bf16.mxu0 %v2620
    %3253 = vmatpush1.bf16.msra.mxu0 %v2619
    %3254 = vmatprep.subr.bf16.mxu0 %v2725
    %3255 = vmatpush2.bf16.msra.mxu0 %v2724
    %3256 = vmatprep.subr.bf16.mxu0 %v2718
    %3257 = vmatpush2.bf16.msra.mxu0 %v2717
    %3258 = vmatprep.subr.bf16.mxu0 %v2711
    %3259 = vmatpush2.bf16.msra.mxu0 %v2710
    %3260 = vmatprep.subr.bf16.mxu0 %v2704
    %3261 = vmatpush2.bf16.msra.mxu0 %v2703
    %3262 = vmatprep.subr.bf16.mxu0 %v2697
    %3263 = vmatpush2.bf16.msra.mxu0 %v2696
    %3264 = vmatprep.subr.bf16.mxu0 %v2690
    %3265 = vmatpush2.bf16.msra.mxu0 %v2689
    %3266 = vmatprep.subr.bf16.mxu0 %v2683
    %3267 = vmatpush2.bf16.msra.mxu0 %v2682
    %3268 = vmatprep.subr.bf16.mxu0 %v2676
    %3269 = vmatpush2.bf16.msra.mxu0 %v2675
    %3270 = vmatprep.mubr.bf16.mxu0 %v996
    %3271 = vmatmul.mubr.bf16.gmra.mxu0 %v995
    %v3272 = vpop.f32.mrf.mxu0
    %v3273 = vadd.f32 %v3232, %v3272
    %v3274 = vpop.f32.mrf.mxu0
    %v3275 = vadd.f32 %v3234, %v3274
    %v3276 = vpop.f32.mrf.mxu0
    %v3277 = vpop.f32.mrf.mxu0
    %3278 = vdwg.mxu0
    %3279 = vmatprep.subr.bf16.mxu0 %v2781
    %3280 = vmatpush1.bf16.msra.mxu0 %v2780
    %3281 = vmatprep.subr.bf16.mxu0 %v2774
    %3282 = vmatpush1.bf16.msra.mxu0 %v2773
    %3283 = vmatprep.subr.bf16.mxu0 %v2767
    %3284 = vmatpush1.bf16.msra.mxu0 %v2766
    %3285 = vmatprep.subr.bf16.mxu0 %v2760
    %3286 = vmatpush1.bf16.msra.mxu0 %v2759
    %3287 = vmatprep.subr.bf16.mxu0 %v2753
    %3288 = vmatpush1.bf16.msra.mxu0 %v2752
    %3289 = vmatprep.subr.bf16.mxu0 %v2746
    %3290 = vmatpush1.bf16.msra.mxu0 %v2745
    %3291 = vmatprep.subr.bf16.mxu0 %v2739
    %3292 = vmatpush1.bf16.msra.mxu0 %v2738
    %3293 = vmatprep.subr.bf16.mxu0 %v2732
    %3294 = vmatpush1.bf16.msra.mxu0 %v2731
    %3295 = vmatprep.subr.bf16.mxu0 %v2837
    %3296 = vmatpush2.bf16.msra.mxu0 %v2836
    %3297 = vmatprep.subr.bf16.mxu0 %v2830
    %3298 = vmatpush2.bf16.msra.mxu0 %v2829
    %3299 = vmatprep.subr.bf16.mxu0 %v2823
    %3300 = vmatpush2.bf16.msra.mxu0 %v2822
    %3301 = vmatprep.subr.bf16.mxu0 %v2816
    %3302 = vmatpush2.bf16.msra.mxu0 %v2815
    %3303 = vmatprep.subr.bf16.mxu0 %v2809
    %3304 = vmatpush2.bf16.msra.mxu0 %v2808
    %3305 = vmatprep.subr.bf16.mxu0 %v2802
    %3306 = vmatpush2.bf16.msra.mxu0 %v2801
    %3307 = vmatprep.subr.bf16.mxu0 %v2795
    %3308 = vmatpush2.bf16.msra.mxu0 %v2794
    %3309 = vmatprep.subr.bf16.mxu0 %v2788
    %3310 = vmatpush2.bf16.msra.mxu0 %v2787
    %3311 = vmatprep.mubr.bf16.mxu0 %v998
    %3312 = vmatmul.mubr.bf16.gmra.mxu0 %v997
    %v3313 = vpop.f32.mrf.mxu0
    %v3314 = vadd.f32 %v3273, %v3313
    %v3315 = vpop.f32.mrf.mxu0
    %v3316 = vadd.f32 %v3275, %v3315
    %v3317 = vpop.f32.mrf.mxu0
    %v3318 = vpop.f32.mrf.mxu0
    %3319 = vdwg.mxu0
    %3320 = vmatprep.subr.bf16.mxu0 0
    %3321 = vmatpush1.bf16.msra.mxu0 0
    %3322 = vmatprep.subr.bf16.mxu0 0
    %3323 = vmatpush1.bf16.msra.mxu0 0
    %3324 = vmatprep.subr.bf16.mxu0 0
    %3325 = vmatpush1.bf16.msra.mxu0 0
    %3326 = vmatprep.subr.bf16.mxu0 0
    %3327 = vmatpush1.bf16.msra.mxu0 0
    %3328 = vmatprep.subr.bf16.mxu0 0
    %3329 = vmatpush1.bf16.msra.mxu0 0
    %3330 = vmatprep.subr.bf16.mxu0 0
    %3331 = vmatpush1.bf16.msra.mxu0 0
    %3332 = vmatprep.subr.bf16.mxu0 0
    %3333 = vmatpush1.bf16.msra.mxu0 0
    %3334 = vmatprep.subr.bf16.mxu0 %v2844
    %3335 = vmatpush1.bf16.msra.mxu0 %v2843
    %3336 = vmatprep.subr.bf16.mxu0 0
    %3337 = vmatpush2.bf16.msra.mxu0 0
    %3338 = vmatprep.subr.bf16.mxu0 0
    %3339 = vmatpush2.bf16.msra.mxu0 0
    %3340 = vmatprep.subr.bf16.mxu0 0
    %3341 = vmatpush2.bf16.msra.mxu0 0
    %3342 = vmatprep.subr.bf16.mxu0 0
    %3343 = vmatpush2.bf16.msra.mxu0 0
    %3344 = vmatprep.subr.bf16.mxu0 0
    %3345 = vmatpush2.bf16.msra.mxu0 0
    %3346 = vmatprep.subr.bf16.mxu0 0
    %3347 = vmatpush2.bf16.msra.mxu0 0
    %3348 = vmatprep.subr.bf16.mxu0 0
    %3349 = vmatpush2.bf16.msra.mxu0 0
    %3350 = vmatprep.subr.bf16.mxu0 0
    %3351 = vmatpush2.bf16.msra.mxu0 0
    %3352 = vmatprep.mubr.bf16.mxu0 0
    %3353 = vmatmul.mubr.bf16.gmra.mxu0 %v3195
    %v3354 = vpop.f32.mrf.mxu0
    %v3355 = vadd.f32 %v3314, %v3354
    %v3356 = vpop.f32.mrf.mxu0
    %v3357 = vadd.f32 %v3316, %v3356
    %v3358 = vpop.f32.mrf.mxu0
    %v3359 = vpop.f32.mrf.mxu0
    %3360 = vdwg.mxu0
    %3361 = vmatprep.subr.bf16.mxu0 %v2559
    %3362 = vmatpush1.bf16.msra.mxu0 %v2558
    %3363 = vmatprep.subr.bf16.mxu0 %v2552
    %3364 = vmatpush1.bf16.msra.mxu0 %v2551
    %3365 = vmatprep.subr.bf16.mxu0 %v2545
    %3366 = vmatpush1.bf16.msra.mxu0 %v2544
    %3367 = vmatprep.subr.bf16.mxu0 %v2538
    %3368 = vmatpush1.bf16.msra.mxu0 %v2537
    %3369 = vmatprep.subr.bf16.mxu0 %v2531
    %3370 = vmatpush1.bf16.msra.mxu0 %v2530
    %3371 = vmatprep.subr.bf16.mxu0 %v2524
    %3372 = vmatpush1.bf16.msra.mxu0 %v2523
    %3373 = vmatprep.subr.bf16.mxu0 %v2517
    %3374 = vmatpush1.bf16.msra.mxu0 %v2516
    %3375 = vmatprep.subr.bf16.mxu0 %v2510
    %3376 = vmatpush1.bf16.msra.mxu0 %v2509
    %3377 = vmatprep.subr.bf16.mxu0 %v2615
    %3378 = vmatpush2.bf16.msra.mxu0 %v2614
    %3379 = vmatprep.subr.bf16.mxu0 %v2608
    %3380 = vmatpush2.bf16.msra.mxu0 %v2607
    %3381 = vmatprep.subr.bf16.mxu0 %v2601
    %3382 = vmatpush2.bf16.msra.mxu0 %v2600
    %3383 = vmatprep.subr.bf16.mxu0 %v2594
    %3384 = vmatpush2.bf16.msra.mxu0 %v2593
    %3385 = vmatprep.subr.bf16.mxu0 %v2587
    %3386 = vmatpush2.bf16.msra.mxu0 %v2586
    %3387 = vmatprep.subr.bf16.mxu0 %v2580
    %3388 = vmatpush2.bf16.msra.mxu0 %v2579
    %3389 = vmatprep.subr.bf16.mxu0 %v2573
    %3390 = vmatpush2.bf16.msra.mxu0 %v2572
    %3391 = vmatprep.subr.bf16.mxu0 %v2566
    %3392 = vmatpush2.bf16.msra.mxu0 %v2565
    %3393 = vmatprep.mubr.bf16.mxu0 %v994
    %3394 = vmatmul.mubr.bf16.gmra.mxu0 %v993
    %v3395 = vpop.f32.mrf.mxu0
    %v3396 = vadd.f32 %v1405, %v3395
    %v3397 = vpop.f32.mrf.mxu0
    %v3398 = vadd.f32 %v1409, %v3397
    %v3399 = vpop.f32.mrf.mxu0
    %v3400 = vpop.f32.mrf.mxu0
    %3401 = vdwg.mxu0
    %3402 = vmatprep.subr.bf16.mxu0 %v2671
    %3403 = vmatpush1.bf16.msra.mxu0 %v2670
    %3404 = vmatprep.subr.bf16.mxu0 %v2664
    %3405 = vmatpush1.bf16.msra.mxu0 %v2663
    %3406 = vmatprep.subr.bf16.mxu0 %v2657
    %3407 = vmatpush1.bf16.msra.mxu0 %v2656
    %3408 = vmatprep.subr.bf16.mxu0 %v2650
    %3409 = vmatpush1.bf16.msra.mxu0 %v2649
    %3410 = vmatprep.subr.bf16.mxu0 %v2643
    %3411 = vmatpush1.bf16.msra.mxu0 %v2642
    %3412 = vmatprep.subr.bf16.mxu0 %v2636
    %3413 = vmatpush1.bf16.msra.mxu0 %v2635
    %3414 = vmatprep.subr.bf16.mxu0 %v2629
    %3415 = vmatpush1.bf16.msra.mxu0 %v2628
    %3416 = vmatprep.subr.bf16.mxu0 %v2622
    %3417 = vmatpush1.bf16.msra.mxu0 %v2621
    %3418 = vmatprep.subr.bf16.mxu0 %v2727
    %3419 = vmatpush2.bf16.msra.mxu0 %v2726
    %3420 = vmatprep.subr.bf16.mxu0 %v2720
    %3421 = vmatpush2.bf16.msra.mxu0 %v2719
    %3422 = vmatprep.subr.bf16.mxu0 %v2713
    %3423 = vmatpush2.bf16.msra.mxu0 %v2712
    %3424 = vmatprep.subr.bf16.mxu0 %v2706
    %3425 = vmatpush2.bf16.msra.mxu0 %v2705
    %3426 = vmatprep.subr.bf16.mxu0 %v2699
    %3427 = vmatpush2.bf16.msra.mxu0 %v2698
    %3428 = vmatprep.subr.bf16.mxu0 %v2692
    %3429 = vmatpush2.bf16.msra.mxu0 %v2691
    %3430 = vmatprep.subr.bf16.mxu0 %v2685
    %3431 = vmatpush2.bf16.msra.mxu0 %v2684
    %3432 = vmatprep.subr.bf16.mxu0 %v2678
    %3433 = vmatpush2.bf16.msra.mxu0 %v2677
    %3434 = vmatprep.mubr.bf16.mxu0 %v996
    %3435 = vmatmul.mubr.bf16.gmra.mxu0 %v995
    %v3436 = vpop.f32.mrf.mxu0
    %v3437 = vadd.f32 %v3396, %v3436
    %v3438 = vpop.f32.mrf.mxu0
    %v3439 = vadd.f32 %v3398, %v3438
    %v3440 = vpop.f32.mrf.mxu0
    %v3441 = vpop.f32.mrf.mxu0
    %3442 = vdwg.mxu0
    %3443 = vmatprep.subr.bf16.mxu0 %v2783
    %3444 = vmatpush1.bf16.msra.mxu0 %v2782
    %3445 = vmatprep.subr.bf16.mxu0 %v2776
    %3446 = vmatpush1.bf16.msra.mxu0 %v2775
    %3447 = vmatprep.subr.bf16.mxu0 %v2769
    %3448 = vmatpush1.bf16.msra.mxu0 %v2768
    %3449 = vmatprep.subr.bf16.mxu0 %v2762
    %3450 = vmatpush1.bf16.msra.mxu0 %v2761
    %3451 = vmatprep.subr.bf16.mxu0 %v2755
    %3452 = vmatpush1.bf16.msra.mxu0 %v2754
    %3453 = vmatprep.subr.bf16.mxu0 %v2748
    %3454 = vmatpush1.bf16.msra.mxu0 %v2747
    %3455 = vmatprep.subr.bf16.mxu0 %v2741
    %3456 = vmatpush1.bf16.msra.mxu0 %v2740
    %3457 = vmatprep.subr.bf16.mxu0 %v2734
    %3458 = vmatpush1.bf16.msra.mxu0 %v2733
    %3459 = vmatprep.subr.bf16.mxu0 %v2839
    %3460 = vmatpush2.bf16.msra.mxu0 %v2838
    %3461 = vmatprep.subr.bf16.mxu0 %v2832
    %3462 = vmatpush2.bf16.msra.mxu0 %v2831
    %3463 = vmatprep.subr.bf16.mxu0 %v2825
    %3464 = vmatpush2.bf16.msra.mxu0 %v2824
    %3465 = vmatprep.subr.bf16.mxu0 %v2818
    %3466 = vmatpush2.bf16.msra.mxu0 %v2817
    %3467 = vmatprep.subr.bf16.mxu0 %v2811
    %3468 = vmatpush2.bf16.msra.mxu0 %v2810
    %3469 = vmatprep.subr.bf16.mxu0 %v2804
    %3470 = vmatpush2.bf16.msra.mxu0 %v2803
    %3471 = vmatprep.subr.bf16.mxu0 %v2797
    %3472 = vmatpush2.bf16.msra.mxu0 %v2796
    %3473 = vmatprep.subr.bf16.mxu0 %v2790
    %3474 = vmatpush2.bf16.msra.mxu0 %v2789
    %3475 = vmatprep.mubr.bf16.mxu0 %v998
    %3476 = vmatmul.mubr.bf16.gmra.mxu0 %v997
    %v3477 = vpop.f32.mrf.mxu0
    %v3478 = vadd.f32 %v3437, %v3477
    %v3479 = vpop.f32.mrf.mxu0
    %v3480 = vadd.f32 %v3439, %v3479
    %v3481 = vpop.f32.mrf.mxu0
    %v3482 = vpop.f32.mrf.mxu0
    %3483 = vdwg.mxu0
    %3484 = vmatprep.subr.bf16.mxu0 0
    %3485 = vmatpush1.bf16.msra.mxu0 0
    %3486 = vmatprep.subr.bf16.mxu0 0
    %3487 = vmatpush1.bf16.msra.mxu0 0
    %3488 = vmatprep.subr.bf16.mxu0 0
    %3489 = vmatpush1.bf16.msra.mxu0 0
    %3490 = vmatprep.subr.bf16.mxu0 0
    %3491 = vmatpush1.bf16.msra.mxu0 0
    %3492 = vmatprep.subr.bf16.mxu0 0
    %3493 = vmatpush1.bf16.msra.mxu0 0
    %3494 = vmatprep.subr.bf16.mxu0 0
    %3495 = vmatpush1.bf16.msra.mxu0 0
    %3496 = vmatprep.subr.bf16.mxu0 0
    %3497 = vmatpush1.bf16.msra.mxu0 0
    %3498 = vmatprep.subr.bf16.mxu0 %v2846
    %3499 = vmatpush1.bf16.msra.mxu0 %v2845
    %3500 = vmatprep.subr.bf16.mxu0 0
    %3501 = vmatpush2.bf16.msra.mxu0 0
    %3502 = vmatprep.subr.bf16.mxu0 0
    %3503 = vmatpush2.bf16.msra.mxu0 0
    %3504 = vmatprep.subr.bf16.mxu0 0
    %3505 = vmatpush2.bf16.msra.mxu0 0
    %3506 = vmatprep.subr.bf16.mxu0 0
    %3507 = vmatpush2.bf16.msra.mxu0 0
    %3508 = vmatprep.subr.bf16.mxu0 0
    %3509 = vmatpush2.bf16.msra.mxu0 0
    %3510 = vmatprep.subr.bf16.mxu0 0
    %3511 = vmatpush2.bf16.msra.mxu0 0
    %3512 = vmatprep.subr.bf16.mxu0 0
    %3513 = vmatpush2.bf16.msra.mxu0 0
    %3514 = vmatprep.subr.bf16.mxu0 0
    %3515 = vmatpush2.bf16.msra.mxu0 0
    %3516 = vmatprep.mubr.bf16.mxu0 0
    %3517 = vmatmul.mubr.bf16.gmra.mxu0 %v3195
    %v3518 = vpop.f32.mrf.mxu0
    %v3519 = vadd.f32 %v3478, %v3518
    %v3520 = vpop.f32.mrf.mxu0
    %v3521 = vadd.f32 %v3480, %v3520
    %v3522 = vpop.f32.mrf.mxu0
    %v3523 = vpop.f32.mrf.mxu0
    %3524 = vdwg.mxu0
    %3525 = vmatprep.subr.bf16.mxu0 %v2561
    %3526 = vmatpush1.bf16.msra.mxu0 %v2560
    %3527 = vmatprep.subr.bf16.mxu0 %v2554
    %3528 = vmatpush1.bf16.msra.mxu0 %v2553
    %3529 = vmatprep.subr.bf16.mxu0 %v2547
    %3530 = vmatpush1.bf16.msra.mxu0 %v2546
    %3531 = vmatprep.subr.bf16.mxu0 %v2540
    %3532 = vmatpush1.bf16.msra.mxu0 %v2539
    %3533 = vmatprep.subr.bf16.mxu0 %v2533
    %3534 = vmatpush1.bf16.msra.mxu0 %v2532
    %3535 = vmatprep.subr.bf16.mxu0 %v2526
    %3536 = vmatpush1.bf16.msra.mxu0 %v2525
    %3537 = vmatprep.subr.bf16.mxu0 %v2519
    %3538 = vmatpush1.bf16.msra.mxu0 %v2518
    %3539 = vmatprep.subr.bf16.mxu0 %v2512
    %3540 = vmatpush1.bf16.msra.mxu0 %v2511
    %3541 = vmatprep.subr.bf16.mxu0 %v2617
    %3542 = vmatpush2.bf16.msra.mxu0 %v2616
    %3543 = vmatprep.subr.bf16.mxu0 %v2610
    %3544 = vmatpush2.bf16.msra.mxu0 %v2609
    %3545 = vmatprep.subr.bf16.mxu0 %v2603
    %3546 = vmatpush2.bf16.msra.mxu0 %v2602
    %3547 = vmatprep.subr.bf16.mxu0 %v2596
    %3548 = vmatpush2.bf16.msra.mxu0 %v2595
    %3549 = vmatprep.subr.bf16.mxu0 %v2589
    %3550 = vmatpush2.bf16.msra.mxu0 %v2588
    %3551 = vmatprep.subr.bf16.mxu0 %v2582
    %3552 = vmatpush2.bf16.msra.mxu0 %v2581
    %3553 = vmatprep.subr.bf16.mxu0 %v2575
    %3554 = vmatpush2.bf16.msra.mxu0 %v2574
    %3555 = vmatprep.subr.bf16.mxu0 %v2568
    %3556 = vmatpush2.bf16.msra.mxu0 %v2567
    %3557 = vmatprep.mubr.bf16.mxu0 %v994
    %3558 = vmatmul.mubr.bf16.gmra.mxu0 %v993
    %v3559 = vpop.f32.mrf.mxu0
    %v3560 = vadd.f32 %v1413, %v3559
    %v3561 = vpop.f32.mrf.mxu0
    %v3562 = vadd.f32 %v1417, %v3561
    %v3563 = vpop.f32.mrf.mxu0
    %v3564 = vpop.f32.mrf.mxu0
    %3565 = vdwg.mxu0
    %3566 = vmatprep.subr.bf16.mxu0 %v2673
    %3567 = vmatpush1.bf16.msra.mxu0 %v2672
    %3568 = vmatprep.subr.bf16.mxu0 %v2666
    %3569 = vmatpush1.bf16.msra.mxu0 %v2665
    %3570 = vmatprep.subr.bf16.mxu0 %v2659
    %3571 = vmatpush1.bf16.msra.mxu0 %v2658
    %3572 = vmatprep.subr.bf16.mxu0 %v2652
    %3573 = vmatpush1.bf16.msra.mxu0 %v2651
    %3574 = vmatprep.subr.bf16.mxu0 %v2645
    %3575 = vmatpush1.bf16.msra.mxu0 %v2644
    %3576 = vmatprep.subr.bf16.mxu0 %v2638
    %3577 = vmatpush1.bf16.msra.mxu0 %v2637
    %3578 = vmatprep.subr.bf16.mxu0 %v2631
    %3579 = vmatpush1.bf16.msra.mxu0 %v2630
    %3580 = vmatprep.subr.bf16.mxu0 %v2624
    %3581 = vmatpush1.bf16.msra.mxu0 %v2623
    %3582 = vmatprep.subr.bf16.mxu0 %v2729
    %3583 = vmatpush2.bf16.msra.mxu0 %v2728
    %3584 = vmatprep.subr.bf16.mxu0 %v2722
    %3585 = vmatpush2.bf16.msra.mxu0 %v2721
    %3586 = vmatprep.subr.bf16.mxu0 %v2715
    %3587 = vmatpush2.bf16.msra.mxu0 %v2714
    %3588 = vmatprep.subr.bf16.mxu0 %v2708
    %3589 = vmatpush2.bf16.msra.mxu0 %v2707
    %3590 = vmatprep.subr.bf16.mxu0 %v2701
    %3591 = vmatpush2.bf16.msra.mxu0 %v2700
    %3592 = vmatprep.subr.bf16.mxu0 %v2694
    %3593 = vmatpush2.bf16.msra.mxu0 %v2693
    %3594 = vmatprep.subr.bf16.mxu0 %v2687
    %3595 = vmatpush2.bf16.msra.mxu0 %v2686
    %3596 = vmatprep.subr.bf16.mxu0 %v2680
    %3597 = vmatpush2.bf16.msra.mxu0 %v2679
    %3598 = vmatprep.mubr.bf16.mxu0 %v996
    %3599 = vmatmul.mubr.bf16.gmra.mxu0 %v995
    %v3600 = vpop.f32.mrf.mxu0
    %v3601 = vadd.f32 %v3560, %v3600
    %v3602 = vpop.f32.mrf.mxu0
    %v3603 = vadd.f32 %v3562, %v3602
    %v3604 = vpop.f32.mrf.mxu0
    %v3605 = vpop.f32.mrf.mxu0
    %3606 = vdwg.mxu0
    %3607 = vmatprep.subr.bf16.mxu0 %v2785
    %3608 = vmatpush1.bf16.msra.mxu0 %v2784
    %3609 = vmatprep.subr.bf16.mxu0 %v2778
    %3610 = vmatpush1.bf16.msra.mxu0 %v2777
    %3611 = vmatprep.subr.bf16.mxu0 %v2771
    %3612 = vmatpush1.bf16.msra.mxu0 %v2770
    %3613 = vmatprep.subr.bf16.mxu0 %v2764
    %3614 = vmatpush1.bf16.msra.mxu0 %v2763
    %3615 = vmatprep.subr.bf16.mxu0 %v2757
    %3616 = vmatpush1.bf16.msra.mxu0 %v2756
    %3617 = vmatprep.subr.bf16.mxu0 %v2750
    %3618 = vmatpush1.bf16.msra.mxu0 %v2749
    %3619 = vmatprep.subr.bf16.mxu0 %v2743
    %3620 = vmatpush1.bf16.msra.mxu0 %v2742
    %3621 = vmatprep.subr.bf16.mxu0 %v2736
    %3622 = vmatpush1.bf16.msra.mxu0 %v2735
    %3623 = vmatprep.subr.bf16.mxu0 %v2841
    %3624 = vmatpush2.bf16.msra.mxu0 %v2840
    %3625 = vmatprep.subr.bf16.mxu0 %v2834
    %3626 = vmatpush2.bf16.msra.mxu0 %v2833
    %3627 = vmatprep.subr.bf16.mxu0 %v2827
    %3628 = vmatpush2.bf16.msra.mxu0 %v2826
    %3629 = vmatprep.subr.bf16.mxu0 %v2820
    %3630 = vmatpush2.bf16.msra.mxu0 %v2819
    %3631 = vmatprep.subr.bf16.mxu0 %v2813
    %3632 = vmatpush2.bf16.msra.mxu0 %v2812
    %3633 = vmatprep.subr.bf16.mxu0 %v2806
    %3634 = vmatpush2.bf16.msra.mxu0 %v2805
    %3635 = vmatprep.subr.bf16.mxu0 %v2799
    %3636 = vmatpush2.bf16.msra.mxu0 %v2798
    %3637 = vmatprep.subr.bf16.mxu0 %v2792
    %3638 = vmatpush2.bf16.msra.mxu0 %v2791
    %3639 = vmatprep.mubr.bf16.mxu0 %v998
    %3640 = vmatmul.mubr.bf16.gmra.mxu0 %v997
    %v3641 = vpop.f32.mrf.mxu0
    %v3642 = vadd.f32 %v3601, %v3641
    %v3643 = vpop.f32.mrf.mxu0
    %v3644 = vadd.f32 %v3603, %v3643
    %v3645 = vpop.f32.mrf.mxu0
    %v3646 = vpop.f32.mrf.mxu0
    %3647 = vdwg.mxu0
    %3648 = vmatprep.subr.bf16.mxu0 0
    %3649 = vmatpush1.bf16.msra.mxu0 0
    %3650 = vmatprep.subr.bf16.mxu0 0
    %3651 = vmatpush1.bf16.msra.mxu0 0
    %3652 = vmatprep.subr.bf16.mxu0 0
    %3653 = vmatpush1.bf16.msra.mxu0 0
    %3654 = vmatprep.subr.bf16.mxu0 0
    %3655 = vmatpush1.bf16.msra.mxu0 0
    %3656 = vmatprep.subr.bf16.mxu0 0
    %3657 = vmatpush1.bf16.msra.mxu0 0
    %3658 = vmatprep.subr.bf16.mxu0 0
    %3659 = vmatpush1.bf16.msra.mxu0 0
    %3660 = vmatprep.subr.bf16.mxu0 0
    %3661 = vmatpush1.bf16.msra.mxu0 0
    %3662 = vmatprep.subr.bf16.mxu0 %v2848
    %3663 = vmatpush1.bf16.msra.mxu0 %v2847
    %3664 = vmatprep.subr.bf16.mxu0 0
    %3665 = vmatpush2.bf16.msra.mxu0 0
    %3666 = vmatprep.subr.bf16.mxu0 0
    %3667 = vmatpush2.bf16.msra.mxu0 0
    %3668 = vmatprep.subr.bf16.mxu0 0
    %3669 = vmatpush2.bf16.msra.mxu0 0
    %3670 = vmatprep.subr.bf16.mxu0 0
    %3671 = vmatpush2.bf16.msra.mxu0 0
    %3672 = vmatprep.subr.bf16.mxu0 0
    %3673 = vmatpush2.bf16.msra.mxu0 0
    %3674 = vmatprep.subr.bf16.mxu0 0
    %3675 = vmatpush2.bf16.msra.mxu0 0
    %3676 = vmatprep.subr.bf16.mxu0 0
    %3677 = vmatpush2.bf16.msra.mxu0 0
    %3678 = vmatprep.subr.bf16.mxu0 0
    %3679 = vmatpush2.bf16.msra.mxu0 0
    %3680 = vmatprep.mubr.bf16.mxu0 0
    %3681 = vmatmul.mubr.bf16.gmra.mxu0 %v3195
    %v3682 = vpop.f32.mrf.mxu0
    %v3683 = vadd.f32 %v3642, %v3682
    %v3684 = vpop.f32.mrf.mxu0
    %v3685 = vadd.f32 %v3644, %v3684
    %v3686 = vpop.f32.mrf.mxu0
    %v3687 = vpop.f32.mrf.mxu0
    %3688 = vdwg.mxu0
    %3689 = vmatprep.subr.bf16.mxu0 0
    %3690 = vmatpush1.bf16.msra.mxu0 %v2562
    %3691 = vmatprep.subr.bf16.mxu0 0
    %3692 = vmatpush1.bf16.msra.mxu0 %v2555
    %3693 = vmatprep.subr.bf16.mxu0 0
    %3694 = vmatpush1.bf16.msra.mxu0 %v2548
    %3695 = vmatprep.subr.bf16.mxu0 0
    %3696 = vmatpush1.bf16.msra.mxu0 %v2541
    %3697 = vmatprep.subr.bf16.mxu0 0
    %3698 = vmatpush1.bf16.msra.mxu0 %v2534
    %3699 = vmatprep.subr.bf16.mxu0 0
    %3700 = vmatpush1.bf16.msra.mxu0 %v2527
    %3701 = vmatprep.subr.bf16.mxu0 0
    %3702 = vmatpush1.bf16.msra.mxu0 %v2520
    %3703 = vmatprep.subr.bf16.mxu0 0
    %3704 = vmatpush1.bf16.msra.mxu0 %v2513
    %3705 = vmatprep.subr.bf16.mxu0 0
    %3706 = vmatpush2.bf16.msra.mxu0 %v2618
    %3707 = vmatprep.subr.bf16.mxu0 0
    %3708 = vmatpush2.bf16.msra.mxu0 %v2611
    %3709 = vmatprep.subr.bf16.mxu0 0
    %3710 = vmatpush2.bf16.msra.mxu0 %v2604
    %3711 = vmatprep.subr.bf16.mxu0 0
    %3712 = vmatpush2.bf16.msra.mxu0 %v2597
    %3713 = vmatprep.subr.bf16.mxu0 0
    %3714 = vmatpush2.bf16.msra.mxu0 %v2590
    %3715 = vmatprep.subr.bf16.mxu0 0
    %3716 = vmatpush2.bf16.msra.mxu0 %v2583
    %3717 = vmatprep.subr.bf16.mxu0 0
    %3718 = vmatpush2.bf16.msra.mxu0 %v2576
    %3719 = vmatprep.subr.bf16.mxu0 0
    %3720 = vmatpush2.bf16.msra.mxu0 %v2569
    %3721 = vmatprep.mubr.bf16.mxu0 %v994
    %3722 = vmatmul.mubr.bf16.gmra.mxu0 %v993
    %v3723 = vpop.f32.mrf.mxu0
    %v3724 = vadd.f32 %v1421, %v3723
    %v3725 = vpop.f32.mrf.mxu0
    %v3726 = vpop.f32.mrf.mxu0
    %v3727 = vpop.f32.mrf.mxu0
    %3728 = vdwg.mxu0
    %3729 = vmatprep.subr.bf16.mxu0 0
    %3730 = vmatpush1.bf16.msra.mxu0 %v2674
    %3731 = vmatprep.subr.bf16.mxu0 0
    %3732 = vmatpush1.bf16.msra.mxu0 %v2667
    %3733 = vmatprep.subr.bf16.mxu0 0
    %3734 = vmatpush1.bf16.msra.mxu0 %v2660
    %3735 = vmatprep.subr.bf16.mxu0 0
    %3736 = vmatpush1.bf16.msra.mxu0 %v2653
    %3737 = vmatprep.subr.bf16.mxu0 0
    %3738 = vmatpush1.bf16.msra.mxu0 %v2646
    %3739 = vmatprep.subr.bf16.mxu0 0
    %3740 = vmatpush1.bf16.msra.mxu0 %v2639
    %3741 = vmatprep.subr.bf16.mxu0 0
    %3742 = vmatpush1.bf16.msra.mxu0 %v2632
    %3743 = vmatprep.subr.bf16.mxu0 0
    %3744 = vmatpush1.bf16.msra.mxu0 %v2625
    %3745 = vmatprep.subr.bf16.mxu0 0
    %3746 = vmatpush2.bf16.msra.mxu0 %v2730
    %3747 = vmatprep.subr.bf16.mxu0 0
    %3748 = vmatpush2.bf16.msra.mxu0 %v2723
    %3749 = vmatprep.subr.bf16.mxu0 0
    %3750 = vmatpush2.bf16.msra.mxu0 %v2716
    %3751 = vmatprep.subr.bf16.mxu0 0
    %3752 = vmatpush2.bf16.msra.mxu0 %v2709
    %3753 = vmatprep.subr.bf16.mxu0 0
    %3754 = vmatpush2.bf16.msra.mxu0 %v2702
    %3755 = vmatprep.subr.bf16.mxu0 0
    %3756 = vmatpush2.bf16.msra.mxu0 %v2695
    %3757 = vmatprep.subr.bf16.mxu0 0
    %3758 = vmatpush2.bf16.msra.mxu0 %v2688
    %3759 = vmatprep.subr.bf16.mxu0 0
    %3760 = vmatpush2.bf16.msra.mxu0 %v2681
    %3761 = vmatprep.mubr.bf16.mxu0 %v996
    %3762 = vmatmul.mubr.bf16.gmra.mxu0 %v995
    %v3763 = vpop.f32.mrf.mxu0
    %v3764 = vadd.f32 %v3724, %v3763
    %v3765 = vpop.f32.mrf.mxu0
    %v3766 = vpop.f32.mrf.mxu0
    %v3767 = vpop.f32.mrf.mxu0
    %3768 = vdwg.mxu0
    %3769 = vmatprep.subr.bf16.mxu0 0
    %3770 = vmatpush1.bf16.msra.mxu0 %v2786
    %3771 = vmatprep.subr.bf16.mxu0 0
    %3772 = vmatpush1.bf16.msra.mxu0 %v2779
    %3773 = vmatprep.subr.bf16.mxu0 0
    %3774 = vmatpush1.bf16.msra.mxu0 %v2772
    %3775 = vmatprep.subr.bf16.mxu0 0
    %3776 = vmatpush1.bf16.msra.mxu0 %v2765
    %3777 = vmatprep.subr.bf16.mxu0 0
    %3778 = vmatpush1.bf16.msra.mxu0 %v2758
    %3779 = vmatprep.subr.bf16.mxu0 0
    %3780 = vmatpush1.bf16.msra.mxu0 %v2751
    %3781 = vmatprep.subr.bf16.mxu0 0
    %3782 = vmatpush1.bf16.msra.mxu0 %v2744
    %3783 = vmatprep.subr.bf16.mxu0 0
    %3784 = vmatpush1.bf16.msra.mxu0 %v2737
    %3785 = vmatprep.subr.bf16.mxu0 0
    %3786 = vmatpush2.bf16.msra.mxu0 %v2842
    %3787 = vmatprep.subr.bf16.mxu0 0
    %3788 = vmatpush2.bf16.msra.mxu0 %v2835
    %3789 = vmatprep.subr.bf16.mxu0 0
    %3790 = vmatpush2.bf16.msra.mxu0 %v2828
    %3791 = vmatprep.subr.bf16.mxu0 0
    %3792 = vmatpush2.bf16.msra.mxu0 %v2821
    %3793 = vmatprep.subr.bf16.mxu0 0
    %3794 = vmatpush2.bf16.msra.mxu0 %v2814
    %3795 = vmatprep.subr.bf16.mxu0 0
    %3796 = vmatpush2.bf16.msra.mxu0 %v2807
    %3797 = vmatprep.subr.bf16.mxu0 0
    %3798 = vmatpush2.bf16.msra.mxu0 %v2800
    %3799 = vmatprep.subr.bf16.mxu0 0
    %3800 = vmatpush2.bf16.msra.mxu0 %v2793
    %3801 = vmatprep.mubr.bf16.mxu0 %v998
    %3802 = vmatmul.mubr.bf16.gmra.mxu0 %v997
    %v3803 = vpop.f32.mrf.mxu0
    %v3804 = vadd.f32 %v3764, %v3803
    %v3805 = vpop.f32.mrf.mxu0
    %v3806 = vpop.f32.mrf.mxu0
    %v3807 = vpop.f32.mrf.mxu0
    %3808 = vdwg.mxu0
    %3809 = vmatprep.subr.bf16.mxu0 0
    %3810 = vmatpush1.bf16.msra.mxu0 0
    %3811 = vmatprep.subr.bf16.mxu0 0
    %3812 = vmatpush1.bf16.msra.mxu0 0
    %3813 = vmatprep.subr.bf16.mxu0 0
    %3814 = vmatpush1.bf16.msra.mxu0 0
    %3815 = vmatprep.subr.bf16.mxu0 0
    %3816 = vmatpush1.bf16.msra.mxu0 0
    %3817 = vmatprep.subr.bf16.mxu0 0
    %3818 = vmatpush1.bf16.msra.mxu0 0
    %3819 = vmatprep.subr.bf16.mxu0 0
    %3820 = vmatpush1.bf16.msra.mxu0 0
    %3821 = vmatprep.subr.bf16.mxu0 0
    %3822 = vmatpush1.bf16.msra.mxu0 0
    %3823 = vmatprep.subr.bf16.mxu0 0
    %3824 = vmatpush1.bf16.msra.mxu0 %v2849
    %3825 = vmatprep.subr.bf16.mxu0 0
    %3826 = vmatpush2.bf16.msra.mxu0 0
    %3827 = vmatprep.subr.bf16.mxu0 0
    %3828 = vmatpush2.bf16.msra.mxu0 0
    %3829 = vmatprep.subr.bf16.mxu0 0
    %3830 = vmatpush2.bf16.msra.mxu0 0
    %3831 = vmatprep.subr.bf16.mxu0 0
    %3832 = vmatpush2.bf16.msra.mxu0 0
    %3833 = vmatprep.subr.bf16.mxu0 0
    %3834 = vmatpush2.bf16.msra.mxu0 0
    %3835 = vmatprep.subr.bf16.mxu0 0
    %3836 = vmatpush2.bf16.msra.mxu0 0
    %3837 = vmatprep.subr.bf16.mxu0 0
    %3838 = vmatpush2.bf16.msra.mxu0 0
    %3839 = vmatprep.subr.bf16.mxu0 0
    %3840 = vmatpush2.bf16.msra.mxu0 0
    %3841 = vmatprep.mubr.bf16.mxu0 0
    %3842 = vmatmul.mubr.bf16.gmra.mxu0 %v3195
    %v3843 = vpop.f32.mrf.mxu0
    %v3844 = vadd.f32 %v3804, %v3843
    %v3845 = vpop.f32.mrf.mxu0
    %v3846 = vpop.f32.mrf.mxu0
    %v3847 = vpop.f32.mrf.mxu0
    %3848 = vdwg.mxu0
    %v3849 = vmax.f32 %v3355, 0.0
    %v3850 = vmax.f32 %v3357, 0.0
    %v3851 = vmax.f32 %v3519, 0.0
    %v3852 = vmax.f32 %v3521, 0.0
    %v3853 = vmax.f32 %v3683, 0.0
    %v3854 = vmax.f32 %v3685, 0.0
    %v3855 = vmax.f32 %v3844, 0.0
    %v3856 = vpack.c.bf16 %v3849, %v3849
    %v3857 = vpack.c.bf16 %v3850, %v3850
    %v3858 = vpack.c.bf16 %v3851, %v3851
    %v3859 = vpack.c.bf16 %v3852, %v3852
    %v3860 = vpack.c.bf16 %v3853, %v3853
    %v3861 = vpack.c.bf16 %v3854, %v3854
    %v3862 = vpack.c.bf16 %v3855, %v3855
    %v3863 = vld [vmem:[#allocation7] sm:$0xff]
    %v3864 = vld [vmem:[#allocation7 + $0x8] sm:$0xff]
    %v3865 = vld [vmem:[#allocation7 + $0x10] sm:$0xf]
    %v3866 = vld [vmem:[#allocation7 + $0x14] sm:$0xff]
    %v3867 = vld [vmem:[#allocation7 + $0x1c] sm:$0xff]
    %v3868 = vld [vmem:[#allocation7 + $0x24] sm:$0xf]
    %v3869 = vld [vmem:[#allocation7 + $0x28] sm:$0xff]
    %v3870 = vld [vmem:[#allocation7 + $0x30] sm:$0xff]
    %v3871 = vld [vmem:[#allocation7 + $0x38] sm:$0xf]
    %v3872 = vld [vmem:[#allocation7 + $0x3c] sm:$0xff]
    %v3873 = vld [vmem:[#allocation7 + $0x44] sm:$0xff]
    %v3874 = vld [vmem:[#allocation7 + $0x4c] sm:$0xf]
    %v3875 = vld [vmem:[#allocation7 + $0x50] sm:$0xff]
    %v3876 = vld [vmem:[#allocation7 + $0x58] sm:$0xff]
    %v3877 = vld [vmem:[#allocation7 + $0x60] sm:$0xf]
    %v3878 = vld [vmem:[#allocation7 + $0x64] sm:$0xff]
    %v3879 = vld [vmem:[#allocation7 + $0x6c] sm:$0xff]
    %v3880 = vld [vmem:[#allocation7 + $0x74] sm:$0xf]
    %v3881 = vld [vmem:[#allocation7 + $0x78] sm:$0xff]
    %v3882 = vld [vmem:[#allocation7 + $0x80] sm:$0xff]
    %v3883 = vld [vmem:[#allocation7 + $0x88] sm:$0xf]
    %v3884 = vld [vmem:[#allocation7 + $0x8c] sm:$0xff]
    %v3885 = vld [vmem:[#allocation7 + $0x94] sm:$0xff]
    %v3886 = vld [vmem:[#allocation7 + $0x9c] sm:$0xf]
    %v3887 = vld [vmem:[#allocation7 + $0xa0] sm:$0xff]
    %v3888 = vld [vmem:[#allocation7 + $0xa8] sm:$0xff]
    %v3889 = vld [vmem:[#allocation7 + $0xb0] sm:$0xf]
    %v3890 = vld [vmem:[#allocation7 + $0xb4] sm:$0xff]
    %v3891 = vld [vmem:[#allocation7 + $0xbc] sm:$0xff]
    %v3892 = vld [vmem:[#allocation7 + $0xc4] sm:$0xf]
    %v3893 = vld [vmem:[#allocation7 + $0xc8] sm:$0xff]
    %v3894 = vld [vmem:[#allocation7 + $0xd0] sm:$0xff]
    %v3895 = vld [vmem:[#allocation7 + $0xd8] sm:$0xf]
    %v3896 = vld [vmem:[#allocation7 + $0xdc] sm:$0xff]
    %v3897 = vld [vmem:[#allocation7 + $0xe4] sm:$0xff]
    %v3898 = vld [vmem:[#allocation7 + $0xec] sm:$0xf]
    %v3899 = vld [vmem:[#allocation7 + $0xf0] sm:$0xff]
    %v3900 = vld [vmem:[#allocation7 + $0xf8] sm:$0xff]
    %v3901 = vld [vmem:[#allocation7 + $0x100] sm:$0xf]
    %v3902 = vld [vmem:[#allocation7 + $0x104] sm:$0xff]
    %v3903 = vld [vmem:[#allocation7 + $0x10c] sm:$0xff]
    %v3904 = vld [vmem:[#allocation7 + $0x114] sm:$0xf]
    %v3905 = vld [vmem:[#allocation7 + $0x118] sm:$0xff]
    %v3906 = vld [vmem:[#allocation7 + $0x120] sm:$0xff]
    %v3907 = vld [vmem:[#allocation7 + $0x128] sm:$0xf]
    %v3908 = vld [vmem:[#allocation7 + $0x12c] sm:$0xff]
    %v3909 = vld [vmem:[#allocation7 + $0x134] sm:$0xff]
    %v3910 = vld [vmem:[#allocation7 + $0x13c] sm:$0xf]
    %v3911 = vld [vmem:[#allocation7 + $0x140] sm:$0xff]
    %v3912 = vld [vmem:[#allocation7 + $0x148] sm:$0xff]
    %v3913 = vld [vmem:[#allocation7 + $0x150] sm:$0xf]
    %v3914 = vld [vmem:[#allocation7 + $0x154] sm:$0xff]
    %v3915 = vld [vmem:[#allocation7 + $0x15c] sm:$0xff]
    %v3916 = vld [vmem:[#allocation7 + $0x164] sm:$0xf]
    %v3917 = vld [vmem:[#allocation7 + $0x168] sm:$0xff]
    %v3918 = vld [vmem:[#allocation7 + $0x170] sm:$0xff]
    %v3919 = vld [vmem:[#allocation7 + $0x178] sm:$0xf]
    %v3920 = vld [vmem:[#allocation7 + $0x17c] sm:$0xff]
    %v3921 = vld [vmem:[#allocation7 + $0x184] sm:$0xff]
    %v3922 = vld [vmem:[#allocation7 + $0x18c] sm:$0xf]
    %v3923 = vld [vmem:[#allocation7 + $0x190] sm:$0xff]
    %v3924 = vld [vmem:[#allocation7 + $0x198] sm:$0xff]
    %v3925 = vld [vmem:[#allocation7 + $0x1a0] sm:$0xf]
    %v3926 = vld [vmem:[#allocation7 + $0x1a4] sm:$0xff]
    %v3927 = vld [vmem:[#allocation7 + $0x1ac] sm:$0xff]
    %v3928 = vld [vmem:[#allocation7 + $0x1b4] sm:$0xf]
    %v3929 = vld [vmem:[#allocation7 + $0x1b8] sm:$0xff]
    %v3930 = vld [vmem:[#allocation7 + $0x1c0] sm:$0xff]
    %v3931 = vld [vmem:[#allocation7 + $0x1c8] sm:$0xf]
    %v3932 = vld [vmem:[#allocation7 + $0x1cc] sm:$0xff]
    %v3933 = vld [vmem:[#allocation7 + $0x1d4] sm:$0xff]
    %v3934 = vld [vmem:[#allocation7 + $0x1dc] sm:$0xf]
    %v3935 = vld [vmem:[#allocation7 + $0x1e0] sm:$0xff]
    %v3936 = vld [vmem:[#allocation7 + $0x1e8] sm:$0xff]
    %v3937 = vld [vmem:[#allocation7 + $0x1f0] sm:$0xf]
    %v3938 = vld [vmem:[#allocation7 + $0x1f4] sm:$0xff]
    %v3939 = vld [vmem:[#allocation7 + $0x1fc] sm:$0xff]
    %v3940 = vld [vmem:[#allocation7 + $0x204] sm:$0xf]
    %v3941 = vld [vmem:[#allocation7 + $0x208] sm:$0xff]
    %v3942 = vld [vmem:[#allocation7 + $0x210] sm:$0xff]
    %v3943 = vld [vmem:[#allocation7 + $0x218] sm:$0xf]
    %v3944 = vld [vmem:[#allocation7 + $0x21c] sm:$0xff]
    %v3945 = vld [vmem:[#allocation7 + $0x224] sm:$0xff]
    %v3946 = vld [vmem:[#allocation7 + $0x22c] sm:$0xf]
    %v3947 = vld [vmem:[#allocation7 + $0x230] sm:$0xff]
    %v3948 = vld [vmem:[#allocation7 + $0x238] sm:$0xff]
    %v3949 = vld [vmem:[#allocation7 + $0x240] sm:$0xf]
    %v3950 = vld [vmem:[#allocation7 + $0x244] sm:$0xff]
    %v3951 = vld [vmem:[#allocation7 + $0x24c] sm:$0xff]
    %v3952 = vld [vmem:[#allocation7 + $0x254] sm:$0xf]
    %v3953 = vld [vmem:[#allocation7 + $0x258] sm:$0xff]
    %v3954 = vld [vmem:[#allocation7 + $0x260] sm:$0xff]
    %v3955 = vld [vmem:[#allocation7 + $0x268] sm:$0xf]
    %v3956 = vld [vmem:[#allocation7 + $0x26c] sm:$0xff]
    %v3957 = vld [vmem:[#allocation7 + $0x274] sm:$0xff]
    %v3958 = vld [vmem:[#allocation7 + $0x27c] sm:$0xf]
    %v3959 = vld [vmem:[#allocation7 + $0x280] sm:$0xff]
    %v3960 = vld [vmem:[#allocation7 + $0x288] sm:$0xff]
    %v3961 = vld [vmem:[#allocation7 + $0x290] sm:$0xf]
    %v3962 = vld [vmem:[#allocation7 + $0x294] sm:$0xff]
    %v3963 = vld [vmem:[#allocation7 + $0x29c] sm:$0xff]
    %v3964 = vld [vmem:[#allocation7 + $0x2a4] sm:$0xf]
    %v3965 = vld [vmem:[#allocation7 + $0x2a8] sm:$0xff]
    %v3966 = vld [vmem:[#allocation7 + $0x2b0] sm:$0xff]
    %v3967 = vld [vmem:[#allocation7 + $0x2b8] sm:$0xf]
    %v3968 = vld [vmem:[#allocation7 + $0x2bc] sm:$0xff]
    %v3969 = vld [vmem:[#allocation7 + $0x2c4] sm:$0xff]
    %v3970 = vld [vmem:[#allocation7 + $0x2cc] sm:$0xf]
    %v3971 = vld [vmem:[#allocation7 + $0x2d0] sm:$0xff]
    %v3972 = vld [vmem:[#allocation7 + $0x2d8] sm:$0xff]
    %v3973 = vld [vmem:[#allocation7 + $0x2e0] sm:$0xf]
    %v3974 = vld [vmem:[#allocation7 + $0x2e4] sm:$0xff]
    %v3975 = vld [vmem:[#allocation7 + $0x2ec] sm:$0xff]
    %v3976 = vld [vmem:[#allocation7 + $0x2f4] sm:$0xf]
    %v3977 = vld [vmem:[#allocation7 + $0x2f8] sm:$0xff]
    %v3978 = vld [vmem:[#allocation7 + $0x300] sm:$0xff]
    %v3979 = vld [vmem:[#allocation7 + $0x308] sm:$0xf]
    %v3980 = vld [vmem:[#allocation7 + $0x30c] sm:$0xff]
    %v3981 = vld [vmem:[#allocation7 + $0x314] sm:$0xff]
    %v3982 = vld [vmem:[#allocation7 + $0x31c] sm:$0xf]
    %v3983 = vld [vmem:[#allocation7 + $0x320] sm:$0xff]
    %v3984 = vld [vmem:[#allocation7 + $0x328] sm:$0xff]
    %v3985 = vld [vmem:[#allocation7 + $0x330] sm:$0xf]
    %v3986 = vld [vmem:[#allocation7 + $0x334] sm:$0xff]
    %v3987 = vld [vmem:[#allocation7 + $0x33c] sm:$0xff]
    %v3988 = vld [vmem:[#allocation7 + $0x344] sm:$0xf]
    %v3989 = vld [vmem:[#allocation7 + $0x348] sm:$0xff]
    %v3990 = vld [vmem:[#allocation7 + $0x350] sm:$0xff]
    %v3991 = vld [vmem:[#allocation7 + $0x358] sm:$0xf]
    %v3992 = vld [vmem:[#allocation7 + $0x35c] sm:$0xff]
    %v3993 = vld [vmem:[#allocation7 + $0x364] sm:$0xff]
    %v3994 = vld [vmem:[#allocation7 + $0x36c] sm:$0xf]
    %v3995 = vld [vmem:[#allocation7 + $0x370] sm:$0xff]
    %v3996 = vld [vmem:[#allocation7 + $0x378] sm:$0xff]
    %v3997 = vld [vmem:[#allocation7 + $0x380] sm:$0xf]
    %v3998 = vld [vmem:[#allocation7 + $0x384] sm:$0xff]
    %v3999 = vld [vmem:[#allocation7 + $0x38c] sm:$0xff]
    %v4000 = vld [vmem:[#allocation7 + $0x394] sm:$0xf]
    %v4001 = vld [vmem:[#allocation7 + $0x398] sm:$0xff]
    %v4002 = vld [vmem:[#allocation7 + $0x3a0] sm:$0xff]
    %v4003 = vld [vmem:[#allocation7 + $0x3a8] sm:$0xf]
    %v4004 = vld [vmem:[#allocation7 + $0x3ac] sm:$0xff]
    %v4005 = vld [vmem:[#allocation7 + $0x3b4] sm:$0xff]
    %v4006 = vld [vmem:[#allocation7 + $0x3bc] sm:$0xf]
    %v4007 = vld [vmem:[#allocation7 + $0x3c0] sm:$0xff]
    %v4008 = vld [vmem:[#allocation7 + $0x3c8] sm:$0xff]
    %v4009 = vld [vmem:[#allocation7 + $0x3d0] sm:$0xf]
    %v4010 = vld [vmem:[#allocation7 + $0x3d4] sm:$0xff]
    %v4011 = vld [vmem:[#allocation7 + $0x3dc] sm:$0xff]
    %v4012 = vld [vmem:[#allocation7 + $0x3e4] sm:$0xf]
    %v4013 = vld [vmem:[#allocation7 + $0x3e8] sm:$0xff]
    %v4014 = vld [vmem:[#allocation7 + $0x3f0] sm:$0xff]
    %v4015 = vld [vmem:[#allocation7 + $0x3f8] sm:$0xf]
    %v4016 = vld [vmem:[#allocation7 + $0x3fc] sm:$0xff]
    %v4017 = vld [vmem:[#allocation7 + $0x404] sm:$0xff]
    %v4018 = vld [vmem:[#allocation7 + $0x40c] sm:$0xf]
    %v4019 = vld [vmem:[#allocation7 + $0x410] sm:$0xff]
    %v4020 = vld [vmem:[#allocation7 + $0x418] sm:$0xff]
    %v4021 = vld [vmem:[#allocation7 + $0x420] sm:$0xf]
    %v4022 = vld [vmem:[#allocation7 + $0x424] sm:$0xff]
    %v4023 = vld [vmem:[#allocation7 + $0x42c] sm:$0xff]
    %v4024 = vld [vmem:[#allocation7 + $0x434] sm:$0xf]
    %v4025 = vld [vmem:[#allocation7 + $0x438] sm:$0xff]
    %v4026 = vld [vmem:[#allocation7 + $0x440] sm:$0xff]
    %v4027 = vld [vmem:[#allocation7 + $0x448] sm:$0xf]
    %v4028 = vld [vmem:[#allocation7 + $0x44c] sm:$0xff]
    %v4029 = vld [vmem:[#allocation7 + $0x454] sm:$0xff]
    %v4030 = vld [vmem:[#allocation7 + $0x45c] sm:$0xf]
    %v4031 = vld [vmem:[#allocation7 + $0x460] sm:$0xff]
    %v4032 = vld [vmem:[#allocation7 + $0x468] sm:$0xff]
    %v4033 = vld [vmem:[#allocation7 + $0x470] sm:$0xf]
    %v4034 = vld [vmem:[#allocation7 + $0x474] sm:$0xff]
    %v4035 = vld [vmem:[#allocation7 + $0x47c] sm:$0xff]
    %v4036 = vld [vmem:[#allocation7 + $0x484] sm:$0xf]
    %v4037 = vld [vmem:[#allocation7 + $0x488] sm:$0xff]
    %v4038 = vld [vmem:[#allocation7 + $0x490] sm:$0xff]
    %v4039 = vld [vmem:[#allocation7 + $0x498] sm:$0xf]
    %v4040 = vld [vmem:[#allocation7 + $0x49c] sm:$0xff]
    %v4041 = vld [vmem:[#allocation7 + $0x4a4] sm:$0xff]
    %v4042 = vld [vmem:[#allocation7 + $0x4ac] sm:$0xf]
    %v4043 = vld [vmem:[#allocation7 + $0x4b0] sm:$0xff]
    %v4044 = vld [vmem:[#allocation7 + $0x4b8] sm:$0xff]
    %v4045 = vld [vmem:[#allocation7 + $0x4c0] sm:$0xf]
    %v4046 = vld [vmem:[#allocation7 + $0x4c4] sm:$0xff]
    %v4047 = vld [vmem:[#allocation7 + $0x4cc] sm:$0xff]
    %v4048 = vld [vmem:[#allocation7 + $0x4d4] sm:$0xf]
    %v4049 = vld [vmem:[#allocation7 + $0x4d8] sm:$0xff]
    %v4050 = vld [vmem:[#allocation7 + $0x4e0] sm:$0xff]
    %v4051 = vld [vmem:[#allocation7 + $0x4e8] sm:$0xf]
    %v4052 = vld [vmem:[#allocation7 + $0x4ec] sm:$0xff]
    %v4053 = vld [vmem:[#allocation7 + $0x4f4] sm:$0xff]
    %v4054 = vld [vmem:[#allocation7 + $0x4fc] sm:$0xf]
    %v4055 = vld [vmem:[#allocation7 + $0x500] sm:$0xff]
    %v4056 = vld [vmem:[#allocation7 + $0x508] sm:$0xff]
    %v4057 = vld [vmem:[#allocation7 + $0x510] sm:$0xf]
    %v4058 = vld [vmem:[#allocation7 + $0x514] sm:$0xff]
    %v4059 = vld [vmem:[#allocation7 + $0x51c] sm:$0xff]
    %v4060 = vld [vmem:[#allocation7 + $0x524] sm:$0xf]
    %v4061 = vld [vmem:[#allocation7 + $0x528] sm:$0xff]
    %v4062 = vld [vmem:[#allocation7 + $0x530] sm:$0xff]
    %v4063 = vld [vmem:[#allocation7 + $0x538] sm:$0xf]
    %v4064 = vld [vmem:[#allocation7 + $0x53c] sm:$0xff]
    %v4065 = vld [vmem:[#allocation7 + $0x544] sm:$0xff]
    %v4066 = vld [vmem:[#allocation7 + $0x54c] sm:$0xf]
    %v4067 = vld [vmem:[#allocation7 + $0x550] sm:$0xff]
    %v4068 = vld [vmem:[#allocation7 + $0x558] sm:$0xff]
    %v4069 = vld [vmem:[#allocation7 + $0x560] sm:$0xf]
    %v4070 = vld [vmem:[#allocation7 + $0x564] sm:$0xff]
    %v4071 = vld [vmem:[#allocation7 + $0x56c] sm:$0xff]
    %v4072 = vld [vmem:[#allocation7 + $0x574] sm:$0xf]
    %v4073 = vld [vmem:[#allocation7 + $0x578] sm:$0xff]
    %v4074 = vld [vmem:[#allocation7 + $0x580] sm:$0xff]
    %v4075 = vld [vmem:[#allocation7 + $0x588] sm:$0xf]
    %v4076 = vld [vmem:[#allocation7 + $0x58c] sm:$0xff]
    %v4077 = vld [vmem:[#allocation7 + $0x594] sm:$0xff]
    %v4078 = vld [vmem:[#allocation7 + $0x59c] sm:$0xf]
    %v4079 = vld [vmem:[#allocation7 + $0x5a0] sm:$0xff]
    %v4080 = vld [vmem:[#allocation7 + $0x5a8] sm:$0xff]
    %v4081 = vld [vmem:[#allocation7 + $0x5b0] sm:$0xf]
    %v4082 = vld [vmem:[#allocation7 + $0x5b4] sm:$0xff]
    %v4083 = vld [vmem:[#allocation7 + $0x5bc] sm:$0xff]
    %v4084 = vld [vmem:[#allocation7 + $0x5c4] sm:$0xf]
    %v4085 = vld [vmem:[#allocation7 + $0x5c8] sm:$0xff]
    %v4086 = vld [vmem:[#allocation7 + $0x5d0] sm:$0xff]
    %v4087 = vld [vmem:[#allocation7 + $0x5d8] sm:$0xf]
    %v4088 = vld [vmem:[#allocation7 + $0x5dc] sm:$0xff]
    %v4089 = vld [vmem:[#allocation7 + $0x5e4] sm:$0xff]
    %v4090 = vld [vmem:[#allocation7 + $0x5ec] sm:$0xf]
    %v4091 = vld [vmem:[#allocation7 + $0x5f0] sm:$0xff]
    %v4092 = vld [vmem:[#allocation7 + $0x5f8] sm:$0xff]
    %v4093 = vld [vmem:[#allocation7 + $0x600] sm:$0xf]
    %v4094 = vld [vmem:[#allocation7 + $0x604] sm:$0xff]
    %v4095 = vld [vmem:[#allocation7 + $0x60c] sm:$0xff]
    %v4096 = vld [vmem:[#allocation7 + $0x614] sm:$0xf]
    %v4097 = vld [vmem:[#allocation7 + $0x618] sm:$0xff]
    %v4098 = vld [vmem:[#allocation7 + $0x620] sm:$0xff]
    %v4099 = vld [vmem:[#allocation7 + $0x628] sm:$0xf]
    %v4100 = vld [vmem:[#allocation7 + $0x62c] sm:$0xff]
    %v4101 = vld [vmem:[#allocation7 + $0x634] sm:$0xff]
    %v4102 = vld [vmem:[#allocation7 + $0x63c] sm:$0xf]
    %v4103 = vld [vmem:[#allocation7 + $0x640] sm:$0xff]
    %v4104 = vld [vmem:[#allocation7 + $0x648] sm:$0xff]
    %v4105 = vld [vmem:[#allocation7 + $0x650] sm:$0xf]
    %v4106 = vld [vmem:[#allocation7 + $0x654] sm:$0xff]
    %v4107 = vld [vmem:[#allocation7 + $0x65c] sm:$0xff]
    %v4108 = vld [vmem:[#allocation7 + $0x664] sm:$0xf]
    %v4109 = vld [vmem:[#allocation7 + $0x668] sm:$0xff]
    %v4110 = vld [vmem:[#allocation7 + $0x670] sm:$0xff]
    %v4111 = vld [vmem:[#allocation7 + $0x678] sm:$0xf]
    %v4112 = vld [vmem:[#allocation7 + $0x67c] sm:$0xff]
    %v4113 = vld [vmem:[#allocation7 + $0x684] sm:$0xff]
    %v4114 = vld [vmem:[#allocation7 + $0x68c] sm:$0xf]
    %v4115 = vld [vmem:[#allocation7 + $0x690] sm:$0xff]
    %v4116 = vld [vmem:[#allocation7 + $0x698] sm:$0xff]
    %v4117 = vld [vmem:[#allocation7 + $0x6a0] sm:$0xf]
    %v4118 = vld [vmem:[#allocation7 + $0x6a4] sm:$0xff]
    %v4119 = vld [vmem:[#allocation7 + $0x6ac] sm:$0xff]
    %v4120 = vld [vmem:[#allocation7 + $0x6b4] sm:$0xf]
    %v4121 = vld [vmem:[#allocation7 + $0x6b8] sm:$0xff]
    %v4122 = vld [vmem:[#allocation7 + $0x6c0] sm:$0xff]
    %v4123 = vld [vmem:[#allocation7 + $0x6c8] sm:$0xf]
    %v4124 = vld [vmem:[#allocation7 + $0x6cc] sm:$0xff]
    %v4125 = vld [vmem:[#allocation7 + $0x6d4] sm:$0xff]
    %v4126 = vld [vmem:[#allocation7 + $0x6dc] sm:$0xf]
    %v4127 = vld [vmem:[#allocation7 + $0x6e0] sm:$0xff]
    %v4128 = vld [vmem:[#allocation7 + $0x6e8] sm:$0xff]
    %v4129 = vld [vmem:[#allocation7 + $0x6f0] sm:$0xf]
    %v4130 = vld [vmem:[#allocation7 + $0x6f4] sm:$0xff]
    %v4131 = vld [vmem:[#allocation7 + $0x6fc] sm:$0xff]
    %v4132 = vld [vmem:[#allocation7 + $0x704] sm:$0xf]
    %v4133 = vld [vmem:[#allocation7 + $0x708] sm:$0xff]
    %v4134 = vld [vmem:[#allocation7 + $0x710] sm:$0xff]
    %v4135 = vld [vmem:[#allocation7 + $0x718] sm:$0xf]
    %v4136 = vld [vmem:[#allocation7 + $0x71c] sm:$0xff]
    %v4137 = vld [vmem:[#allocation7 + $0x724] sm:$0xff]
    %v4138 = vld [vmem:[#allocation7 + $0x72c] sm:$0xf]
    %v4139 = vld [vmem:[#allocation7 + $0x730] sm:$0xff]
    %v4140 = vld [vmem:[#allocation7 + $0x738] sm:$0xff]
    %v4141 = vld [vmem:[#allocation7 + $0x740] sm:$0xf]
    %v4142 = vld [vmem:[#allocation7 + $0x744] sm:$0xff]
    %v4143 = vld [vmem:[#allocation7 + $0x74c] sm:$0xff]
    %v4144 = vld [vmem:[#allocation7 + $0x754] sm:$0xf]
    %v4145 = vld [vmem:[#allocation7 + $0x758] sm:$0xff]
    %v4146 = vld [vmem:[#allocation7 + $0x760] sm:$0xff]
    %v4147 = vld [vmem:[#allocation7 + $0x768] sm:$0xf]
    %v4148 = vld [vmem:[#allocation7 + $0x76c] sm:$0xff]
    %v4149 = vld [vmem:[#allocation7 + $0x774] sm:$0xff]
    %v4150 = vld [vmem:[#allocation7 + $0x77c] sm:$0xf]
    %v4151 = vld [vmem:[#allocation7 + $0x780] sm:$0xff]
    %v4152 = vld [vmem:[#allocation7 + $0x788] sm:$0xff]
    %v4153 = vld [vmem:[#allocation7 + $0x790] sm:$0xf]
    %v4154 = vld [vmem:[#allocation7 + $0x794] sm:$0xff]
    %v4155 = vld [vmem:[#allocation7 + $0x79c] sm:$0xff]
    %v4156 = vld [vmem:[#allocation7 + $0x7a4] sm:$0xf]
    %v4157 = vld [vmem:[#allocation7 + $0x7a8] sm:$0xff]
    %v4158 = vld [vmem:[#allocation7 + $0x7b0] sm:$0xff]
    %v4159 = vld [vmem:[#allocation7 + $0x7b8] sm:$0xf]
    %v4160 = vld [vmem:[#allocation7 + $0x7bc] sm:$0xff]
    %v4161 = vld [vmem:[#allocation7 + $0x7c4] sm:$0xff]
    %v4162 = vld [vmem:[#allocation7 + $0x7cc] sm:$0xf]
    %v4163 = vld [vmem:[#allocation10 + $0x10] sm:$0x1f]
    %v4165 = vlaneseq
    %v4166 = vshrl.u32 %v4165, 7
    %v4167 = vsub.s32 0, %v4166
    %v4168 = vrot.slane %v4163, %v4167
    %v4169 = vlaneseq
    %v4170 = vshrl.u32 %v4169, 7
    %v4171 = vsub.s32 1, %v4170
    %v4172 = vrot.slane %v4163, %v4171
    %v4173 = vlaneseq
    %v4174 = vshrl.u32 %v4173, 7
    %v4175 = vsub.s32 2, %v4174
    %v4176 = vrot.slane %v4163, %v4175
    %v4177 = vlaneseq
    %v4178 = vshrl.u32 %v4177, 7
    %v4179 = vsub.s32 3, %v4178
    %v4180 = vrot.slane %v4163, %v4179
    %v4181 = vlaneseq
    %v4182 = vshrl.u32 %v4181, 7
    %v4183 = vsub.s32 4, %v4182
    %v4184 = vrot.slane %v4163, %v4183
    %v4490 = vunpack.c.l.b16 %v3863
    %v4491 = vunpack.c.h.b16 %v3863
    %v4492 = vunpack.c.l.b16 %v3864
    %v4493 = vunpack.c.h.b16 %v3864
    %v4494 = vunpack.c.l.b16 %v3865
    %v4495 = vunpack.c.l.b16 %v3866
    %v4496 = vunpack.c.h.b16 %v3866
    %v4497 = vunpack.c.l.b16 %v3867
    %v4498 = vunpack.c.h.b16 %v3867
    %v4499 = vunpack.c.l.b16 %v3868
    %v4500 = vunpack.c.l.b16 %v3869
    %v4501 = vunpack.c.h.b16 %v3869
    %v4502 = vunpack.c.l.b16 %v3870
    %v4503 = vunpack.c.h.b16 %v3870
    %v4504 = vunpack.c.l.b16 %v3871
    %v4505 = vunpack.c.l.b16 %v3872
    %v4506 = vunpack.c.h.b16 %v3872
    %v4507 = vunpack.c.l.b16 %v3873
    %v4508 = vunpack.c.h.b16 %v3873
    %v4509 = vunpack.c.l.b16 %v3874
    %v4510 = vunpack.c.l.b16 %v3875
    %v4511 = vunpack.c.h.b16 %v3875
    %v4512 = vunpack.c.l.b16 %v3876
    %v4513 = vunpack.c.h.b16 %v3876
    %v4514 = vunpack.c.l.b16 %v3877
    %v4515 = vunpack.c.l.b16 %v3878
    %v4516 = vunpack.c.h.b16 %v3878
    %v4517 = vunpack.c.l.b16 %v3879
    %v4518 = vunpack.c.h.b16 %v3879
    %v4519 = vunpack.c.l.b16 %v3880
    %v4520 = vunpack.c.l.b16 %v3881
    %v4521 = vunpack.c.h.b16 %v3881
    %v4522 = vunpack.c.l.b16 %v3882
    %v4523 = vunpack.c.h.b16 %v3882
    %v4524 = vunpack.c.l.b16 %v3883
    %v4525 = vunpack.c.l.b16 %v3884
    %v4526 = vunpack.c.h.b16 %v3884
    %v4527 = vunpack.c.l.b16 %v3885
    %v4528 = vunpack.c.h.b16 %v3885
    %v4529 = vunpack.c.l.b16 %v3886
    %v4530 = vunpack.c.l.b16 %v3887
    %v4531 = vunpack.c.h.b16 %v3887
    %v4532 = vunpack.c.l.b16 %v3888
    %v4533 = vunpack.c.h.b16 %v3888
    %v4534 = vunpack.c.l.b16 %v3889
    %v4535 = vunpack.c.l.b16 %v3890
    %v4536 = vunpack.c.h.b16 %v3890
    %v4537 = vunpack.c.l.b16 %v3891
    %v4538 = vunpack.c.h.b16 %v3891
    %v4539 = vunpack.c.l.b16 %v3892
    %v4540 = vunpack.c.l.b16 %v3893
    %v4541 = vunpack.c.h.b16 %v3893
    %v4542 = vunpack.c.l.b16 %v3894
    %v4543 = vunpack.c.h.b16 %v3894
    %v4544 = vunpack.c.l.b16 %v3895
    %v4545 = vunpack.c.l.b16 %v3896
    %v4546 = vunpack.c.h.b16 %v3896
    %v4547 = vunpack.c.l.b16 %v3897
    %v4548 = vunpack.c.h.b16 %v3897
    %v4549 = vunpack.c.l.b16 %v3898
    %v4550 = vunpack.c.l.b16 %v3899
    %v4551 = vunpack.c.h.b16 %v3899
    %v4552 = vunpack.c.l.b16 %v3900
    %v4553 = vunpack.c.h.b16 %v3900
    %v4554 = vunpack.c.l.b16 %v3901
    %v4555 = vunpack.c.l.b16 %v3902
    %v4556 = vunpack.c.h.b16 %v3902
    %v4557 = vunpack.c.l.b16 %v3903
    %v4558 = vunpack.c.h.b16 %v3903
    %v4559 = vunpack.c.l.b16 %v3904
    %v4560 = vunpack.c.l.b16 %v3905
    %v4561 = vunpack.c.h.b16 %v3905
    %v4562 = vunpack.c.l.b16 %v3906
    %v4563 = vunpack.c.h.b16 %v3906
    %v4564 = vunpack.c.l.b16 %v3907
    %v4565 = vunpack.c.l.b16 %v3908
    %v4566 = vunpack.c.h.b16 %v3908
    %v4567 = vunpack.c.l.b16 %v3909
    %v4568 = vunpack.c.h.b16 %v3909
    %v4569 = vunpack.c.l.b16 %v3910
    %v4570 = vunpack.c.l.b16 %v3911
    %v4571 = vunpack.c.h.b16 %v3911
    %v4572 = vunpack.c.l.b16 %v3912
    %v4573 = vunpack.c.h.b16 %v3912
    %v4574 = vunpack.c.l.b16 %v3913
    %v4575 = vunpack.c.l.b16 %v3914
    %v4576 = vunpack.c.h.b16 %v3914
    %v4577 = vunpack.c.l.b16 %v3915
    %v4578 = vunpack.c.h.b16 %v3915
    %v4579 = vunpack.c.l.b16 %v3916
    %v4580 = vunpack.c.l.b16 %v3917
    %v4581 = vunpack.c.h.b16 %v3917
    %v4582 = vunpack.c.l.b16 %v3918
    %v4583 = vunpack.c.h.b16 %v3918
    %v4584 = vunpack.c.l.b16 %v3919
    %v4585 = vunpack.c.l.b16 %v3920
    %v4586 = vunpack.c.h.b16 %v3920
    %v4587 = vunpack.c.l.b16 %v3921
    %v4588 = vunpack.c.h.b16 %v3921
    %v4589 = vunpack.c.l.b16 %v3922
    %v4590 = vunpack.c.l.b16 %v3923
    %v4591 = vunpack.c.h.b16 %v3923
    %v4592 = vunpack.c.l.b16 %v3924
    %v4593 = vunpack.c.h.b16 %v3924
    %v4594 = vunpack.c.l.b16 %v3925
    %v4595 = vunpack.c.l.b16 %v3926
    %v4596 = vunpack.c.h.b16 %v3926
    %v4597 = vunpack.c.l.b16 %v3927
    %v4598 = vunpack.c.h.b16 %v3927
    %v4599 = vunpack.c.l.b16 %v3928
    %v4600 = vunpack.c.l.b16 %v3929
    %v4601 = vunpack.c.h.b16 %v3929
    %v4602 = vunpack.c.l.b16 %v3930
    %v4603 = vunpack.c.h.b16 %v3930
    %v4604 = vunpack.c.l.b16 %v3931
    %v4605 = vunpack.c.l.b16 %v3932
    %v4606 = vunpack.c.h.b16 %v3932
    %v4607 = vunpack.c.l.b16 %v3933
    %v4608 = vunpack.c.h.b16 %v3933
    %v4609 = vunpack.c.l.b16 %v3934
    %v4610 = vunpack.c.l.b16 %v3935
    %v4611 = vunpack.c.h.b16 %v3935
    %v4612 = vunpack.c.l.b16 %v3936
    %v4613 = vunpack.c.h.b16 %v3936
    %v4614 = vunpack.c.l.b16 %v3937
    %v4615 = vunpack.c.l.b16 %v3938
    %v4616 = vunpack.c.h.b16 %v3938
    %v4617 = vunpack.c.l.b16 %v3939
    %v4618 = vunpack.c.h.b16 %v3939
    %v4619 = vunpack.c.l.b16 %v3940
    %v4620 = vunpack.c.l.b16 %v3941
    %v4621 = vunpack.c.h.b16 %v3941
    %v4622 = vunpack.c.l.b16 %v3942
    %v4623 = vunpack.c.h.b16 %v3942
    %v4624 = vunpack.c.l.b16 %v3943
    %v4625 = vunpack.c.l.b16 %v3944
    %v4626 = vunpack.c.h.b16 %v3944
    %v4627 = vunpack.c.l.b16 %v3945
    %v4628 = vunpack.c.h.b16 %v3945
    %v4629 = vunpack.c.l.b16 %v3946
    %v4630 = vunpack.c.l.b16 %v3947
    %v4631 = vunpack.c.h.b16 %v3947
    %v4632 = vunpack.c.l.b16 %v3948
    %v4633 = vunpack.c.h.b16 %v3948
    %v4634 = vunpack.c.l.b16 %v3949
    %v4635 = vunpack.c.l.b16 %v3950
    %v4636 = vunpack.c.h.b16 %v3950
    %v4637 = vunpack.c.l.b16 %v3951
    %v4638 = vunpack.c.h.b16 %v3951
    %v4639 = vunpack.c.l.b16 %v3952
    %v4640 = vunpack.c.l.b16 %v3953
    %v4641 = vunpack.c.h.b16 %v3953
    %v4642 = vunpack.c.l.b16 %v3954
    %v4643 = vunpack.c.h.b16 %v3954
    %v4644 = vunpack.c.l.b16 %v3955
    %v4645 = vunpack.c.l.b16 %v3956
    %v4646 = vunpack.c.h.b16 %v3956
    %v4647 = vunpack.c.l.b16 %v3957
    %v4648 = vunpack.c.h.b16 %v3957
    %v4649 = vunpack.c.l.b16 %v3958
    %v4650 = vunpack.c.l.b16 %v3959
    %v4651 = vunpack.c.h.b16 %v3959
    %v4652 = vunpack.c.l.b16 %v3960
    %v4653 = vunpack.c.h.b16 %v3960
    %v4654 = vunpack.c.l.b16 %v3961
    %v4655 = vunpack.c.l.b16 %v3962
    %v4656 = vunpack.c.h.b16 %v3962
    %v4657 = vunpack.c.l.b16 %v3963
    %v4658 = vunpack.c.h.b16 %v3963
    %v4659 = vunpack.c.l.b16 %v3964
    %v4660 = vunpack.c.l.b16 %v3965
    %v4661 = vunpack.c.h.b16 %v3965
    %v4662 = vunpack.c.l.b16 %v3966
    %v4663 = vunpack.c.h.b16 %v3966
    %v4664 = vunpack.c.l.b16 %v3967
    %v4665 = vunpack.c.l.b16 %v3968
    %v4666 = vunpack.c.h.b16 %v3968
    %v4667 = vunpack.c.l.b16 %v3969
    %v4668 = vunpack.c.h.b16 %v3969
    %v4669 = vunpack.c.l.b16 %v3970
    %v4670 = vunpack.c.l.b16 %v3971
    %v4671 = vunpack.c.h.b16 %v3971
    %v4672 = vunpack.c.l.b16 %v3972
    %v4673 = vunpack.c.h.b16 %v3972
    %v4674 = vunpack.c.l.b16 %v3973
    %v4675 = vunpack.c.l.b16 %v3974
    %v4676 = vunpack.c.h.b16 %v3974
    %v4677 = vunpack.c.l.b16 %v3975
    %v4678 = vunpack.c.h.b16 %v3975
    %v4679 = vunpack.c.l.b16 %v3976
    %v4680 = vunpack.c.l.b16 %v3977
    %v4681 = vunpack.c.h.b16 %v3977
    %v4682 = vunpack.c.l.b16 %v3978
    %v4683 = vunpack.c.h.b16 %v3978
    %v4684 = vunpack.c.l.b16 %v3979
    %v4685 = vunpack.c.l.b16 %v3980
    %v4686 = vunpack.c.h.b16 %v3980
    %v4687 = vunpack.c.l.b16 %v3981
    %v4688 = vunpack.c.h.b16 %v3981
    %v4689 = vunpack.c.l.b16 %v3982
    %v4690 = vunpack.c.l.b16 %v3983
    %v4691 = vunpack.c.h.b16 %v3983
    %v4692 = vunpack.c.l.b16 %v3984
    %v4693 = vunpack.c.h.b16 %v3984
    %v4694 = vunpack.c.l.b16 %v3985
    %v4695 = vunpack.c.l.b16 %v3986
    %v4696 = vunpack.c.h.b16 %v3986
    %v4697 = vunpack.c.l.b16 %v3987
    %v4698 = vunpack.c.h.b16 %v3987
    %v4699 = vunpack.c.l.b16 %v3988
    %v4700 = vunpack.c.l.b16 %v3989
    %v4701 = vunpack.c.h.b16 %v3989
    %v4702 = vunpack.c.l.b16 %v3990
    %v4703 = vunpack.c.h.b16 %v3990
    %v4704 = vunpack.c.l.b16 %v3991
    %v4705 = vunpack.c.l.b16 %v3992
    %v4706 = vunpack.c.h.b16 %v3992
    %v4707 = vunpack.c.l.b16 %v3993
    %v4708 = vunpack.c.h.b16 %v3993
    %v4709 = vunpack.c.l.b16 %v3994
    %v4710 = vunpack.c.l.b16 %v3995
    %v4711 = vunpack.c.h.b16 %v3995
    %v4712 = vunpack.c.l.b16 %v3996
    %v4713 = vunpack.c.h.b16 %v3996
    %v4714 = vunpack.c.l.b16 %v3997
    %v4715 = vunpack.c.l.b16 %v3998
    %v4716 = vunpack.c.h.b16 %v3998
    %v4717 = vunpack.c.l.b16 %v3999
    %v4718 = vunpack.c.h.b16 %v3999
    %v4719 = vunpack.c.l.b16 %v4000
    %v4720 = vunpack.c.l.b16 %v4001
    %v4721 = vunpack.c.h.b16 %v4001
    %v4722 = vunpack.c.l.b16 %v4002
    %v4723 = vunpack.c.h.b16 %v4002
    %v4724 = vunpack.c.l.b16 %v4003
    %v4725 = vunpack.c.l.b16 %v4004
    %v4726 = vunpack.c.h.b16 %v4004
    %v4727 = vunpack.c.l.b16 %v4005
    %v4728 = vunpack.c.h.b16 %v4005
    %v4729 = vunpack.c.l.b16 %v4006
    %v4730 = vunpack.c.l.b16 %v4007
    %v4731 = vunpack.c.h.b16 %v4007
    %v4732 = vunpack.c.l.b16 %v4008
    %v4733 = vunpack.c.h.b16 %v4008
    %v4734 = vunpack.c.l.b16 %v4009
    %v4735 = vunpack.c.l.b16 %v4010
    %v4736 = vunpack.c.h.b16 %v4010
    %v4737 = vunpack.c.l.b16 %v4011
    %v4738 = vunpack.c.h.b16 %v4011
    %v4739 = vunpack.c.l.b16 %v4012
    %v4740 = vunpack.c.l.b16 %v4013
    %v4741 = vunpack.c.h.b16 %v4013
    %v4742 = vunpack.c.l.b16 %v4014
    %v4743 = vunpack.c.h.b16 %v4014
    %v4744 = vunpack.c.l.b16 %v4015
    %v4745 = vunpack.c.l.b16 %v4016
    %v4746 = vunpack.c.h.b16 %v4016
    %v4747 = vunpack.c.l.b16 %v4017
    %v4748 = vunpack.c.h.b16 %v4017
    %v4749 = vunpack.c.l.b16 %v4018
    %v4750 = vunpack.c.l.b16 %v4019
    %v4751 = vunpack.c.h.b16 %v4019
    %v4752 = vunpack.c.l.b16 %v4020
    %v4753 = vunpack.c.h.b16 %v4020
    %v4754 = vunpack.c.l.b16 %v4021
    %v4755 = vunpack.c.l.b16 %v4022
    %v4756 = vunpack.c.h.b16 %v4022
    %v4757 = vunpack.c.l.b16 %v4023
    %v4758 = vunpack.c.h.b16 %v4023
    %v4759 = vunpack.c.l.b16 %v4024
    %v4760 = vunpack.c.l.b16 %v4025
    %v4761 = vunpack.c.h.b16 %v4025
    %v4762 = vunpack.c.l.b16 %v4026
    %v4763 = vunpack.c.h.b16 %v4026
    %v4764 = vunpack.c.l.b16 %v4027
    %v4765 = vunpack.c.l.b16 %v4028
    %v4766 = vunpack.c.h.b16 %v4028
    %v4767 = vunpack.c.l.b16 %v4029
    %v4768 = vunpack.c.h.b16 %v4029
    %v4769 = vunpack.c.l.b16 %v4030
    %v4770 = vunpack.c.l.b16 %v4031
    %v4771 = vunpack.c.h.b16 %v4031
    %v4772 = vunpack.c.l.b16 %v4032
    %v4773 = vunpack.c.h.b16 %v4032
    %v4774 = vunpack.c.l.b16 %v4033
    %v4775 = vunpack.c.l.b16 %v4034
    %v4776 = vunpack.c.h.b16 %v4034
    %v4777 = vunpack.c.l.b16 %v4035
    %v4778 = vunpack.c.h.b16 %v4035
    %v4779 = vunpack.c.l.b16 %v4036
    %v4780 = vunpack.c.l.b16 %v4037
    %v4781 = vunpack.c.h.b16 %v4037
    %v4782 = vunpack.c.l.b16 %v4038
    %v4783 = vunpack.c.h.b16 %v4038
    %v4784 = vunpack.c.l.b16 %v4039
    %v4785 = vunpack.c.l.b16 %v4040
    %v4786 = vunpack.c.h.b16 %v4040
    %v4787 = vunpack.c.l.b16 %v4041
    %v4788 = vunpack.c.h.b16 %v4041
    %v4789 = vunpack.c.l.b16 %v4042
    %v4790 = vunpack.c.l.b16 %v4043
    %v4791 = vunpack.c.h.b16 %v4043
    %v4792 = vunpack.c.l.b16 %v4044
    %v4793 = vunpack.c.h.b16 %v4044
    %v4794 = vunpack.c.l.b16 %v4045
    %v4795 = vunpack.c.l.b16 %v4046
    %v4796 = vunpack.c.h.b16 %v4046
    %v4797 = vunpack.c.l.b16 %v4047
    %v4798 = vunpack.c.h.b16 %v4047
    %v4799 = vunpack.c.l.b16 %v4048
    %v4800 = vunpack.c.l.b16 %v4049
    %v4801 = vunpack.c.h.b16 %v4049
    %v4802 = vunpack.c.l.b16 %v4050
    %v4803 = vunpack.c.h.b16 %v4050
    %v4804 = vunpack.c.l.b16 %v4051
    %v4805 = vunpack.c.l.b16 %v4052
    %v4806 = vunpack.c.h.b16 %v4052
    %v4807 = vunpack.c.l.b16 %v4053
    %v4808 = vunpack.c.h.b16 %v4053
    %v4809 = vunpack.c.l.b16 %v4054
    %v4810 = vunpack.c.l.b16 %v4055
    %v4811 = vunpack.c.h.b16 %v4055
    %v4812 = vunpack.c.l.b16 %v4056
    %v4813 = vunpack.c.h.b16 %v4056
    %v4814 = vunpack.c.l.b16 %v4057
    %v4815 = vunpack.c.l.b16 %v4058
    %v4816 = vunpack.c.h.b16 %v4058
    %v4817 = vunpack.c.l.b16 %v4059
    %v4818 = vunpack.c.h.b16 %v4059
    %v4819 = vunpack.c.l.b16 %v4060
    %v4820 = vunpack.c.l.b16 %v4061
    %v4821 = vunpack.c.h.b16 %v4061
    %v4822 = vunpack.c.l.b16 %v4062
    %v4823 = vunpack.c.h.b16 %v4062
    %v4824 = vunpack.c.l.b16 %v4063
    %v4825 = vunpack.c.l.b16 %v4064
    %v4826 = vunpack.c.h.b16 %v4064
    %v4827 = vunpack.c.l.b16 %v4065
    %v4828 = vunpack.c.h.b16 %v4065
    %v4829 = vunpack.c.l.b16 %v4066
    %v4830 = vunpack.c.l.b16 %v4067
    %v4831 = vunpack.c.h.b16 %v4067
    %v4832 = vunpack.c.l.b16 %v4068
    %v4833 = vunpack.c.h.b16 %v4068
    %v4834 = vunpack.c.l.b16 %v4069
    %v4835 = vunpack.c.l.b16 %v4070
    %v4836 = vunpack.c.h.b16 %v4070
    %v4837 = vunpack.c.l.b16 %v4071
    %v4838 = vunpack.c.h.b16 %v4071
    %v4839 = vunpack.c.l.b16 %v4072
    %v4840 = vunpack.c.l.b16 %v4073
    %v4841 = vunpack.c.h.b16 %v4073
    %v4842 = vunpack.c.l.b16 %v4074
    %v4843 = vunpack.c.h.b16 %v4074
    %v4844 = vunpack.c.l.b16 %v4075
    %v4845 = vunpack.c.l.b16 %v4076
    %v4846 = vunpack.c.h.b16 %v4076
    %v4847 = vunpack.c.l.b16 %v4077
    %v4848 = vunpack.c.h.b16 %v4077
    %v4849 = vunpack.c.l.b16 %v4078
    %v4850 = vunpack.c.l.b16 %v4079
    %v4851 = vunpack.c.h.b16 %v4079
    %v4852 = vunpack.c.l.b16 %v4080
    %v4853 = vunpack.c.h.b16 %v4080
    %v4854 = vunpack.c.l.b16 %v4081
    %v4855 = vunpack.c.l.b16 %v4082
    %v4856 = vunpack.c.h.b16 %v4082
    %v4857 = vunpack.c.l.b16 %v4083
    %v4858 = vunpack.c.h.b16 %v4083
    %v4859 = vunpack.c.l.b16 %v4084
    %v4860 = vunpack.c.l.b16 %v4085
    %v4861 = vunpack.c.h.b16 %v4085
    %v4862 = vunpack.c.l.b16 %v4086
    %v4863 = vunpack.c.h.b16 %v4086
    %v4864 = vunpack.c.l.b16 %v4087
    %v4865 = vunpack.c.l.b16 %v4088
    %v4866 = vunpack.c.h.b16 %v4088
    %v4867 = vunpack.c.l.b16 %v4089
    %v4868 = vunpack.c.h.b16 %v4089
    %v4869 = vunpack.c.l.b16 %v4090
    %v4870 = vunpack.c.l.b16 %v4091
    %v4871 = vunpack.c.h.b16 %v4091
    %v4872 = vunpack.c.l.b16 %v4092
    %v4873 = vunpack.c.h.b16 %v4092
    %v4874 = vunpack.c.l.b16 %v4093
    %v4875 = vunpack.c.l.b16 %v4094
    %v4876 = vunpack.c.h.b16 %v4094
    %v4877 = vunpack.c.l.b16 %v4095
    %v4878 = vunpack.c.h.b16 %v4095
    %v4879 = vunpack.c.l.b16 %v4096
    %v4880 = vunpack.c.l.b16 %v4097
    %v4881 = vunpack.c.h.b16 %v4097
    %v4882 = vunpack.c.l.b16 %v4098
    %v4883 = vunpack.c.h.b16 %v4098
    %v4884 = vunpack.c.l.b16 %v4099
    %v4885 = vunpack.c.l.b16 %v4100
    %v4886 = vunpack.c.h.b16 %v4100
    %v4887 = vunpack.c.l.b16 %v4101
    %v4888 = vunpack.c.h.b16 %v4101
    %v4889 = vunpack.c.l.b16 %v4102
    %v4890 = vunpack.c.l.b16 %v4103
    %v4891 = vunpack.c.h.b16 %v4103
    %v4892 = vunpack.c.l.b16 %v4104
    %v4893 = vunpack.c.h.b16 %v4104
    %v4894 = vunpack.c.l.b16 %v4105
    %v4895 = vunpack.c.l.b16 %v4106
    %v4896 = vunpack.c.h.b16 %v4106
    %v4897 = vunpack.c.l.b16 %v4107
    %v4898 = vunpack.c.h.b16 %v4107
    %v4899 = vunpack.c.l.b16 %v4108
    %v4900 = vunpack.c.l.b16 %v4109
    %v4901 = vunpack.c.h.b16 %v4109
    %v4902 = vunpack.c.l.b16 %v4110
    %v4903 = vunpack.c.h.b16 %v4110
    %v4904 = vunpack.c.l.b16 %v4111
    %v4905 = vunpack.c.l.b16 %v4112
    %v4906 = vunpack.c.h.b16 %v4112
    %v4907 = vunpack.c.l.b16 %v4113
    %v4908 = vunpack.c.h.b16 %v4113
    %v4909 = vunpack.c.l.b16 %v4114
    %v4910 = vunpack.c.l.b16 %v4115
    %v4911 = vunpack.c.h.b16 %v4115
    %v4912 = vunpack.c.l.b16 %v4116
    %v4913 = vunpack.c.h.b16 %v4116
    %v4914 = vunpack.c.l.b16 %v4117
    %v4915 = vunpack.c.l.b16 %v4118
    %v4916 = vunpack.c.h.b16 %v4118
    %v4917 = vunpack.c.l.b16 %v4119
    %v4918 = vunpack.c.h.b16 %v4119
    %v4919 = vunpack.c.l.b16 %v4120
    %v4920 = vunpack.c.l.b16 %v4121
    %v4921 = vunpack.c.h.b16 %v4121
    %v4922 = vunpack.c.l.b16 %v4122
    %v4923 = vunpack.c.h.b16 %v4122
    %v4924 = vunpack.c.l.b16 %v4123
    %v4925 = vunpack.c.l.b16 %v4124
    %v4926 = vunpack.c.h.b16 %v4124
    %v4927 = vunpack.c.l.b16 %v4125
    %v4928 = vunpack.c.h.b16 %v4125
    %v4929 = vunpack.c.l.b16 %v4126
    %v4930 = vunpack.c.l.b16 %v4127
    %v4931 = vunpack.c.h.b16 %v4127
    %v4932 = vunpack.c.l.b16 %v4128
    %v4933 = vunpack.c.h.b16 %v4128
    %v4934 = vunpack.c.l.b16 %v4129
    %v4935 = vunpack.c.l.b16 %v4130
    %v4936 = vunpack.c.h.b16 %v4130
    %v4937 = vunpack.c.l.b16 %v4131
    %v4938 = vunpack.c.h.b16 %v4131
    %v4939 = vunpack.c.l.b16 %v4132
    %v4940 = vunpack.c.l.b16 %v4133
    %v4941 = vunpack.c.h.b16 %v4133
    %v4942 = vunpack.c.l.b16 %v4134
    %v4943 = vunpack.c.h.b16 %v4134
    %v4944 = vunpack.c.l.b16 %v4135
    %v4945 = vunpack.c.l.b16 %v4136
    %v4946 = vunpack.c.h.b16 %v4136
    %v4947 = vunpack.c.l.b16 %v4137
    %v4948 = vunpack.c.h.b16 %v4137
    %v4949 = vunpack.c.l.b16 %v4138
    %v4950 = vunpack.c.l.b16 %v4139
    %v4951 = vunpack.c.h.b16 %v4139
    %v4952 = vunpack.c.l.b16 %v4140
    %v4953 = vunpack.c.h.b16 %v4140
    %v4954 = vunpack.c.l.b16 %v4141
    %v4955 = vunpack.c.l.b16 %v4142
    %v4956 = vunpack.c.h.b16 %v4142
    %v4957 = vunpack.c.l.b16 %v4143
    %v4958 = vunpack.c.h.b16 %v4143
    %v4959 = vunpack.c.l.b16 %v4144
    %v4960 = vunpack.c.l.b16 %v4145
    %v4961 = vunpack.c.h.b16 %v4145
    %v4962 = vunpack.c.l.b16 %v4146
    %v4963 = vunpack.c.h.b16 %v4146
    %v4964 = vunpack.c.l.b16 %v4147
    %v4965 = vunpack.c.l.b16 %v4148
    %v4966 = vunpack.c.h.b16 %v4148
    %v4967 = vunpack.c.l.b16 %v4149
    %v4968 = vunpack.c.h.b16 %v4149
    %v4969 = vunpack.c.l.b16 %v4150
    %v4970 = vunpack.c.l.b16 %v4151
    %v4971 = vunpack.c.h.b16 %v4151
    %v4972 = vunpack.c.l.b16 %v4152
    %v4973 = vunpack.c.h.b16 %v4152
    %v4974 = vunpack.c.l.b16 %v4153
    %v4975 = vunpack.c.l.b16 %v4154
    %v4976 = vunpack.c.h.b16 %v4154
    %v4977 = vunpack.c.l.b16 %v4155
    %v4978 = vunpack.c.h.b16 %v4155
    %v4979 = vunpack.c.l.b16 %v4156
    %v4980 = vunpack.c.l.b16 %v4157
    %v4981 = vunpack.c.h.b16 %v4157
    %v4982 = vunpack.c.l.b16 %v4158
    %v4983 = vunpack.c.h.b16 %v4158
    %v4984 = vunpack.c.l.b16 %v4159
    %v4985 = vunpack.c.l.b16 %v4160
    %v4986 = vunpack.c.h.b16 %v4160
    %v4987 = vunpack.c.l.b16 %v4161
    %v4988 = vunpack.c.h.b16 %v4161
    %v4989 = vunpack.c.l.b16 %v4162
    %v4990 = vpack.c.b16 %v4495, %v4490
    %v4991 = vpack.c.b16 %v4496, %v4491
    %v4992 = vpack.c.b16 %v4497, %v4492
    %v4993 = vpack.c.b16 %v4498, %v4493
    %v4994 = vpack.c.b16 %v4499, %v4494
    %v4995 = vpack.c.b16 %v4505, %v4500
    %v4996 = vpack.c.b16 %v4506, %v4501
    %v4997 = vpack.c.b16 %v4507, %v4502
    %v4998 = vpack.c.b16 %v4508, %v4503
    %v4999 = vpack.c.b16 %v4509, %v4504
    %v5000 = vpack.c.b16 %v4515, %v4510
    %v5001 = vpack.c.b16 %v4516, %v4511
    %v5002 = vpack.c.b16 %v4517, %v4512
    %v5003 = vpack.c.b16 %v4518, %v4513
    %v5004 = vpack.c.b16 %v4519, %v4514
    %v5005 = vpack.c.b16 %v4525, %v4520
    %v5006 = vpack.c.b16 %v4526, %v4521
    %v5007 = vpack.c.b16 %v4527, %v4522
    %v5008 = vpack.c.b16 %v4528, %v4523
    %v5009 = vpack.c.b16 %v4529, %v4524
    %v5010 = vpack.c.b16 %v4535, %v4530
    %v5011 = vpack.c.b16 %v4536, %v4531
    %v5012 = vpack.c.b16 %v4537, %v4532
    %v5013 = vpack.c.b16 %v4538, %v4533
    %v5014 = vpack.c.b16 %v4539, %v4534
    %v5015 = vpack.c.b16 %v4545, %v4540
    %v5016 = vpack.c.b16 %v4546, %v4541
    %v5017 = vpack.c.b16 %v4547, %v4542
    %v5018 = vpack.c.b16 %v4548, %v4543
    %v5019 = vpack.c.b16 %v4549, %v4544
    %v5020 = vpack.c.b16 %v4555, %v4550
    %v5021 = vpack.c.b16 %v4556, %v4551
    %v5022 = vpack.c.b16 %v4557, %v4552
    %v5023 = vpack.c.b16 %v4558, %v4553
    %v5024 = vpack.c.b16 %v4559, %v4554
    %v5025 = vpack.c.b16 %v4565, %v4560
    %v5026 = vpack.c.b16 %v4566, %v4561
    %v5027 = vpack.c.b16 %v4567, %v4562
    %v5028 = vpack.c.b16 %v4568, %v4563
    %v5029 = vpack.c.b16 %v4569, %v4564
    %v5030 = vpack.c.b16 %v4575, %v4570
    %v5031 = vpack.c.b16 %v4576, %v4571
    %v5032 = vpack.c.b16 %v4577, %v4572
    %v5033 = vpack.c.b16 %v4578, %v4573
    %v5034 = vpack.c.b16 %v4579, %v4574
    %v5035 = vpack.c.b16 %v4585, %v4580
    %v5036 = vpack.c.b16 %v4586, %v4581
    %v5037 = vpack.c.b16 %v4587, %v4582
    %v5038 = vpack.c.b16 %v4588, %v4583
    %v5039 = vpack.c.b16 %v4589, %v4584
    %v5040 = vpack.c.b16 %v4595, %v4590
    %v5041 = vpack.c.b16 %v4596, %v4591
    %v5042 = vpack.c.b16 %v4597, %v4592
    %v5043 = vpack.c.b16 %v4598, %v4593
    %v5044 = vpack.c.b16 %v4599, %v4594
    %v5045 = vpack.c.b16 %v4605, %v4600
    %v5046 = vpack.c.b16 %v4606, %v4601
    %v5047 = vpack.c.b16 %v4607, %v4602
    %v5048 = vpack.c.b16 %v4608, %v4603
    %v5049 = vpack.c.b16 %v4609, %v4604
    %v5050 = vpack.c.b16 %v4615, %v4610
    %v5051 = vpack.c.b16 %v4616, %v4611
    %v5052 = vpack.c.b16 %v4617, %v4612
    %v5053 = vpack.c.b16 %v4618, %v4613
    %v5054 = vpack.c.b16 %v4619, %v4614
    %v5055 = vpack.c.b16 %v4625, %v4620
    %v5056 = vpack.c.b16 %v4626, %v4621
    %v5057 = vpack.c.b16 %v4627, %v4622
    %v5058 = vpack.c.b16 %v4628, %v4623
    %v5059 = vpack.c.b16 %v4629, %v4624
    %v5060 = vpack.c.b16 %v4635, %v4630
    %v5061 = vpack.c.b16 %v4636, %v4631
    %v5062 = vpack.c.b16 %v4637, %v4632
    %v5063 = vpack.c.b16 %v4638, %v4633
    %v5064 = vpack.c.b16 %v4639, %v4634
    %v5065 = vpack.c.b16 %v4645, %v4640
    %v5066 = vpack.c.b16 %v4646, %v4641
    %v5067 = vpack.c.b16 %v4647, %v4642
    %v5068 = vpack.c.b16 %v4648, %v4643
    %v5069 = vpack.c.b16 %v4649, %v4644
    %v5070 = vpack.c.b16 %v4655, %v4650
    %v5071 = vpack.c.b16 %v4656, %v4651
    %v5072 = vpack.c.b16 %v4657, %v4652
    %v5073 = vpack.c.b16 %v4658, %v4653
    %v5074 = vpack.c.b16 %v4659, %v4654
    %v5075 = vpack.c.b16 %v4665, %v4660
    %v5076 = vpack.c.b16 %v4666, %v4661
    %v5077 = vpack.c.b16 %v4667, %v4662
    %v5078 = vpack.c.b16 %v4668, %v4663
    %v5079 = vpack.c.b16 %v4669, %v4664
    %v5080 = vpack.c.b16 %v4675, %v4670
    %v5081 = vpack.c.b16 %v4676, %v4671
    %v5082 = vpack.c.b16 %v4677, %v4672
    %v5083 = vpack.c.b16 %v4678, %v4673
    %v5084 = vpack.c.b16 %v4679, %v4674
    %v5085 = vpack.c.b16 %v4685, %v4680
    %v5086 = vpack.c.b16 %v4686, %v4681
    %v5087 = vpack.c.b16 %v4687, %v4682
    %v5088 = vpack.c.b16 %v4688, %v4683
    %v5089 = vpack.c.b16 %v4689, %v4684
    %v5090 = vpack.c.b16 %v4695, %v4690
    %v5091 = vpack.c.b16 %v4696, %v4691
    %v5092 = vpack.c.b16 %v4697, %v4692
    %v5093 = vpack.c.b16 %v4698, %v4693
    %v5094 = vpack.c.b16 %v4699, %v4694
    %v5095 = vpack.c.b16 %v4705, %v4700
    %v5096 = vpack.c.b16 %v4706, %v4701
    %v5097 = vpack.c.b16 %v4707, %v4702
    %v5098 = vpack.c.b16 %v4708, %v4703
    %v5099 = vpack.c.b16 %v4709, %v4704
    %v5100 = vpack.c.b16 %v4715, %v4710
    %v5101 = vpack.c.b16 %v4716, %v4711
    %v5102 = vpack.c.b16 %v4717, %v4712
    %v5103 = vpack.c.b16 %v4718, %v4713
    %v5104 = vpack.c.b16 %v4719, %v4714
    %v5105 = vpack.c.b16 %v4725, %v4720
    %v5106 = vpack.c.b16 %v4726, %v4721
    %v5107 = vpack.c.b16 %v4727, %v4722
    %v5108 = vpack.c.b16 %v4728, %v4723
    %v5109 = vpack.c.b16 %v4729, %v4724
    %v5110 = vpack.c.b16 %v4735, %v4730
    %v5111 = vpack.c.b16 %v4736, %v4731
    %v5112 = vpack.c.b16 %v4737, %v4732
    %v5113 = vpack.c.b16 %v4738, %v4733
    %v5114 = vpack.c.b16 %v4739, %v4734
    %v5115 = vpack.c.b16 %v4745, %v4740
    %v5116 = vpack.c.b16 %v4746, %v4741
    %v5117 = vpack.c.b16 %v4747, %v4742
    %v5118 = vpack.c.b16 %v4748, %v4743
    %v5119 = vpack.c.b16 %v4749, %v4744
    %v5120 = vpack.c.b16 %v4755, %v4750
    %v5121 = vpack.c.b16 %v4756, %v4751
    %v5122 = vpack.c.b16 %v4757, %v4752
    %v5123 = vpack.c.b16 %v4758, %v4753
    %v5124 = vpack.c.b16 %v4759, %v4754
    %v5125 = vpack.c.b16 %v4765, %v4760
    %v5126 = vpack.c.b16 %v4766, %v4761
    %v5127 = vpack.c.b16 %v4767, %v4762
    %v5128 = vpack.c.b16 %v4768, %v4763
    %v5129 = vpack.c.b16 %v4769, %v4764
    %v5130 = vpack.c.b16 %v4775, %v4770
    %v5131 = vpack.c.b16 %v4776, %v4771
    %v5132 = vpack.c.b16 %v4777, %v4772
    %v5133 = vpack.c.b16 %v4778, %v4773
    %v5134 = vpack.c.b16 %v4779, %v4774
    %v5135 = vpack.c.b16 %v4785, %v4780
    %v5136 = vpack.c.b16 %v4786, %v4781
    %v5137 = vpack.c.b16 %v4787, %v4782
    %v5138 = vpack.c.b16 %v4788, %v4783
    %v5139 = vpack.c.b16 %v4789, %v4784
    %v5140 = vpack.c.b16 %v4795, %v4790
    %v5141 = vpack.c.b16 %v4796, %v4791
    %v5142 = vpack.c.b16 %v4797, %v4792
    %v5143 = vpack.c.b16 %v4798, %v4793
    %v5144 = vpack.c.b16 %v4799, %v4794
    %v5145 = vpack.c.b16 %v4805, %v4800
    %v5146 = vpack.c.b16 %v4806, %v4801
    %v5147 = vpack.c.b16 %v4807, %v4802
    %v5148 = vpack.c.b16 %v4808, %v4803
    %v5149 = vpack.c.b16 %v4809, %v4804
    %v5150 = vpack.c.b16 %v4815, %v4810
    %v5151 = vpack.c.b16 %v4816, %v4811
    %v5152 = vpack.c.b16 %v4817, %v4812
    %v5153 = vpack.c.b16 %v4818, %v4813
    %v5154 = vpack.c.b16 %v4819, %v4814
    %v5155 = vpack.c.b16 %v4825, %v4820
    %v5156 = vpack.c.b16 %v4826, %v4821
    %v5157 = vpack.c.b16 %v4827, %v4822
    %v5158 = vpack.c.b16 %v4828, %v4823
    %v5159 = vpack.c.b16 %v4829, %v4824
    %v5160 = vpack.c.b16 %v4835, %v4830
    %v5161 = vpack.c.b16 %v4836, %v4831
    %v5162 = vpack.c.b16 %v4837, %v4832
    %v5163 = vpack.c.b16 %v4838, %v4833
    %v5164 = vpack.c.b16 %v4839, %v4834
    %v5165 = vpack.c.b16 %v4845, %v4840
    %v5166 = vpack.c.b16 %v4846, %v4841
    %v5167 = vpack.c.b16 %v4847, %v4842
    %v5168 = vpack.c.b16 %v4848, %v4843
    %v5169 = vpack.c.b16 %v4849, %v4844
    %v5170 = vpack.c.b16 %v4855, %v4850
    %v5171 = vpack.c.b16 %v4856, %v4851
    %v5172 = vpack.c.b16 %v4857, %v4852
    %v5173 = vpack.c.b16 %v4858, %v4853
    %v5174 = vpack.c.b16 %v4859, %v4854
    %v5175 = vpack.c.b16 %v4865, %v4860
    %v5176 = vpack.c.b16 %v4866, %v4861
    %v5177 = vpack.c.b16 %v4867, %v4862
    %v5178 = vpack.c.b16 %v4868, %v4863
    %v5179 = vpack.c.b16 %v4869, %v4864
    %v5180 = vpack.c.b16 %v4875, %v4870
    %v5181 = vpack.c.b16 %v4876, %v4871
    %v5182 = vpack.c.b16 %v4877, %v4872
    %v5183 = vpack.c.b16 %v4878, %v4873
    %v5184 = vpack.c.b16 %v4879, %v4874
    %v5185 = vpack.c.b16 %v4885, %v4880
    %v5186 = vpack.c.b16 %v4886, %v4881
    %v5187 = vpack.c.b16 %v4887, %v4882
    %v5188 = vpack.c.b16 %v4888, %v4883
    %v5189 = vpack.c.b16 %v4889, %v4884
    %v5190 = vpack.c.b16 %v4895, %v4890
    %v5191 = vpack.c.b16 %v4896, %v4891
    %v5192 = vpack.c.b16 %v4897, %v4892
    %v5193 = vpack.c.b16 %v4898, %v4893
    %v5194 = vpack.c.b16 %v4899, %v4894
    %v5195 = vpack.c.b16 %v4905, %v4900
    %v5196 = vpack.c.b16 %v4906, %v4901
    %v5197 = vpack.c.b16 %v4907, %v4902
    %v5198 = vpack.c.b16 %v4908, %v4903
    %v5199 = vpack.c.b16 %v4909, %v4904
    %v5200 = vpack.c.b16 %v4915, %v4910
    %v5201 = vpack.c.b16 %v4916, %v4911
    %v5202 = vpack.c.b16 %v4917, %v4912
    %v5203 = vpack.c.b16 %v4918, %v4913
    %v5204 = vpack.c.b16 %v4919, %v4914
    %v5205 = vpack.c.b16 %v4925, %v4920
    %v5206 = vpack.c.b16 %v4926, %v4921
    %v5207 = vpack.c.b16 %v4927, %v4922
    %v5208 = vpack.c.b16 %v4928, %v4923
    %v5209 = vpack.c.b16 %v4929, %v4924
    %v5210 = vpack.c.b16 %v4935, %v4930
    %v5211 = vpack.c.b16 %v4936, %v4931
    %v5212 = vpack.c.b16 %v4937, %v4932
    %v5213 = vpack.c.b16 %v4938, %v4933
    %v5214 = vpack.c.b16 %v4939, %v4934
    %v5215 = vpack.c.b16 %v4945, %v4940
    %v5216 = vpack.c.b16 %v4946, %v4941
    %v5217 = vpack.c.b16 %v4947, %v4942
    %v5218 = vpack.c.b16 %v4948, %v4943
    %v5219 = vpack.c.b16 %v4949, %v4944
    %v5220 = vpack.c.b16 %v4955, %v4950
    %v5221 = vpack.c.b16 %v4956, %v4951
    %v5222 = vpack.c.b16 %v4957, %v4952
    %v5223 = vpack.c.b16 %v4958, %v4953
    %v5224 = vpack.c.b16 %v4959, %v4954
    %v5225 = vpack.c.b16 %v4965, %v4960
    %v5226 = vpack.c.b16 %v4966, %v4961
    %v5227 = vpack.c.b16 %v4967, %v4962
    %v5228 = vpack.c.b16 %v4968, %v4963
    %v5229 = vpack.c.b16 %v4969, %v4964
    %v5230 = vpack.c.b16 %v4975, %v4970
    %v5231 = vpack.c.b16 %v4976, %v4971
    %v5232 = vpack.c.b16 %v4977, %v4972
    %v5233 = vpack.c.b16 %v4978, %v4973
    %v5234 = vpack.c.b16 %v4979, %v4974
    %v5235 = vpack.c.b16 %v4985, %v4980
    %v5236 = vpack.c.b16 %v4986, %v4981
    %v5237 = vpack.c.b16 %v4987, %v4982
    %v5238 = vpack.c.b16 %v4988, %v4983
    %v5239 = vpack.c.b16 %v4989, %v4984
    %vm5490 = vcmask 261120
    %v5492 = vsel %vm5490, %v3862, 0
    %5494 = vmatprep.subr.bf16.mxu0 %v5026
    %5495 = vmatpush1.bf16.msra.mxu0 %v5025
    %5496 = vmatprep.subr.bf16.mxu0 %v5021
    %5497 = vmatpush1.bf16.msra.mxu0 %v5020
    %5498 = vmatprep.subr.bf16.mxu0 %v5016
    %5499 = vmatpush1.bf16.msra.mxu0 %v5015
    %5500 = vmatprep.subr.bf16.mxu0 %v5011
    %5501 = vmatpush1.bf16.msra.mxu0 %v5010
    %5502 = vmatprep.subr.bf16.mxu0 %v5006
    %5503 = vmatpush1.bf16.msra.mxu0 %v5005
    %5504 = vmatprep.subr.bf16.mxu0 %v5001
    %5505 = vmatpush1.bf16.msra.mxu0 %v5000
    %5506 = vmatprep.subr.bf16.mxu0 %v4996
    %5507 = vmatpush1.bf16.msra.mxu0 %v4995
    %5508 = vmatprep.subr.bf16.mxu0 %v4991
    %5509 = vmatpush1.bf16.msra.mxu0 %v4990
    %5510 = vmatprep.subr.bf16.mxu0 %v5066
    %5511 = vmatpush2.bf16.msra.mxu0 %v5065
    %5512 = vmatprep.subr.bf16.mxu0 %v5061
    %5513 = vmatpush2.bf16.msra.mxu0 %v5060
    %5514 = vmatprep.subr.bf16.mxu0 %v5056
    %5515 = vmatpush2.bf16.msra.mxu0 %v5055
    %5516 = vmatprep.subr.bf16.mxu0 %v5051
    %5517 = vmatpush2.bf16.msra.mxu0 %v5050
    %5518 = vmatprep.subr.bf16.mxu0 %v5046
    %5519 = vmatpush2.bf16.msra.mxu0 %v5045
    %5520 = vmatprep.subr.bf16.mxu0 %v5041
    %5521 = vmatpush2.bf16.msra.mxu0 %v5040
    %5522 = vmatprep.subr.bf16.mxu0 %v5036
    %5523 = vmatpush2.bf16.msra.mxu0 %v5035
    %5524 = vmatprep.subr.bf16.mxu0 %v5031
    %5525 = vmatpush2.bf16.msra.mxu0 %v5030
    %5526 = vmatprep.mubr.bf16.mxu0 %v3857
    %5527 = vmatmul.mubr.bf16.gmra.mxu0 %v3856
    %v5528 = vpop.f32.mrf.mxu0
    %v5529 = vadd.f32 %v4168, %v5528
    %v5530 = vpop.f32.mrf.mxu0
    %v5531 = vadd.f32 %v4172, %v5530
    %v5532 = vpop.f32.mrf.mxu0
    %v5533 = vpop.f32.mrf.mxu0
    %5534 = vdwg.mxu0
    %5535 = vmatprep.subr.bf16.mxu0 %v5106
    %5536 = vmatpush1.bf16.msra.mxu0 %v5105
    %5537 = vmatprep.subr.bf16.mxu0 %v5101
    %5538 = vmatpush1.bf16.msra.mxu0 %v5100
    %5539 = vmatprep.subr.bf16.mxu0 %v5096
    %5540 = vmatpush1.bf16.msra.mxu0 %v5095
    %5541 = vmatprep.subr.bf16.mxu0 %v5091
    %5542 = vmatpush1.bf16.msra.mxu0 %v5090
    %5543 = vmatprep.subr.bf16.mxu0 %v5086
    %5544 = vmatpush1.bf16.msra.mxu0 %v5085
    %5545 = vmatprep.subr.bf16.mxu0 %v5081
    %5546 = vmatpush1.bf16.msra.mxu0 %v5080
    %5547 = vmatprep.subr.bf16.mxu0 %v5076
    %5548 = vmatpush1.bf16.msra.mxu0 %v5075
    %5549 = vmatprep.subr.bf16.mxu0 %v5071
    %5550 = vmatpush1.bf16.msra.mxu0 %v5070
    %5551 = vmatprep.subr.bf16.mxu0 %v5146
    %5552 = vmatpush2.bf16.msra.mxu0 %v5145
    %5553 = vmatprep.subr.bf16.mxu0 %v5141
    %5554 = vmatpush2.bf16.msra.mxu0 %v5140
    %5555 = vmatprep.subr.bf16.mxu0 %v5136
    %5556 = vmatpush2.bf16.msra.mxu0 %v5135
    %5557 = vmatprep.subr.bf16.mxu0 %v5131
    %5558 = vmatpush2.bf16.msra.mxu0 %v5130
    %5559 = vmatprep.subr.bf16.mxu0 %v5126
    %5560 = vmatpush2.bf16.msra.mxu0 %v5125
    %5561 = vmatprep.subr.bf16.mxu0 %v5121
    %5562 = vmatpush2.bf16.msra.mxu0 %v5120
    %5563 = vmatprep.subr.bf16.mxu0 %v5116
    %5564 = vmatpush2.bf16.msra.mxu0 %v5115
    %5565 = vmatprep.subr.bf16.mxu0 %v5111
    %5566 = vmatpush2.bf16.msra.mxu0 %v5110
    %5567 = vmatprep.mubr.bf16.mxu0 %v3859
    %5568 = vmatmul.mubr.bf16.gmra.mxu0 %v3858
    %v5569 = vpop.f32.mrf.mxu0
    %v5570 = vadd.f32 %v5529, %v5569
    %v5571 = vpop.f32.mrf.mxu0
    %v5572 = vadd.f32 %v5531, %v5571
    %v5573 = vpop.f32.mrf.mxu0
    %v5574 = vpop.f32.mrf.mxu0
    %5575 = vdwg.mxu0
    %5576 = vmatprep.subr.bf16.mxu0 %v5186
    %5577 = vmatpush1.bf16.msra.mxu0 %v5185
    %5578 = vmatprep.subr.bf16.mxu0 %v5181
    %5579 = vmatpush1.bf16.msra.mxu0 %v5180
    %5580 = vmatprep.subr.bf16.mxu0 %v5176
    %5581 = vmatpush1.bf16.msra.mxu0 %v5175
    %5582 = vmatprep.subr.bf16.mxu0 %v5171
    %5583 = vmatpush1.bf16.msra.mxu0 %v5170
    %5584 = vmatprep.subr.bf16.mxu0 %v5166
    %5585 = vmatpush1.bf16.msra.mxu0 %v5165
    %5586 = vmatprep.subr.bf16.mxu0 %v5161
    %5587 = vmatpush1.bf16.msra.mxu0 %v5160
    %5588 = vmatprep.subr.bf16.mxu0 %v5156
    %5589 = vmatpush1.bf16.msra.mxu0 %v5155
    %5590 = vmatprep.subr.bf16.mxu0 %v5151
    %5591 = vmatpush1.bf16.msra.mxu0 %v5150
    %5592 = vmatprep.subr.bf16.mxu0 %v5226
    %5593 = vmatpush2.bf16.msra.mxu0 %v5225
    %5594 = vmatprep.subr.bf16.mxu0 %v5221
    %5595 = vmatpush2.bf16.msra.mxu0 %v5220
    %5596 = vmatprep.subr.bf16.mxu0 %v5216
    %5597 = vmatpush2.bf16.msra.mxu0 %v5215
    %5598 = vmatprep.subr.bf16.mxu0 %v5211
    %5599 = vmatpush2.bf16.msra.mxu0 %v5210
    %5600 = vmatprep.subr.bf16.mxu0 %v5206
    %5601 = vmatpush2.bf16.msra.mxu0 %v5205
    %5602 = vmatprep.subr.bf16.mxu0 %v5201
    %5603 = vmatpush2.bf16.msra.mxu0 %v5200
    %5604 = vmatprep.subr.bf16.mxu0 %v5196
    %5605 = vmatpush2.bf16.msra.mxu0 %v5195
    %5606 = vmatprep.subr.bf16.mxu0 %v5191
    %5607 = vmatpush2.bf16.msra.mxu0 %v5190
    %5608 = vmatprep.mubr.bf16.mxu0 %v3861
    %5609 = vmatmul.mubr.bf16.gmra.mxu0 %v3860
    %v5610 = vpop.f32.mrf.mxu0
    %v5611 = vadd.f32 %v5570, %v5610
    %v5612 = vpop.f32.mrf.mxu0
    %v5613 = vadd.f32 %v5572, %v5612
    %v5614 = vpop.f32.mrf.mxu0
    %v5615 = vpop.f32.mrf.mxu0
    %5616 = vdwg.mxu0
    %5617 = vmatprep.subr.bf16.mxu0 0
    %5618 = vmatpush1.bf16.msra.mxu0 0
    %5619 = vmatprep.subr.bf16.mxu0 0
    %5620 = vmatpush1.bf16.msra.mxu0 0
    %5621 = vmatprep.subr.bf16.mxu0 0
    %5622 = vmatpush1.bf16.msra.mxu0 0
    %5623 = vmatprep.subr.bf16.mxu0 0
    %5624 = vmatpush1.bf16.msra.mxu0 0
    %5625 = vmatprep.subr.bf16.mxu0 0
    %5626 = vmatpush1.bf16.msra.mxu0 0
    %5627 = vmatprep.subr.bf16.mxu0 0
    %5628 = vmatpush1.bf16.msra.mxu0 0
    %5629 = vmatprep.subr.bf16.mxu0 %v5236
    %5630 = vmatpush1.bf16.msra.mxu0 %v5235
    %5631 = vmatprep.subr.bf16.mxu0 %v5231
    %5632 = vmatpush1.bf16.msra.mxu0 %v5230
    %5633 = vmatprep.subr.bf16.mxu0 0
    %5634 = vmatpush2.bf16.msra.mxu0 0
    %5635 = vmatprep.subr.bf16.mxu0 0
    %5636 = vmatpush2.bf16.msra.mxu0 0
    %5637 = vmatprep.subr.bf16.mxu0 0
    %5638 = vmatpush2.bf16.msra.mxu0 0
    %5639 = vmatprep.subr.bf16.mxu0 0
    %5640 = vmatpush2.bf16.msra.mxu0 0
    %5641 = vmatprep.subr.bf16.mxu0 0
    %5642 = vmatpush2.bf16.msra.mxu0 0
    %5643 = vmatprep.subr.bf16.mxu0 0
    %5644 = vmatpush2.bf16.msra.mxu0 0
    %5645 = vmatprep.subr.bf16.mxu0 0
    %5646 = vmatpush2.bf16.msra.mxu0 0
    %5647 = vmatprep.subr.bf16.mxu0 0
    %5648 = vmatpush2.bf16.msra.mxu0 0
    %5649 = vmatprep.mubr.bf16.mxu0 0
    %5650 = vmatmul.mubr.bf16.gmra.mxu0 %v5492
    %v5651 = vpop.f32.mrf.mxu0
    %v5652 = vadd.f32 %v5611, %v5651
    %v5653 = vpop.f32.mrf.mxu0
    %v5654 = vadd.f32 %v5613, %v5653
    %v5655 = vpop.f32.mrf.mxu0
    %v5656 = vpop.f32.mrf.mxu0
    %5657 = vdwg.mxu0
    %5658 = vmatprep.subr.bf16.mxu0 %v5028
    %5659 = vmatpush1.bf16.msra.mxu0 %v5027
    %5660 = vmatprep.subr.bf16.mxu0 %v5023
    %5661 = vmatpush1.bf16.msra.mxu0 %v5022
    %5662 = vmatprep.subr.bf16.mxu0 %v5018
    %5663 = vmatpush1.bf16.msra.mxu0 %v5017
    %5664 = vmatprep.subr.bf16.mxu0 %v5013
    %5665 = vmatpush1.bf16.msra.mxu0 %v5012
    %5666 = vmatprep.subr.bf16.mxu0 %v5008
    %5667 = vmatpush1.bf16.msra.mxu0 %v5007
    %5668 = vmatprep.subr.bf16.mxu0 %v5003
    %5669 = vmatpush1.bf16.msra.mxu0 %v5002
    %5670 = vmatprep.subr.bf16.mxu0 %v4998
    %5671 = vmatpush1.bf16.msra.mxu0 %v4997
    %5672 = vmatprep.subr.bf16.mxu0 %v4993
    %5673 = vmatpush1.bf16.msra.mxu0 %v4992
    %5674 = vmatprep.subr.bf16.mxu0 %v5068
    %5675 = vmatpush2.bf16.msra.mxu0 %v5067
    %5676 = vmatprep.subr.bf16.mxu0 %v5063
    %5677 = vmatpush2.bf16.msra.mxu0 %v5062
    %5678 = vmatprep.subr.bf16.mxu0 %v5058
    %5679 = vmatpush2.bf16.msra.mxu0 %v5057
    %5680 = vmatprep.subr.bf16.mxu0 %v5053
    %5681 = vmatpush2.bf16.msra.mxu0 %v5052
    %5682 = vmatprep.subr.bf16.mxu0 %v5048
    %5683 = vmatpush2.bf16.msra.mxu0 %v5047
    %5684 = vmatprep.subr.bf16.mxu0 %v5043
    %5685 = vmatpush2.bf16.msra.mxu0 %v5042
    %5686 = vmatprep.subr.bf16.mxu0 %v5038
    %5687 = vmatpush2.bf16.msra.mxu0 %v5037
    %5688 = vmatprep.subr.bf16.mxu0 %v5033
    %5689 = vmatpush2.bf16.msra.mxu0 %v5032
    %5690 = vmatprep.mubr.bf16.mxu0 %v3857
    %5691 = vmatmul.mubr.bf16.gmra.mxu0 %v3856
    %v5692 = vpop.f32.mrf.mxu0
    %v5693 = vadd.f32 %v4176, %v5692
    %v5694 = vpop.f32.mrf.mxu0
    %v5695 = vadd.f32 %v4180, %v5694
    %v5696 = vpop.f32.mrf.mxu0
    %v5697 = vpop.f32.mrf.mxu0
    %5698 = vdwg.mxu0
    %5699 = vmatprep.subr.bf16.mxu0 %v5108
    %5700 = vmatpush1.bf16.msra.mxu0 %v5107
    %5701 = vmatprep.subr.bf16.mxu0 %v5103
    %5702 = vmatpush1.bf16.msra.mxu0 %v5102
    %5703 = vmatprep.subr.bf16.mxu0 %v5098
    %5704 = vmatpush1.bf16.msra.mxu0 %v5097
    %5705 = vmatprep.subr.bf16.mxu0 %v5093
    %5706 = vmatpush1.bf16.msra.mxu0 %v5092
    %5707 = vmatprep.subr.bf16.mxu0 %v5088
    %5708 = vmatpush1.bf16.msra.mxu0 %v5087
    %5709 = vmatprep.subr.bf16.mxu0 %v5083
    %5710 = vmatpush1.bf16.msra.mxu0 %v5082
    %5711 = vmatprep.subr.bf16.mxu0 %v5078
    %5712 = vmatpush1.bf16.msra.mxu0 %v5077
    %5713 = vmatprep.subr.bf16.mxu0 %v5073
    %5714 = vmatpush1.bf16.msra.mxu0 %v5072
    %5715 = vmatprep.subr.bf16.mxu0 %v5148
    %5716 = vmatpush2.bf16.msra.mxu0 %v5147
    %5717 = vmatprep.subr.bf16.mxu0 %v5143
    %5718 = vmatpush2.bf16.msra.mxu0 %v5142
    %5719 = vmatprep.subr.bf16.mxu0 %v5138
    %5720 = vmatpush2.bf16.msra.mxu0 %v5137
    %5721 = vmatprep.subr.bf16.mxu0 %v5133
    %5722 = vmatpush2.bf16.msra.mxu0 %v5132
    %5723 = vmatprep.subr.bf16.mxu0 %v5128
    %5724 = vmatpush2.bf16.msra.mxu0 %v5127
    %5725 = vmatprep.subr.bf16.mxu0 %v5123
    %5726 = vmatpush2.bf16.msra.mxu0 %v5122
    %5727 = vmatprep.subr.bf16.mxu0 %v5118
    %5728 = vmatpush2.bf16.msra.mxu0 %v5117
    %5729 = vmatprep.subr.bf16.mxu0 %v5113
    %5730 = vmatpush2.bf16.msra.mxu0 %v5112
    %5731 = vmatprep.mubr.bf16.mxu0 %v3859
    %5732 = vmatmul.mubr.bf16.gmra.mxu0 %v3858
    %v5733 = vpop.f32.mrf.mxu0
    %v5734 = vadd.f32 %v5693, %v5733
    %v5735 = vpop.f32.mrf.mxu0
    %v5736 = vadd.f32 %v5695, %v5735
    %v5737 = vpop.f32.mrf.mxu0
    %v5738 = vpop.f32.mrf.mxu0
    %5739 = vdwg.mxu0
    %5740 = vmatprep.subr.bf16.mxu0 %v5188
    %5741 = vmatpush1.bf16.msra.mxu0 %v5187
    %5742 = vmatprep.subr.bf16.mxu0 %v5183
    %5743 = vmatpush1.bf16.msra.mxu0 %v5182
    %5744 = vmatprep.subr.bf16.mxu0 %v5178
    %5745 = vmatpush1.bf16.msra.mxu0 %v5177
    %5746 = vmatprep.subr.bf16.mxu0 %v5173
    %5747 = vmatpush1.bf16.msra.mxu0 %v5172
    %5748 = vmatprep.subr.bf16.mxu0 %v5168
    %5749 = vmatpush1.bf16.msra.mxu0 %v5167
    %5750 = vmatprep.subr.bf16.mxu0 %v5163
    %5751 = vmatpush1.bf16.msra.mxu0 %v5162
    %5752 = vmatprep.subr.bf16.mxu0 %v5158
    %5753 = vmatpush1.bf16.msra.mxu0 %v5157
    %5754 = vmatprep.subr.bf16.mxu0 %v5153
    %5755 = vmatpush1.bf16.msra.mxu0 %v5152
    %5756 = vmatprep.subr.bf16.mxu0 %v5228
    %5757 = vmatpush2.bf16.msra.mxu0 %v5227
    %5758 = vmatprep.subr.bf16.mxu0 %v5223
    %5759 = vmatpush2.bf16.msra.mxu0 %v5222
    %5760 = vmatprep.subr.bf16.mxu0 %v5218
    %5761 = vmatpush2.bf16.msra.mxu0 %v5217
    %5762 = vmatprep.subr.bf16.mxu0 %v5213
    %5763 = vmatpush2.bf16.msra.mxu0 %v5212
    %5764 = vmatprep.subr.bf16.mxu0 %v5208
    %5765 = vmatpush2.bf16.msra.mxu0 %v5207
    %5766 = vmatprep.subr.bf16.mxu0 %v5203
    %5767 = vmatpush2.bf16.msra.mxu0 %v5202
    %5768 = vmatprep.subr.bf16.mxu0 %v5198
    %5769 = vmatpush2.bf16.msra.mxu0 %v5197
    %5770 = vmatprep.subr.bf16.mxu0 %v5193
    %5771 = vmatpush2.bf16.msra.mxu0 %v5192
    %5772 = vmatprep.mubr.bf16.mxu0 %v3861
    %5773 = vmatmul.mubr.bf16.gmra.mxu0 %v3860
    %v5774 = vpop.f32.mrf.mxu0
    %v5775 = vadd.f32 %v5734, %v5774
    %v5776 = vpop.f32.mrf.mxu0
    %v5777 = vadd.f32 %v5736, %v5776
    %v5778 = vpop.f32.mrf.mxu0
    %v5779 = vpop.f32.mrf.mxu0
    %5780 = vdwg.mxu0
    %5781 = vmatprep.subr.bf16.mxu0 0
    %5782 = vmatpush1.bf16.msra.mxu0 0
    %5783 = vmatprep.subr.bf16.mxu0 0
    %5784 = vmatpush1.bf16.msra.mxu0 0
    %5785 = vmatprep.subr.bf16.mxu0 0
    %5786 = vmatpush1.bf16.msra.mxu0 0
    %5787 = vmatprep.subr.bf16.mxu0 0
    %5788 = vmatpush1.bf16.msra.mxu0 0
    %5789 = vmatprep.subr.bf16.mxu0 0
    %5790 = vmatpush1.bf16.msra.mxu0 0
    %5791 = vmatprep.subr.bf16.mxu0 0
    %5792 = vmatpush1.bf16.msra.mxu0 0
    %5793 = vmatprep.subr.bf16.mxu0 %v5238
    %5794 = vmatpush1.bf16.msra.mxu0 %v5237
    %5795 = vmatprep.subr.bf16.mxu0 %v5233
    %5796 = vmatpush1.bf16.msra.mxu0 %v5232
    %5797 = vmatprep.subr.bf16.mxu0 0
    %5798 = vmatpush2.bf16.msra.mxu0 0
    %5799 = vmatprep.subr.bf16.mxu0 0
    %5800 = vmatpush2.bf16.msra.mxu0 0
    %5801 = vmatprep.subr.bf16.mxu0 0
    %5802 = vmatpush2.bf16.msra.mxu0 0
    %5803 = vmatprep.subr.bf16.mxu0 0
    %5804 = vmatpush2.bf16.msra.mxu0 0
    %5805 = vmatprep.subr.bf16.mxu0 0
    %5806 = vmatpush2.bf16.msra.mxu0 0
    %5807 = vmatprep.subr.bf16.mxu0 0
    %5808 = vmatpush2.bf16.msra.mxu0 0
    %5809 = vmatprep.subr.bf16.mxu0 0
    %5810 = vmatpush2.bf16.msra.mxu0 0
    %5811 = vmatprep.subr.bf16.mxu0 0
    %5812 = vmatpush2.bf16.msra.mxu0 0
    %5813 = vmatprep.mubr.bf16.mxu0 0
    %5814 = vmatmul.mubr.bf16.gmra.mxu0 %v5492
    %v5815 = vpop.f32.mrf.mxu0
    %v5816 = vadd.f32 %v5775, %v5815
    %v5817 = vpop.f32.mrf.mxu0
    %v5818 = vadd.f32 %v5777, %v5817
    %v5819 = vpop.f32.mrf.mxu0
    %v5820 = vpop.f32.mrf.mxu0
    %5821 = vdwg.mxu0
    %5822 = vmatprep.subr.bf16.mxu0 0
    %5823 = vmatpush1.bf16.msra.mxu0 %v5029
    %5824 = vmatprep.subr.bf16.mxu0 0
    %5825 = vmatpush1.bf16.msra.mxu0 %v5024
    %5826 = vmatprep.subr.bf16.mxu0 0
    %5827 = vmatpush1.bf16.msra.mxu0 %v5019
    %5828 = vmatprep.subr.bf16.mxu0 0
    %5829 = vmatpush1.bf16.msra.mxu0 %v5014
    %5830 = vmatprep.subr.bf16.mxu0 0
    %5831 = vmatpush1.bf16.msra.mxu0 %v5009
    %5832 = vmatprep.subr.bf16.mxu0 0
    %5833 = vmatpush1.bf16.msra.mxu0 %v5004
    %5834 = vmatprep.subr.bf16.mxu0 0
    %5835 = vmatpush1.bf16.msra.mxu0 %v4999
    %5836 = vmatprep.subr.bf16.mxu0 0
    %5837 = vmatpush1.bf16.msra.mxu0 %v4994
    %5838 = vmatprep.subr.bf16.mxu0 0
    %5839 = vmatpush2.bf16.msra.mxu0 %v5069
    %5840 = vmatprep.subr.bf16.mxu0 0
    %5841 = vmatpush2.bf16.msra.mxu0 %v5064
    %5842 = vmatprep.subr.bf16.mxu0 0
    %5843 = vmatpush2.bf16.msra.mxu0 %v5059
    %5844 = vmatprep.subr.bf16.mxu0 0
    %5845 = vmatpush2.bf16.msra.mxu0 %v5054
    %5846 = vmatprep.subr.bf16.mxu0 0
    %5847 = vmatpush2.bf16.msra.mxu0 %v5049
    %5848 = vmatprep.subr.bf16.mxu0 0
    %5849 = vmatpush2.bf16.msra.mxu0 %v5044
    %5850 = vmatprep.subr.bf16.mxu0 0
    %5851 = vmatpush2.bf16.msra.mxu0 %v5039
    %5852 = vmatprep.subr.bf16.mxu0 0
    %5853 = vmatpush2.bf16.msra.mxu0 %v5034
    %5854 = vmatprep.mubr.bf16.mxu0 %v3857
    %5855 = vmatmul.mubr.bf16.gmra.mxu0 %v3856
    %v5856 = vpop.f32.mrf.mxu0
    %v5857 = vadd.f32 %v4184, %v5856
    %v5858 = vpop.f32.mrf.mxu0
    %v5859 = vpop.f32.mrf.mxu0
    %v5860 = vpop.f32.mrf.mxu0
    %5861 = vdwg.mxu0
    %5862 = vmatprep.subr.bf16.mxu0 0
    %5863 = vmatpush1.bf16.msra.mxu0 %v5109
    %5864 = vmatprep.subr.bf16.mxu0 0
    %5865 = vmatpush1.bf16.msra.mxu0 %v5104
    %5866 = vmatprep.subr.bf16.mxu0 0
    %5867 = vmatpush1.bf16.msra.mxu0 %v5099
    %5868 = vmatprep.subr.bf16.mxu0 0
    %5869 = vmatpush1.bf16.msra.mxu0 %v5094
    %5870 = vmatprep.subr.bf16.mxu0 0
    %5871 = vmatpush1.bf16.msra.mxu0 %v5089
    %5872 = vmatprep.subr.bf16.mxu0 0
    %5873 = vmatpush1.bf16.msra.mxu0 %v5084
    %5874 = vmatprep.subr.bf16.mxu0 0
    %5875 = vmatpush1.bf16.msra.mxu0 %v5079
    %5876 = vmatprep.subr.bf16.mxu0 0
    %5877 = vmatpush1.bf16.msra.mxu0 %v5074
    %5878 = vmatprep.subr.bf16.mxu0 0
    %5879 = vmatpush2.bf16.msra.mxu0 %v5149
    %5880 = vmatprep.subr.bf16.mxu0 0
    %5881 = vmatpush2.bf16.msra.mxu0 %v5144
    %5882 = vmatprep.subr.bf16.mxu0 0
    %5883 = vmatpush2.bf16.msra.mxu0 %v5139
    %5884 = vmatprep.subr.bf16.mxu0 0
    %5885 = vmatpush2.bf16.msra.mxu0 %v5134
    %5886 = vmatprep.subr.bf16.mxu0 0
    %5887 = vmatpush2.bf16.msra.mxu0 %v5129
    %5888 = vmatprep.subr.bf16.mxu0 0
    %5889 = vmatpush2.bf16.msra.mxu0 %v5124
    %5890 = vmatprep.subr.bf16.mxu0 0
    %5891 = vmatpush2.bf16.msra.mxu0 %v5119
    %5892 = vmatprep.subr.bf16.mxu0 0
    %5893 = vmatpush2.bf16.msra.mxu0 %v5114
    %5894 = vmatprep.mubr.bf16.mxu0 %v3859
    %5895 = vmatmul.mubr.bf16.gmra.mxu0 %v3858
    %v5896 = vpop.f32.mrf.mxu0
    %v5897 = vadd.f32 %v5857, %v5896
    %v5898 = vpop.f32.mrf.mxu0
    %v5899 = vpop.f32.mrf.mxu0
    %v5900 = vpop.f32.mrf.mxu0
    %5901 = vdwg.mxu0
    %5902 = vmatprep.subr.bf16.mxu0 0
    %5903 = vmatpush1.bf16.msra.mxu0 %v5189
    %5904 = vmatprep.subr.bf16.mxu0 0
    %5905 = vmatpush1.bf16.msra.mxu0 %v5184
    %5906 = vmatprep.subr.bf16.mxu0 0
    %5907 = vmatpush1.bf16.msra.mxu0 %v5179
    %5908 = vmatprep.subr.bf16.mxu0 0
    %5909 = vmatpush1.bf16.msra.mxu0 %v5174
    %5910 = vmatprep.subr.bf16.mxu0 0
    %5911 = vmatpush1.bf16.msra.mxu0 %v5169
    %5912 = vmatprep.subr.bf16.mxu0 0
    %5913 = vmatpush1.bf16.msra.mxu0 %v5164
    %5914 = vmatprep.subr.bf16.mxu0 0
    %5915 = vmatpush1.bf16.msra.mxu0 %v5159
    %5916 = vmatprep.subr.bf16.mxu0 0
    %5917 = vmatpush1.bf16.msra.mxu0 %v5154
    %5918 = vmatprep.subr.bf16.mxu0 0
    %5919 = vmatpush2.bf16.msra.mxu0 %v5229
    %5920 = vmatprep.subr.bf16.mxu0 0
    %5921 = vmatpush2.bf16.msra.mxu0 %v5224
    %5922 = vmatprep.subr.bf16.mxu0 0
    %5923 = vmatpush2.bf16.msra.mxu0 %v5219
    %5924 = vmatprep.subr.bf16.mxu0 0
    %5925 = vmatpush2.bf16.msra.mxu0 %v5214
    %5926 = vmatprep.subr.bf16.mxu0 0
    %5927 = vmatpush2.bf16.msra.mxu0 %v5209
    %5928 = vmatprep.subr.bf16.mxu0 0
    %5929 = vmatpush2.bf16.msra.mxu0 %v5204
    %5930 = vmatprep.subr.bf16.mxu0 0
    %5931 = vmatpush2.bf16.msra.mxu0 %v5199
    %5932 = vmatprep.subr.bf16.mxu0 0
    %5933 = vmatpush2.bf16.msra.mxu0 %v5194
    %5934 = vmatprep.mubr.bf16.mxu0 %v3861
    %5935 = vmatmul.mubr.bf16.gmra.mxu0 %v3860
    %v5936 = vpop.f32.mrf.mxu0
    %v5937 = vadd.f32 %v5897, %v5936
    %v5938 = vpop.f32.mrf.mxu0
    %v5939 = vpop.f32.mrf.mxu0
    %v5940 = vpop.f32.mrf.mxu0
    %5941 = vdwg.mxu0
    %5942 = vmatprep.subr.bf16.mxu0 0
    %5943 = vmatpush1.bf16.msra.mxu0 0
    %5944 = vmatprep.subr.bf16.mxu0 0
    %5945 = vmatpush1.bf16.msra.mxu0 0
    %5946 = vmatprep.subr.bf16.mxu0 0
    %5947 = vmatpush1.bf16.msra.mxu0 0
    %5948 = vmatprep.subr.bf16.mxu0 0
    %5949 = vmatpush1.bf16.msra.mxu0 0
    %5950 = vmatprep.subr.bf16.mxu0 0
    %5951 = vmatpush1.bf16.msra.mxu0 0
    %5952 = vmatprep.subr.bf16.mxu0 0
    %5953 = vmatpush1.bf16.msra.mxu0 0
    %5954 = vmatprep.subr.bf16.mxu0 0
    %5955 = vmatpush1.bf16.msra.mxu0 %v5239
    %5956 = vmatprep.subr.bf16.mxu0 0
    %5957 = vmatpush1.bf16.msra.mxu0 %v5234
    %5958 = vmatprep.subr.bf16.mxu0 0
    %5959 = vmatpush2.bf16.msra.mxu0 0
    %5960 = vmatprep.subr.bf16.mxu0 0
    %5961 = vmatpush2.bf16.msra.mxu0 0
    %5962 = vmatprep.subr.bf16.mxu0 0
    %5963 = vmatpush2.bf16.msra.mxu0 0
    %5964 = vmatprep.subr.bf16.mxu0 0
    %5965 = vmatpush2.bf16.msra.mxu0 0
    %5966 = vmatprep.subr.bf16.mxu0 0
    %5967 = vmatpush2.bf16.msra.mxu0 0
    %5968 = vmatprep.subr.bf16.mxu0 0
    %5969 = vmatpush2.bf16.msra.mxu0 0
    %5970 = vmatprep.subr.bf16.mxu0 0
    %5971 = vmatpush2.bf16.msra.mxu0 0
    %5972 = vmatprep.subr.bf16.mxu0 0
    %5973 = vmatpush2.bf16.msra.mxu0 0
    %5974 = vmatprep.mubr.bf16.mxu0 0
    %5975 = vmatmul.mubr.bf16.gmra.mxu0 %v5492
    %v5976 = vpop.f32.mrf.mxu0
    %v5977 = vadd.f32 %v5937, %v5976
    %v5978 = vpop.f32.mrf.mxu0
    %v5979 = vpop.f32.mrf.mxu0
    %v5980 = vpop.f32.mrf.mxu0
    %5981 = vdwg.mxu0
    %v5982 = vmax.f32 %v5652, 0.0
    %v5983 = vmax.f32 %v5654, 0.0
    %v5984 = vmax.f32 %v5816, 0.0
    %v5985 = vmax.f32 %v5818, 0.0
    %v5986 = vmax.f32 %v5977, 0.0
    %5988 = vset.pattern.permute.xlu0 0
    %5989 = vperm.xlu0 %5988, %v128
    %v5990 = vpop.permute.xlu0 %5989
    %v5992 = vadd.f32 %v5982, %v5990
    %5993 = vset.pattern.permute.xlu0 1
    %5994 = vperm.xlu0 %5993, %v128
    %v5995 = vpop.permute.xlu0 %5994
    %v5997 = vadd.f32 %v5982, %v5995
    %5998 = vset.pattern.permute.xlu0 2
    %5999 = vperm.xlu0 %5998, %v128
    %v6000 = vpop.permute.xlu0 %5999
    %v6002 = vadd.f32 %v5983, %v6000
    %6003 = vset.pattern.permute.xlu0 3
    %6004 = vperm.xlu0 %6003, %v128
    %v6005 = vpop.permute.xlu0 %6004
    %v6007 = vadd.f32 %v5983, %v6005
    %6008 = vset.pattern.permute.xlu0 4
    %6009 = vperm.xlu0 %6008, %v128
    %v6010 = vpop.permute.xlu0 %6009
    %v6012 = vadd.f32 %v5984, %v6010
    %6013 = vset.pattern.permute.xlu0 5
    %6014 = vperm.xlu0 %6013, %v128
    %v6015 = vpop.permute.xlu0 %6014
    %v6017 = vadd.f32 %v5984, %v6015
    %6018 = vset.pattern.permute.xlu0 6
    %6019 = vperm.xlu0 %6018, %v128
    %v6020 = vpop.permute.xlu0 %6019
    %v6022 = vadd.f32 %v5985, %v6020
    %6023 = vset.pattern.permute.xlu0 7
    %6024 = vperm.xlu0 %6023, %v128
    %v6025 = vpop.permute.xlu0 %6024
    %v6027 = vadd.f32 %v5985, %v6025
    %6028 = vset.pattern.permute.xlu0 8
    %6029 = vperm.xlu0 %6028, %v128
    %v6030 = vpop.permute.xlu0 %6029
    %v6032 = vadd.f32 %v5986, %v6030
    %6034 = vrot.lane.b32.xlu0 %v5997, 64
    %v6035 = vpop.permute.xlu0 %6034
    %6038 = vrot.lane.b32.xlu0 %v6007, 64
    %v6039 = vpop.permute.xlu0 %6038
    %6042 = vrot.lane.b32.xlu0 %v6017, 64
    %v6043 = vpop.permute.xlu0 %6042
    %6046 = vrot.lane.b32.xlu0 %v6027, 64
    %v6047 = vpop.permute.xlu0 %6046
    %v6049 = vpack.c.bf16 %v6035, %v5992
    %v6050 = vpack.c.bf16 %v6039, %v6002
    %v6051 = vpack.c.bf16 %v6043, %v6012
    %v6052 = vpack.c.bf16 %v6047, %v6022
    %v6053 = vpack.c.bf16 %v6032, %v6032
    %v6054 = vld [vmem:[#allocation9] sm:$0xf]
    %v6055 = vld [vmem:[#allocation9 + $0x4] sm:$0xf]
    %v6056 = vld [vmem:[#allocation9 + $0x8] sm:$0xf]
    %v6057 = vld [vmem:[#allocation9 + $0xc] sm:$0xf]
    %v6058 = vld [vmem:[#allocation9 + $0x10] sm:$0xf]
    %v6059 = vld [vmem:[#allocation9 + $0x14] sm:$0xf]
    %v6060 = vld [vmem:[#allocation9 + $0x18] sm:$0xf]
    %v6061 = vld [vmem:[#allocation9 + $0x1c] sm:$0xf]
    %v6062 = vld [vmem:[#allocation10 + $0x15] sm:$0x1]
    %v6064 = vlaneseq
    %v6065 = vshrl.u32 %v6064, 7
    %v6066 = vsub.s32 0, %v6065
    %v6067 = vrot.slane %v6062, %v6066
    %v6077 = vunpack.c.l.b16 %v6054
    %v6078 = vunpack.c.l.b16 %v6055
    %v6079 = vunpack.c.l.b16 %v6056
    %v6080 = vunpack.c.l.b16 %v6057
    %v6081 = vunpack.c.l.b16 %v6058
    %v6082 = vunpack.c.l.b16 %v6059
    %v6083 = vunpack.c.l.b16 %v6060
    %v6084 = vunpack.c.l.b16 %v6061
    %v6085 = vpack.c.b16 %v6078, %v6077
    %v6086 = vpack.c.b16 %v6080, %v6079
    %v6087 = vpack.c.b16 %v6082, %v6081
    %v6088 = vpack.c.b16 %v6084, %v6083
    %vm6093 = vcmask 523264
    %v6095 = vsel %vm6093, %v6049, 0
    %v6098 = vsel %vm6093, %v6050, 0
    %v6101 = vsel %vm6093, %v6051, 0
    %v6104 = vsel %vm6093, %v6052, 0
    %v6107 = vsel %vm6093, %v6053, 0
    %6109 = vmatprep.subr.bf16.mxu0 0
    %6110 = vmatpush1.bf16.msra.mxu0 0
    %6111 = vmatprep.subr.bf16.mxu0 0
    %6112 = vmatpush1.bf16.msra.mxu0 0
    %6113 = vmatprep.subr.bf16.mxu0 0
    %6114 = vmatpush1.bf16.msra.mxu0 0
    %6115 = vmatprep.subr.bf16.mxu0 0
    %6116 = vmatpush1.bf16.msra.mxu0 0
    %6117 = vmatprep.subr.bf16.mxu0 0
    %6118 = vmatpush1.bf16.msra.mxu0 %v6088
    %6119 = vmatprep.subr.bf16.mxu0 0
    %6120 = vmatpush1.bf16.msra.mxu0 %v6087
    %6121 = vmatprep.subr.bf16.mxu0 0
    %6122 = vmatpush1.bf16.msra.mxu0 %v6086
    %6123 = vmatprep.subr.bf16.mxu0 0
    %6124 = vmatpush1.bf16.msra.mxu0 %v6085
    %6125 = vmatprep.subr.bf16.mxu0 0
    %6126 = vmatpush2.bf16.msra.mxu0 0
    %6127 = vmatprep.subr.bf16.mxu0 0
    %6128 = vmatpush2.bf16.msra.mxu0 0
    %6129 = vmatprep.subr.bf16.mxu0 0
    %6130 = vmatpush2.bf16.msra.mxu0 0
    %6131 = vmatprep.subr.bf16.mxu0 0
    %6132 = vmatpush2.bf16.msra.mxu0 0
    %6133 = vmatprep.subr.bf16.mxu0 0
    %6134 = vmatpush2.bf16.msra.mxu0 0
    %6135 = vmatprep.subr.bf16.mxu0 0
    %6136 = vmatpush2.bf16.msra.mxu0 0
    %6137 = vmatprep.subr.bf16.mxu0 0
    %6138 = vmatpush2.bf16.msra.mxu0 0
    %6139 = vmatprep.subr.bf16.mxu0 0
    %6140 = vmatpush2.bf16.msra.mxu0 0
    %6141 = vmatprep.mubr.bf16.mxu0 0
    %6142 = vmatmul.mubr.bf16.gmra.mxu0 %v6095
    %v6143 = vpop.f32.mrf.mxu0
    %v6144 = vadd.f32 %v6067, %v6143
    %v6145 = vpop.f32.mrf.mxu0
    %v6146 = vpop.f32.mrf.mxu0
    %v6147 = vadd.f32 %v6067, %v6146
    %v6148 = vpop.f32.mrf.mxu0
    %6149 = vmatprep.mubr.bf16.mxu0 0
    %6150 = vmatmul.mubr.bf16.gmra.mxu0 %v6098
    %v6151 = vpop.f32.mrf.mxu0
    %v6152 = vadd.f32 %v6067, %v6151
    %v6153 = vpop.f32.mrf.mxu0
    %v6154 = vpop.f32.mrf.mxu0
    %v6155 = vadd.f32 %v6067, %v6154
    %v6156 = vpop.f32.mrf.mxu0
    %6157 = vmatprep.mubr.bf16.mxu0 0
    %6158 = vmatmul.mubr.bf16.gmra.mxu0 %v6101
    %v6159 = vpop.f32.mrf.mxu0
    %v6160 = vadd.f32 %v6067, %v6159
    %v6161 = vpop.f32.mrf.mxu0
    %v6162 = vpop.f32.mrf.mxu0
    %v6163 = vadd.f32 %v6067, %v6162
    %v6164 = vpop.f32.mrf.mxu0
    %6165 = vmatprep.mubr.bf16.mxu0 0
    %6166 = vmatmul.mubr.bf16.gmra.mxu0 %v6104
    %v6167 = vpop.f32.mrf.mxu0
    %v6168 = vadd.f32 %v6067, %v6167
    %v6169 = vpop.f32.mrf.mxu0
    %v6170 = vpop.f32.mrf.mxu0
    %v6171 = vadd.f32 %v6067, %v6170
    %v6172 = vpop.f32.mrf.mxu0
    %6173 = vmatprep.mubr.bf16.mxu0 0
    %6174 = vmatmul.mubr.bf16.gmra.mxu0 %v6107
    %v6175 = vpop.f32.mrf.mxu0
    %v6176 = vadd.f32 %v6067, %v6175
    %v6177 = vpop.f32.mrf.mxu0
    %v6178 = vpop.f32.mrf.mxu0
    %v6179 = vpop.f32.mrf.mxu0
    %6180 = vdwg.mxu0
    %v6181 = vld [vmem:[#allocation12] sm:$0xff]
    %v6182 = vld [vmem:[#allocation12 + $0x8] sm:$0xff]
    %v6183 = vld [vmem:[#allocation12 + $0x10] sm:$0xff]
    %v6184 = vld [vmem:[#allocation12 + $0x18] sm:$0xff]
    %v6185 = vld [vmem:[#allocation12 + $0x20] sm:$0xff]
    %v6186 = vld [vmem:[#allocation12 + $0x28] sm:$0xff]
    %v6187 = vld [vmem:[#allocation12 + $0x30] sm:$0xff]
    %v6188 = vld [vmem:[#allocation12 + $0x38] sm:$0xff]
    %v6189 = vld [vmem:[#allocation12 + $0x40] sm:$0xff]
    %v6190 = vld [vmem:[#allocation12 + $0x48] sm:$0xff]
    %v6191 = vld [vmem:[#allocation12 + $0x50] sm:$0xff]
    %v6192 = vld [vmem:[#allocation12 + $0x58] sm:$0xff]
    %v6193 = vld [vmem:[#allocation12 + $0x60] sm:$0xff]
    %v6194 = vld [vmem:[#allocation12 + $0x68] sm:$0xff]
    %v6195 = vld [vmem:[#allocation12 + $0x70] sm:$0xff]
    %v6196 = vld [vmem:[#allocation12 + $0x78] sm:$0xff]
    %v6197 = vld [vmem:[#allocation12 + $0x80] sm:$0xff]
    %v6198 = vld [vmem:[#allocation12 + $0x88] sm:$0xff]
    %v6199 = vld [vmem:[#allocation12 + $0x90] sm:$0xff]
    %v6200 = vld [vmem:[#allocation12 + $0x98] sm:$0xff]
    %v6201 = vld [vmem:[#allocation12 + $0xa0] sm:$0xff]
    %v6202 = vld [vmem:[#allocation12 + $0xa8] sm:$0xff]
    %v6203 = vld [vmem:[#allocation12 + $0xb0] sm:$0xff]
    %v6204 = vld [vmem:[#allocation12 + $0xb8] sm:$0xff]
    %v6205 = vld [vmem:[#allocation12 + $0xc0] sm:$0xff]
    %v6206 = vld [vmem:[#allocation12 + $0xc8] sm:$0xff]
    %v6207 = vld [vmem:[#allocation12 + $0xd0] sm:$0xff]
    %v6208 = vld [vmem:[#allocation12 + $0xd8] sm:$0xff]
    %v6209 = vld [vmem:[#allocation12 + $0xe0] sm:$0xff]
    %v6210 = vld [vmem:[#allocation12 + $0xe8] sm:$0xff]
    %v6211 = vld [vmem:[#allocation12 + $0xf0] sm:$0xff]
    %v6212 = vld [vmem:[#allocation12 + $0xf8] sm:$0xff]
    %v6213 = vld [vmem:[#allocation12 + $0x100] sm:$0xff]
    %v6214 = vld [vmem:[#allocation12 + $0x108] sm:$0xff]
    %v6215 = vld [vmem:[#allocation12 + $0x110] sm:$0xff]
    %v6216 = vld [vmem:[#allocation12 + $0x118] sm:$0xff]
    %v6217 = vld [vmem:[#allocation12 + $0x120] sm:$0xff]
    %v6218 = vld [vmem:[#allocation12 + $0x128] sm:$0xff]
    %v6219 = vld [vmem:[#allocation12 + $0x130] sm:$0xff]
    %v6220 = vld [vmem:[#allocation12 + $0x138] sm:$0xff]
    %v6221 = vld [vmem:[#allocation12 + $0x140] sm:$0xff]
    %v6222 = vld [vmem:[#allocation12 + $0x148] sm:$0xff]
    %v6223 = vld [vmem:[#allocation12 + $0x150] sm:$0xff]
    %v6224 = vld [vmem:[#allocation12 + $0x158] sm:$0xff]
    %v6225 = vld [vmem:[#allocation12 + $0x160] sm:$0xff]
    %v6226 = vld [vmem:[#allocation12 + $0x168] sm:$0xff]
    %v6227 = vld [vmem:[#allocation12 + $0x170] sm:$0xff]
    %v6228 = vld [vmem:[#allocation12 + $0x178] sm:$0xff]
    %v6229 = vld [vmem:[#allocation10 + $0x16] sm:$0x1]
    %v6230 = vld [vmem:[%s8] sm:$0xff]
    %s6231 = scalar_lea.vmem %s8, 8
    %v6232 = vld [vmem:[%s6231] sm:$0xff]
    %v6234 = vsel %vm5490, %v6230, 0
    %6236 = vmatprep.subr.mxu0 0.0
    %6237 = vmatpush1.msra.mxu0 0.0
    %6238 = vmatprep.subr.mxu0 0.0
    %6239 = vmatpush1.msra.mxu0 0.0
    %6240 = vmatprep.subr.mxu0 0.0
    %6241 = vmatpush1.msra.mxu0 0.0
    %6242 = vmatprep.subr.mxu0 0.0
    %6243 = vmatpush1.msra.mxu0 0.0
    %6244 = vmatprep.subr.mxu0 0.0
    %6245 = vmatpush1.msra.mxu0 0.0
    %6246 = vmatprep.subr.mxu0 0.0
    %6247 = vmatpush1.msra.mxu0 0.0
    %6248 = vmatprep.subr.mxu0 0.0
    %6249 = vmatpush1.msra.mxu0 0.0
    %6250 = vmatprep.subr.mxu0 0.0
    %6251 = vmatpush1.msra.mxu0 0.0
    %6252 = vmatprep.subr.mxu0 0.0
    %6253 = vmatpush1.msra.mxu0 0.0
    %6254 = vmatprep.subr.mxu0 0.0
    %6255 = vmatpush1.msra.mxu0 0.0
    %6256 = vmatprep.subr.mxu0 0.0
    %6257 = vmatpush1.msra.mxu0 0.0
    %6258 = vmatprep.subr.mxu0 0.0
    %6259 = vmatpush1.msra.mxu0 0.0
    %6260 = vmatprep.subr.mxu0 0.0
    %6261 = vmatpush1.msra.mxu0 %v6184
    %6262 = vmatprep.subr.mxu0 0.0
    %6263 = vmatpush1.msra.mxu0 %v6183
    %6264 = vmatprep.subr.mxu0 0.0
    %6265 = vmatpush1.msra.mxu0 %v6182
    %6266 = vmatprep.subr.mxu0 0.0
    %6267 = vmatpush1.msra.mxu0 %v6181
    %6268 = vmatprep.subr.mxu0 0.0
    %6269 = vmatpush2.msra.mxu0 0.0
    %6270 = vmatprep.subr.mxu0 0.0
    %6271 = vmatpush2.msra.mxu0 0.0
    %6272 = vmatprep.subr.mxu0 0.0
    %6273 = vmatpush2.msra.mxu0 0.0
    %6274 = vmatprep.subr.mxu0 0.0
    %6275 = vmatpush2.msra.mxu0 0.0
    %6276 = vmatprep.subr.mxu0 0.0
    %6277 = vmatpush2.msra.mxu0 0.0
    %6278 = vmatprep.subr.mxu0 0.0
    %6279 = vmatpush2.msra.mxu0 0.0
    %6280 = vmatprep.subr.mxu0 0.0
    %6281 = vmatpush2.msra.mxu0 0.0
    %6282 = vmatprep.subr.mxu0 0.0
    %6283 = vmatpush2.msra.mxu0 0.0
    %6284 = vmatprep.subr.mxu0 0.0
    %6285 = vmatpush2.msra.mxu0 0.0
    %6286 = vmatprep.subr.mxu0 0.0
    %6287 = vmatpush2.msra.mxu0 0.0
    %6288 = vmatprep.subr.mxu0 0.0
    %6289 = vmatpush2.msra.mxu0 0.0
    %6290 = vmatprep.subr.mxu0 0.0
    %6291 = vmatpush2.msra.mxu0 0.0
    %6292 = vmatprep.subr.mxu0 0.0
    %6293 = vmatpush2.msra.mxu0 0.0
    %6294 = vmatprep.subr.mxu0 0.0
    %6295 = vmatpush2.msra.mxu0 0.0
    %6296 = vmatprep.subr.mxu0 0.0
    %6297 = vmatpush2.msra.mxu0 0.0
    %6298 = vmatprep.subr.mxu0 0.0
    %6299 = vmatpush2.msra.mxu0 0.0
    %6300 = vmatprep.mubr.f32.mxu0 0.0
    %6301 = vmatmul.mubr.f32.gmra.mxu0 %v6234
    %v6302 = vpop.f32.mrf.mxu0
    %v6303 = vadd.f32 0.0, %v6302
    %v6304 = vpop.f32.mrf.mxu0
    %6305 = vdwg.mxu0
    %v6306 = vadd.f32 %v6144, %v6303
    %v6307 = vxor.u32 %v6306, 2147483648
    %v6308 = vmul.f32 %v6307, 1.442695
    %v6309 = vpow.pop %v6308
    %v6310 = vadd.f32 %v6309, 1.0
    %v6311 = vrcp.pop %v6310
    %v6312 = vmul.f32 1.0, %v6311
    %6314 = vrot.lane.b32.xlu0 %v6306, 32
    %v6315 = vpop.permute.xlu0 %6314
    %v6317 = vmul.f32 %v6312, %v6315
    %6319 = vrot.lane.b32.xlu0 %v6317, 64
    %v6320 = vpop.permute.xlu0 %6319
    %v6322 = vadd.f32 %v6306, %v6320
    %v6323 = vtanh.pop %v6322
    %v6324 = vsub.f32 1.0, %v6312
    %6326 = vrot.lane.b32.xlu0 %v6323, 96
    %v6327 = vpop.permute.xlu0 %6326
    %v6329 = vmul.f32 %v6324, %v6327
    %6330 = vrot.lane.b32.xlu0 %v6230, 32
    %v6331 = vpop.permute.xlu0 %6330
    %v6333 = vmul.f32 %v6312, %v6331
    %v6334 = vadd.f32 %v6329, %v6333
    %6336 = vrot.lane.b32.xlu0 %v6334, 96
    %v6337 = vpop.permute.xlu0 %6336
    %6340 = vrot.lane.b32.xlu0 %v6232, 32
    %v6341 = vpop.permute.xlu0 %6340
    %v6343 = vsel %vm5490, %v6337, %v6341
    %v6345 = vlaneseq
    %v6346 = vshrl.u32 %v6345, 7
    %v6347 = vsub.s32 0, %v6346
    %v6348 = vrot.slane %v6229, %v6347
    %v6351 = vsel %vm6093, %v6343, 0
    %6353 = vmatprep.subr.mxu0 0.0
    %6354 = vmatpush1.msra.mxu0 0.0
    %6355 = vmatprep.subr.mxu0 0.0
    %6356 = vmatpush1.msra.mxu0 0.0
    %6357 = vmatprep.subr.mxu0 0.0
    %6358 = vmatpush1.msra.mxu0 0.0
    %6359 = vmatprep.subr.mxu0 0.0
    %6360 = vmatpush1.msra.mxu0 0.0
    %6361 = vmatprep.subr.mxu0 0.0
    %6362 = vmatpush1.msra.mxu0 0.0
    %6363 = vmatprep.subr.mxu0 0.0
    %6364 = vmatpush1.msra.mxu0 0.0
    %6365 = vmatprep.subr.mxu0 0.0
    %6366 = vmatpush1.msra.mxu0 0.0
    %6367 = vmatprep.subr.mxu0 0.0
    %6368 = vmatpush1.msra.mxu0 0.0
    %6369 = vmatprep.subr.mxu0 0.0
    %6370 = vmatpush1.msra.mxu0 %v6192
    %6371 = vmatprep.subr.mxu0 0.0
    %6372 = vmatpush1.msra.mxu0 %v6191
    %6373 = vmatprep.subr.mxu0 0.0
    %6374 = vmatpush1.msra.mxu0 %v6190
    %6375 = vmatprep.subr.mxu0 0.0
    %6376 = vmatpush1.msra.mxu0 %v6189
    %6377 = vmatprep.subr.mxu0 0.0
    %6378 = vmatpush1.msra.mxu0 %v6188
    %6379 = vmatprep.subr.mxu0 0.0
    %6380 = vmatpush1.msra.mxu0 %v6187
    %6381 = vmatprep.subr.mxu0 0.0
    %6382 = vmatpush1.msra.mxu0 %v6186
    %6383 = vmatprep.subr.mxu0 0.0
    %6384 = vmatpush1.msra.mxu0 %v6185
    %6385 = vmatprep.subr.mxu0 0.0
    %6386 = vmatpush2.msra.mxu0 0.0
    %6387 = vmatprep.subr.mxu0 0.0
    %6388 = vmatpush2.msra.mxu0 0.0
    %6389 = vmatprep.subr.mxu0 0.0
    %6390 = vmatpush2.msra.mxu0 0.0
    %6391 = vmatprep.subr.mxu0 0.0
    %6392 = vmatpush2.msra.mxu0 0.0
    %6393 = vmatprep.subr.mxu0 0.0
    %6394 = vmatpush2.msra.mxu0 0.0
    %6395 = vmatprep.subr.mxu0 0.0
    %6396 = vmatpush2.msra.mxu0 0.0
    %6397 = vmatprep.subr.mxu0 0.0
    %6398 = vmatpush2.msra.mxu0 0.0
    %6399 = vmatprep.subr.mxu0 0.0
    %6400 = vmatpush2.msra.mxu0 0.0
    %6401 = vmatprep.subr.mxu0 0.0
    %6402 = vmatpush2.msra.mxu0 0.0
    %6403 = vmatprep.subr.mxu0 0.0
    %6404 = vmatpush2.msra.mxu0 0.0
    %6405 = vmatprep.subr.mxu0 0.0
    %6406 = vmatpush2.msra.mxu0 0.0
    %6407 = vmatprep.subr.mxu0 0.0
    %6408 = vmatpush2.msra.mxu0 0.0
    %6409 = vmatprep.subr.mxu0 0.0
    %6410 = vmatpush2.msra.mxu0 0.0
    %6411 = vmatprep.subr.mxu0 0.0
    %6412 = vmatpush2.msra.mxu0 0.0
    %6413 = vmatprep.subr.mxu0 0.0
    %6414 = vmatpush2.msra.mxu0 0.0
    %6415 = vmatprep.subr.mxu0 0.0
    %6416 = vmatpush2.msra.mxu0 0.0
    %6417 = vmatprep.mubr.f32.mxu0 0.0
    %6418 = vmatmul.mubr.f32.gmra.mxu0 %v6351
    %v6419 = vpop.f32.mrf.mxu0
    %v6420 = vadd.f32 %v6348, %v6419
    %v6421 = vpop.f32.mrf.mxu0
    %6422 = vdwg.mxu0
    %v6423 = vxor.u32 %v6420, 2147483648
    %v6424 = vmul.f32 %v6423, 1.442695
    %v6425 = vpow.pop %v6424
    %v6426 = vadd.f32 %v6425, 1.0
    %v6427 = vrcp.pop %v6426
    %v6428 = vmul.f32 1.0, %v6427
    %6430 = vrot.lane.b32.xlu0 %v6420, 32
    %v6431 = vpop.permute.xlu0 %6430
    %v6433 = vmul.f32 %v6428, %v6431
    %6435 = vrot.lane.b32.xlu0 %v6433, 64
    %v6436 = vpop.permute.xlu0 %6435
    %v6438 = vadd.f32 %v6420, %v6436
    %v6439 = vtanh.pop %v6438
    %v6440 = vsub.f32 1.0, %v6428
    %6442 = vrot.lane.b32.xlu0 %v6439, 96
    %v6443 = vpop.permute.xlu0 %6442
    %v6445 = vmul.f32 %v6440, %v6443
    %v6446 = vmul.f32 %v6428, %v6341
    %v6447 = vadd.f32 %v6445, %v6446
    %v6448 = vsel %vm5490, %v6337, 0
    %6450 = vmatprep.subr.mxu0 0.0
    %6451 = vmatpush1.msra.mxu0 0.0
    %6452 = vmatprep.subr.mxu0 0.0
    %6453 = vmatpush1.msra.mxu0 0.0
    %6454 = vmatprep.subr.mxu0 0.0
    %6455 = vmatpush1.msra.mxu0 0.0
    %6456 = vmatprep.subr.mxu0 0.0
    %6457 = vmatpush1.msra.mxu0 0.0
    %6458 = vmatprep.subr.mxu0 0.0
    %6459 = vmatpush1.msra.mxu0 0.0
    %6460 = vmatprep.subr.mxu0 0.0
    %6461 = vmatpush1.msra.mxu0 0.0
    %6462 = vmatprep.subr.mxu0 0.0
    %6463 = vmatpush1.msra.mxu0 0.0
    %6464 = vmatprep.subr.mxu0 0.0
    %6465 = vmatpush1.msra.mxu0 0.0
    %6466 = vmatprep.subr.mxu0 0.0
    %6467 = vmatpush1.msra.mxu0 0.0
    %6468 = vmatprep.subr.mxu0 0.0
    %6469 = vmatpush1.msra.mxu0 0.0
    %6470 = vmatprep.subr.mxu0 0.0
    %6471 = vmatpush1.msra.mxu0 0.0
    %6472 = vmatprep.subr.mxu0 0.0
    %6473 = vmatpush1.msra.mxu0 0.0
    %6474 = vmatprep.subr.mxu0 0.0
    %6475 = vmatpush1.msra.mxu0 %v6184
    %6476 = vmatprep.subr.mxu0 0.0
    %6477 = vmatpush1.msra.mxu0 %v6183
    %6478 = vmatprep.subr.mxu0 0.0
    %6479 = vmatpush1.msra.mxu0 %v6182
    %6480 = vmatprep.subr.mxu0 0.0
    %6481 = vmatpush1.msra.mxu0 %v6181
    %6482 = vmatprep.subr.mxu0 0.0
    %6483 = vmatpush2.msra.mxu0 0.0
    %6484 = vmatprep.subr.mxu0 0.0
    %6485 = vmatpush2.msra.mxu0 0.0
    %6486 = vmatprep.subr.mxu0 0.0
    %6487 = vmatpush2.msra.mxu0 0.0
    %6488 = vmatprep.subr.mxu0 0.0
    %6489 = vmatpush2.msra.mxu0 0.0
    %6490 = vmatprep.subr.mxu0 0.0
    %6491 = vmatpush2.msra.mxu0 0.0
    %6492 = vmatprep.subr.mxu0 0.0
    %6493 = vmatpush2.msra.mxu0 0.0
    %6494 = vmatprep.subr.mxu0 0.0
    %6495 = vmatpush2.msra.mxu0 0.0
    %6496 = vmatprep.subr.mxu0 0.0
    %6497 = vmatpush2.msra.mxu0 0.0
    %6498 = vmatprep.subr.mxu0 0.0
    %6499 = vmatpush2.msra.mxu0 0.0
    %6500 = vmatprep.subr.mxu0 0.0
    %6501 = vmatpush2.msra.mxu0 0.0
    %6502 = vmatprep.subr.mxu0 0.0
    %6503 = vmatpush2.msra.mxu0 0.0
    %6504 = vmatprep.subr.mxu0 0.0
    %6505 = vmatpush2.msra.mxu0 0.0
    %6506 = vmatprep.subr.mxu0 0.0
    %6507 = vmatpush2.msra.mxu0 0.0
    %6508 = vmatprep.subr.mxu0 0.0
    %6509 = vmatpush2.msra.mxu0 0.0
    %6510 = vmatprep.subr.mxu0 0.0
    %6511 = vmatpush2.msra.mxu0 0.0
    %6512 = vmatprep.subr.mxu0 0.0
    %6513 = vmatpush2.msra.mxu0 0.0
    %6514 = vmatprep.mubr.f32.mxu0 0.0
    %6515 = vmatmul.mubr.f32.gmra.mxu0 %v6448
    %v6516 = vpop.f32.mrf.mxu0
    %v6517 = vadd.f32 0.0, %v6516
    %v6518 = vpop.f32.mrf.mxu0
    %6519 = vdwg.mxu0
    %v6520 = vadd.f32 %v6147, %v6517
    %v6521 = vxor.u32 %v6520, 2147483648
    %v6522 = vmul.f32 %v6521, 1.442695
    %v6523 = vpow.pop %v6522
    %v6524 = vadd.f32 %v6523, 1.0
    %v6525 = vrcp.pop %v6524
    %v6526 = vmul.f32 1.0, %v6525
    %6528 = vrot.lane.b32.xlu0 %v6520, 32
    %v6529 = vpop.permute.xlu0 %6528
    %v6531 = vmul.f32 %v6526, %v6529
    %6533 = vrot.lane.b32.xlu0 %v6531, 64
    %v6534 = vpop.permute.xlu0 %6533
    %v6536 = vadd.f32 %v6520, %v6534
    %v6537 = vtanh.pop %v6536
    %v6538 = vsub.f32 1.0, %v6526
    %6540 = vrot.lane.b32.xlu0 %v6537, 96
    %v6541 = vpop.permute.xlu0 %6540
    %v6543 = vmul.f32 %v6538, %v6541
    %v6544 = vmul.f32 %v6526, %v6334
    %v6545 = vadd.f32 %v6543, %v6544
    %6547 = vrot.lane.b32.xlu0 %v6545, 96
    %v6548 = vpop.permute.xlu0 %6547
    %v6550 = vsel %vm5490, %v6548, %v6447
    %v6552 = vsel %vm6093, %v6550, 0
    %6554 = vmatprep.subr.mxu0 0.0
    %6555 = vmatpush1.msra.mxu0 0.0
    %6556 = vmatprep.subr.mxu0 0.0
    %6557 = vmatpush1.msra.mxu0 0.0
    %6558 = vmatprep.subr.mxu0 0.0
    %6559 = vmatpush1.msra.mxu0 0.0
    %6560 = vmatprep.subr.mxu0 0.0
    %6561 = vmatpush1.msra.mxu0 0.0
    %6562 = vmatprep.subr.mxu0 0.0
    %6563 = vmatpush1.msra.mxu0 0.0
    %6564 = vmatprep.subr.mxu0 0.0
    %6565 = vmatpush1.msra.mxu0 0.0
    %6566 = vmatprep.subr.mxu0 0.0
    %6567 = vmatpush1.msra.mxu0 0.0
    %6568 = vmatprep.subr.mxu0 0.0
    %6569 = vmatpush1.msra.mxu0 0.0
    %6570 = vmatprep.subr.mxu0 0.0
    %6571 = vmatpush1.msra.mxu0 %v6192
    %6572 = vmatprep.subr.mxu0 0.0
    %6573 = vmatpush1.msra.mxu0 %v6191
    %6574 = vmatprep.subr.mxu0 0.0
    %6575 = vmatpush1.msra.mxu0 %v6190
    %6576 = vmatprep.subr.mxu0 0.0
    %6577 = vmatpush1.msra.mxu0 %v6189
    %6578 = vmatprep.subr.mxu0 0.0
    %6579 = vmatpush1.msra.mxu0 %v6188
    %6580 = vmatprep.subr.mxu0 0.0
    %6581 = vmatpush1.msra.mxu0 %v6187
    %6582 = vmatprep.subr.mxu0 0.0
    %6583 = vmatpush1.msra.mxu0 %v6186
    %6584 = vmatprep.subr.mxu0 0.0
    %6585 = vmatpush1.msra.mxu0 %v6185
    %6586 = vmatprep.subr.mxu0 0.0
    %6587 = vmatpush2.msra.mxu0 0.0
    %6588 = vmatprep.subr.mxu0 0.0
    %6589 = vmatpush2.msra.mxu0 0.0
    %6590 = vmatprep.subr.mxu0 0.0
    %6591 = vmatpush2.msra.mxu0 0.0
    %6592 = vmatprep.subr.mxu0 0.0
    %6593 = vmatpush2.msra.mxu0 0.0
    %6594 = vmatprep.subr.mxu0 0.0
    %6595 = vmatpush2.msra.mxu0 0.0
    %6596 = vmatprep.subr.mxu0 0.0
    %6597 = vmatpush2.msra.mxu0 0.0
    %6598 = vmatprep.subr.mxu0 0.0
    %6599 = vmatpush2.msra.mxu0 0.0
    %6600 = vmatprep.subr.mxu0 0.0
    %6601 = vmatpush2.msra.mxu0 0.0
    %6602 = vmatprep.subr.mxu0 0.0
    %6603 = vmatpush2.msra.mxu0 0.0
    %6604 = vmatprep.subr.mxu0 0.0
    %6605 = vmatpush2.msra.mxu0 0.0
    %6606 = vmatprep.subr.mxu0 0.0
    %6607 = vmatpush2.msra.mxu0 0.0
    %6608 = vmatprep.subr.mxu0 0.0
    %6609 = vmatpush2.msra.mxu0 0.0
    %6610 = vmatprep.subr.mxu0 0.0
    %6611 = vmatpush2.msra.mxu0 0.0
    %6612 = vmatprep.subr.mxu0 0.0
    %6613 = vmatpush2.msra.mxu0 0.0
    %6614 = vmatprep.subr.mxu0 0.0
    %6615 = vmatpush2.msra.mxu0 0.0
    %6616 = vmatprep.subr.mxu0 0.0
    %6617 = vmatpush2.msra.mxu0 0.0
    %6618 = vmatprep.mubr.f32.mxu0 0.0
    %6619 = vmatmul.mubr.f32.gmra.mxu0 %v6552
    %v6620 = vpop.f32.mrf.mxu0
    %v6621 = vadd.f32 %v6348, %v6620
    %v6622 = vpop.f32.mrf.mxu0
    %6623 = vdwg.mxu0
    %v6624 = vxor.u32 %v6621, 2147483648
    %v6625 = vmul.f32 %v6624, 1.442695
    %v6626 = vpow.pop %v6625
    %v6627 = vadd.f32 %v6626, 1.0
    %v6628 = vrcp.pop %v6627
    %v6629 = vmul.f32 1.0, %v6628
    %6631 = vrot.lane.b32.xlu0 %v6621, 32
    %v6632 = vpop.permute.xlu0 %6631
    %v6634 = vmul.f32 %v6629, %v6632
    %6636 = vrot.lane.b32.xlu0 %v6634, 64
    %v6637 = vpop.permute.xlu0 %6636
    %v6639 = vadd.f32 %v6621, %v6637
    %v6640 = vtanh.pop %v6639
    %v6641 = vsub.f32 1.0, %v6629
    %6643 = vrot.lane.b32.xlu0 %v6640, 96
    %v6644 = vpop.permute.xlu0 %6643
    %v6646 = vmul.f32 %v6641, %v6644
    %v6647 = vmul.f32 %v6629, %v6447
    %v6648 = vadd.f32 %v6646, %v6647
    %v6649 = vsel %vm5490, %v6548, 0
    %6651 = vmatprep.subr.mxu0 0.0
    %6652 = vmatpush1.msra.mxu0 0.0
    %6653 = vmatprep.subr.mxu0 0.0
    %6654 = vmatpush1.msra.mxu0 0.0
    %6655 = vmatprep.subr.mxu0 0.0
    %6656 = vmatpush1.msra.mxu0 0.0
    %6657 = vmatprep.subr.mxu0 0.0
    %6658 = vmatpush1.msra.mxu0 0.0
    %6659 = vmatprep.subr.mxu0 0.0
    %6660 = vmatpush1.msra.mxu0 0.0
    %6661 = vmatprep.subr.mxu0 0.0
    %6662 = vmatpush1.msra.mxu0 0.0
    %6663 = vmatprep.subr.mxu0 0.0
    %6664 = vmatpush1.msra.mxu0 0.0
    %6665 = vmatprep.subr.mxu0 0.0
    %6666 = vmatpush1.msra.mxu0 0.0
    %6667 = vmatprep.subr.mxu0 0.0
    %6668 = vmatpush1.msra.mxu0 0.0
    %6669 = vmatprep.subr.mxu0 0.0
    %6670 = vmatpush1.msra.mxu0 0.0
    %6671 = vmatprep.subr.mxu0 0.0
    %6672 = vmatpush1.msra.mxu0 0.0
    %6673 = vmatprep.subr.mxu0 0.0
    %6674 = vmatpush1.msra.mxu0 0.0
    %6675 = vmatprep.subr.mxu0 0.0
    %6676 = vmatpush1.msra.mxu0 %v6184
    %6677 = vmatprep.subr.mxu0 0.0
    %6678 = vmatpush1.msra.mxu0 %v6183
    %6679 = vmatprep.subr.mxu0 0.0
    %6680 = vmatpush1.msra.mxu0 %v6182
    %6681 = vmatprep.subr.mxu0 0.0
    %6682 = vmatpush1.msra.mxu0 %v6181
    %6683 = vmatprep.subr.mxu0 0.0
    %6684 = vmatpush2.msra.mxu0 0.0
    %6685 = vmatprep.subr.mxu0 0.0
    %6686 = vmatpush2.msra.mxu0 0.0
    %6687 = vmatprep.subr.mxu0 0.0
    %6688 = vmatpush2.msra.mxu0 0.0
    %6689 = vmatprep.subr.mxu0 0.0
    %6690 = vmatpush2.msra.mxu0 0.0
    %6691 = vmatprep.subr.mxu0 0.0
    %6692 = vmatpush2.msra.mxu0 0.0
    %6693 = vmatprep.subr.mxu0 0.0
    %6694 = vmatpush2.msra.mxu0 0.0
    %6695 = vmatprep.subr.mxu0 0.0
    %6696 = vmatpush2.msra.mxu0 0.0
    %6697 = vmatprep.subr.mxu0 0.0
    %6698 = vmatpush2.msra.mxu0 0.0
    %6699 = vmatprep.subr.mxu0 0.0
    %6700 = vmatpush2.msra.mxu0 0.0
    %6701 = vmatprep.subr.mxu0 0.0
    %6702 = vmatpush2.msra.mxu0 0.0
    %6703 = vmatprep.subr.mxu0 0.0
    %6704 = vmatpush2.msra.mxu0 0.0
    %6705 = vmatprep.subr.mxu0 0.0
    %6706 = vmatpush2.msra.mxu0 0.0
    %6707 = vmatprep.subr.mxu0 0.0
    %6708 = vmatpush2.msra.mxu0 0.0
    %6709 = vmatprep.subr.mxu0 0.0
    %6710 = vmatpush2.msra.mxu0 0.0
    %6711 = vmatprep.subr.mxu0 0.0
    %6712 = vmatpush2.msra.mxu0 0.0
    %6713 = vmatprep.subr.mxu0 0.0
    %6714 = vmatpush2.msra.mxu0 0.0
    %6715 = vmatprep.mubr.f32.mxu0 0.0
    %6716 = vmatmul.mubr.f32.gmra.mxu0 %v6649
    %v6717 = vpop.f32.mrf.mxu0
    %v6718 = vadd.f32 0.0, %v6717
    %v6719 = vpop.f32.mrf.mxu0
    %6720 = vdwg.mxu0
    %v6721 = vadd.f32 %v6152, %v6718
    %v6722 = vxor.u32 %v6721, 2147483648
    %v6723 = vmul.f32 %v6722, 1.442695
    %v6724 = vpow.pop %v6723
    %v6725 = vadd.f32 %v6724, 1.0
    %v6726 = vrcp.pop %v6725
    %v6727 = vmul.f32 1.0, %v6726
    %6729 = vrot.lane.b32.xlu0 %v6721, 32
    %v6730 = vpop.permute.xlu0 %6729
    %v6732 = vmul.f32 %v6727, %v6730
    %6734 = vrot.lane.b32.xlu0 %v6732, 64
    %v6735 = vpop.permute.xlu0 %6734
    %v6737 = vadd.f32 %v6721, %v6735
    %v6738 = vtanh.pop %v6737
    %v6739 = vsub.f32 1.0, %v6727
    %6741 = vrot.lane.b32.xlu0 %v6738, 96
    %v6742 = vpop.permute.xlu0 %6741
    %v6744 = vmul.f32 %v6739, %v6742
    %v6745 = vmul.f32 %v6727, %v6545
    %v6746 = vadd.f32 %v6744, %v6745
    %6748 = vrot.lane.b32.xlu0 %v6746, 96
    %v6749 = vpop.permute.xlu0 %6748
    %v6751 = vsel %vm5490, %v6749, %v6648
    %v6753 = vsel %vm6093, %v6751, 0
    %6755 = vmatprep.subr.mxu0 0.0
    %6756 = vmatpush1.msra.mxu0 0.0
    %6757 = vmatprep.subr.mxu0 0.0
    %6758 = vmatpush1.msra.mxu0 0.0
    %6759 = vmatprep.subr.mxu0 0.0
    %6760 = vmatpush1.msra.mxu0 0.0
    %6761 = vmatprep.subr.mxu0 0.0
    %6762 = vmatpush1.msra.mxu0 0.0
    %6763 = vmatprep.subr.mxu0 0.0
    %6764 = vmatpush1.msra.mxu0 0.0
    %6765 = vmatprep.subr.mxu0 0.0
    %6766 = vmatpush1.msra.mxu0 0.0
    %6767 = vmatprep.subr.mxu0 0.0
    %6768 = vmatpush1.msra.mxu0 0.0
    %6769 = vmatprep.subr.mxu0 0.0
    %6770 = vmatpush1.msra.mxu0 0.0
    %6771 = vmatprep.subr.mxu0 0.0
    %6772 = vmatpush1.msra.mxu0 %v6192
    %6773 = vmatprep.subr.mxu0 0.0
    %6774 = vmatpush1.msra.mxu0 %v6191
    %6775 = vmatprep.subr.mxu0 0.0
    %6776 = vmatpush1.msra.mxu0 %v6190
    %6777 = vmatprep.subr.mxu0 0.0
    %6778 = vmatpush1.msra.mxu0 %v6189
    %6779 = vmatprep.subr.mxu0 0.0
    %6780 = vmatpush1.msra.mxu0 %v6188
    %6781 = vmatprep.subr.mxu0 0.0
    %6782 = vmatpush1.msra.mxu0 %v6187
    %6783 = vmatprep.subr.mxu0 0.0
    %6784 = vmatpush1.msra.mxu0 %v6186
    %6785 = vmatprep.subr.mxu0 0.0
    %6786 = vmatpush1.msra.mxu0 %v6185
    %6787 = vmatprep.subr.mxu0 0.0
    %6788 = vmatpush2.msra.mxu0 0.0
    %6789 = vmatprep.subr.mxu0 0.0
    %6790 = vmatpush2.msra.mxu0 0.0
    %6791 = vmatprep.subr.mxu0 0.0
    %6792 = vmatpush2.msra.mxu0 0.0
    %6793 = vmatprep.subr.mxu0 0.0
    %6794 = vmatpush2.msra.mxu0 0.0
    %6795 = vmatprep.subr.mxu0 0.0
    %6796 = vmatpush2.msra.mxu0 0.0
    %6797 = vmatprep.subr.mxu0 0.0
    %6798 = vmatpush2.msra.mxu0 0.0
    %6799 = vmatprep.subr.mxu0 0.0
    %6800 = vmatpush2.msra.mxu0 0.0
    %6801 = vmatprep.subr.mxu0 0.0
    %6802 = vmatpush2.msra.mxu0 0.0
    %6803 = vmatprep.subr.mxu0 0.0
    %6804 = vmatpush2.msra.mxu0 0.0
    %6805 = vmatprep.subr.mxu0 0.0
    %6806 = vmatpush2.msra.mxu0 0.0
    %6807 = vmatprep.subr.mxu0 0.0
    %6808 = vmatpush2.msra.mxu0 0.0
    %6809 = vmatprep.subr.mxu0 0.0
    %6810 = vmatpush2.msra.mxu0 0.0
    %6811 = vmatprep.subr.mxu0 0.0
    %6812 = vmatpush2.msra.mxu0 0.0
    %6813 = vmatprep.subr.mxu0 0.0
    %6814 = vmatpush2.msra.mxu0 0.0
    %6815 = vmatprep.subr.mxu0 0.0
    %6816 = vmatpush2.msra.mxu0 0.0
    %6817 = vmatprep.subr.mxu0 0.0
    %6818 = vmatpush2.msra.mxu0 0.0
    %6819 = vmatprep.mubr.f32.mxu0 0.0
    %6820 = vmatmul.mubr.f32.gmra.mxu0 %v6753
    %v6821 = vpop.f32.mrf.mxu0
    %v6822 = vadd.f32 %v6348, %v6821
    %v6823 = vpop.f32.mrf.mxu0
    %6824 = vdwg.mxu0
    %v6825 = vxor.u32 %v6822, 2147483648
    %v6826 = vmul.f32 %v6825, 1.442695
    %v6827 = vpow.pop %v6826
    %v6828 = vadd.f32 %v6827, 1.0
    %v6829 = vrcp.pop %v6828
    %v6830 = vmul.f32 1.0, %v6829
    %6832 = vrot.lane.b32.xlu0 %v6822, 32
    %v6833 = vpop.permute.xlu0 %6832
    %v6835 = vmul.f32 %v6830, %v6833
    %6837 = vrot.lane.b32.xlu0 %v6835, 64
    %v6838 = vpop.permute.xlu0 %6837
    %v6840 = vadd.f32 %v6822, %v6838
    %v6841 = vtanh.pop %v6840
    %v6842 = vsub.f32 1.0, %v6830
    %6844 = vrot.lane.b32.xlu0 %v6841, 96
    %v6845 = vpop.permute.xlu0 %6844
    %v6847 = vmul.f32 %v6842, %v6845
    %v6848 = vmul.f32 %v6830, %v6648
    %v6849 = vadd.f32 %v6847, %v6848
    %v6850 = vsel %vm5490, %v6749, 0
    %6852 = vmatprep.subr.mxu0 0.0
    %6853 = vmatpush1.msra.mxu0 0.0
    %6854 = vmatprep.subr.mxu0 0.0
    %6855 = vmatpush1.msra.mxu0 0.0
    %6856 = vmatprep.subr.mxu0 0.0
    %6857 = vmatpush1.msra.mxu0 0.0
    %6858 = vmatprep.subr.mxu0 0.0
    %6859 = vmatpush1.msra.mxu0 0.0
    %6860 = vmatprep.subr.mxu0 0.0
    %6861 = vmatpush1.msra.mxu0 0.0
    %6862 = vmatprep.subr.mxu0 0.0
    %6863 = vmatpush1.msra.mxu0 0.0
    %6864 = vmatprep.subr.mxu0 0.0
    %6865 = vmatpush1.msra.mxu0 0.0
    %6866 = vmatprep.subr.mxu0 0.0
    %6867 = vmatpush1.msra.mxu0 0.0
    %6868 = vmatprep.subr.mxu0 0.0
    %6869 = vmatpush1.msra.mxu0 0.0
    %6870 = vmatprep.subr.mxu0 0.0
    %6871 = vmatpush1.msra.mxu0 0.0
    %6872 = vmatprep.subr.mxu0 0.0
    %6873 = vmatpush1.msra.mxu0 0.0
    %6874 = vmatprep.subr.mxu0 0.0
    %6875 = vmatpush1.msra.mxu0 0.0
    %6876 = vmatprep.subr.mxu0 0.0
    %6877 = vmatpush1.msra.mxu0 %v6184
    %6878 = vmatprep.subr.mxu0 0.0
    %6879 = vmatpush1.msra.mxu0 %v6183
    %6880 = vmatprep.subr.mxu0 0.0
    %6881 = vmatpush1.msra.mxu0 %v6182
    %6882 = vmatprep.subr.mxu0 0.0
    %6883 = vmatpush1.msra.mxu0 %v6181
    %6884 = vmatprep.subr.mxu0 0.0
    %6885 = vmatpush2.msra.mxu0 0.0
    %6886 = vmatprep.subr.mxu0 0.0
    %6887 = vmatpush2.msra.mxu0 0.0
    %6888 = vmatprep.subr.mxu0 0.0
    %6889 = vmatpush2.msra.mxu0 0.0
    %6890 = vmatprep.subr.mxu0 0.0
    %6891 = vmatpush2.msra.mxu0 0.0
    %6892 = vmatprep.subr.mxu0 0.0
    %6893 = vmatpush2.msra.mxu0 0.0
    %6894 = vmatprep.subr.mxu0 0.0
    %6895 = vmatpush2.msra.mxu0 0.0
    %6896 = vmatprep.subr.mxu0 0.0
    %6897 = vmatpush2.msra.mxu0 0.0
    %6898 = vmatprep.subr.mxu0 0.0
    %6899 = vmatpush2.msra.mxu0 0.0
    %6900 = vmatprep.subr.mxu0 0.0
    %6901 = vmatpush2.msra.mxu0 0.0
    %6902 = vmatprep.subr.mxu0 0.0
    %6903 = vmatpush2.msra.mxu0 0.0
    %6904 = vmatprep.subr.mxu0 0.0
    %6905 = vmatpush2.msra.mxu0 0.0
    %6906 = vmatprep.subr.mxu0 0.0
    %6907 = vmatpush2.msra.mxu0 0.0
    %6908 = vmatprep.subr.mxu0 0.0
    %6909 = vmatpush2.msra.mxu0 0.0
    %6910 = vmatprep.subr.mxu0 0.0
    %6911 = vmatpush2.msra.mxu0 0.0
    %6912 = vmatprep.subr.mxu0 0.0
    %6913 = vmatpush2.msra.mxu0 0.0
    %6914 = vmatprep.subr.mxu0 0.0
    %6915 = vmatpush2.msra.mxu0 0.0
    %6916 = vmatprep.mubr.f32.mxu0 0.0
    %6917 = vmatmul.mubr.f32.gmra.mxu0 %v6850
    %v6918 = vpop.f32.mrf.mxu0
    %v6919 = vadd.f32 0.0, %v6918
    %v6920 = vpop.f32.mrf.mxu0
    %6921 = vdwg.mxu0
    %v6922 = vadd.f32 %v6155, %v6919
    %v6923 = vxor.u32 %v6922, 2147483648
    %v6924 = vmul.f32 %v6923, 1.442695
    %v6925 = vpow.pop %v6924
    %v6926 = vadd.f32 %v6925, 1.0
    %v6927 = vrcp.pop %v6926
    %v6928 = vmul.f32 1.0, %v6927
    %6930 = vrot.lane.b32.xlu0 %v6922, 32
    %v6931 = vpop.permute.xlu0 %6930
    %v6933 = vmul.f32 %v6928, %v6931
    %6935 = vrot.lane.b32.xlu0 %v6933, 64
    %v6936 = vpop.permute.xlu0 %6935
    %v6938 = vadd.f32 %v6922, %v6936
    %v6939 = vtanh.pop %v6938
    %v6940 = vsub.f32 1.0, %v6928
    %6942 = vrot.lane.b32.xlu0 %v6939, 96
    %v6943 = vpop.permute.xlu0 %6942
    %v6945 = vmul.f32 %v6940, %v6943
    %v6946 = vmul.f32 %v6928, %v6746
    %v6947 = vadd.f32 %v6945, %v6946
    %6949 = vrot.lane.b32.xlu0 %v6947, 96
    %v6950 = vpop.permute.xlu0 %6949
    %v6952 = vsel %vm5490, %v6950, %v6849
    %v6954 = vsel %vm6093, %v6952, 0
    %6956 = vmatprep.subr.mxu0 0.0
    %6957 = vmatpush1.msra.mxu0 0.0
    %6958 = vmatprep.subr.mxu0 0.0
    %6959 = vmatpush1.msra.mxu0 0.0
    %6960 = vmatprep.subr.mxu0 0.0
    %6961 = vmatpush1.msra.mxu0 0.0
    %6962 = vmatprep.subr.mxu0 0.0
    %6963 = vmatpush1.msra.mxu0 0.0
    %6964 = vmatprep.subr.mxu0 0.0
    %6965 = vmatpush1.msra.mxu0 0.0
    %6966 = vmatprep.subr.mxu0 0.0
    %6967 = vmatpush1.msra.mxu0 0.0
    %6968 = vmatprep.subr.mxu0 0.0
    %6969 = vmatpush1.msra.mxu0 0.0
    %6970 = vmatprep.subr.mxu0 0.0
    %6971 = vmatpush1.msra.mxu0 0.0
    %6972 = vmatprep.subr.mxu0 0.0
    %6973 = vmatpush1.msra.mxu0 %v6192
    %6974 = vmatprep.subr.mxu0 0.0
    %6975 = vmatpush1.msra.mxu0 %v6191
    %6976 = vmatprep.subr.mxu0 0.0
    %6977 = vmatpush1.msra.mxu0 %v6190
    %6978 = vmatprep.subr.mxu0 0.0
    %6979 = vmatpush1.msra.mxu0 %v6189
    %6980 = vmatprep.subr.mxu0 0.0
    %6981 = vmatpush1.msra.mxu0 %v6188
    %6982 = vmatprep.subr.mxu0 0.0
    %6983 = vmatpush1.msra.mxu0 %v6187
    %6984 = vmatprep.subr.mxu0 0.0
    %6985 = vmatpush1.msra.mxu0 %v6186
    %6986 = vmatprep.subr.mxu0 0.0
    %6987 = vmatpush1.msra.mxu0 %v6185
    %6988 = vmatprep.subr.mxu0 0.0
    %6989 = vmatpush2.msra.mxu0 0.0
    %6990 = vmatprep.subr.mxu0 0.0
    %6991 = vmatpush2.msra.mxu0 0.0
    %6992 = vmatprep.subr.mxu0 0.0
    %6993 = vmatpush2.msra.mxu0 0.0
    %6994 = vmatprep.subr.mxu0 0.0
    %6995 = vmatpush2.msra.mxu0 0.0
    %6996 = vmatprep.subr.mxu0 0.0
    %6997 = vmatpush2.msra.mxu0 0.0
    %6998 = vmatprep.subr.mxu0 0.0
    %6999 = vmatpush2.msra.mxu0 0.0
    %7000 = vmatprep.subr.mxu0 0.0
    %7001 = vmatpush2.msra.mxu0 0.0
    %7002 = vmatprep.subr.mxu0 0.0
    %7003 = vmatpush2.msra.mxu0 0.0
    %7004 = vmatprep.subr.mxu0 0.0
    %7005 = vmatpush2.msra.mxu0 0.0
    %7006 = vmatprep.subr.mxu0 0.0
    %7007 = vmatpush2.msra.mxu0 0.0
    %7008 = vmatprep.subr.mxu0 0.0
    %7009 = vmatpush2.msra.mxu0 0.0
    %7010 = vmatprep.subr.mxu0 0.0
    %7011 = vmatpush2.msra.mxu0 0.0
    %7012 = vmatprep.subr.mxu0 0.0
    %7013 = vmatpush2.msra.mxu0 0.0
    %7014 = vmatprep.subr.mxu0 0.0
    %7015 = vmatpush2.msra.mxu0 0.0
    %7016 = vmatprep.subr.mxu0 0.0
    %7017 = vmatpush2.msra.mxu0 0.0
    %7018 = vmatprep.subr.mxu0 0.0
    %7019 = vmatpush2.msra.mxu0 0.0
    %7020 = vmatprep.mubr.f32.mxu0 0.0
    %7021 = vmatmul.mubr.f32.gmra.mxu0 %v6954
    %v7022 = vpop.f32.mrf.mxu0
    %v7023 = vadd.f32 %v6348, %v7022
    %v7024 = vpop.f32.mrf.mxu0
    %7025 = vdwg.mxu0
    %v7026 = vxor.u32 %v7023, 2147483648
    %v7027 = vmul.f32 %v7026, 1.442695
    %v7028 = vpow.pop %v7027
    %v7029 = vadd.f32 %v7028, 1.0
    %v7030 = vrcp.pop %v7029
    %v7031 = vmul.f32 1.0, %v7030
    %7033 = vrot.lane.b32.xlu0 %v7023, 32
    %v7034 = vpop.permute.xlu0 %7033
    %v7036 = vmul.f32 %v7031, %v7034
    %7038 = vrot.lane.b32.xlu0 %v7036, 64
    %v7039 = vpop.permute.xlu0 %7038
    %v7041 = vadd.f32 %v7023, %v7039
    %v7042 = vtanh.pop %v7041
    %v7043 = vsub.f32 1.0, %v7031
    %7045 = vrot.lane.b32.xlu0 %v7042, 96
    %v7046 = vpop.permute.xlu0 %7045
    %v7048 = vmul.f32 %v7043, %v7046
    %v7049 = vmul.f32 %v7031, %v6849
    %v7050 = vadd.f32 %v7048, %v7049
    %v7051 = vsel %vm5490, %v6950, 0
    %7053 = vmatprep.subr.mxu0 0.0
    %7054 = vmatpush1.msra.mxu0 0.0
    %7055 = vmatprep.subr.mxu0 0.0
    %7056 = vmatpush1.msra.mxu0 0.0
    %7057 = vmatprep.subr.mxu0 0.0
    %7058 = vmatpush1.msra.mxu0 0.0
    %7059 = vmatprep.subr.mxu0 0.0
    %7060 = vmatpush1.msra.mxu0 0.0
    %7061 = vmatprep.subr.mxu0 0.0
    %7062 = vmatpush1.msra.mxu0 0.0
    %7063 = vmatprep.subr.mxu0 0.0
    %7064 = vmatpush1.msra.mxu0 0.0
    %7065 = vmatprep.subr.mxu0 0.0
    %7066 = vmatpush1.msra.mxu0 0.0
    %7067 = vmatprep.subr.mxu0 0.0
    %7068 = vmatpush1.msra.mxu0 0.0
    %7069 = vmatprep.subr.mxu0 0.0
    %7070 = vmatpush1.msra.mxu0 0.0
    %7071 = vmatprep.subr.mxu0 0.0
    %7072 = vmatpush1.msra.mxu0 0.0
    %7073 = vmatprep.subr.mxu0 0.0
    %7074 = vmatpush1.msra.mxu0 0.0
    %7075 = vmatprep.subr.mxu0 0.0
    %7076 = vmatpush1.msra.mxu0 0.0
    %7077 = vmatprep.subr.mxu0 0.0
    %7078 = vmatpush1.msra.mxu0 %v6184
    %7079 = vmatprep.subr.mxu0 0.0
    %7080 = vmatpush1.msra.mxu0 %v6183
    %7081 = vmatprep.subr.mxu0 0.0
    %7082 = vmatpush1.msra.mxu0 %v6182
    %7083 = vmatprep.subr.mxu0 0.0
    %7084 = vmatpush1.msra.mxu0 %v6181
    %7085 = vmatprep.subr.mxu0 0.0
    %7086 = vmatpush2.msra.mxu0 0.0
    %7087 = vmatprep.subr.mxu0 0.0
    %7088 = vmatpush2.msra.mxu0 0.0
    %7089 = vmatprep.subr.mxu0 0.0
    %7090 = vmatpush2.msra.mxu0 0.0
    %7091 = vmatprep.subr.mxu0 0.0
    %7092 = vmatpush2.msra.mxu0 0.0
    %7093 = vmatprep.subr.mxu0 0.0
    %7094 = vmatpush2.msra.mxu0 0.0
    %7095 = vmatprep.subr.mxu0 0.0
    %7096 = vmatpush2.msra.mxu0 0.0
    %7097 = vmatprep.subr.mxu0 0.0
    %7098 = vmatpush2.msra.mxu0 0.0
    %7099 = vmatprep.subr.mxu0 0.0
    %7100 = vmatpush2.msra.mxu0 0.0
    %7101 = vmatprep.subr.mxu0 0.0
    %7102 = vmatpush2.msra.mxu0 0.0
    %7103 = vmatprep.subr.mxu0 0.0
    %7104 = vmatpush2.msra.mxu0 0.0
    %7105 = vmatprep.subr.mxu0 0.0
    %7106 = vmatpush2.msra.mxu0 0.0
    %7107 = vmatprep.subr.mxu0 0.0
    %7108 = vmatpush2.msra.mxu0 0.0
    %7109 = vmatprep.subr.mxu0 0.0
    %7110 = vmatpush2.msra.mxu0 0.0
    %7111 = vmatprep.subr.mxu0 0.0
    %7112 = vmatpush2.msra.mxu0 0.0
    %7113 = vmatprep.subr.mxu0 0.0
    %7114 = vmatpush2.msra.mxu0 0.0
    %7115 = vmatprep.subr.mxu0 0.0
    %7116 = vmatpush2.msra.mxu0 0.0
    %7117 = vmatprep.mubr.f32.mxu0 0.0
    %7118 = vmatmul.mubr.f32.gmra.mxu0 %v7051
    %v7119 = vpop.f32.mrf.mxu0
    %v7120 = vadd.f32 0.0, %v7119
    %v7121 = vpop.f32.mrf.mxu0
    %7122 = vdwg.mxu0
    %v7123 = vadd.f32 %v6160, %v7120
    %v7124 = vxor.u32 %v7123, 2147483648
    %v7125 = vmul.f32 %v7124, 1.442695
    %v7126 = vpow.pop %v7125
    %v7127 = vadd.f32 %v7126, 1.0
    %v7128 = vrcp.pop %v7127
    %v7129 = vmul.f32 1.0, %v7128
    %7131 = vrot.lane.b32.xlu0 %v7123, 32
    %v7132 = vpop.permute.xlu0 %7131
    %v7134 = vmul.f32 %v7129, %v7132
    %7136 = vrot.lane.b32.xlu0 %v7134, 64
    %v7137 = vpop.permute.xlu0 %7136
    %v7139 = vadd.f32 %v7123, %v7137
    %v7140 = vtanh.pop %v7139
    %v7141 = vsub.f32 1.0, %v7129
    %7143 = vrot.lane.b32.xlu0 %v7140, 96
    %v7144 = vpop.permute.xlu0 %7143
    %v7146 = vmul.f32 %v7141, %v7144
    %v7147 = vmul.f32 %v7129, %v6947
    %v7148 = vadd.f32 %v7146, %v7147
    %7150 = vrot.lane.b32.xlu0 %v7148, 96
    %v7151 = vpop.permute.xlu0 %7150
    %v7153 = vsel %vm5490, %v7151, %v7050
    %v7155 = vsel %vm6093, %v7153, 0
    %7157 = vmatprep.subr.mxu0 0.0
    %7158 = vmatpush1.msra.mxu0 0.0
    %7159 = vmatprep.subr.mxu0 0.0
    %7160 = vmatpush1.msra.mxu0 0.0
    %7161 = vmatprep.subr.mxu0 0.0
    %7162 = vmatpush1.msra.mxu0 0.0
    %7163 = vmatprep.subr.mxu0 0.0
    %7164 = vmatpush1.msra.mxu0 0.0
    %7165 = vmatprep.subr.mxu0 0.0
    %7166 = vmatpush1.msra.mxu0 0.0
    %7167 = vmatprep.subr.mxu0 0.0
    %7168 = vmatpush1.msra.mxu0 0.0
    %7169 = vmatprep.subr.mxu0 0.0
    %7170 = vmatpush1.msra.mxu0 0.0
    %7171 = vmatprep.subr.mxu0 0.0
    %7172 = vmatpush1.msra.mxu0 0.0
    %7173 = vmatprep.subr.mxu0 0.0
    %7174 = vmatpush1.msra.mxu0 %v6192
    %7175 = vmatprep.subr.mxu0 0.0
    %7176 = vmatpush1.msra.mxu0 %v6191
    %7177 = vmatprep.subr.mxu0 0.0
    %7178 = vmatpush1.msra.mxu0 %v6190
    %7179 = vmatprep.subr.mxu0 0.0
    %7180 = vmatpush1.msra.mxu0 %v6189
    %7181 = vmatprep.subr.mxu0 0.0
    %7182 = vmatpush1.msra.mxu0 %v6188
    %7183 = vmatprep.subr.mxu0 0.0
    %7184 = vmatpush1.msra.mxu0 %v6187
    %7185 = vmatprep.subr.mxu0 0.0
    %7186 = vmatpush1.msra.mxu0 %v6186
    %7187 = vmatprep.subr.mxu0 0.0
    %7188 = vmatpush1.msra.mxu0 %v6185
    %7189 = vmatprep.subr.mxu0 0.0
    %7190 = vmatpush2.msra.mxu0 0.0
    %7191 = vmatprep.subr.mxu0 0.0
    %7192 = vmatpush2.msra.mxu0 0.0
    %7193 = vmatprep.subr.mxu0 0.0
    %7194 = vmatpush2.msra.mxu0 0.0
    %7195 = vmatprep.subr.mxu0 0.0
    %7196 = vmatpush2.msra.mxu0 0.0
    %7197 = vmatprep.subr.mxu0 0.0
    %7198 = vmatpush2.msra.mxu0 0.0
    %7199 = vmatprep.subr.mxu0 0.0
    %7200 = vmatpush2.msra.mxu0 0.0
    %7201 = vmatprep.subr.mxu0 0.0
    %7202 = vmatpush2.msra.mxu0 0.0
    %7203 = vmatprep.subr.mxu0 0.0
    %7204 = vmatpush2.msra.mxu0 0.0
    %7205 = vmatprep.subr.mxu0 0.0
    %7206 = vmatpush2.msra.mxu0 0.0
    %7207 = vmatprep.subr.mxu0 0.0
    %7208 = vmatpush2.msra.mxu0 0.0
    %7209 = vmatprep.subr.mxu0 0.0
    %7210 = vmatpush2.msra.mxu0 0.0
    %7211 = vmatprep.subr.mxu0 0.0
    %7212 = vmatpush2.msra.mxu0 0.0
    %7213 = vmatprep.subr.mxu0 0.0
    %7214 = vmatpush2.msra.mxu0 0.0
    %7215 = vmatprep.subr.mxu0 0.0
    %7216 = vmatpush2.msra.mxu0 0.0
    %7217 = vmatprep.subr.mxu0 0.0
    %7218 = vmatpush2.msra.mxu0 0.0
    %7219 = vmatprep.subr.mxu0 0.0
    %7220 = vmatpush2.msra.mxu0 0.0
    %7221 = vmatprep.mubr.f32.mxu0 0.0
    %7222 = vmatmul.mubr.f32.gmra.mxu0 %v7155
    %v7223 = vpop.f32.mrf.mxu0
    %v7224 = vadd.f32 %v6348, %v7223
    %v7225 = vpop.f32.mrf.mxu0
    %7226 = vdwg.mxu0
    %v7227 = vxor.u32 %v7224, 2147483648
    %v7228 = vmul.f32 %v7227, 1.442695
    %v7229 = vpow.pop %v7228
    %v7230 = vadd.f32 %v7229, 1.0
    %v7231 = vrcp.pop %v7230
    %v7232 = vmul.f32 1.0, %v7231
    %7234 = vrot.lane.b32.xlu0 %v7224, 32
    %v7235 = vpop.permute.xlu0 %7234
    %v7237 = vmul.f32 %v7232, %v7235
    %7239 = vrot.lane.b32.xlu0 %v7237, 64
    %v7240 = vpop.permute.xlu0 %7239
    %v7242 = vadd.f32 %v7224, %v7240
    %v7243 = vtanh.pop %v7242
    %v7244 = vsub.f32 1.0, %v7232
    %7246 = vrot.lane.b32.xlu0 %v7243, 96
    %v7247 = vpop.permute.xlu0 %7246
    %v7249 = vmul.f32 %v7244, %v7247
    %v7250 = vmul.f32 %v7232, %v7050
    %v7251 = vadd.f32 %v7249, %v7250
    %v7252 = vsel %vm5490, %v7151, 0
    %7254 = vmatprep.subr.mxu0 0.0
    %7255 = vmatpush1.msra.mxu0 0.0
    %7256 = vmatprep.subr.mxu0 0.0
    %7257 = vmatpush1.msra.mxu0 0.0
    %7258 = vmatprep.subr.mxu0 0.0
    %7259 = vmatpush1.msra.mxu0 0.0
    %7260 = vmatprep.subr.mxu0 0.0
    %7261 = vmatpush1.msra.mxu0 0.0
    %7262 = vmatprep.subr.mxu0 0.0
    %7263 = vmatpush1.msra.mxu0 0.0
    %7264 = vmatprep.subr.mxu0 0.0
    %7265 = vmatpush1.msra.mxu0 0.0
    %7266 = vmatprep.subr.mxu0 0.0
    %7267 = vmatpush1.msra.mxu0 0.0
    %7268 = vmatprep.subr.mxu0 0.0
    %7269 = vmatpush1.msra.mxu0 0.0
    %7270 = vmatprep.subr.mxu0 0.0
    %7271 = vmatpush1.msra.mxu0 0.0
    %7272 = vmatprep.subr.mxu0 0.0
    %7273 = vmatpush1.msra.mxu0 0.0
    %7274 = vmatprep.subr.mxu0 0.0
    %7275 = vmatpush1.msra.mxu0 0.0
    %7276 = vmatprep.subr.mxu0 0.0
    %7277 = vmatpush1.msra.mxu0 0.0
    %7278 = vmatprep.subr.mxu0 0.0
    %7279 = vmatpush1.msra.mxu0 %v6184
    %7280 = vmatprep.subr.mxu0 0.0
    %7281 = vmatpush1.msra.mxu0 %v6183
    %7282 = vmatprep.subr.mxu0 0.0
    %7283 = vmatpush1.msra.mxu0 %v6182
    %7284 = vmatprep.subr.mxu0 0.0
    %7285 = vmatpush1.msra.mxu0 %v6181
    %7286 = vmatprep.subr.mxu0 0.0
    %7287 = vmatpush2.msra.mxu0 0.0
    %7288 = vmatprep.subr.mxu0 0.0
    %7289 = vmatpush2.msra.mxu0 0.0
    %7290 = vmatprep.subr.mxu0 0.0
    %7291 = vmatpush2.msra.mxu0 0.0
    %7292 = vmatprep.subr.mxu0 0.0
    %7293 = vmatpush2.msra.mxu0 0.0
    %7294 = vmatprep.subr.mxu0 0.0
    %7295 = vmatpush2.msra.mxu0 0.0
    %7296 = vmatprep.subr.mxu0 0.0
    %7297 = vmatpush2.msra.mxu0 0.0
    %7298 = vmatprep.subr.mxu0 0.0
    %7299 = vmatpush2.msra.mxu0 0.0
    %7300 = vmatprep.subr.mxu0 0.0
    %7301 = vmatpush2.msra.mxu0 0.0
    %7302 = vmatprep.subr.mxu0 0.0
    %7303 = vmatpush2.msra.mxu0 0.0
    %7304 = vmatprep.subr.mxu0 0.0
    %7305 = vmatpush2.msra.mxu0 0.0
    %7306 = vmatprep.subr.mxu0 0.0
    %7307 = vmatpush2.msra.mxu0 0.0
    %7308 = vmatprep.subr.mxu0 0.0
    %7309 = vmatpush2.msra.mxu0 0.0
    %7310 = vmatprep.subr.mxu0 0.0
    %7311 = vmatpush2.msra.mxu0 0.0
    %7312 = vmatprep.subr.mxu0 0.0
    %7313 = vmatpush2.msra.mxu0 0.0
    %7314 = vmatprep.subr.mxu0 0.0
    %7315 = vmatpush2.msra.mxu0 0.0
    %7316 = vmatprep.subr.mxu0 0.0
    %7317 = vmatpush2.msra.mxu0 0.0
    %7318 = vmatprep.mubr.f32.mxu0 0.0
    %7319 = vmatmul.mubr.f32.gmra.mxu0 %v7252
    %v7320 = vpop.f32.mrf.mxu0
    %v7321 = vadd.f32 0.0, %v7320
    %v7322 = vpop.f32.mrf.mxu0
    %7323 = vdwg.mxu0
    %v7324 = vadd.f32 %v6163, %v7321
    %v7325 = vxor.u32 %v7324, 2147483648
    %v7326 = vmul.f32 %v7325, 1.442695
    %v7327 = vpow.pop %v7326
    %v7328 = vadd.f32 %v7327, 1.0
    %v7329 = vrcp.pop %v7328
    %v7330 = vmul.f32 1.0, %v7329
    %7332 = vrot.lane.b32.xlu0 %v7324, 32
    %v7333 = vpop.permute.xlu0 %7332
    %v7335 = vmul.f32 %v7330, %v7333
    %7337 = vrot.lane.b32.xlu0 %v7335, 64
    %v7338 = vpop.permute.xlu0 %7337
    %v7340 = vadd.f32 %v7324, %v7338
    %v7341 = vtanh.pop %v7340
    %v7342 = vsub.f32 1.0, %v7330
    %7344 = vrot.lane.b32.xlu0 %v7341, 96
    %v7345 = vpop.permute.xlu0 %7344
    %v7347 = vmul.f32 %v7342, %v7345
    %v7348 = vmul.f32 %v7330, %v7148
    %v7349 = vadd.f32 %v7347, %v7348
    %7351 = vrot.lane.b32.xlu0 %v7349, 96
    %v7352 = vpop.permute.xlu0 %7351
    %v7354 = vsel %vm5490, %v7352, %v7251
    %v7356 = vsel %vm6093, %v7354, 0
    %7358 = vmatprep.subr.mxu0 0.0
    %7359 = vmatpush1.msra.mxu0 0.0
    %7360 = vmatprep.subr.mxu0 0.0
    %7361 = vmatpush1.msra.mxu0 0.0
    %7362 = vmatprep.subr.mxu0 0.0
    %7363 = vmatpush1.msra.mxu0 0.0
    %7364 = vmatprep.subr.mxu0 0.0
    %7365 = vmatpush1.msra.mxu0 0.0
    %7366 = vmatprep.subr.mxu0 0.0
    %7367 = vmatpush1.msra.mxu0 0.0
    %7368 = vmatprep.subr.mxu0 0.0
    %7369 = vmatpush1.msra.mxu0 0.0
    %7370 = vmatprep.subr.mxu0 0.0
    %7371 = vmatpush1.msra.mxu0 0.0
    %7372 = vmatprep.subr.mxu0 0.0
    %7373 = vmatpush1.msra.mxu0 0.0
    %7374 = vmatprep.subr.mxu0 0.0
    %7375 = vmatpush1.msra.mxu0 %v6192
    %7376 = vmatprep.subr.mxu0 0.0
    %7377 = vmatpush1.msra.mxu0 %v6191
    %7378 = vmatprep.subr.mxu0 0.0
    %7379 = vmatpush1.msra.mxu0 %v6190
    %7380 = vmatprep.subr.mxu0 0.0
    %7381 = vmatpush1.msra.mxu0 %v6189
    %7382 = vmatprep.subr.mxu0 0.0
    %7383 = vmatpush1.msra.mxu0 %v6188
    %7384 = vmatprep.subr.mxu0 0.0
    %7385 = vmatpush1.msra.mxu0 %v6187
    %7386 = vmatprep.subr.mxu0 0.0
    %7387 = vmatpush1.msra.mxu0 %v6186
    %7388 = vmatprep.subr.mxu0 0.0
    %7389 = vmatpush1.msra.mxu0 %v6185
    %7390 = vmatprep.subr.mxu0 0.0
    %7391 = vmatpush2.msra.mxu0 0.0
    %7392 = vmatprep.subr.mxu0 0.0
    %7393 = vmatpush2.msra.mxu0 0.0
    %7394 = vmatprep.subr.mxu0 0.0
    %7395 = vmatpush2.msra.mxu0 0.0
    %7396 = vmatprep.subr.mxu0 0.0
    %7397 = vmatpush2.msra.mxu0 0.0
    %7398 = vmatprep.subr.mxu0 0.0
    %7399 = vmatpush2.msra.mxu0 0.0
    %7400 = vmatprep.subr.mxu0 0.0
    %7401 = vmatpush2.msra.mxu0 0.0
    %7402 = vmatprep.subr.mxu0 0.0
    %7403 = vmatpush2.msra.mxu0 0.0
    %7404 = vmatprep.subr.mxu0 0.0
    %7405 = vmatpush2.msra.mxu0 0.0
    %7406 = vmatprep.subr.mxu0 0.0
    %7407 = vmatpush2.msra.mxu0 0.0
    %7408 = vmatprep.subr.mxu0 0.0
    %7409 = vmatpush2.msra.mxu0 0.0
    %7410 = vmatprep.subr.mxu0 0.0
    %7411 = vmatpush2.msra.mxu0 0.0
    %7412 = vmatprep.subr.mxu0 0.0
    %7413 = vmatpush2.msra.mxu0 0.0
    %7414 = vmatprep.subr.mxu0 0.0
    %7415 = vmatpush2.msra.mxu0 0.0
    %7416 = vmatprep.subr.mxu0 0.0
    %7417 = vmatpush2.msra.mxu0 0.0
    %7418 = vmatprep.subr.mxu0 0.0
    %7419 = vmatpush2.msra.mxu0 0.0
    %7420 = vmatprep.subr.mxu0 0.0
    %7421 = vmatpush2.msra.mxu0 0.0
    %7422 = vmatprep.mubr.f32.mxu0 0.0
    %7423 = vmatmul.mubr.f32.gmra.mxu0 %v7356
    %v7424 = vpop.f32.mrf.mxu0
    %v7425 = vadd.f32 %v6348, %v7424
    %v7426 = vpop.f32.mrf.mxu0
    %7427 = vdwg.mxu0
    %v7428 = vxor.u32 %v7425, 2147483648
    %v7429 = vmul.f32 %v7428, 1.442695
    %v7430 = vpow.pop %v7429
    %v7431 = vadd.f32 %v7430, 1.0
    %v7432 = vrcp.pop %v7431
    %v7433 = vmul.f32 1.0, %v7432
    %7435 = vrot.lane.b32.xlu0 %v7425, 32
    %v7436 = vpop.permute.xlu0 %7435
    %v7438 = vmul.f32 %v7433, %v7436
    %7440 = vrot.lane.b32.xlu0 %v7438, 64
    %v7441 = vpop.permute.xlu0 %7440
    %v7443 = vadd.f32 %v7425, %v7441
    %v7444 = vtanh.pop %v7443
    %v7445 = vsub.f32 1.0, %v7433
    %7447 = vrot.lane.b32.xlu0 %v7444, 96
    %v7448 = vpop.permute.xlu0 %7447
    %v7450 = vmul.f32 %v7445, %v7448
    %v7451 = vmul.f32 %v7433, %v7251
    %v7452 = vadd.f32 %v7450, %v7451
    %v7453 = vsel %vm5490, %v7352, 0
    %7455 = vmatprep.subr.mxu0 0.0
    %7456 = vmatpush1.msra.mxu0 0.0
    %7457 = vmatprep.subr.mxu0 0.0
    %7458 = vmatpush1.msra.mxu0 0.0
    %7459 = vmatprep.subr.mxu0 0.0
    %7460 = vmatpush1.msra.mxu0 0.0
    %7461 = vmatprep.subr.mxu0 0.0
    %7462 = vmatpush1.msra.mxu0 0.0
    %7463 = vmatprep.subr.mxu0 0.0
    %7464 = vmatpush1.msra.mxu0 0.0
    %7465 = vmatprep.subr.mxu0 0.0
    %7466 = vmatpush1.msra.mxu0 0.0
    %7467 = vmatprep.subr.mxu0 0.0
    %7468 = vmatpush1.msra.mxu0 0.0
    %7469 = vmatprep.subr.mxu0 0.0
    %7470 = vmatpush1.msra.mxu0 0.0
    %7471 = vmatprep.subr.mxu0 0.0
    %7472 = vmatpush1.msra.mxu0 0.0
    %7473 = vmatprep.subr.mxu0 0.0
    %7474 = vmatpush1.msra.mxu0 0.0
    %7475 = vmatprep.subr.mxu0 0.0
    %7476 = vmatpush1.msra.mxu0 0.0
    %7477 = vmatprep.subr.mxu0 0.0
    %7478 = vmatpush1.msra.mxu0 0.0
    %7479 = vmatprep.subr.mxu0 0.0
    %7480 = vmatpush1.msra.mxu0 %v6184
    %7481 = vmatprep.subr.mxu0 0.0
    %7482 = vmatpush1.msra.mxu0 %v6183
    %7483 = vmatprep.subr.mxu0 0.0
    %7484 = vmatpush1.msra.mxu0 %v6182
    %7485 = vmatprep.subr.mxu0 0.0
    %7486 = vmatpush1.msra.mxu0 %v6181
    %7487 = vmatprep.subr.mxu0 0.0
    %7488 = vmatpush2.msra.mxu0 0.0
    %7489 = vmatprep.subr.mxu0 0.0
    %7490 = vmatpush2.msra.mxu0 0.0
    %7491 = vmatprep.subr.mxu0 0.0
    %7492 = vmatpush2.msra.mxu0 0.0
    %7493 = vmatprep.subr.mxu0 0.0
    %7494 = vmatpush2.msra.mxu0 0.0
    %7495 = vmatprep.subr.mxu0 0.0
    %7496 = vmatpush2.msra.mxu0 0.0
    %7497 = vmatprep.subr.mxu0 0.0
    %7498 = vmatpush2.msra.mxu0 0.0
    %7499 = vmatprep.subr.mxu0 0.0
    %7500 = vmatpush2.msra.mxu0 0.0
    %7501 = vmatprep.subr.mxu0 0.0
    %7502 = vmatpush2.msra.mxu0 0.0
    %7503 = vmatprep.subr.mxu0 0.0
    %7504 = vmatpush2.msra.mxu0 0.0
    %7505 = vmatprep.subr.mxu0 0.0
    %7506 = vmatpush2.msra.mxu0 0.0
    %7507 = vmatprep.subr.mxu0 0.0
    %7508 = vmatpush2.msra.mxu0 0.0
    %7509 = vmatprep.subr.mxu0 0.0
    %7510 = vmatpush2.msra.mxu0 0.0
    %7511 = vmatprep.subr.mxu0 0.0
    %7512 = vmatpush2.msra.mxu0 0.0
    %7513 = vmatprep.subr.mxu0 0.0
    %7514 = vmatpush2.msra.mxu0 0.0
    %7515 = vmatprep.subr.mxu0 0.0
    %7516 = vmatpush2.msra.mxu0 0.0
    %7517 = vmatprep.subr.mxu0 0.0
    %7518 = vmatpush2.msra.mxu0 0.0
    %7519 = vmatprep.mubr.f32.mxu0 0.0
    %7520 = vmatmul.mubr.f32.gmra.mxu0 %v7453
    %v7521 = vpop.f32.mrf.mxu0
    %v7522 = vadd.f32 0.0, %v7521
    %v7523 = vpop.f32.mrf.mxu0
    %7524 = vdwg.mxu0
    %v7525 = vadd.f32 %v6168, %v7522
    %v7526 = vxor.u32 %v7525, 2147483648
    %v7527 = vmul.f32 %v7526, 1.442695
    %v7528 = vpow.pop %v7527
    %v7529 = vadd.f32 %v7528, 1.0
    %v7530 = vrcp.pop %v7529
    %v7531 = vmul.f32 1.0, %v7530
    %7533 = vrot.lane.b32.xlu0 %v7525, 32
    %v7534 = vpop.permute.xlu0 %7533
    %v7536 = vmul.f32 %v7531, %v7534
    %7538 = vrot.lane.b32.xlu0 %v7536, 64
    %v7539 = vpop.permute.xlu0 %7538
    %v7541 = vadd.f32 %v7525, %v7539
    %v7542 = vtanh.pop %v7541
    %v7543 = vsub.f32 1.0, %v7531
    %7545 = vrot.lane.b32.xlu0 %v7542, 96
    %v7546 = vpop.permute.xlu0 %7545
    %v7548 = vmul.f32 %v7543, %v7546
    %v7549 = vmul.f32 %v7531, %v7349
    %v7550 = vadd.f32 %v7548, %v7549
    %7552 = vrot.lane.b32.xlu0 %v7550, 96
    %v7553 = vpop.permute.xlu0 %7552
    %v7555 = vsel %vm5490, %v7553, %v7452
    %v7557 = vsel %vm6093, %v7555, 0
    %7559 = vmatprep.subr.mxu0 0.0
    %7560 = vmatpush1.msra.mxu0 0.0
    %7561 = vmatprep.subr.mxu0 0.0
    %7562 = vmatpush1.msra.mxu0 0.0
    %7563 = vmatprep.subr.mxu0 0.0
    %7564 = vmatpush1.msra.mxu0 0.0
    %7565 = vmatprep.subr.mxu0 0.0
    %7566 = vmatpush1.msra.mxu0 0.0
    %7567 = vmatprep.subr.mxu0 0.0
    %7568 = vmatpush1.msra.mxu0 0.0
    %7569 = vmatprep.subr.mxu0 0.0
    %7570 = vmatpush1.msra.mxu0 0.0
    %7571 = vmatprep.subr.mxu0 0.0
    %7572 = vmatpush1.msra.mxu0 0.0
    %7573 = vmatprep.subr.mxu0 0.0
    %7574 = vmatpush1.msra.mxu0 0.0
    %7575 = vmatprep.subr.mxu0 0.0
    %7576 = vmatpush1.msra.mxu0 %v6192
    %7577 = vmatprep.subr.mxu0 0.0
    %7578 = vmatpush1.msra.mxu0 %v6191
    %7579 = vmatprep.subr.mxu0 0.0
    %7580 = vmatpush1.msra.mxu0 %v6190
    %7581 = vmatprep.subr.mxu0 0.0
    %7582 = vmatpush1.msra.mxu0 %v6189
    %7583 = vmatprep.subr.mxu0 0.0
    %7584 = vmatpush1.msra.mxu0 %v6188
    %7585 = vmatprep.subr.mxu0 0.0
    %7586 = vmatpush1.msra.mxu0 %v6187
    %7587 = vmatprep.subr.mxu0 0.0
    %7588 = vmatpush1.msra.mxu0 %v6186
    %7589 = vmatprep.subr.mxu0 0.0
    %7590 = vmatpush1.msra.mxu0 %v6185
    %7591 = vmatprep.subr.mxu0 0.0
    %7592 = vmatpush2.msra.mxu0 0.0
    %7593 = vmatprep.subr.mxu0 0.0
    %7594 = vmatpush2.msra.mxu0 0.0
    %7595 = vmatprep.subr.mxu0 0.0
    %7596 = vmatpush2.msra.mxu0 0.0
    %7597 = vmatprep.subr.mxu0 0.0
    %7598 = vmatpush2.msra.mxu0 0.0
    %7599 = vmatprep.subr.mxu0 0.0
    %7600 = vmatpush2.msra.mxu0 0.0
    %7601 = vmatprep.subr.mxu0 0.0
    %7602 = vmatpush2.msra.mxu0 0.0
    %7603 = vmatprep.subr.mxu0 0.0
    %7604 = vmatpush2.msra.mxu0 0.0
    %7605 = vmatprep.subr.mxu0 0.0
    %7606 = vmatpush2.msra.mxu0 0.0
    %7607 = vmatprep.subr.mxu0 0.0
    %7608 = vmatpush2.msra.mxu0 0.0
    %7609 = vmatprep.subr.mxu0 0.0
    %7610 = vmatpush2.msra.mxu0 0.0
    %7611 = vmatprep.subr.mxu0 0.0
    %7612 = vmatpush2.msra.mxu0 0.0
    %7613 = vmatprep.subr.mxu0 0.0
    %7614 = vmatpush2.msra.mxu0 0.0
    %7615 = vmatprep.subr.mxu0 0.0
    %7616 = vmatpush2.msra.mxu0 0.0
    %7617 = vmatprep.subr.mxu0 0.0
    %7618 = vmatpush2.msra.mxu0 0.0
    %7619 = vmatprep.subr.mxu0 0.0
    %7620 = vmatpush2.msra.mxu0 0.0
    %7621 = vmatprep.subr.mxu0 0.0
    %7622 = vmatpush2.msra.mxu0 0.0
    %7623 = vmatprep.mubr.f32.mxu0 0.0
    %7624 = vmatmul.mubr.f32.gmra.mxu0 %v7557
    %v7625 = vpop.f32.mrf.mxu0
    %v7626 = vadd.f32 %v6348, %v7625
    %v7627 = vpop.f32.mrf.mxu0
    %7628 = vdwg.mxu0
    %v7629 = vxor.u32 %v7626, 2147483648
    %v7630 = vmul.f32 %v7629, 1.442695
    %v7631 = vpow.pop %v7630
    %v7632 = vadd.f32 %v7631, 1.0
    %v7633 = vrcp.pop %v7632
    %v7634 = vmul.f32 1.0, %v7633
    %7636 = vrot.lane.b32.xlu0 %v7626, 32
    %v7637 = vpop.permute.xlu0 %7636
    %v7639 = vmul.f32 %v7634, %v7637
    %7641 = vrot.lane.b32.xlu0 %v7639, 64
    %v7642 = vpop.permute.xlu0 %7641
    %v7644 = vadd.f32 %v7626, %v7642
    %v7645 = vtanh.pop %v7644
    %v7646 = vsub.f32 1.0, %v7634
    %7648 = vrot.lane.b32.xlu0 %v7645, 96
    %v7649 = vpop.permute.xlu0 %7648
    %v7651 = vmul.f32 %v7646, %v7649
    %v7652 = vmul.f32 %v7634, %v7452
    %v7653 = vadd.f32 %v7651, %v7652
    %v7654 = vsel %vm5490, %v7553, 0
    %7656 = vmatprep.subr.mxu0 0.0
    %7657 = vmatpush1.msra.mxu0 0.0
    %7658 = vmatprep.subr.mxu0 0.0
    %7659 = vmatpush1.msra.mxu0 0.0
    %7660 = vmatprep.subr.mxu0 0.0
    %7661 = vmatpush1.msra.mxu0 0.0
    %7662 = vmatprep.subr.mxu0 0.0
    %7663 = vmatpush1.msra.mxu0 0.0
    %7664 = vmatprep.subr.mxu0 0.0
    %7665 = vmatpush1.msra.mxu0 0.0
    %7666 = vmatprep.subr.mxu0 0.0
    %7667 = vmatpush1.msra.mxu0 0.0
    %7668 = vmatprep.subr.mxu0 0.0
    %7669 = vmatpush1.msra.mxu0 0.0
    %7670 = vmatprep.subr.mxu0 0.0
    %7671 = vmatpush1.msra.mxu0 0.0
    %7672 = vmatprep.subr.mxu0 0.0
    %7673 = vmatpush1.msra.mxu0 0.0
    %7674 = vmatprep.subr.mxu0 0.0
    %7675 = vmatpush1.msra.mxu0 0.0
    %7676 = vmatprep.subr.mxu0 0.0
    %7677 = vmatpush1.msra.mxu0 0.0
    %7678 = vmatprep.subr.mxu0 0.0
    %7679 = vmatpush1.msra.mxu0 0.0
    %7680 = vmatprep.subr.mxu0 0.0
    %7681 = vmatpush1.msra.mxu0 %v6184
    %7682 = vmatprep.subr.mxu0 0.0
    %7683 = vmatpush1.msra.mxu0 %v6183
    %7684 = vmatprep.subr.mxu0 0.0
    %7685 = vmatpush1.msra.mxu0 %v6182
    %7686 = vmatprep.subr.mxu0 0.0
    %7687 = vmatpush1.msra.mxu0 %v6181
    %7688 = vmatprep.subr.mxu0 0.0
    %7689 = vmatpush2.msra.mxu0 0.0
    %7690 = vmatprep.subr.mxu0 0.0
    %7691 = vmatpush2.msra.mxu0 0.0
    %7692 = vmatprep.subr.mxu0 0.0
    %7693 = vmatpush2.msra.mxu0 0.0
    %7694 = vmatprep.subr.mxu0 0.0
    %7695 = vmatpush2.msra.mxu0 0.0
    %7696 = vmatprep.subr.mxu0 0.0
    %7697 = vmatpush2.msra.mxu0 0.0
    %7698 = vmatprep.subr.mxu0 0.0
    %7699 = vmatpush2.msra.mxu0 0.0
    %7700 = vmatprep.subr.mxu0 0.0
    %7701 = vmatpush2.msra.mxu0 0.0
    %7702 = vmatprep.subr.mxu0 0.0
    %7703 = vmatpush2.msra.mxu0 0.0
    %7704 = vmatprep.subr.mxu0 0.0
    %7705 = vmatpush2.msra.mxu0 0.0
    %7706 = vmatprep.subr.mxu0 0.0
    %7707 = vmatpush2.msra.mxu0 0.0
    %7708 = vmatprep.subr.mxu0 0.0
    %7709 = vmatpush2.msra.mxu0 0.0
    %7710 = vmatprep.subr.mxu0 0.0
    %7711 = vmatpush2.msra.mxu0 0.0
    %7712 = vmatprep.subr.mxu0 0.0
    %7713 = vmatpush2.msra.mxu0 0.0
    %7714 = vmatprep.subr.mxu0 0.0
    %7715 = vmatpush2.msra.mxu0 0.0
    %7716 = vmatprep.subr.mxu0 0.0
    %7717 = vmatpush2.msra.mxu0 0.0
    %7718 = vmatprep.subr.mxu0 0.0
    %7719 = vmatpush2.msra.mxu0 0.0
    %7720 = vmatprep.mubr.f32.mxu0 0.0
    %7721 = vmatmul.mubr.f32.gmra.mxu0 %v7654
    %v7722 = vpop.f32.mrf.mxu0
    %v7723 = vadd.f32 0.0, %v7722
    %v7724 = vpop.f32.mrf.mxu0
    %7725 = vdwg.mxu0
    %v7726 = vadd.f32 %v6171, %v7723
    %v7727 = vxor.u32 %v7726, 2147483648
    %v7728 = vmul.f32 %v7727, 1.442695
    %v7729 = vpow.pop %v7728
    %v7730 = vadd.f32 %v7729, 1.0
    %v7731 = vrcp.pop %v7730
    %v7732 = vmul.f32 1.0, %v7731
    %7734 = vrot.lane.b32.xlu0 %v7726, 32
    %v7735 = vpop.permute.xlu0 %7734
    %v7737 = vmul.f32 %v7732, %v7735
    %7739 = vrot.lane.b32.xlu0 %v7737, 64
    %v7740 = vpop.permute.xlu0 %7739
    %v7742 = vadd.f32 %v7726, %v7740
    %v7743 = vtanh.pop %v7742
    %v7744 = vsub.f32 1.0, %v7732
    %7746 = vrot.lane.b32.xlu0 %v7743, 96
    %v7747 = vpop.permute.xlu0 %7746
    %v7749 = vmul.f32 %v7744, %v7747
    %v7750 = vmul.f32 %v7732, %v7550
    %v7751 = vadd.f32 %v7749, %v7750
    %7753 = vrot.lane.b32.xlu0 %v7751, 96
    %v7754 = vpop.permute.xlu0 %7753
    %v7756 = vsel %vm5490, %v7754, %v7653
    %v7758 = vsel %vm6093, %v7756, 0
    %7760 = vmatprep.subr.mxu0 0.0
    %7761 = vmatpush1.msra.mxu0 0.0
    %7762 = vmatprep.subr.mxu0 0.0
    %7763 = vmatpush1.msra.mxu0 0.0
    %7764 = vmatprep.subr.mxu0 0.0
    %7765 = vmatpush1.msra.mxu0 0.0
    %7766 = vmatprep.subr.mxu0 0.0
    %7767 = vmatpush1.msra.mxu0 0.0
    %7768 = vmatprep.subr.mxu0 0.0
    %7769 = vmatpush1.msra.mxu0 0.0
    %7770 = vmatprep.subr.mxu0 0.0
    %7771 = vmatpush1.msra.mxu0 0.0
    %7772 = vmatprep.subr.mxu0 0.0
    %7773 = vmatpush1.msra.mxu0 0.0
    %7774 = vmatprep.subr.mxu0 0.0
    %7775 = vmatpush1.msra.mxu0 0.0
    %7776 = vmatprep.subr.mxu0 0.0
    %7777 = vmatpush1.msra.mxu0 %v6192
    %7778 = vmatprep.subr.mxu0 0.0
    %7779 = vmatpush1.msra.mxu0 %v6191
    %7780 = vmatprep.subr.mxu0 0.0
    %7781 = vmatpush1.msra.mxu0 %v6190
    %7782 = vmatprep.subr.mxu0 0.0
    %7783 = vmatpush1.msra.mxu0 %v6189
    %7784 = vmatprep.subr.mxu0 0.0
    %7785 = vmatpush1.msra.mxu0 %v6188
    %7786 = vmatprep.subr.mxu0 0.0
    %7787 = vmatpush1.msra.mxu0 %v6187
    %7788 = vmatprep.subr.mxu0 0.0
    %7789 = vmatpush1.msra.mxu0 %v6186
    %7790 = vmatprep.subr.mxu0 0.0
    %7791 = vmatpush1.msra.mxu0 %v6185
    %7792 = vmatprep.subr.mxu0 0.0
    %7793 = vmatpush2.msra.mxu0 0.0
    %7794 = vmatprep.subr.mxu0 0.0
    %7795 = vmatpush2.msra.mxu0 0.0
    %7796 = vmatprep.subr.mxu0 0.0
    %7797 = vmatpush2.msra.mxu0 0.0
    %7798 = vmatprep.subr.mxu0 0.0
    %7799 = vmatpush2.msra.mxu0 0.0
    %7800 = vmatprep.subr.mxu0 0.0
    %7801 = vmatpush2.msra.mxu0 0.0
    %7802 = vmatprep.subr.mxu0 0.0
    %7803 = vmatpush2.msra.mxu0 0.0
    %7804 = vmatprep.subr.mxu0 0.0
    %7805 = vmatpush2.msra.mxu0 0.0
    %7806 = vmatprep.subr.mxu0 0.0
    %7807 = vmatpush2.msra.mxu0 0.0
    %7808 = vmatprep.subr.mxu0 0.0
    %7809 = vmatpush2.msra.mxu0 0.0
    %7810 = vmatprep.subr.mxu0 0.0
    %7811 = vmatpush2.msra.mxu0 0.0
    %7812 = vmatprep.subr.mxu0 0.0
    %7813 = vmatpush2.msra.mxu0 0.0
    %7814 = vmatprep.subr.mxu0 0.0
    %7815 = vmatpush2.msra.mxu0 0.0
    %7816 = vmatprep.subr.mxu0 0.0
    %7817 = vmatpush2.msra.mxu0 0.0
    %7818 = vmatprep.subr.mxu0 0.0
    %7819 = vmatpush2.msra.mxu0 0.0
    %7820 = vmatprep.subr.mxu0 0.0
    %7821 = vmatpush2.msra.mxu0 0.0
    %7822 = vmatprep.subr.mxu0 0.0
    %7823 = vmatpush2.msra.mxu0 0.0
    %7824 = vmatprep.mubr.f32.mxu0 0.0
    %7825 = vmatmul.mubr.f32.gmra.mxu0 %v7758
    %v7826 = vpop.f32.mrf.mxu0
    %v7827 = vadd.f32 %v6348, %v7826
    %v7828 = vpop.f32.mrf.mxu0
    %7829 = vdwg.mxu0
    %v7830 = vxor.u32 %v7827, 2147483648
    %v7831 = vmul.f32 %v7830, 1.442695
    %v7832 = vpow.pop %v7831
    %v7833 = vadd.f32 %v7832, 1.0
    %v7834 = vrcp.pop %v7833
    %v7835 = vmul.f32 1.0, %v7834
    %7837 = vrot.lane.b32.xlu0 %v7827, 32
    %v7838 = vpop.permute.xlu0 %7837
    %v7840 = vmul.f32 %v7835, %v7838
    %7842 = vrot.lane.b32.xlu0 %v7840, 64
    %v7843 = vpop.permute.xlu0 %7842
    %v7845 = vadd.f32 %v7827, %v7843
    %v7846 = vtanh.pop %v7845
    %v7847 = vsub.f32 1.0, %v7835
    %7849 = vrot.lane.b32.xlu0 %v7846, 96
    %v7850 = vpop.permute.xlu0 %7849
    %v7852 = vmul.f32 %v7847, %v7850
    %v7853 = vmul.f32 %v7835, %v7653
    %v7854 = vadd.f32 %v7852, %v7853
    %v7855 = vsel %vm5490, %v7754, 0
    %7857 = vmatprep.subr.mxu0 0.0
    %7858 = vmatpush1.msra.mxu0 0.0
    %7859 = vmatprep.subr.mxu0 0.0
    %7860 = vmatpush1.msra.mxu0 0.0
    %7861 = vmatprep.subr.mxu0 0.0
    %7862 = vmatpush1.msra.mxu0 0.0
    %7863 = vmatprep.subr.mxu0 0.0
    %7864 = vmatpush1.msra.mxu0 0.0
    %7865 = vmatprep.subr.mxu0 0.0
    %7866 = vmatpush1.msra.mxu0 0.0
    %7867 = vmatprep.subr.mxu0 0.0
    %7868 = vmatpush1.msra.mxu0 0.0
    %7869 = vmatprep.subr.mxu0 0.0
    %7870 = vmatpush1.msra.mxu0 0.0
    %7871 = vmatprep.subr.mxu0 0.0
    %7872 = vmatpush1.msra.mxu0 0.0
    %7873 = vmatprep.subr.mxu0 0.0
    %7874 = vmatpush1.msra.mxu0 0.0
    %7875 = vmatprep.subr.mxu0 0.0
    %7876 = vmatpush1.msra.mxu0 0.0
    %7877 = vmatprep.subr.mxu0 0.0
    %7878 = vmatpush1.msra.mxu0 0.0
    %7879 = vmatprep.subr.mxu0 0.0
    %7880 = vmatpush1.msra.mxu0 0.0
    %7881 = vmatprep.subr.mxu0 0.0
    %7882 = vmatpush1.msra.mxu0 %v6184
    %7883 = vmatprep.subr.mxu0 0.0
    %7884 = vmatpush1.msra.mxu0 %v6183
    %7885 = vmatprep.subr.mxu0 0.0
    %7886 = vmatpush1.msra.mxu0 %v6182
    %7887 = vmatprep.subr.mxu0 0.0
    %7888 = vmatpush1.msra.mxu0 %v6181
    %7889 = vmatprep.subr.mxu0 0.0
    %7890 = vmatpush2.msra.mxu0 0.0
    %7891 = vmatprep.subr.mxu0 0.0
    %7892 = vmatpush2.msra.mxu0 0.0
    %7893 = vmatprep.subr.mxu0 0.0
    %7894 = vmatpush2.msra.mxu0 0.0
    %7895 = vmatprep.subr.mxu0 0.0
    %7896 = vmatpush2.msra.mxu0 0.0
    %7897 = vmatprep.subr.mxu0 0.0
    %7898 = vmatpush2.msra.mxu0 0.0
    %7899 = vmatprep.subr.mxu0 0.0
    %7900 = vmatpush2.msra.mxu0 0.0
    %7901 = vmatprep.subr.mxu0 0.0
    %7902 = vmatpush2.msra.mxu0 0.0
    %7903 = vmatprep.subr.mxu0 0.0
    %7904 = vmatpush2.msra.mxu0 0.0
    %7905 = vmatprep.subr.mxu0 0.0
    %7906 = vmatpush2.msra.mxu0 0.0
    %7907 = vmatprep.subr.mxu0 0.0
    %7908 = vmatpush2.msra.mxu0 0.0
    %7909 = vmatprep.subr.mxu0 0.0
    %7910 = vmatpush2.msra.mxu0 0.0
    %7911 = vmatprep.subr.mxu0 0.0
    %7912 = vmatpush2.msra.mxu0 0.0
    %7913 = vmatprep.subr.mxu0 0.0
    %7914 = vmatpush2.msra.mxu0 0.0
    %7915 = vmatprep.subr.mxu0 0.0
    %7916 = vmatpush2.msra.mxu0 0.0
    %7917 = vmatprep.subr.mxu0 0.0
    %7918 = vmatpush2.msra.mxu0 0.0
    %7919 = vmatprep.subr.mxu0 0.0
    %7920 = vmatpush2.msra.mxu0 0.0
    %7921 = vmatprep.mubr.f32.mxu0 0.0
    %7922 = vmatmul.mubr.f32.gmra.mxu0 %v7855
    %v7923 = vpop.f32.mrf.mxu0
    %v7924 = vadd.f32 0.0, %v7923
    %v7925 = vpop.f32.mrf.mxu0
    %7926 = vdwg.mxu0
    %v7927 = vadd.f32 %v6176, %v7924
    %v7928 = vxor.u32 %v7927, 2147483648
    %v7929 = vmul.f32 %v7928, 1.442695
    %v7930 = vpow.pop %v7929
    %v7931 = vadd.f32 %v7930, 1.0
    %v7932 = vrcp.pop %v7931
    %v7933 = vmul.f32 1.0, %v7932
    %7935 = vrot.lane.b32.xlu0 %v7927, 32
    %v7936 = vpop.permute.xlu0 %7935
    %v7938 = vmul.f32 %v7933, %v7936
    %7940 = vrot.lane.b32.xlu0 %v7938, 64
    %v7941 = vpop.permute.xlu0 %7940
    %v7943 = vadd.f32 %v7927, %v7941
    %v7944 = vtanh.pop %v7943
    %v7945 = vsub.f32 1.0, %v7933
    %7947 = vrot.lane.b32.xlu0 %v7944, 96
    %v7948 = vpop.permute.xlu0 %7947
    %v7950 = vmul.f32 %v7945, %v7948
    %v7951 = vmul.f32 %v7933, %v7751
    %v7952 = vadd.f32 %v7950, %v7951
    %7954 = vrot.lane.b32.xlu0 %v7952, 96
    %v7955 = vpop.permute.xlu0 %7954
    %v7957 = vsel %vm5490, %v7955, %v7854
    %v7959 = vsel %vm6093, %v7957, 0
    %7961 = vmatprep.subr.mxu0 0.0
    %7962 = vmatpush1.msra.mxu0 0.0
    %7963 = vmatprep.subr.mxu0 0.0
    %7964 = vmatpush1.msra.mxu0 0.0
    %7965 = vmatprep.subr.mxu0 0.0
    %7966 = vmatpush1.msra.mxu0 0.0
    %7967 = vmatprep.subr.mxu0 0.0
    %7968 = vmatpush1.msra.mxu0 0.0
    %7969 = vmatprep.subr.mxu0 0.0
    %7970 = vmatpush1.msra.mxu0 0.0
    %7971 = vmatprep.subr.mxu0 0.0
    %7972 = vmatpush1.msra.mxu0 0.0
    %7973 = vmatprep.subr.mxu0 0.0
    %7974 = vmatpush1.msra.mxu0 0.0
    %7975 = vmatprep.subr.mxu0 0.0
    %7976 = vmatpush1.msra.mxu0 0.0
    %7977 = vmatprep.subr.mxu0 0.0
    %7978 = vmatpush1.msra.mxu0 %v6192
    %7979 = vmatprep.subr.mxu0 0.0
    %7980 = vmatpush1.msra.mxu0 %v6191
    %7981 = vmatprep.subr.mxu0 0.0
    %7982 = vmatpush1.msra.mxu0 %v6190
    %7983 = vmatprep.subr.mxu0 0.0
    %7984 = vmatpush1.msra.mxu0 %v6189
    %7985 = vmatprep.subr.mxu0 0.0
    %7986 = vmatpush1.msra.mxu0 %v6188
    %7987 = vmatprep.subr.mxu0 0.0
    %7988 = vmatpush1.msra.mxu0 %v6187
    %7989 = vmatprep.subr.mxu0 0.0
    %7990 = vmatpush1.msra.mxu0 %v6186
    %7991 = vmatprep.subr.mxu0 0.0
    %7992 = vmatpush1.msra.mxu0 %v6185
    %7993 = vmatprep.subr.mxu0 0.0
    %7994 = vmatpush2.msra.mxu0 0.0
    %7995 = vmatprep.subr.mxu0 0.0
    %7996 = vmatpush2.msra.mxu0 0.0
    %7997 = vmatprep.subr.mxu0 0.0
    %7998 = vmatpush2.msra.mxu0 0.0
    %7999 = vmatprep.subr.mxu0 0.0
    %8000 = vmatpush2.msra.mxu0 0.0
    %8001 = vmatprep.subr.mxu0 0.0
    %8002 = vmatpush2.msra.mxu0 0.0
    %8003 = vmatprep.subr.mxu0 0.0
    %8004 = vmatpush2.msra.mxu0 0.0
    %8005 = vmatprep.subr.mxu0 0.0
    %8006 = vmatpush2.msra.mxu0 0.0
    %8007 = vmatprep.subr.mxu0 0.0
    %8008 = vmatpush2.msra.mxu0 0.0
    %8009 = vmatprep.subr.mxu0 0.0
    %8010 = vmatpush2.msra.mxu0 0.0
    %8011 = vmatprep.subr.mxu0 0.0
    %8012 = vmatpush2.msra.mxu0 0.0
    %8013 = vmatprep.subr.mxu0 0.0
    %8014 = vmatpush2.msra.mxu0 0.0
    %8015 = vmatprep.subr.mxu0 0.0
    %8016 = vmatpush2.msra.mxu0 0.0
    %8017 = vmatprep.subr.mxu0 0.0
    %8018 = vmatpush2.msra.mxu0 0.0
    %8019 = vmatprep.subr.mxu0 0.0
    %8020 = vmatpush2.msra.mxu0 0.0
    %8021 = vmatprep.subr.mxu0 0.0
    %8022 = vmatpush2.msra.mxu0 0.0
    %8023 = vmatprep.subr.mxu0 0.0
    %8024 = vmatpush2.msra.mxu0 0.0
    %8025 = vmatprep.mubr.f32.mxu0 0.0
    %8026 = vmatmul.mubr.f32.gmra.mxu0 %v7959
    %v8027 = vpop.f32.mrf.mxu0
    %v8028 = vadd.f32 %v6348, %v8027
    %v8029 = vpop.f32.mrf.mxu0
    %8030 = vdwg.mxu0
    %v8031 = vxor.u32 %v8028, 2147483648
    %v8032 = vmul.f32 %v8031, 1.442695
    %v8033 = vpow.pop %v8032
    %v8034 = vadd.f32 %v8033, 1.0
    %v8035 = vrcp.pop %v8034
    %v8036 = vmul.f32 1.0, %v8035
    %8038 = vrot.lane.b32.xlu0 %v8028, 32
    %v8039 = vpop.permute.xlu0 %8038
    %v8041 = vmul.f32 %v8036, %v8039
    %8043 = vrot.lane.b32.xlu0 %v8041, 64
    %v8044 = vpop.permute.xlu0 %8043
    %v8046 = vadd.f32 %v8028, %v8044
    %v8047 = vtanh.pop %v8046
    %v8048 = vsub.f32 1.0, %v8036
    %8050 = vrot.lane.b32.xlu0 %v8047, 96
    %v8051 = vpop.permute.xlu0 %8050
    %v8053 = vmul.f32 %v8048, %v8051
    %v8054 = vmul.f32 %v8036, %v7854
    %v8055 = vadd.f32 %v8053, %v8054
    %8057 = vrot.lane.b32.xlu0 %v6447, 96
    %v8058 = vpop.permute.xlu0 %8057
    %8061 = vrot.lane.b32.xlu0 %v6849, 32
    %v8062 = vpop.permute.xlu0 %8061
    %8065 = vrot.lane.b32.xlu0 %v7050, 64
    %v8066 = vpop.permute.xlu0 %8065
    %8069 = vrot.lane.b32.xlu0 %v7251, 96
    %v8070 = vpop.permute.xlu0 %8069
    %8073 = vrot.lane.b32.xlu0 %v7653, 32
    %v8074 = vpop.permute.xlu0 %8073
    %8077 = vrot.lane.b32.xlu0 %v7854, 64
    %v8078 = vpop.permute.xlu0 %8077
    %8081 = vrot.lane.b32.xlu0 %v8055, 96
    %v8082 = vpop.permute.xlu0 %8081
    %v8083 = vsel %vm5490, %v8058, %v6648
    %v8084 = vsel %vm6093, %v8083, %v8062
    %vm8085 = vcmask 785408
    %v8086 = vsel %vm8085, %v8084, %v8066
    %v8087 = vsel %vm5490, %v8070, %v7452
    %v8088 = vsel %vm6093, %v8087, %v8074
    %v8089 = vsel %vm8085, %v8088, %v8078
    %v8090 = vld [vmem:[#allocation10 + $0x17] sm:$0x1]
    %v8092 = vlaneseq
    %v8093 = vshrl.u32 %v8092, 7
    %v8094 = vsub.s32 0, %v8093
    %v8095 = vrot.slane %v8090, %v8094
    %v8097 = vsel %vm5490, %v8082, 0
    %8099 = vmatprep.subr.mxu0 0.0
    %8100 = vmatpush1.msra.mxu0 %v6208
    %8101 = vmatprep.subr.mxu0 0.0
    %8102 = vmatpush1.msra.mxu0 %v6207
    %8103 = vmatprep.subr.mxu0 0.0
    %8104 = vmatpush1.msra.mxu0 %v6206
    %8105 = vmatprep.subr.mxu0 0.0
    %8106 = vmatpush1.msra.mxu0 %v6205
    %8107 = vmatprep.subr.mxu0 0.0
    %8108 = vmatpush1.msra.mxu0 %v6204
    %8109 = vmatprep.subr.mxu0 0.0
    %8110 = vmatpush1.msra.mxu0 %v6203
    %8111 = vmatprep.subr.mxu0 0.0
    %8112 = vmatpush1.msra.mxu0 %v6202
    %8113 = vmatprep.subr.mxu0 0.0
    %8114 = vmatpush1.msra.mxu0 %v6201
    %8115 = vmatprep.subr.mxu0 0.0
    %8116 = vmatpush1.msra.mxu0 %v6200
    %8117 = vmatprep.subr.mxu0 0.0
    %8118 = vmatpush1.msra.mxu0 %v6199
    %8119 = vmatprep.subr.mxu0 0.0
    %8120 = vmatpush1.msra.mxu0 %v6198
    %8121 = vmatprep.subr.mxu0 0.0
    %8122 = vmatpush1.msra.mxu0 %v6197
    %8123 = vmatprep.subr.mxu0 0.0
    %8124 = vmatpush1.msra.mxu0 %v6196
    %8125 = vmatprep.subr.mxu0 0.0
    %8126 = vmatpush1.msra.mxu0 %v6195
    %8127 = vmatprep.subr.mxu0 0.0
    %8128 = vmatpush1.msra.mxu0 %v6194
    %8129 = vmatprep.subr.mxu0 0.0
    %8130 = vmatpush1.msra.mxu0 %v6193
    %8131 = vmatprep.subr.mxu0 0.0
    %8132 = vmatpush2.msra.mxu0 %v6224
    %8133 = vmatprep.subr.mxu0 0.0
    %8134 = vmatpush2.msra.mxu0 %v6223
    %8135 = vmatprep.subr.mxu0 0.0
    %8136 = vmatpush2.msra.mxu0 %v6222
    %8137 = vmatprep.subr.mxu0 0.0
    %8138 = vmatpush2.msra.mxu0 %v6221
    %8139 = vmatprep.subr.mxu0 0.0
    %8140 = vmatpush2.msra.mxu0 %v6220
    %8141 = vmatprep.subr.mxu0 0.0
    %8142 = vmatpush2.msra.mxu0 %v6219
    %8143 = vmatprep.subr.mxu0 0.0
    %8144 = vmatpush2.msra.mxu0 %v6218
    %8145 = vmatprep.subr.mxu0 0.0
    %8146 = vmatpush2.msra.mxu0 %v6217
    %8147 = vmatprep.subr.mxu0 0.0
    %8148 = vmatpush2.msra.mxu0 %v6216
    %8149 = vmatprep.subr.mxu0 0.0
    %8150 = vmatpush2.msra.mxu0 %v6215
    %8151 = vmatprep.subr.mxu0 0.0
    %8152 = vmatpush2.msra.mxu0 %v6214
    %8153 = vmatprep.subr.mxu0 0.0
    %8154 = vmatpush2.msra.mxu0 %v6213
    %8155 = vmatprep.subr.mxu0 0.0
    %8156 = vmatpush2.msra.mxu0 %v6212
    %8157 = vmatprep.subr.mxu0 0.0
    %8158 = vmatpush2.msra.mxu0 %v6211
    %8159 = vmatprep.subr.mxu0 0.0
    %8160 = vmatpush2.msra.mxu0 %v6210
    %8161 = vmatprep.subr.mxu0 0.0
    %8162 = vmatpush2.msra.mxu0 %v6209
    %8163 = vmatprep.mubr.f32.mxu0 %v8089
    %8164 = vmatmul.mubr.f32.gmra.mxu0 %v8086
    %v8165 = vpop.f32.mrf.mxu0
    %v8166 = vadd.f32 %v8095, %v8165
    %v8167 = vpop.f32.mrf.mxu0
    %8168 = vdwg.mxu0
    %8169 = vmatprep.subr.mxu0 0.0
    %8170 = vmatpush1.msra.mxu0 0.0
    %8171 = vmatprep.subr.mxu0 0.0
    %8172 = vmatpush1.msra.mxu0 0.0
    %8173 = vmatprep.subr.mxu0 0.0
    %8174 = vmatpush1.msra.mxu0 0.0
    %8175 = vmatprep.subr.mxu0 0.0
    %8176 = vmatpush1.msra.mxu0 0.0
    %8177 = vmatprep.subr.mxu0 0.0
    %8178 = vmatpush1.msra.mxu0 0.0
    %8179 = vmatprep.subr.mxu0 0.0
    %8180 = vmatpush1.msra.mxu0 0.0
    %8181 = vmatprep.subr.mxu0 0.0
    %8182 = vmatpush1.msra.mxu0 0.0
    %8183 = vmatprep.subr.mxu0 0.0
    %8184 = vmatpush1.msra.mxu0 0.0
    %8185 = vmatprep.subr.mxu0 0.0
    %8186 = vmatpush1.msra.mxu0 0.0
    %8187 = vmatprep.subr.mxu0 0.0
    %8188 = vmatpush1.msra.mxu0 0.0
    %8189 = vmatprep.subr.mxu0 0.0
    %8190 = vmatpush1.msra.mxu0 0.0
    %8191 = vmatprep.subr.mxu0 0.0
    %8192 = vmatpush1.msra.mxu0 0.0
    %8193 = vmatprep.subr.mxu0 0.0
    %8194 = vmatpush1.msra.mxu0 %v6228
    %8195 = vmatprep.subr.mxu0 0.0
    %8196 = vmatpush1.msra.mxu0 %v6227
    %8197 = vmatprep.subr.mxu0 0.0
    %8198 = vmatpush1.msra.mxu0 %v6226
    %8199 = vmatprep.subr.mxu0 0.0
    %8200 = vmatpush1.msra.mxu0 %v6225
    %8201 = vmatprep.subr.mxu0 0.0
    %8202 = vmatpush2.msra.mxu0 0.0
    %8203 = vmatprep.subr.mxu0 0.0
    %8204 = vmatpush2.msra.mxu0 0.0
    %8205 = vmatprep.subr.mxu0 0.0
    %8206 = vmatpush2.msra.mxu0 0.0
    %8207 = vmatprep.subr.mxu0 0.0
    %8208 = vmatpush2.msra.mxu0 0.0
    %8209 = vmatprep.subr.mxu0 0.0
    %8210 = vmatpush2.msra.mxu0 0.0
    %8211 = vmatprep.subr.mxu0 0.0
    %8212 = vmatpush2.msra.mxu0 0.0
    %8213 = vmatprep.subr.mxu0 0.0
    %8214 = vmatpush2.msra.mxu0 0.0
    %8215 = vmatprep.subr.mxu0 0.0
    %8216 = vmatpush2.msra.mxu0 0.0
    %8217 = vmatprep.subr.mxu0 0.0
    %8218 = vmatpush2.msra.mxu0 0.0
    %8219 = vmatprep.subr.mxu0 0.0
    %8220 = vmatpush2.msra.mxu0 0.0
    %8221 = vmatprep.subr.mxu0 0.0
    %8222 = vmatpush2.msra.mxu0 0.0
    %8223 = vmatprep.subr.mxu0 0.0
    %8224 = vmatpush2.msra.mxu0 0.0
    %8225 = vmatprep.subr.mxu0 0.0
    %8226 = vmatpush2.msra.mxu0 0.0
    %8227 = vmatprep.subr.mxu0 0.0
    %8228 = vmatpush2.msra.mxu0 0.0
    %8229 = vmatprep.subr.mxu0 0.0
    %8230 = vmatpush2.msra.mxu0 0.0
    %8231 = vmatprep.subr.mxu0 0.0
    %8232 = vmatpush2.msra.mxu0 0.0
    %8233 = vmatprep.mubr.f32.mxu0 0.0
    %8234 = vmatmul.mubr.f32.gmra.mxu0 %v8097
    %v8235 = vpop.f32.mrf.mxu0
    %v8236 = vadd.f32 %v8166, %v8235
    %v8237 = vpop.f32.mrf.mxu0
    %8238 = vdwg.mxu0
    %8239 = vst [vmem:[%s9] sm:$0xff] %v8236
    %8240 = vst.msk [vmem:[%s10] sm:$0xff] %vm5490, %v7955
    %s8242 = scalar_lea.vmem %s10, 8
    %8243 = vst.msk [vmem:[%s8242] sm:$0xff] %vm5490, %v8082
    // Predicated region
    $region66: #{cnn_with_rnn_forward.1} parent=1 // pred_check
      _
    $region67: #{cnn_with_rnn_forward.1} parent=1 // pred_check_branch
      %8245 = sbr.rel (0) target = $region69
    $region68: #{cnn_with_rnn_forward.1} parent=1 // pred_region
      _
    $region69: #{cnn_with_rnn_forward.1} parent=1 // pred_fallthru
      _
    // Predicated region
    $region70: #{cnn_with_rnn_forward.1} parent=1 // pred_check
      _
    $region71: #{cnn_with_rnn_forward.1} parent=1 // pred_check_branch
      %8247 = sbr.rel (0) target = $region73
    $region72: #{cnn_with_rnn_forward.1} parent=1 // pred_region
      _
    $region73: #{cnn_with_rnn_forward.1} parent=1 // pred_fallthru
      _
    // Predicated region
    $region74: #{cnn_with_rnn_forward.1} parent=1 // pred_check
      _
    $region75: #{cnn_with_rnn_forward.1} parent=1 // pred_check_branch
      %8249 = sbr.rel (0) target = $region77
    $region76: #{cnn_with_rnn_forward.1} parent=1 // pred_region
      _
    $region77: #{cnn_with_rnn_forward.1} parent=1 // pred_fallthru
      _
    // Predicated region
    $region78: #{cnn_with_rnn_forward.1} parent=1 // pred_check
      _
    $region79: #{cnn_with_rnn_forward.1} parent=1 // pred_check_branch
      %8251 = sbr.rel (0) target = $region81
    $region80: #{cnn_with_rnn_forward.1} parent=1 // pred_region
      _
    $region81: #{cnn_with_rnn_forward.1} parent=1 // pred_fallthru
      _
    %8252 = vsyncpa [#allocation3], 1
    %8253 = vsyncpa [#allocation5], 1
    %8254 = vsyncpa [#allocation8], 1
    %8255 = vsyncpa [#allocation11], 1

</llo_original>
